<compile_context>
chip_gen: v5e
topology: v5e:2x2
jax: 0.10.0
libtpu: 0.0.40
codegen_flags: <defaults>
</compile_context>

<pallas_src>
import numpy as np
import jax
import jax.numpy as jnp
from jax import lax
from jax.experimental import pallas as pl
from jax.experimental.pallas import tpu as pltpu


def _dwconv_kernel(x_ref, w_ref, b_ref, out_ref, pad_ref):
    # x_ref / out_ref blocks: (1, D, H, W, C); pad_ref: (D+2, H+2, W+2, C)
    _, D, H, W, C = x_ref.shape

    # Re-zero only the halo border (6 thin faces), not the whole buffer.
    # Together these faces cover exactly everything outside the interior.
    zface_d = jnp.zeros((1, H + 2, W + 2, C), jnp.float32)
    pad_ref[0:1, :, :, :] = zface_d
    pad_ref[D + 1:D + 2, :, :, :] = zface_d
    zface_h = jnp.zeros((D, 1, W + 2, C), jnp.float32)
    pad_ref[1:1 + D, 0:1, :, :] = zface_h
    pad_ref[1:1 + D, H + 1:H + 2, :, :] = zface_h
    zface_w = jnp.zeros((D, H, 1, C), jnp.float32)
    pad_ref[1:1 + D, 1:1 + H, 0:1, :] = zface_w
    pad_ref[1:1 + D, 1:1 + H, W + 1:W + 2, :] = zface_w

    # Interior = this batch's volume (zero border implements "same" padding).
    pad_ref[1:1 + D, 1:1 + H, 1:1 + W, :] = x_ref[0]

    # Depthwise 3x3x3: 27 statically shifted reads, FMA with per-channel
    # weights that broadcast along the lane axis.  Accumulate in f32.
    acc = jnp.broadcast_to(b_ref[0], (D, H, W, C)).astype(jnp.float32)
    for kd in range(3):
        for kh in range(3):
            for kw in range(3):
                w = w_ref[(kd * 3 + kh) * 3 + kw, :]                      # (C,)
                acc = acc + pad_ref[kd:kd + D, kh:kh + H, kw:kw + W, :] * w

    out_ref[0] = acc.astype(out_ref.dtype)


def dwconv_pallas(x_ndhwc, w_flat, bias):
    """x_ndhwc: (B, D, H, W, C) f32, channels-last; w_flat: (27, C); bias: (1, C)."""
    B, D, H, W, C = x_ndhwc.shape
    itemsize = 4
    block_bytes = D * H * W * C * itemsize
    halo_bytes = (D + 2) * (H + 2) * (W + 2) * C * itemsize
    weight_bytes = (27 + 1) * C * itemsize
    # scratch + double-buffered in/out blocks + weights, 1.5x for layout
    # padding, plus fixed headroom for internal scratch.
    vmem_limit = int(1.5 * (halo_bytes + 4 * block_bytes + 2 * weight_bytes)) + (8 << 20)

    return pl.pallas_call(
        _dwconv_kernel,
        out_shape=jax.ShapeDtypeStruct((B, D, H, W, C), jnp.float32),
        grid=(B,),
        in_specs=[
            pl.BlockSpec((1, D, H, W, C), lambda b: (b, 0, 0, 0, 0)),  # x
            pl.BlockSpec((27, C), lambda b: (0, 0)),                   # dw weights
            pl.BlockSpec((1, C), lambda b: (0, 0)),                    # bias
        ],
        out_specs=pl.BlockSpec((1, D, H, W, C), lambda b: (b, 0, 0, 0, 0)),
        scratch_shapes=[
            pltpu.VMEM((D + 2, H + 2, W + 2, C), jnp.float32),         # halo = 1
        ],
        compiler_params=pltpu.CompilerParams(
            dimension_semantics=("parallel",),        # batches independent -> megacore
            vmem_limit_bytes=vmem_limit,
        ),
    )(x_ndhwc, w_flat, bias)


# ---------------- parameter init (PyTorch layout), packing, reference ----------------

def init_params(key, C):
    k1, k2 = jax.random.split(key)
    bound = 1.0 / float(np.sqrt(27.0))   # fan_in = (C/groups) * 3*3*3 = 27
    return {
        'w': jax.random.uniform(k1, (C, 1, 3, 3, 3), jnp.float32, minval=-bound, maxval=bound),
        'b': jax.random.uniform(k2, (C,), jnp.float32, minval=-bound, maxval=bound),
    }


def pack_params(p, C):
    # (C, 1, 3, 3, 3) -> (27, C) with tap index kd*9 + kh*3 + kw.
    w_flat = jnp.transpose(p['w'][:, 0].reshape(C, 27), (1, 0))
    return w_flat, p['b'].reshape(1, C)


def ref_dwconv_ncdhw(x, p):
    """Pure-JAX reference (NCDHW), mirrors nn.Conv3d(dim, dim, 3, 1, 1, groups=dim)."""
    C = x.shape[1]
    y = lax.conv_general_dilated(
        x, p['w'], (1, 1, 1), [(1, 1)] * 3,
        dimension_numbers=('NCDHW', 'OIDHW', 'NCDHW'),
        feature_group_count=C, precision=lax.Precision.HIGHEST)
    return y + p['b'].reshape(1, C, 1, 1, 1)


if __name__ == "__main__":
    key = jax.random.PRNGKey(0)
    kx, kp = jax.random.split(key)

    # Small but lane-dense: C=128 fills the lane axis, spatial 8^3, batch 2.
    B, C, D, H, W = 2, 128, 8, 8, 8
    x_ncdhw = jax.random.normal(kx, (B, C, D, H, W), jnp.float32)
    params = init_params(kp, C)
    w_flat, bias = pack_params(params, C)

    x_ndhwc = jnp.transpose(x_ncdhw, (0, 2, 3, 4, 1))
    out = dwconv_pallas(x_ndhwc, w_flat, bias)
    out = jax.block_until_ready(out)

    ref = ref_dwconv_ncdhw(x_ncdhw, params)
    ref_ndhwc = jnp.transpose(ref, (0, 2, 3, 4, 1))
    np.testing.assert_allclose(np.asarray(out), np.asarray(ref_ndhwc),
                               rtol=1e-4, atol=1e-5)
    print("KERNEL_OK")
</pallas_src>

<mosaic_0001>
module attributes {stable_mosaic.version = 11 : i64} {
  func.func @_dwconv_kernel(%arg0: i32, %arg1: memref<1x8x8x8x128xf32, #tpu.memory_space<vmem>>, %arg2: memref<27x128xf32, #tpu.memory_space<vmem>>, %arg3: memref<1x128xf32, #tpu.memory_space<vmem>>, %arg4: memref<1x8x8x8x128xf32, #tpu.memory_space<vmem>>, %arg5: memref<10x10x10x128xf32, #tpu.memory_space<vmem>>) attributes {dimension_semantics = [#tpu.dimension_semantics<parallel>], iteration_bounds = array<i64: 2>, scalar_prefetch = 0 : i64, scratch_operands = 1 : i64, tpu.core_type = #tpu.core_type<tc>, window_params = [{transform_indices = @transform_0, window_bounds = array<i64: 1, 8, 8, 8, 128>}, {pipeline_mode = #tpu.pipeline_mode<synchronous>, transform_indices = @transform_1, window_bounds = array<i64: 27, 128>}, {pipeline_mode = #tpu.pipeline_mode<synchronous>, transform_indices = @transform_2, window_bounds = array<i64: 1, 128>}, {transform_indices = @transform_3, window_bounds = array<i64: 1, 8, 8, 8, 128>}]} {
    %cst = arith.constant 0.000000e+00 : f32
    %0 = vector.broadcast %cst : f32 to vector<1x10x10x128xf32>
    %c0 = arith.constant 0 : index
    %c0_0 = arith.constant 0 : index
    %c0_1 = arith.constant 0 : index
    %c0_2 = arith.constant 0 : index
    %1 = vector.load %arg5[%c0, %c0_0, %c0_1, %c0_2] : memref<10x10x10x128xf32, #tpu.memory_space<vmem>>, vector<1x10x10x128xf32>
    tpu.vector_store %arg5[%c0, %c0_0, %c0_1, %c0_2], %0 {strides = array<i32>} : memref<10x10x10x128xf32, #tpu.memory_space<vmem>>, vector<1x10x10x128xf32>,
    %c9 = arith.constant 9 : index
    %c0_3 = arith.constant 0 : index
    %c0_4 = arith.constant 0 : index
    %c0_5 = arith.constant 0 : index
    %2 = vector.load %arg5[%c9, %c0_3, %c0_4, %c0_5] : memref<10x10x10x128xf32, #tpu.memory_space<vmem>>, vector<1x10x10x128xf32>
    tpu.vector_store %arg5[%c9, %c0_3, %c0_4, %c0_5], %0 {strides = array<i32>} : memref<10x10x10x128xf32, #tpu.memory_space<vmem>>, vector<1x10x10x128xf32>,
    %cst_6 = arith.constant 0.000000e+00 : f32
    %3 = vector.broadcast %cst_6 : f32 to vector<8x1x10x128xf32>
    %c1 = arith.constant 1 : index
    %c0_7 = arith.constant 0 : index
    %c0_8 = arith.constant 0 : index
    %c0_9 = arith.constant 0 : index
    %4 = vector.load %arg5[%c1, %c0_7, %c0_8, %c0_9] : memref<10x10x10x128xf32, #tpu.memory_space<vmem>>, vector<8x1x10x128xf32>
    tpu.vector_store %arg5[%c1, %c0_7, %c0_8, %c0_9], %3 {strides = array<i32>} : memref<10x10x10x128xf32, #tpu.memory_space<vmem>>, vector<8x1x10x128xf32>,
    %c1_10 = arith.constant 1 : index
    %c9_11 = arith.constant 9 : index
    %c0_12 = arith.constant 0 : index
    %c0_13 = arith.constant 0 : index
    %5 = vector.load %arg5[%c1_10, %c9_11, %c0_12, %c0_13] : memref<10x10x10x128xf32, #tpu.memory_space<vmem>>, vector<8x1x10x128xf32>
    tpu.vector_store %arg5[%c1_10, %c9_11, %c0_12, %c0_13], %3 {strides = array<i32>} : memref<10x10x10x128xf32, #tpu.memory_space<vmem>>, vector<8x1x10x128xf32>,
    %cst_14 = arith.constant 0.000000e+00 : f32
    %6 = vector.broadcast %cst_14 : f32 to vector<8x8x1x128xf32>
    %c1_15 = arith.constant 1 : index
    %c1_16 = arith.constant 1 : index
    %c0_17 = arith.constant 0 : index
    %c0_18 = arith.constant 0 : index
    %7 = vector.load %arg5[%c1_15, %c1_16, %c0_17, %c0_18] : memref<10x10x10x128xf32, #tpu.memory_space<vmem>>, vector<8x8x1x128xf32>
    tpu.vector_store %arg5[%c1_15, %c1_16, %c0_17, %c0_18], %6 {strides = array<i32>} : memref<10x10x10x128xf32, #tpu.memory_space<vmem>>, vector<8x8x1x128xf32>,
    %c1_19 = arith.constant 1 : index
    %c1_20 = arith.constant 1 : index
    %c9_21 = arith.constant 9 : index
    %c0_22 = arith.constant 0 : index
    %8 = vector.load %arg5[%c1_19, %c1_20, %c9_21, %c0_22] : memref<10x10x10x128xf32, #tpu.memory_space<vmem>>, vector<8x8x1x128xf32>
    tpu.vector_store %arg5[%c1_19, %c1_20, %c9_21, %c0_22], %6 {strides = array<i32>} : memref<10x10x10x128xf32, #tpu.memory_space<vmem>>, vector<8x8x1x128xf32>,
    %c0_23 = arith.constant 0 : index
    %c0_24 = arith.constant 0 : index
    %c0_25 = arith.constant 0 : index
    %c0_26 = arith.constant 0 : index
    %c0_27 = arith.constant 0 : index
    %9 = vector.load %arg1[%c0_23, %c0_24, %c0_25, %c0_26, %c0_27] : memref<1x8x8x8x128xf32, #tpu.memory_space<vmem>>, vector<1x8x8x8x128xf32>
    %10 = vector.shape_cast %9 : vector<1x8x8x8x128xf32> to vector<8x8x8x128xf32>
    %c1_28 = arith.constant 1 : index
    %c1_29 = arith.constant 1 : index
    %c1_30 = arith.constant 1 : index
    %c0_31 = arith.constant 0 : index
    %11 = vector.load %arg5[%c1_28, %c1_29, %c1_30, %c0_31] : memref<10x10x10x128xf32, #tpu.memory_space<vmem>>, vector<8x8x8x128xf32>
    tpu.vector_store %arg5[%c1_28, %c1_29, %c1_30, %c0_31], %10 {strides = array<i32>} : memref<10x10x10x128xf32, #tpu.memory_space<vmem>>, vector<8x8x8x128xf32>,
    %c0_32 = arith.constant 0 : index
    %c0_33 = arith.constant 0 : index
    %12 = vector.load %arg3[%c0_32, %c0_33] : memref<1x128xf32, #tpu.memory_space<vmem>>, vector<1x128xf32>
    %13 = vector.shape_cast %12 : vector<1x128xf32> to vector<128xf32>
    %14 = vector.shape_cast %13 : vector<128xf32> to vector<1x1x1x128xf32>
    %15 = vector.broadcast %14 : vector<1x1x1x128xf32> to vector<8x8x8x128xf32>
    %c0_34 = arith.constant 0 : index
    %c0_35 = arith.constant 0 : index
    %16 = vector.load %arg2[%c0_34, %c0_35] : memref<27x128xf32, #tpu.memory_space<vmem>>, vector<1x128xf32>
    %17 = vector.shape_cast %16 : vector<1x128xf32> to vector<128xf32>
    %c0_36 = arith.constant 0 : index
    %c0_37 = arith.constant 0 : index
    %c0_38 = arith.constant 0 : index
    %c0_39 = arith.constant 0 : index
    %18 = vector.load %arg5[%c0_36, %c0_37, %c0_38, %c0_39] : memref<10x10x10x128xf32, #tpu.memory_space<vmem>>, vector<8x8x8x128xf32>
    %19 = vector.shape_cast %17 : vector<128xf32> to vector<1x1x1x128xf32>
    %20 = vector.broadcast %19 : vector<1x1x1x128xf32> to vector<8x8x8x128xf32>
    %21 = arith.mulf %18, %20 : vector<8x8x8x128xf32>
    %22 = arith.addf %15, %21 : vector<8x8x8x128xf32>
    %c1_40 = arith.constant 1 : index
    %c0_41 = arith.constant 0 : index
    %23 = vector.load %arg2[%c1_40, %c0_41] : memref<27x128xf32, #tpu.memory_space<vmem>>, vector<1x128xf32>
    %24 = vector.shape_cast %23 : vector<1x128xf32> to vector<128xf32>
    %c0_42 = arith.constant 0 : index
    %c0_43 = arith.constant 0 : index
    %c1_44 = arith.constant 1 : index
    %c0_45 = arith.constant 0 : index
    %25 = vector.load %arg5[%c0_42, %c0_43, %c1_44, %c0_45] : memref<10x10x10x128xf32, #tpu.memory_space<vmem>>, vector<8x8x8x128xf32>
    %26 = vector.shape_cast %24 : vector<128xf32> to vector<1x1x1x128xf32>
    %27 = vector.broadcast %26 : vector<1x1x1x128xf32> to vector<8x8x8x128xf32>
    %28 = arith.mulf %25, %27 : vector<8x8x8x128xf32>
    %29 = arith.addf %22, %28 : vector<8x8x8x128xf32>
    %c2 = arith.constant 2 : index
    %c0_46 = arith.constant 0 : index
    %30 = vector.load %arg2[%c2, %c0_46] : memref<27x128xf32, #tpu.memory_space<vmem>>, vector<1x128xf32>
    %31 = vector.shape_cast %30 : vector<1x128xf32> to vector<128xf32>
    %c0_47 = arith.constant 0 : index
    %c0_48 = arith.constant 0 : index
    %c2_49 = arith.constant 2 : index
    %c0_50 = arith.constant 0 : index
    %32 = vector.load %arg5[%c0_47, %c0_48, %c2_49, %c0_50] : memref<10x10x10x128xf32, #tpu.memory_space<vmem>>, vector<8x8x8x128xf32>
    %33 = vector.shape_cast %31 : vector<128xf32> to vector<1x1x1x128xf32>
    %34 = vector.broadcast %33 : vector<1x1x1x128xf32> to vector<8x8x8x128xf32>
    %35 = arith.mulf %32, %34 : vector<8x8x8x128xf32>
    %36 = arith.addf %29, %35 : vector<8x8x8x128xf32>
    %c3 = arith.constant 3 : index
    %c0_51 = arith.constant 0 : index
    %37 = vector.load %arg2[%c3, %c0_51] : memref<27x128xf32, #tpu.memory_space<vmem>>, vector<1x128xf32>
    %38 = vector.shape_cast %37 : vector<1x128xf32> to vector<128xf32>
    %c0_52 = arith.constant 0 : index
    %c1_53 = arith.constant 1 : index
    %c0_54 = arith.constant 0 : index
    %c0_55 = arith.constant 0 : index
    %39 = vector.load %arg5[%c0_52, %c1_53, %c0_54, %c0_55] : memref<10x10x10x128xf32, #tpu.memory_space<vmem>>, vector<8x8x8x128xf32>
    %40 = vector.shape_cast %38 : vector<128xf32> to vector<1x1x1x128xf32>
    %41 = vector.broadcast %40 : vector<1x1x1x128xf32> to vector<8x8x8x128xf32>
    %42 = arith.mulf %39, %41 : vector<8x8x8x128xf32>
    %43 = arith.addf %36, %42 : vector<8x8x8x128xf32>
    %c4 = arith.constant 4 : index
    %c0_56 = arith.constant 0 : index
    %44 = vector.load %arg2[%c4, %c0_56] : memref<27x128xf32, #tpu.memory_space<vmem>>, vector<1x128xf32>
    %45 = vector.shape_cast %44 : vector<1x128xf32> to vector<128xf32>
    %c0_57 = arith.constant 0 : index
    %c1_58 = arith.constant 1 : index
    %c1_59 = arith.constant 1 : index
    %c0_60 = arith.constant 0 : index
    %46 = vector.load %arg5[%c0_57, %c1_58, %c1_59, %c0_60] : memref<10x10x10x128xf32, #tpu.memory_space<vmem>>, vector<8x8x8x128xf32>
    %47 = vector.shape_cast %45 : vector<128xf32> to vector<1x1x1x128xf32>
    %48 = vector.broadcast %47 : vector<1x1x1x128xf32> to vector<8x8x8x128xf32>
    %49 = arith.mulf %46, %48 : vector<8x8x8x128xf32>
    %50 = arith.addf %43, %49 : vector<8x8x8x128xf32>
    %c5 = arith.constant 5 : index
    %c0_61 = arith.constant 0 : index
    %51 = vector.load %arg2[%c5, %c0_61] : memref<27x128xf32, #tpu.memory_space<vmem>>, vector<1x128xf32>
    %52 = vector.shape_cast %51 : vector<1x128xf32> to vector<128xf32>
    %c0_62 = arith.constant 0 : index
    %c1_63 = arith.constant 1 : index
    %c2_64 = arith.constant 2 : index
    %c0_65 = arith.constant 0 : index
    %53 = vector.load %arg5[%c0_62, %c1_63, %c2_64, %c0_65] : memref<10x10x10x128xf32, #tpu.memory_space<vmem>>, vector<8x8x8x128xf32>
    %54 = vector.shape_cast %52 : vector<128xf32> to vector<1x1x1x128xf32>
    %55 = vector.broadcast %54 : vector<1x1x1x128xf32> to vector<8x8x8x128xf32>
    %56 = arith.mulf %53, %55 : vector<8x8x8x128xf32>
    %57 = arith.addf %50, %56 : vector<8x8x8x128xf32>
    %c6 = arith.constant 6 : index
    %c0_66 = arith.constant 0 : index
    %58 = vector.load %arg2[%c6, %c0_66] : memref<27x128xf32, #tpu.memory_space<vmem>>, vector<1x128xf32>
    %59 = vector.shape_cast %58 : vector<1x128xf32> to vector<128xf32>
    %c0_67 = arith.constant 0 : index
    %c2_68 = arith.constant 2 : index
    %c0_69 = arith.constant 0 : index
    %c0_70 = arith.constant 0 : index
    %60 = vector.load %arg5[%c0_67, %c2_68, %c0_69, %c0_70] : memref<10x10x10x128xf32, #tpu.memory_space<vmem>>, vector<8x8x8x128xf32>
    %61 = vector.shape_cast %59 : vector<128xf32> to vector<1x1x1x128xf32>
    %62 = vector.broadcast %61 : vector<1x1x1x128xf32> to vector<8x8x8x128xf32>
    %63 = arith.mulf %60, %62 : vector<8x8x8x128xf32>
    %64 = arith.addf %57, %63 : vector<8x8x8x128xf32>
    %c7 = arith.constant 7 : index
    %c0_71 = arith.constant 0 : index
    %65 = vector.load %arg2[%c7, %c0_71] : memref<27x128xf32, #tpu.memory_space<vmem>>, vector<1x128xf32>
    %66 = vector.shape_cast %65 : vector<1x128xf32> to vector<128xf32>
    %c0_72 = arith.constant 0 : index
    %c2_73 = arith.constant 2 : index
    %c1_74 = arith.constant 1 : index
    %c0_75 = arith.constant 0 : index
    %67 = vector.load %arg5[%c0_72, %c2_73, %c1_74, %c0_75] : memref<10x10x10x128xf32, #tpu.memory_space<vmem>>, vector<8x8x8x128xf32>
    %68 = vector.shape_cast %66 : vector<128xf32> to vector<1x1x1x128xf32>
    %69 = vector.broadcast %68 : vector<1x1x1x128xf32> to vector<8x8x8x128xf32>
    %70 = arith.mulf %67, %69 : vector<8x8x8x128xf32>
    %71 = arith.addf %64, %70 : vector<8x8x8x128xf32>
    %c8 = arith.constant 8 : index
    %c0_76 = arith.constant 0 : index
    %72 = vector.load %arg2[%c8, %c0_76] : memref<27x128xf32, #tpu.memory_space<vmem>>, vector<1x128xf32>
    %73 = vector.shape_cast %72 : vector<1x128xf32> to vector<128xf32>
    %c0_77 = arith.constant 0 : index
    %c2_78 = arith.constant 2 : index
    %c2_79 = arith.constant 2 : index
    %c0_80 = arith.constant 0 : index
    %74 = vector.load %arg5[%c0_77, %c2_78, %c2_79, %c0_80] : memref<10x10x10x128xf32, #tpu.memory_space<vmem>>, vector<8x8x8x128xf32>
    %75 = vector.shape_cast %73 : vector<128xf32> to vector<1x1x1x128xf32>
    %76 = vector.broadcast %75 : vector<1x1x1x128xf32> to vector<8x8x8x128xf32>
    %77 = arith.mulf %74, %76 : vector<8x8x8x128xf32>
    %78 = arith.addf %71, %77 : vector<8x8x8x128xf32>
    %c9_81 = arith.constant 9 : index
    %c0_82 = arith.constant 0 : index
    %79 = vector.load %arg2[%c9_81, %c0_82] : memref<27x128xf32, #tpu.memory_space<vmem>>, vector<1x128xf32>
    %80 = vector.shape_cast %79 : vector<1x128xf32> to vector<128xf32>
    %c1_83 = arith.constant 1 : index
    %c0_84 = arith.constant 0 : index
    %c0_85 = arith.constant 0 : index
    %c0_86 = arith.constant 0 : index
    %81 = vector.load %arg5[%c1_83, %c0_84, %c0_85, %c0_86] : memref<10x10x10x128xf32, #tpu.memory_space<vmem>>, vector<8x8x8x128xf32>
    %82 = vector.shape_cast %80 : vector<128xf32> to vector<1x1x1x128xf32>
    %83 = vector.broadcast %82 : vector<1x1x1x128xf32> to vector<8x8x8x128xf32>
    %84 = arith.mulf %81, %83 : vector<8x8x8x128xf32>
    %85 = arith.addf %78, %84 : vector<8x8x8x128xf32>
    %c10 = arith.constant 10 : index
    %c0_87 = arith.constant 0 : index
    %86 = vector.load %arg2[%c10, %c0_87] : memref<27x128xf32, #tpu.memory_space<vmem>>, vector<1x128xf32>
    %87 = vector.shape_cast %86 : vector<1x128xf32> to vector<128xf32>
    %c1_88 = arith.constant 1 : index
    %c0_89 = arith.constant 0 : index
    %c1_90 = arith.constant 1 : index
    %c0_91 = arith.constant 0 : index
    %88 = vector.load %arg5[%c1_88, %c0_89, %c1_90, %c0_91] : memref<10x10x10x128xf32, #tpu.memory_space<vmem>>, vector<8x8x8x128xf32>
    %89 = vector.shape_cast %87 : vector<128xf32> to vector<1x1x1x128xf32>
    %90 = vector.broadcast %89 : vector<1x1x1x128xf32> to vector<8x8x8x128xf32>
    %91 = arith.mulf %88, %90 : vector<8x8x8x128xf32>
    %92 = arith.addf %85, %91 : vector<8x8x8x128xf32>
    %c11 = arith.constant 11 : index
    %c0_92 = arith.constant 0 : index
    %93 = vector.load %arg2[%c11, %c0_92] : memref<27x128xf32, #tpu.memory_space<vmem>>, vector<1x128xf32>
    %94 = vector.shape_cast %93 : vector<1x128xf32> to vector<128xf32>
    %c1_93 = arith.constant 1 : index
    %c0_94 = arith.constant 0 : index
    %c2_95 = arith.constant 2 : index
    %c0_96 = arith.constant 0 : index
    %95 = vector.load %arg5[%c1_93, %c0_94, %c2_95, %c0_96] : memref<10x10x10x128xf32, #tpu.memory_space<vmem>>, vector<8x8x8x128xf32>
    %96 = vector.shape_cast %94 : vector<128xf32> to vector<1x1x1x128xf32>
    %97 = vector.broadcast %96 : vector<1x1x1x128xf32> to vector<8x8x8x128xf32>
    %98 = arith.mulf %95, %97 : vector<8x8x8x128xf32>
    %99 = arith.addf %92, %98 : vector<8x8x8x128xf32>
    %c12 = arith.constant 12 : index
    %c0_97 = arith.constant 0 : index
    %100 = vector.load %arg2[%c12, %c0_97] : memref<27x128xf32, #tpu.memory_space<vmem>>, vector<1x128xf32>
    %101 = vector.shape_cast %100 : vector<1x128xf32> to vector<128xf32>
    %c1_98 = arith.constant 1 : index
    %c1_99 = arith.constant 1 : index
    %c0_100 = arith.constant 0 : index
    %c0_101 = arith.constant 0 : index
    %102 = vector.load %arg5[%c1_98, %c1_99, %c0_100, %c0_101] : memref<10x10x10x128xf32, #tpu.memory_space<vmem>>, vector<8x8x8x128xf32>
    %103 = vector.shape_cast %101 : vector<128xf32> to vector<1x1x1x128xf32>
    %104 = vector.broadcast %103 : vector<1x1x1x128xf32> to vector<8x8x8x128xf32>
    %105 = arith.mulf %102, %104 : vector<8x8x8x128xf32>
    %106 = arith.addf %99, %105 : vector<8x8x8x128xf32>
    %c13 = arith.constant 13 : index
    %c0_102 = arith.constant 0 : index
    %107 = vector.load %arg2[%c13, %c0_102] : memref<27x128xf32, #tpu.memory_space<vmem>>, vector<1x128xf32>
    %108 = vector.shape_cast %107 : vector<1x128xf32> to vector<128xf32>
    %c1_103 = arith.constant 1 : index
    %c1_104 = arith.constant 1 : index
    %c1_105 = arith.constant 1 : index
    %c0_106 = arith.constant 0 : index
    %109 = vector.load %arg5[%c1_103, %c1_104, %c1_105, %c0_106] : memref<10x10x10x128xf32, #tpu.memory_space<vmem>>, vector<8x8x8x128xf32>
    %110 = vector.shape_cast %108 : vector<128xf32> to vector<1x1x1x128xf32>
    %111 = vector.broadcast %110 : vector<1x1x1x128xf32> to vector<8x8x8x128xf32>
    %112 = arith.mulf %109, %111 : vector<8x8x8x128xf32>
    %113 = arith.addf %106, %112 : vector<8x8x8x128xf32>
    %c14 = arith.constant 14 : index
    %c0_107 = arith.constant 0 : index
    %114 = vector.load %arg2[%c14, %c0_107] : memref<27x128xf32, #tpu.memory_space<vmem>>, vector<1x128xf32>
    %115 = vector.shape_cast %114 : vector<1x128xf32> to vector<128xf32>
    %c1_108 = arith.constant 1 : index
    %c1_109 = arith.constant 1 : index
    %c2_110 = arith.constant 2 : index
    %c0_111 = arith.constant 0 : index
    %116 = vector.load %arg5[%c1_108, %c1_109, %c2_110, %c0_111] : memref<10x10x10x128xf32, #tpu.memory_space<vmem>>, vector<8x8x8x128xf32>
    %117 = vector.shape_cast %115 : vector<128xf32> to vector<1x1x1x128xf32>
    %118 = vector.broadcast %117 : vector<1x1x1x128xf32> to vector<8x8x8x128xf32>
    %119 = arith.mulf %116, %118 : vector<8x8x8x128xf32>
    %120 = arith.addf %113, %119 : vector<8x8x8x128xf32>
    %c15 = arith.constant 15 : index
    %c0_112 = arith.constant 0 : index
    %121 = vector.load %arg2[%c15, %c0_112] : memref<27x128xf32, #tpu.memory_space<vmem>>, vector<1x128xf32>
    %122 = vector.shape_cast %121 : vector<1x128xf32> to vector<128xf32>
    %c1_113 = arith.constant 1 : index
    %c2_114 = arith.constant 2 : index
    %c0_115 = arith.constant 0 : index
    %c0_116 = arith.constant 0 : index
    %123 = vector.load %arg5[%c1_113, %c2_114, %c0_115, %c0_116] : memref<10x10x10x128xf32, #tpu.memory_space<vmem>>, vector<8x8x8x128xf32>
    %124 = vector.shape_cast %122 : vector<128xf32> to vector<1x1x1x128xf32>
    %125 = vector.broadcast %124 : vector<1x1x1x128xf32> to vector<8x8x8x128xf32>
    %126 = arith.mulf %123, %125 : vector<8x8x8x128xf32>
    %127 = arith.addf %120, %126 : vector<8x8x8x128xf32>
    %c16 = arith.constant 16 : index
    %c0_117 = arith.constant 0 : index
    %128 = vector.load %arg2[%c16, %c0_117] : memref<27x128xf32, #tpu.memory_space<vmem>>, vector<1x128xf32>
    %129 = vector.shape_cast %128 : vector<1x128xf32> to vector<128xf32>
    %c1_118 = arith.constant 1 : index
    %c2_119 = arith.constant 2 : index
    %c1_120 = arith.constant 1 : index
    %c0_121 = arith.constant 0 : index
    %130 = vector.load %arg5[%c1_118, %c2_119, %c1_120, %c0_121] : memref<10x10x10x128xf32, #tpu.memory_space<vmem>>, vector<8x8x8x128xf32>
    %131 = vector.shape_cast %129 : vector<128xf32> to vector<1x1x1x128xf32>
    %132 = vector.broadcast %131 : vector<1x1x1x128xf32> to vector<8x8x8x128xf32>
    %133 = arith.mulf %130, %132 : vector<8x8x8x128xf32>
    %134 = arith.addf %127, %133 : vector<8x8x8x128xf32>
    %c17 = arith.constant 17 : index
    %c0_122 = arith.constant 0 : index
    %135 = vector.load %arg2[%c17, %c0_122] : memref<27x128xf32, #tpu.memory_space<vmem>>, vector<1x128xf32>
    %136 = vector.shape_cast %135 : vector<1x128xf32> to vector<128xf32>
    %c1_123 = arith.constant 1 : index
    %c2_124 = arith.constant 2 : index
    %c2_125 = arith.constant 2 : index
    %c0_126 = arith.constant 0 : index
    %137 = vector.load %arg5[%c1_123, %c2_124, %c2_125, %c0_126] : memref<10x10x10x128xf32, #tpu.memory_space<vmem>>, vector<8x8x8x128xf32>
    %138 = vector.shape_cast %136 : vector<128xf32> to vector<1x1x1x128xf32>
    %139 = vector.broadcast %138 : vector<1x1x1x128xf32> to vector<8x8x8x128xf32>
    %140 = arith.mulf %137, %139 : vector<8x8x8x128xf32>
    %141 = arith.addf %134, %140 : vector<8x8x8x128xf32>
    %c18 = arith.constant 18 : index
    %c0_127 = arith.constant 0 : index
    %142 = vector.load %arg2[%c18, %c0_127] : memref<27x128xf32, #tpu.memory_space<vmem>>, vector<1x128xf32>
    %143 = vector.shape_cast %142 : vector<1x128xf32> to vector<128xf32>
    %c2_128 = arith.constant 2 : index
    %c0_129 = arith.constant 0 : index
    %c0_130 = arith.constant 0 : index
    %c0_131 = arith.constant 0 : index
    %144 = vector.load %arg5[%c2_128, %c0_129, %c0_130, %c0_131] : memref<10x10x10x128xf32, #tpu.memory_space<vmem>>, vector<8x8x8x128xf32>
    %145 = vector.shape_cast %143 : vector<128xf32> to vector<1x1x1x128xf32>
    %146 = vector.broadcast %145 : vector<1x1x1x128xf32> to vector<8x8x8x128xf32>
    %147 = arith.mulf %144, %146 : vector<8x8x8x128xf32>
    %148 = arith.addf %141, %147 : vector<8x8x8x128xf32>
    %c19 = arith.constant 19 : index
    %c0_132 = arith.constant 0 : index
    %149 = vector.load %arg2[%c19, %c0_132] : memref<27x128xf32, #tpu.memory_space<vmem>>, vector<1x128xf32>
    %150 = vector.shape_cast %149 : vector<1x128xf32> to vector<128xf32>
    %c2_133 = arith.constant 2 : index
    %c0_134 = arith.constant 0 : index
    %c1_135 = arith.constant 1 : index
    %c0_136 = arith.constant 0 : index
    %151 = vector.load %arg5[%c2_133, %c0_134, %c1_135, %c0_136] : memref<10x10x10x128xf32, #tpu.memory_space<vmem>>, vector<8x8x8x128xf32>
    %152 = vector.shape_cast %150 : vector<128xf32> to vector<1x1x1x128xf32>
    %153 = vector.broadcast %152 : vector<1x1x1x128xf32> to vector<8x8x8x128xf32>
    %154 = arith.mulf %151, %153 : vector<8x8x8x128xf32>
    %155 = arith.addf %148, %154 : vector<8x8x8x128xf32>
    %c20 = arith.constant 20 : index
    %c0_137 = arith.constant 0 : index
    %156 = vector.load %arg2[%c20, %c0_137] : memref<27x128xf32, #tpu.memory_space<vmem>>, vector<1x128xf32>
    %157 = vector.shape_cast %156 : vector<1x128xf32> to vector<128xf32>
    %c2_138 = arith.constant 2 : index
    %c0_139 = arith.constant 0 : index
    %c2_140 = arith.constant 2 : index
    %c0_141 = arith.constant 0 : index
    %158 = vector.load %arg5[%c2_138, %c0_139, %c2_140, %c0_141] : memref<10x10x10x128xf32, #tpu.memory_space<vmem>>, vector<8x8x8x128xf32>
    %159 = vector.shape_cast %157 : vector<128xf32> to vector<1x1x1x128xf32>
    %160 = vector.broadcast %159 : vector<1x1x1x128xf32> to vector<8x8x8x128xf32>
    %161 = arith.mulf %158, %160 : vector<8x8x8x128xf32>
    %162 = arith.addf %155, %161 : vector<8x8x8x128xf32>
    %c21 = arith.constant 21 : index
    %c0_142 = arith.constant 0 : index
    %163 = vector.load %arg2[%c21, %c0_142] : memref<27x128xf32, #tpu.memory_space<vmem>>, vector<1x128xf32>
    %164 = vector.shape_cast %163 : vector<1x128xf32> to vector<128xf32>
    %c2_143 = arith.constant 2 : index
    %c1_144 = arith.constant 1 : index
    %c0_145 = arith.constant 0 : index
    %c0_146 = arith.constant 0 : index
    %165 = vector.load %arg5[%c2_143, %c1_144, %c0_145, %c0_146] : memref<10x10x10x128xf32, #tpu.memory_space<vmem>>, vector<8x8x8x128xf32>
    %166 = vector.shape_cast %164 : vector<128xf32> to vector<1x1x1x128xf32>
    %167 = vector.broadcast %166 : vector<1x1x1x128xf32> to vector<8x8x8x128xf32>
    %168 = arith.mulf %165, %167 : vector<8x8x8x128xf32>
    %169 = arith.addf %162, %168 : vector<8x8x8x128xf32>
    %c22 = arith.constant 22 : index
    %c0_147 = arith.constant 0 : index
    %170 = vector.load %arg2[%c22, %c0_147] : memref<27x128xf32, #tpu.memory_space<vmem>>, vector<1x128xf32>
    %171 = vector.shape_cast %170 : vector<1x128xf32> to vector<128xf32>
    %c2_148 = arith.constant 2 : index
    %c1_149 = arith.constant 1 : index
    %c1_150 = arith.constant 1 : index
    %c0_151 = arith.constant 0 : index
    %172 = vector.load %arg5[%c2_148, %c1_149, %c1_150, %c0_151] : memref<10x10x10x128xf32, #tpu.memory_space<vmem>>, vector<8x8x8x128xf32>
    %173 = vector.shape_cast %171 : vector<128xf32> to vector<1x1x1x128xf32>
    %174 = vector.broadcast %173 : vector<1x1x1x128xf32> to vector<8x8x8x128xf32>
    %175 = arith.mulf %172, %174 : vector<8x8x8x128xf32>
    %176 = arith.addf %169, %175 : vector<8x8x8x128xf32>
    %c23 = arith.constant 23 : index
    %c0_152 = arith.constant 0 : index
    %177 = vector.load %arg2[%c23, %c0_152] : memref<27x128xf32, #tpu.memory_space<vmem>>, vector<1x128xf32>
    %178 = vector.shape_cast %177 : vector<1x128xf32> to vector<128xf32>
    %c2_153 = arith.constant 2 : index
    %c1_154 = arith.constant 1 : index
    %c2_155 = arith.constant 2 : index
    %c0_156 = arith.constant 0 : index
    %179 = vector.load %arg5[%c2_153, %c1_154, %c2_155, %c0_156] : memref<10x10x10x128xf32, #tpu.memory_space<vmem>>, vector<8x8x8x128xf32>
    %180 = vector.shape_cast %178 : vector<128xf32> to vector<1x1x1x128xf32>
    %181 = vector.broadcast %180 : vector<1x1x1x128xf32> to vector<8x8x8x128xf32>
    %182 = arith.mulf %179, %181 : vector<8x8x8x128xf32>
    %183 = arith.addf %176, %182 : vector<8x8x8x128xf32>
    %c24 = arith.constant 24 : index
    %c0_157 = arith.constant 0 : index
    %184 = vector.load %arg2[%c24, %c0_157] : memref<27x128xf32, #tpu.memory_space<vmem>>, vector<1x128xf32>
    %185 = vector.shape_cast %184 : vector<1x128xf32> to vector<128xf32>
    %c2_158 = arith.constant 2 : index
    %c2_159 = arith.constant 2 : index
    %c0_160 = arith.constant 0 : index
    %c0_161 = arith.constant 0 : index
    %186 = vector.load %arg5[%c2_158, %c2_159, %c0_160, %c0_161] : memref<10x10x10x128xf32, #tpu.memory_space<vmem>>, vector<8x8x8x128xf32>
    %187 = vector.shape_cast %185 : vector<128xf32> to vector<1x1x1x128xf32>
    %188 = vector.broadcast %187 : vector<1x1x1x128xf32> to vector<8x8x8x128xf32>
    %189 = arith.mulf %186, %188 : vector<8x8x8x128xf32>
    %190 = arith.addf %183, %189 : vector<8x8x8x128xf32>
    %c25 = arith.constant 25 : index
    %c0_162 = arith.constant 0 : index
    %191 = vector.load %arg2[%c25, %c0_162] : memref<27x128xf32, #tpu.memory_space<vmem>>, vector<1x128xf32>
    %192 = vector.shape_cast %191 : vector<1x128xf32> to vector<128xf32>
    %c2_163 = arith.constant 2 : index
    %c2_164 = arith.constant 2 : index
    %c1_165 = arith.constant 1 : index
    %c0_166 = arith.constant 0 : index
    %193 = vector.load %arg5[%c2_163, %c2_164, %c1_165, %c0_166] : memref<10x10x10x128xf32, #tpu.memory_space<vmem>>, vector<8x8x8x128xf32>
    %194 = vector.shape_cast %192 : vector<128xf32> to vector<1x1x1x128xf32>
    %195 = vector.broadcast %194 : vector<1x1x1x128xf32> to vector<8x8x8x128xf32>
    %196 = arith.mulf %193, %195 : vector<8x8x8x128xf32>
    %197 = arith.addf %190, %196 : vector<8x8x8x128xf32>
    %c26 = arith.constant 26 : index
    %c0_167 = arith.constant 0 : index
    %198 = vector.load %arg2[%c26, %c0_167] : memref<27x128xf32, #tpu.memory_space<vmem>>, vector<1x128xf32>
    %199 = vector.shape_cast %198 : vector<1x128xf32> to vector<128xf32>
    %c2_168 = arith.constant 2 : index
    %c2_169 = arith.constant 2 : index
    %c2_170 = arith.constant 2 : index
    %c0_171 = arith.constant 0 : index
    %200 = vector.load %arg5[%c2_168, %c2_169, %c2_170, %c0_171] : memref<10x10x10x128xf32, #tpu.memory_space<vmem>>, vector<8x8x8x128xf32>
    %201 = vector.shape_cast %199 : vector<128xf32> to vector<1x1x1x128xf32>
    %202 = vector.broadcast %201 : vector<1x1x1x128xf32> to vector<8x8x8x128xf32>
    %203 = arith.mulf %200, %202 : vector<8x8x8x128xf32>
    %204 = arith.addf %197, %203 : vector<8x8x8x128xf32>
    %c0_172 = arith.constant 0 : index
    %c0_173 = arith.constant 0 : index
    %c0_174 = arith.constant 0 : index
    %c0_175 = arith.constant 0 : index
    %c0_176 = arith.constant 0 : index
    %205 = vector.load %arg4[%c0_172, %c0_173, %c0_174, %c0_175, %c0_176] : memref<1x8x8x8x128xf32, #tpu.memory_space<vmem>>, vector<1x8x8x8x128xf32>
    %206 = vector.shape_cast %205 : vector<1x8x8x8x128xf32> to vector<8x8x8x128xf32>
    %207 = vector.shape_cast %204 : vector<8x8x8x128xf32> to vector<1x8x8x8x128xf32>
    tpu.vector_store %arg4[%c0_172, %c0_173, %c0_174, %c0_175, %c0_176], %207 {strides = array<i32>} : memref<1x8x8x8x128xf32, #tpu.memory_space<vmem>>, vector<1x8x8x8x128xf32>,
    return
  }
  func.func @transform_0(%arg0: i32) -> (i32, i32, i32, i32, i32) {
    %c0_i32 = arith.constant 0 : i32
    %c0_i32_0 = arith.constant 0 : i32
    %c0_i32_1 = arith.constant 0 : i32
    %c0_i32_2 = arith.constant 0 : i32
    %c0_i32_3 = arith.constant 0 : i32
    return %arg0, %c0_i32, %c0_i32_0, %c0_i32_1, %c0_i32_2 : i32, i32, i32, i32, i32
  }
  func.func @transform_1(%arg0: i32) -> (i32, i32) {
    %c0_i32 = arith.constant 0 : i32
    %c0_i32_0 = arith.constant 0 : i32
    %c0_i32_1 = arith.constant 0 : i32
    return %c0_i32, %c0_i32_0 : i32, i32
  }
  func.func @transform_2(%arg0: i32) -> (i32, i32) {
    %c0_i32 = arith.constant 0 : i32
    %c0_i32_0 = arith.constant 0 : i32
    %c0_i32_1 = arith.constant 0 : i32
    return %c0_i32, %c0_i32_0 : i32, i32
  }
  func.func @transform_3(%arg0: i32) -> (i32, i32, i32, i32, i32) {
    %c0_i32 = arith.constant 0 : i32
    %c0_i32_0 = arith.constant 0 : i32
    %c0_i32_1 = arith.constant 0 : i32
    %c0_i32_2 = arith.constant 0 : i32
    %c0_i32_3 = arith.constant 0 : i32
    return %arg0, %c0_i32, %c0_i32_0, %c0_i32_1, %c0_i32_2 : i32, i32, i32, i32, i32
  }
}

</mosaic_0001>

<llo_original>
// kernel: tpu_custom_call.1
$region0: #{tpu_custom_call.1}
  #allocation0 [shape = 'u32[]', space=smem, size = 0x4, offset = 0x4, fixed_abs, tag = 'smem constant byte address 0x4 - core index']
  #allocation1 [shape = 'u32[72,128]{1,0:T(1,128)}', space=vmem, size = 0x9000, scoped, tag = 'internal scratch']
  #allocation2 [shape = 'f32[10,10,10,128]{3,2,1,0:T(8,128)}', space=vmem, size = 0xc8000, scoped, tag = 'scratch operand']
  %s0 = inlined_call_operand.hbm [shape: f32[2,8,8,8,128], index: 0, kind: input, shape index: {}]
  %s1 = inlined_call_operand.hbm [shape: f32[27,128], index: 1, kind: input, shape index: {}]
  %s2 = inlined_call_operand.vmem [shape: f32[1,128], index: 2, kind: input, shape index: {}]
  %s3 = inlined_call_operand.hbm [shape: f32[2,8,8,8,128], index: 3, kind: output, shape index: {}]
  %s4 = sld [smem:[#allocation0]]
  $region53: #{tpu_custom_call.1} parent=0
    _
  %s6 = ssub.s32 1, %s4
  %s7 = scalar_select 0, %s6, %s4
  $region1: #{tpu_custom_call.1} parent=0
    #allocation3 [shape = 'u8[524288]{0}', space=vmem, size = 0x80000, scoped, tag = 'input window, operand 0']
    #allocation4 [shape = 's32[2]{0}', space=sflag, size = 0x8, scoped, tag = 'scoped memory for tpu_custom_call.1']
    #allocation5 [shape = 's32[2]{0}', space=sflag, size = 0x8, scoped, tag = 'scoped memory for tpu_custom_call.1']
    #allocation6 [shape = 'u8[16384]{0}', space=vmem, size = 0x4000, scoped, tag = 'input window, operand 1, single buffered']
    #allocation7 [shape = 's32[1]{0}', space=sflag, size = 0x4, scoped, tag = 'scoped memory for tpu_custom_call.1']
    #allocation8 [shape = 'u8[524288]{0}', space=vmem, size = 0x80000, scoped, tag = 'output window, operand 0']
    %8 = vsyncpa [#allocation4], 0
    %s9 = scalar_lea.sflag [#allocation4], 1
    %10 = vsyncpa %s9, 0
    %11 = vsyncpa [#allocation7], 0
    %12 = vsyncpa [#allocation5], 0
    %s13 = scalar_lea.sflag [#allocation5], 1
    %14 = vsyncpa %s13, 0
    loop: start=0, step=1, limit=4
    $region2: #{tpu_custom_call.1} parent=1 // loop_pre_header
      _
    $region3: #{tpu_custom_call.1} parent=1 // loop_header
      %s16 = sphi 0, %s20
      %p17 = scmp.ge.s32.totalorder %s16, 4
      %s26 = sphi 0, %s28
      %s29 = sphi 0, %s26
      %s30 = sphi 0, %s29
      %s46 = sphi 0, %s30
      %s50 = sphi 0, %s50
      %s52 = sphi 0, %s50
      %s53 = sphi 0, %s52
      %s67 = sphi 0, %s53
      %s71 = sphi 0, %s71
      %s73 = sphi 0, %s71
      %s74 = sphi 0, %s73
      %s88 = sphi 0, %s74
      %s94 = sphi 0, %s96
      %s97 = sphi 0, %s94
      %s98 = sphi 0, %s97
      %s114 = sphi 0, %s98
    $region4: #{tpu_custom_call.1} parent=1 // loop_header_branch
      %19 = sbr.rel (%p17) target = $region8
    $region5: #{tpu_custom_call.1} parent=1 // loop_body
      %s21 = ssub.s32 %s16, 1
      %s22 = ssub.s32 %s16, 2
      %s23 = sadd.s32 %s16, 1
      %s24 = ssub.s32 %s16, %s23
      %p25 = scmp.eq.s32.totalorder %s24, 0
      %s27 = sadd.s32 %s26, 1
      %s28 = scalar_select %p25, %s26, %s27
      %p31 = pneg %p25
      %p32 = scmp.eq.s32.totalorder %s16, 1
      %p33 = por %p31, %p32
      %p34 = scmp.ne.s32.totalorder %s26, %s29
      %p35 = scmp.eq.s32.totalorder %s16, 0
      %p36 = por %p34, %p35
      %p37 = scmp.ne.s32.totalorder %s26, %s29
      %p38 = scmp.eq.s32.totalorder %s21, 1
      %p39 = por %p37, %p38
      %p40 = scmp.ne.s32.totalorder %s29, %s30
      %p41 = scmp.eq.s32.totalorder %s21, 0
      %p42 = por %p40, %p41
      %p43 = scmp.ne.s32.totalorder %s29, %s30
      %p44 = scmp.eq.s32.totalorder %s22, 1
      %p45 = por %p43, %p44
      %p47 = scmp.ne.s32.totalorder %s30, %s46
      %p48 = scmp.eq.s32.totalorder %s22, 0
      %p49 = por %p47, %p48
      %s51 = sadd.s32 %s50, 1
      %p54 = scmp.eq.s32.totalorder %s16, 1
      %p55 = scmp.ne.s32.totalorder %s50, %s52
      %p56 = scmp.eq.s32.totalorder %s16, 0
      %p57 = por %p55, %p56
      %p58 = scmp.ne.s32.totalorder %s50, %s52
      %p59 = scmp.eq.s32.totalorder %s21, 1
      %p60 = por %p58, %p59
      %p61 = scmp.ne.s32.totalorder %s52, %s53
      %p62 = scmp.eq.s32.totalorder %s21, 0
      %p63 = por %p61, %p62
      %p64 = scmp.ne.s32.totalorder %s52, %s53
      %p65 = scmp.eq.s32.totalorder %s22, 1
      %p66 = por %p64, %p65
      %p68 = scmp.ne.s32.totalorder %s53, %s67
      %p69 = scmp.eq.s32.totalorder %s22, 0
      %p70 = por %p68, %p69
      %s72 = sadd.s32 %s71, 1
      %p75 = scmp.eq.s32.totalorder %s16, 1
      %p76 = scmp.ne.s32.totalorder %s71, %s73
      %p77 = scmp.eq.s32.totalorder %s16, 0
      %p78 = por %p76, %p77
      %p79 = scmp.ne.s32.totalorder %s71, %s73
      %p80 = scmp.eq.s32.totalorder %s21, 1
      %p81 = por %p79, %p80
      %p82 = scmp.ne.s32.totalorder %s73, %s74
      %p83 = scmp.eq.s32.totalorder %s21, 0
      %p84 = por %p82, %p83
      %p85 = scmp.ne.s32.totalorder %s73, %s74
      %p86 = scmp.eq.s32.totalorder %s22, 1
      %p87 = por %p85, %p86
      %p89 = scmp.ne.s32.totalorder %s74, %s88
      %p90 = scmp.eq.s32.totalorder %s22, 0
      %p91 = por %p89, %p90
      %s92 = ssub.s32 %s16, %s23
      %p93 = scmp.eq.s32.totalorder %s92, 0
      %s95 = sadd.s32 %s94, 1
      %s96 = scalar_select %p93, %s94, %s95
      %p99 = pneg %p93
      %p100 = scmp.eq.s32.totalorder %s16, 1
      %p101 = por %p99, %p100
      %p102 = scmp.ne.s32.totalorder %s94, %s97
      %p103 = scmp.eq.s32.totalorder %s16, 0
      %p104 = por %p102, %p103
      %p105 = scmp.ne.s32.totalorder %s94, %s97
      %p106 = scmp.eq.s32.totalorder %s21, 1
      %p107 = por %p105, %p106
      %p108 = scmp.ne.s32.totalorder %s97, %s98
      %p109 = scmp.eq.s32.totalorder %s21, 0
      %p110 = por %p108, %p109
      %p111 = scmp.ne.s32.totalorder %s97, %s98
      %p112 = scmp.eq.s32.totalorder %s22, 1
      %p113 = por %p111, %p112
      %p115 = scmp.ne.s32.totalorder %s98, %s114
      %p116 = scmp.eq.s32.totalorder %s22, 0
      %p117 = por %p115, %p116
      %p118 = scmp.le.s32.totalorder 1, %s16
      %p119 = scmp.lt.s32.totalorder %s16, 3
      %p120 = pnand %p118, %p119
      %p121 = pneg %p120
      // Predicated region
      $region9: #{tpu_custom_call.1} parent=5 // pred_check
        _
      $region10: #{tpu_custom_call.1} parent=5 // pred_check_branch
        %123 = sbr.rel (%p120) target = $region12
      $region11: #{tpu_custom_call.1} parent=5 // pred_region
        %s124 = ssub.s32 %s16, 1
        // Predicated region
        $region13: #{tpu_custom_call.1} parent=11 // pred_check
          %p125 = pneg %p63
        $region14: #{tpu_custom_call.1} parent=11 // pred_check_branch
          %127 = sbr.rel (%p125) target = $region16
        $region15: #{tpu_custom_call.1} parent=11 // pred_region
          %129 = vsyncadd [#allocation7], 0
          %s130 = sshll.u32 %s1, 4
          %s131 = int_to_ptr.hbm [resolvable:$true] %s130
          %s132 = sshll.u32 [#allocation6], 4
          %s133 = int_to_ptr.vmem [resolvable:$true] %s132
          %138 = dma.hbm_to_vmem [thread:$0]  %s131, 512, %s133, [#allocation7], 128, 128, 8
        $region16: #{tpu_custom_call.1} parent=11 // pred_fallthru
          _
        // Predicated region
        $region17: #{tpu_custom_call.1} parent=11 // pred_check
          %p139 = pneg %p84
        $region18: #{tpu_custom_call.1} parent=11 // pred_check_branch
          %141 = sbr.rel (%p139) target = $region20
        $region19: #{tpu_custom_call.1} parent=11 // pred_region
          _
        $region20: #{tpu_custom_call.1} parent=11 // pred_fallthru
          _
      $region12: #{tpu_custom_call.1} parent=5 // pred_fallthru
        _
      %p142 = scmp.lt.s32.totalorder %s16, 2
      // Predicated region
      $region21: #{tpu_custom_call.1} parent=5 // pred_check
        %p143 = pneg %p142
      $region22: #{tpu_custom_call.1} parent=5 // pred_check_branch
        %145 = sbr.rel (%p143) target = $region24
      $region23: #{tpu_custom_call.1} parent=5 // pred_region
        // Predicated region
        $region25: #{tpu_custom_call.1} parent=23 // pred_check
          %p146 = pneg %p36
        $region26: #{tpu_custom_call.1} parent=23 // pred_check_branch
          %148 = sbr.rel (%p146) target = $region28
        $region27: #{tpu_custom_call.1} parent=23 // pred_region
          %s149 = sand.u32 %s26, 1
          %s150 = scalar_lea.sflag [#allocation4], %s149
          %s151 = sand.u32 %s26, 1
          %s152 = smul.addr %s151, 512
          %s153 = scalar_lea.vmem [#allocation3], %s152
          %155 = vsyncadd %s150, 0
          %s156 = smul.addr %s16, 64
          %s157 = smul.addr %s156, 8
          %s158 = scalar_lea.hbm %s0, %s157
          %s159 = sshll.u32 %s158, 4
          %s160 = int_to_ptr.hbm [resolvable:$true] %s159
          %s161 = sshll.u32 %s153, 4
          %s162 = int_to_ptr.vmem [resolvable:$true] %s161
          %167 = dma.hbm_to_vmem [thread:$0]  %s160, 8192, %s162, %s150, 128, 128, 8
        $region28: #{tpu_custom_call.1} parent=23 // pred_fallthru
          _
      $region24: #{tpu_custom_call.1} parent=5 // pred_fallthru
        _
      %p168 = scmp.le.s32.totalorder 1, %s16
      %p169 = scmp.lt.s32.totalorder %s16, 3
      %p170 = pnand %p168, %p169
      %p171 = pneg %p170
      // Predicated region
      $region29: #{tpu_custom_call.1} parent=5 // pred_check
        _
      $region30: #{tpu_custom_call.1} parent=5 // pred_check_branch
        %173 = sbr.rel (%p170) target = $region32
      $region31: #{tpu_custom_call.1} parent=5 // pred_region
        %s174 = ssub.s32 %s16, 1
        %s175 = sand.u32 %s29, 1
        %s176 = scalar_lea.sflag [#allocation4], %s175
        %s177 = sand.u32 %s29, 1
        %s178 = smul.addr %s177, 512
        %s179 = scalar_lea.vmem [#allocation3], %s178
        // Predicated region
        $region33: #{tpu_custom_call.1} parent=31 // pred_check
          %p180 = pneg %p42
        $region34: #{tpu_custom_call.1} parent=31 // pred_check_branch
          %182 = sbr.rel (%p180) target = $region36
        $region35: #{tpu_custom_call.1} parent=31 // pred_region
          %184 = dma.done %s176, 8192
        $region36: #{tpu_custom_call.1} parent=31 // pred_fallthru
          _
        // Predicated region
        $region37: #{tpu_custom_call.1} parent=31 // pred_check
          %p185 = pneg %p63
        $region38: #{tpu_custom_call.1} parent=31 // pred_check_branch
          %187 = sbr.rel (%p185) target = $region40
        $region39: #{tpu_custom_call.1} parent=31 // pred_region
          %189 = dma.done [#allocation7], 512
        $region40: #{tpu_custom_call.1} parent=31 // pred_fallthru
          _
        %s190 = sand.u32 %s29, 1
        %s191 = scalar_lea.sflag [#allocation4], %s190
        %s192 = sand.u32 %s29, 1
        %s193 = smul.addr %s192, 512
        %s194 = scalar_lea.vmem [#allocation3], %s193
        %p195 = pneg %p42
        %p196 = pneg %p39
        %p197 = pneg %p63
        %p198 = pneg %p60
        %p199 = pneg %p84
        %p200 = pneg %p81
        %p201 = pneg %p110
        %p202 = pneg %p107
        %s203 = sand.u32 %s97, 1
        %s204 = scalar_lea.sflag [#allocation5], %s203
        %s205 = sand.u32 %s97, 1
        %s206 = smul.addr %s205, 512
        %s207 = scalar_lea.vmem [#allocation8], %s206
        %208 = vst [vmem:[#allocation2] sm:$0xff] 0.0
        %209 = vst [vmem:[#allocation2 + $0x8] sm:$0x3] 0.0
        %210 = vst [vmem:[#allocation2 + $0x10] sm:$0xff] 0.0
        %211 = vst [vmem:[#allocation2 + $0x18] sm:$0x3] 0.0
        %212 = vst [vmem:[#allocation2 + $0x20] sm:$0xff] 0.0
        %213 = vst [vmem:[#allocation2 + $0x28] sm:$0x3] 0.0
        %214 = vst [vmem:[#allocation2 + $0x30] sm:$0xff] 0.0
        %215 = vst [vmem:[#allocation2 + $0x38] sm:$0x3] 0.0
        %216 = vst [vmem:[#allocation2 + $0x40] sm:$0xff] 0.0
        %217 = vst [vmem:[#allocation2 + $0x48] sm:$0x3] 0.0
        %218 = vst [vmem:[#allocation2 + $0x50] sm:$0xff] 0.0
        %219 = vst [vmem:[#allocation2 + $0x58] sm:$0x3] 0.0
        %220 = vst [vmem:[#allocation2 + $0x60] sm:$0xff] 0.0
        %221 = vst [vmem:[#allocation2 + $0x68] sm:$0x3] 0.0
        %222 = vst [vmem:[#allocation2 + $0x70] sm:$0xff] 0.0
        %223 = vst [vmem:[#allocation2 + $0x78] sm:$0x3] 0.0
        %224 = vst [vmem:[#allocation2 + $0x80] sm:$0xff] 0.0
        %225 = vst [vmem:[#allocation2 + $0x88] sm:$0x3] 0.0
        %226 = vst [vmem:[#allocation2 + $0x90] sm:$0xff] 0.0
        %227 = vst [vmem:[#allocation2 + $0x98] sm:$0x3] 0.0
        %s228 = scalar_lea.vmem [#allocation2], 1440
        %229 = vst [vmem:[%s228] sm:$0xff] 0.0
        %230 = vst [vmem:[%s228 + $0x8] sm:$0x3] 0.0
        %231 = vst [vmem:[%s228 + $0x10] sm:$0xff] 0.0
        %232 = vst [vmem:[%s228 + $0x18] sm:$0x3] 0.0
        %233 = vst [vmem:[%s228 + $0x20] sm:$0xff] 0.0
        %234 = vst [vmem:[%s228 + $0x28] sm:$0x3] 0.0
        %235 = vst [vmem:[%s228 + $0x30] sm:$0xff] 0.0
        %236 = vst [vmem:[%s228 + $0x38] sm:$0x3] 0.0
        %237 = vst [vmem:[%s228 + $0x40] sm:$0xff] 0.0
        %238 = vst [vmem:[%s228 + $0x48] sm:$0x3] 0.0
        %239 = vst [vmem:[%s228 + $0x50] sm:$0xff] 0.0
        %240 = vst [vmem:[%s228 + $0x58] sm:$0x3] 0.0
        %241 = vst [vmem:[%s228 + $0x60] sm:$0xff] 0.0
        %242 = vst [vmem:[%s228 + $0x68] sm:$0x3] 0.0
        %243 = vst [vmem:[%s228 + $0x70] sm:$0xff] 0.0
        %244 = vst [vmem:[%s228 + $0x78] sm:$0x3] 0.0
        %245 = vst [vmem:[%s228 + $0x80] sm:$0xff] 0.0
        %246 = vst [vmem:[%s228 + $0x88] sm:$0x3] 0.0
        %247 = vst [vmem:[%s228 + $0x90] sm:$0xff] 0.0
        %248 = vst [vmem:[%s228 + $0x98] sm:$0x3] 0.0
        %s249 = scalar_lea.vmem [#allocation2], 160
        %250 = vst [vmem:[%s249] sm:$0xff] 0.0
        %251 = vst [vmem:[%s249 + $0x8] sm:$0x3] 0.0
        %252 = vst [vmem:[%s249 + $0xa0] sm:$0xff] 0.0
        %253 = vst [vmem:[%s249 + $0xa8] sm:$0x3] 0.0
        %254 = vst [vmem:[%s249 + $0x140] sm:$0xff] 0.0
        %255 = vst [vmem:[%s249 + $0x148] sm:$0x3] 0.0
        %256 = vst [vmem:[%s249 + $0x1e0] sm:$0xff] 0.0
        %257 = vst [vmem:[%s249 + $0x1e8] sm:$0x3] 0.0
        %258 = vst [vmem:[%s249 + $0x280] sm:$0xff] 0.0
        %259 = vst [vmem:[%s249 + $0x288] sm:$0x3] 0.0
        %260 = vst [vmem:[%s249 + $0x320] sm:$0xff] 0.0
        %261 = vst [vmem:[%s249 + $0x328] sm:$0x3] 0.0
        %262 = vst [vmem:[%s249 + $0x3c0] sm:$0xff] 0.0
        %263 = vst [vmem:[%s249 + $0x3c8] sm:$0x3] 0.0
        %264 = vst [vmem:[%s249 + $0x460] sm:$0xff] 0.0
        %265 = vst [vmem:[%s249 + $0x468] sm:$0x3] 0.0
        %s266 = scalar_lea.vmem [#allocation2], 304
        %267 = vst [vmem:[%s266] sm:$0xff] 0.0
        %268 = vst [vmem:[%s266 + $0x8] sm:$0x3] 0.0
        %269 = vst [vmem:[%s266 + $0xa0] sm:$0xff] 0.0
        %270 = vst [vmem:[%s266 + $0xa8] sm:$0x3] 0.0
        %271 = vst [vmem:[%s266 + $0x140] sm:$0xff] 0.0
        %272 = vst [vmem:[%s266 + $0x148] sm:$0x3] 0.0
        %273 = vst [vmem:[%s266 + $0x1e0] sm:$0xff] 0.0
        %274 = vst [vmem:[%s266 + $0x1e8] sm:$0x3] 0.0
        %275 = vst [vmem:[%s266 + $0x280] sm:$0xff] 0.0
        %276 = vst [vmem:[%s266 + $0x288] sm:$0x3] 0.0
        %277 = vst [vmem:[%s266 + $0x320] sm:$0xff] 0.0
        %278 = vst [vmem:[%s266 + $0x328] sm:$0x3] 0.0
        %279 = vst [vmem:[%s266 + $0x3c0] sm:$0xff] 0.0
        %280 = vst [vmem:[%s266 + $0x3c8] sm:$0x3] 0.0
        %281 = vst [vmem:[%s266 + $0x460] sm:$0xff] 0.0
        %282 = vst [vmem:[%s266 + $0x468] sm:$0x3] 0.0
        %s283 = scalar_lea.vmem [#allocation2], 176
        %284 = vst [vmem:[%s283] sm:$0x1] 0.0
        %285 = vst [vmem:[%s283 + $0x10] sm:$0x1] 0.0
        %286 = vst [vmem:[%s283 + $0x20] sm:$0x1] 0.0
        %287 = vst [vmem:[%s283 + $0x30] sm:$0x1] 0.0
        %288 = vst [vmem:[%s283 + $0x40] sm:$0x1] 0.0
        %289 = vst [vmem:[%s283 + $0x50] sm:$0x1] 0.0
        %290 = vst [vmem:[%s283 + $0x60] sm:$0x1] 0.0
        %291 = vst [vmem:[%s283 + $0x70] sm:$0x1] 0.0
        %292 = vst [vmem:[%s283 + $0xa0] sm:$0x1] 0.0
        %293 = vst [vmem:[%s283 + $0xb0] sm:$0x1] 0.0
        %294 = vst [vmem:[%s283 + $0xc0] sm:$0x1] 0.0
        %295 = vst [vmem:[%s283 + $0xd0] sm:$0x1] 0.0
        %296 = vst [vmem:[%s283 + $0xe0] sm:$0x1] 0.0
        %297 = vst [vmem:[%s283 + $0xf0] sm:$0x1] 0.0
        %298 = vst [vmem:[%s283 + $0x100] sm:$0x1] 0.0
        %299 = vst [vmem:[%s283 + $0x110] sm:$0x1] 0.0
        %300 = vst [vmem:[%s283 + $0x140] sm:$0x1] 0.0
        %301 = vst [vmem:[%s283 + $0x150] sm:$0x1] 0.0
        %302 = vst [vmem:[%s283 + $0x160] sm:$0x1] 0.0
        %303 = vst [vmem:[%s283 + $0x170] sm:$0x1] 0.0
        %304 = vst [vmem:[%s283 + $0x180] sm:$0x1] 0.0
        %305 = vst [vmem:[%s283 + $0x190] sm:$0x1] 0.0
        %306 = vst [vmem:[%s283 + $0x1a0] sm:$0x1] 0.0
        %307 = vst [vmem:[%s283 + $0x1b0] sm:$0x1] 0.0
        %308 = vst [vmem:[%s283 + $0x1e0] sm:$0x1] 0.0
        %309 = vst [vmem:[%s283 + $0x1f0] sm:$0x1] 0.0
        %310 = vst [vmem:[%s283 + $0x200] sm:$0x1] 0.0
        %311 = vst [vmem:[%s283 + $0x210] sm:$0x1] 0.0
        %312 = vst [vmem:[%s283 + $0x220] sm:$0x1] 0.0
        %313 = vst [vmem:[%s283 + $0x230] sm:$0x1] 0.0
        %314 = vst [vmem:[%s283 + $0x240] sm:$0x1] 0.0
        %315 = vst [vmem:[%s283 + $0x250] sm:$0x1] 0.0
        %316 = vst [vmem:[%s283 + $0x280] sm:$0x1] 0.0
        %317 = vst [vmem:[%s283 + $0x290] sm:$0x1] 0.0
        %318 = vst [vmem:[%s283 + $0x2a0] sm:$0x1] 0.0
        %319 = vst [vmem:[%s283 + $0x2b0] sm:$0x1] 0.0
        %320 = vst [vmem:[%s283 + $0x2c0] sm:$0x1] 0.0
        %321 = vst [vmem:[%s283 + $0x2d0] sm:$0x1] 0.0
        %322 = vst [vmem:[%s283 + $0x2e0] sm:$0x1] 0.0
        %323 = vst [vmem:[%s283 + $0x2f0] sm:$0x1] 0.0
        %324 = vst [vmem:[%s283 + $0x320] sm:$0x1] 0.0
        %325 = vst [vmem:[%s283 + $0x330] sm:$0x1] 0.0
        %326 = vst [vmem:[%s283 + $0x340] sm:$0x1] 0.0
        %327 = vst [vmem:[%s283 + $0x350] sm:$0x1] 0.0
        %328 = vst [vmem:[%s283 + $0x360] sm:$0x1] 0.0
        %329 = vst [vmem:[%s283 + $0x370] sm:$0x1] 0.0
        %330 = vst [vmem:[%s283 + $0x380] sm:$0x1] 0.0
        %331 = vst [vmem:[%s283 + $0x390] sm:$0x1] 0.0
        %332 = vst [vmem:[%s283 + $0x3c0] sm:$0x1] 0.0
        %333 = vst [vmem:[%s283 + $0x3d0] sm:$0x1] 0.0
        %334 = vst [vmem:[%s283 + $0x3e0] sm:$0x1] 0.0
        %335 = vst [vmem:[%s283 + $0x3f0] sm:$0x1] 0.0
        %336 = vst [vmem:[%s283 + $0x400] sm:$0x1] 0.0
        %337 = vst [vmem:[%s283 + $0x410] sm:$0x1] 0.0
        %338 = vst [vmem:[%s283 + $0x420] sm:$0x1] 0.0
        %339 = vst [vmem:[%s283 + $0x430] sm:$0x1] 0.0
        %340 = vst [vmem:[%s283 + $0x460] sm:$0x1] 0.0
        %341 = vst [vmem:[%s283 + $0x470] sm:$0x1] 0.0
        %342 = vst [vmem:[%s283 + $0x480] sm:$0x1] 0.0
        %343 = vst [vmem:[%s283 + $0x490] sm:$0x1] 0.0
        %344 = vst [vmem:[%s283 + $0x4a0] sm:$0x1] 0.0
        %345 = vst [vmem:[%s283 + $0x4b0] sm:$0x1] 0.0
        %346 = vst [vmem:[%s283 + $0x4c0] sm:$0x1] 0.0
        %347 = vst [vmem:[%s283 + $0x4d0] sm:$0x1] 0.0
        %348 = vst [vmem:[%s283 + $0x9] sm:$0x1] 0.0
        %349 = vst [vmem:[%s283 + $0x19] sm:$0x1] 0.0
        %350 = vst [vmem:[%s283 + $0x29] sm:$0x1] 0.0
        %351 = vst [vmem:[%s283 + $0x39] sm:$0x1] 0.0
        %352 = vst [vmem:[%s283 + $0x49] sm:$0x1] 0.0
        %353 = vst [vmem:[%s283 + $0x59] sm:$0x1] 0.0
        %354 = vst [vmem:[%s283 + $0x69] sm:$0x1] 0.0
        %355 = vst [vmem:[%s283 + $0x79] sm:$0x1] 0.0
        %356 = vst [vmem:[%s283 + $0xa9] sm:$0x1] 0.0
        %357 = vst [vmem:[%s283 + $0xb9] sm:$0x1] 0.0
        %358 = vst [vmem:[%s283 + $0xc9] sm:$0x1] 0.0
        %359 = vst [vmem:[%s283 + $0xd9] sm:$0x1] 0.0
        %360 = vst [vmem:[%s283 + $0xe9] sm:$0x1] 0.0
        %361 = vst [vmem:[%s283 + $0xf9] sm:$0x1] 0.0
        %362 = vst [vmem:[%s283 + $0x109] sm:$0x1] 0.0
        %363 = vst [vmem:[%s283 + $0x119] sm:$0x1] 0.0
        %364 = vst [vmem:[%s283 + $0x149] sm:$0x1] 0.0
        %365 = vst [vmem:[%s283 + $0x159] sm:$0x1] 0.0
        %366 = vst [vmem:[%s283 + $0x169] sm:$0x1] 0.0
        %367 = vst [vmem:[%s283 + $0x179] sm:$0x1] 0.0
        %368 = vst [vmem:[%s283 + $0x189] sm:$0x1] 0.0
        %369 = vst [vmem:[%s283 + $0x199] sm:$0x1] 0.0
        %370 = vst [vmem:[%s283 + $0x1a9] sm:$0x1] 0.0
        %371 = vst [vmem:[%s283 + $0x1b9] sm:$0x1] 0.0
        %372 = vst [vmem:[%s283 + $0x1e9] sm:$0x1] 0.0
        %373 = vst [vmem:[%s283 + $0x1f9] sm:$0x1] 0.0
        %374 = vst [vmem:[%s283 + $0x209] sm:$0x1] 0.0
        %375 = vst [vmem:[%s283 + $0x219] sm:$0x1] 0.0
        %376 = vst [vmem:[%s283 + $0x229] sm:$0x1] 0.0
        %377 = vst [vmem:[%s283 + $0x239] sm:$0x1] 0.0
        %378 = vst [vmem:[%s283 + $0x249] sm:$0x1] 0.0
        %379 = vst [vmem:[%s283 + $0x259] sm:$0x1] 0.0
        %380 = vst [vmem:[%s283 + $0x289] sm:$0x1] 0.0
        %381 = vst [vmem:[%s283 + $0x299] sm:$0x1] 0.0
        %382 = vst [vmem:[%s283 + $0x2a9] sm:$0x1] 0.0
        %383 = vst [vmem:[%s283 + $0x2b9] sm:$0x1] 0.0
        %384 = vst [vmem:[%s283 + $0x2c9] sm:$0x1] 0.0
        %385 = vst [vmem:[%s283 + $0x2d9] sm:$0x1] 0.0
        %386 = vst [vmem:[%s283 + $0x2e9] sm:$0x1] 0.0
        %387 = vst [vmem:[%s283 + $0x2f9] sm:$0x1] 0.0
        %388 = vst [vmem:[%s283 + $0x329] sm:$0x1] 0.0
        %389 = vst [vmem:[%s283 + $0x339] sm:$0x1] 0.0
        %390 = vst [vmem:[%s283 + $0x349] sm:$0x1] 0.0
        %391 = vst [vmem:[%s283 + $0x359] sm:$0x1] 0.0
        %392 = vst [vmem:[%s283 + $0x369] sm:$0x1] 0.0
        %393 = vst [vmem:[%s283 + $0x379] sm:$0x1] 0.0
        %394 = vst [vmem:[%s283 + $0x389] sm:$0x1] 0.0
        %395 = vst [vmem:[%s283 + $0x399] sm:$0x1] 0.0
        %396 = vst [vmem:[%s283 + $0x3c9] sm:$0x1] 0.0
        %397 = vst [vmem:[%s283 + $0x3d9] sm:$0x1] 0.0
        %398 = vst [vmem:[%s283 + $0x3e9] sm:$0x1] 0.0
        %399 = vst [vmem:[%s283 + $0x3f9] sm:$0x1] 0.0
        %400 = vst [vmem:[%s283 + $0x409] sm:$0x1] 0.0
        %401 = vst [vmem:[%s283 + $0x419] sm:$0x1] 0.0
        %402 = vst [vmem:[%s283 + $0x429] sm:$0x1] 0.0
        %403 = vst [vmem:[%s283 + $0x439] sm:$0x1] 0.0
        %404 = vst [vmem:[%s283 + $0x469] sm:$0x1] 0.0
        %405 = vst [vmem:[%s283 + $0x479] sm:$0x1] 0.0
        %406 = vst [vmem:[%s283 + $0x489] sm:$0x1] 0.0
        %407 = vst [vmem:[%s283 + $0x499] sm:$0x1] 0.0
        %408 = vst [vmem:[%s283 + $0x4a9] sm:$0x1] 0.0
        %409 = vst [vmem:[%s283 + $0x4b9] sm:$0x1] 0.0
        %410 = vst [vmem:[%s283 + $0x4c9] sm:$0x1] 0.0
        %411 = vst [vmem:[%s283 + $0x4d9] sm:$0x1] 0.0
        %v412 = vld [vmem:[%s179] sm:$0xff]
        %v413 = vld [vmem:[%s179 + $0x8] sm:$0xff]
        %v414 = vld [vmem:[%s179 + $0x10] sm:$0xff]
        %v415 = vld [vmem:[%s179 + $0x18] sm:$0xff]
        %v416 = vld [vmem:[%s179 + $0x20] sm:$0xff]
        %v417 = vld [vmem:[%s179 + $0x28] sm:$0xff]
        %v418 = vld [vmem:[%s179 + $0x30] sm:$0xff]
        %v419 = vld [vmem:[%s179 + $0x38] sm:$0xff]
        %v420 = vld [vmem:[%s179 + $0x40] sm:$0xff]
        %v421 = vld [vmem:[%s179 + $0x48] sm:$0xff]
        %v422 = vld [vmem:[%s179 + $0x50] sm:$0xff]
        %v423 = vld [vmem:[%s179 + $0x58] sm:$0xff]
        %v424 = vld [vmem:[%s179 + $0x60] sm:$0xff]
        %v425 = vld [vmem:[%s179 + $0x68] sm:$0xff]
        %v426 = vld [vmem:[%s179 + $0x70] sm:$0xff]
        %v427 = vld [vmem:[%s179 + $0x78] sm:$0xff]
        %v428 = vld [vmem:[%s179 + $0x80] sm:$0xff]
        %v429 = vld [vmem:[%s179 + $0x88] sm:$0xff]
        %v430 = vld [vmem:[%s179 + $0x90] sm:$0xff]
        %v431 = vld [vmem:[%s179 + $0x98] sm:$0xff]
        %v432 = vld [vmem:[%s179 + $0xa0] sm:$0xff]
        %v433 = vld [vmem:[%s179 + $0xa8] sm:$0xff]
        %v434 = vld [vmem:[%s179 + $0xb0] sm:$0xff]
        %v435 = vld [vmem:[%s179 + $0xb8] sm:$0xff]
        %v436 = vld [vmem:[%s179 + $0xc0] sm:$0xff]
        %v437 = vld [vmem:[%s179 + $0xc8] sm:$0xff]
        %v438 = vld [vmem:[%s179 + $0xd0] sm:$0xff]
        %v439 = vld [vmem:[%s179 + $0xd8] sm:$0xff]
        %v440 = vld [vmem:[%s179 + $0xe0] sm:$0xff]
        %v441 = vld [vmem:[%s179 + $0xe8] sm:$0xff]
        %v442 = vld [vmem:[%s179 + $0xf0] sm:$0xff]
        %v443 = vld [vmem:[%s179 + $0xf8] sm:$0xff]
        %v444 = vld [vmem:[%s179 + $0x100] sm:$0xff]
        %v445 = vld [vmem:[%s179 + $0x108] sm:$0xff]
        %v446 = vld [vmem:[%s179 + $0x110] sm:$0xff]
        %v447 = vld [vmem:[%s179 + $0x118] sm:$0xff]
        %v448 = vld [vmem:[%s179 + $0x120] sm:$0xff]
        %v449 = vld [vmem:[%s179 + $0x128] sm:$0xff]
        %v450 = vld [vmem:[%s179 + $0x130] sm:$0xff]
        %v451 = vld [vmem:[%s179 + $0x138] sm:$0xff]
        %v452 = vld [vmem:[%s179 + $0x140] sm:$0xff]
        %v453 = vld [vmem:[%s179 + $0x148] sm:$0xff]
        %v454 = vld [vmem:[%s179 + $0x150] sm:$0xff]
        %v455 = vld [vmem:[%s179 + $0x158] sm:$0xff]
        %v456 = vld [vmem:[%s179 + $0x160] sm:$0xff]
        %v457 = vld [vmem:[%s179 + $0x168] sm:$0xff]
        %v458 = vld [vmem:[%s179 + $0x170] sm:$0xff]
        %v459 = vld [vmem:[%s179 + $0x178] sm:$0xff]
        %v460 = vld [vmem:[%s179 + $0x180] sm:$0xff]
        %v461 = vld [vmem:[%s179 + $0x188] sm:$0xff]
        %v462 = vld [vmem:[%s179 + $0x190] sm:$0xff]
        %v463 = vld [vmem:[%s179 + $0x198] sm:$0xff]
        %v464 = vld [vmem:[%s179 + $0x1a0] sm:$0xff]
        %v465 = vld [vmem:[%s179 + $0x1a8] sm:$0xff]
        %v466 = vld [vmem:[%s179 + $0x1b0] sm:$0xff]
        %v467 = vld [vmem:[%s179 + $0x1b8] sm:$0xff]
        %v468 = vld [vmem:[%s179 + $0x1c0] sm:$0xff]
        %v469 = vld [vmem:[%s179 + $0x1c8] sm:$0xff]
        %v470 = vld [vmem:[%s179 + $0x1d0] sm:$0xff]
        %v471 = vld [vmem:[%s179 + $0x1d8] sm:$0xff]
        %v472 = vld [vmem:[%s179 + $0x1e0] sm:$0xff]
        %v473 = vld [vmem:[%s179 + $0x1e8] sm:$0xff]
        %v474 = vld [vmem:[%s179 + $0x1f0] sm:$0xff]
        %v475 = vld [vmem:[%s179 + $0x1f8] sm:$0xff]
        %476 = vst [vmem:[%s283 + $0x1] sm:$0xff] %v412
        %477 = vst [vmem:[%s283 + $0x11] sm:$0xff] %v413
        %478 = vst [vmem:[%s283 + $0x21] sm:$0xff] %v414
        %479 = vst [vmem:[%s283 + $0x31] sm:$0xff] %v415
        %480 = vst [vmem:[%s283 + $0x41] sm:$0xff] %v416
        %481 = vst [vmem:[%s283 + $0x51] sm:$0xff] %v417
        %482 = vst [vmem:[%s283 + $0x61] sm:$0xff] %v418
        %483 = vst [vmem:[%s283 + $0x71] sm:$0xff] %v419
        %484 = vst [vmem:[%s283 + $0xa1] sm:$0xff] %v420
        %485 = vst [vmem:[%s283 + $0xb1] sm:$0xff] %v421
        %486 = vst [vmem:[%s283 + $0xc1] sm:$0xff] %v422
        %487 = vst [vmem:[%s283 + $0xd1] sm:$0xff] %v423
        %488 = vst [vmem:[%s283 + $0xe1] sm:$0xff] %v424
        %489 = vst [vmem:[%s283 + $0xf1] sm:$0xff] %v425
        %490 = vst [vmem:[%s283 + $0x101] sm:$0xff] %v426
        %491 = vst [vmem:[%s283 + $0x111] sm:$0xff] %v427
        %492 = vst [vmem:[%s283 + $0x141] sm:$0xff] %v428
        %493 = vst [vmem:[%s283 + $0x151] sm:$0xff] %v429
        %494 = vst [vmem:[%s283 + $0x161] sm:$0xff] %v430
        %495 = vst [vmem:[%s283 + $0x171] sm:$0xff] %v431
        %496 = vst [vmem:[%s283 + $0x181] sm:$0xff] %v432
        %497 = vst [vmem:[%s283 + $0x191] sm:$0xff] %v433
        %498 = vst [vmem:[%s283 + $0x1a1] sm:$0xff] %v434
        %499 = vst [vmem:[%s283 + $0x1b1] sm:$0xff] %v435
        %500 = vst [vmem:[%s283 + $0x1e1] sm:$0xff] %v436
        %501 = vst [vmem:[%s283 + $0x1f1] sm:$0xff] %v437
        %502 = vst [vmem:[%s283 + $0x201] sm:$0xff] %v438
        %503 = vst [vmem:[%s283 + $0x211] sm:$0xff] %v439
        %504 = vst [vmem:[%s283 + $0x221] sm:$0xff] %v440
        %505 = vst [vmem:[%s283 + $0x231] sm:$0xff] %v441
        %506 = vst [vmem:[%s283 + $0x241] sm:$0xff] %v442
        %507 = vst [vmem:[%s283 + $0x251] sm:$0xff] %v443
        %508 = vst [vmem:[%s283 + $0x281] sm:$0xff] %v444
        %509 = vst [vmem:[%s283 + $0x291] sm:$0xff] %v445
        %510 = vst [vmem:[%s283 + $0x2a1] sm:$0xff] %v446
        %511 = vst [vmem:[%s283 + $0x2b1] sm:$0xff] %v447
        %512 = vst [vmem:[%s283 + $0x2c1] sm:$0xff] %v448
        %513 = vst [vmem:[%s283 + $0x2d1] sm:$0xff] %v449
        %514 = vst [vmem:[%s283 + $0x2e1] sm:$0xff] %v450
        %515 = vst [vmem:[%s283 + $0x2f1] sm:$0xff] %v451
        %516 = vst [vmem:[%s283 + $0x321] sm:$0xff] %v452
        %517 = vst [vmem:[%s283 + $0x331] sm:$0xff] %v453
        %518 = vst [vmem:[%s283 + $0x341] sm:$0xff] %v454
        %519 = vst [vmem:[%s283 + $0x351] sm:$0xff] %v455
        %520 = vst [vmem:[%s283 + $0x361] sm:$0xff] %v456
        %521 = vst [vmem:[%s283 + $0x371] sm:$0xff] %v457
        %522 = vst [vmem:[%s283 + $0x381] sm:$0xff] %v458
        %523 = vst [vmem:[%s283 + $0x391] sm:$0xff] %v459
        %524 = vst [vmem:[%s283 + $0x3c1] sm:$0xff] %v460
        %525 = vst [vmem:[%s283 + $0x3d1] sm:$0xff] %v461
        %526 = vst [vmem:[%s283 + $0x3e1] sm:$0xff] %v462
        %527 = vst [vmem:[%s283 + $0x3f1] sm:$0xff] %v463
        %528 = vst [vmem:[%s283 + $0x401] sm:$0xff] %v464
        %529 = vst [vmem:[%s283 + $0x411] sm:$0xff] %v465
        %530 = vst [vmem:[%s283 + $0x421] sm:$0xff] %v466
        %531 = vst [vmem:[%s283 + $0x431] sm:$0xff] %v467
        %532 = vst [vmem:[%s283 + $0x461] sm:$0xff] %v468
        %533 = vst [vmem:[%s283 + $0x471] sm:$0xff] %v469
        %534 = vst [vmem:[%s283 + $0x481] sm:$0xff] %v470
        %535 = vst [vmem:[%s283 + $0x491] sm:$0xff] %v471
        %536 = vst [vmem:[%s283 + $0x4a1] sm:$0xff] %v472
        %537 = vst [vmem:[%s283 + $0x4b1] sm:$0xff] %v473
        %538 = vst [vmem:[%s283 + $0x4c1] sm:$0xff] %v474
        %539 = vst [vmem:[%s283 + $0x4d1] sm:$0xff] %v475
        %v540 = vld [vmem:[%s2] sm:$0x1]
        %v542 = vperm.slane %v540, 0
        %v544 = vld [vmem:[#allocation6] sm:$0x1]
        %v545 = vld [vmem:[#allocation2] sm:$0xff]
        %v546 = vld [vmem:[#allocation2 + $0x10] sm:$0xff]
        %v547 = vld [vmem:[#allocation2 + $0x20] sm:$0xff]
        %v548 = vld [vmem:[#allocation2 + $0x30] sm:$0xff]
        %v549 = vld [vmem:[#allocation2 + $0x40] sm:$0xff]
        %v550 = vld [vmem:[#allocation2 + $0x50] sm:$0xff]
        %v551 = vld [vmem:[#allocation2 + $0x60] sm:$0xff]
        %v552 = vld [vmem:[#allocation2 + $0x70] sm:$0xff]
        %v553 = vld [vmem:[#allocation2 + $0xa0] sm:$0xff]
        %v554 = vld [vmem:[#allocation2 + $0xb0] sm:$0xff]
        %v555 = vld [vmem:[#allocation2 + $0xc0] sm:$0xff]
        %v556 = vld [vmem:[#allocation2 + $0xd0] sm:$0xff]
        %v557 = vld [vmem:[#allocation2 + $0xe0] sm:$0xff]
        %v558 = vld [vmem:[#allocation2 + $0xf0] sm:$0xff]
        %v559 = vld [vmem:[#allocation2 + $0x100] sm:$0xff]
        %v560 = vld [vmem:[#allocation2 + $0x110] sm:$0xff]
        %v561 = vld [vmem:[#allocation2 + $0x140] sm:$0xff]
        %v562 = vld [vmem:[#allocation2 + $0x150] sm:$0xff]
        %v563 = vld [vmem:[#allocation2 + $0x160] sm:$0xff]
        %v564 = vld [vmem:[#allocation2 + $0x170] sm:$0xff]
        %v565 = vld [vmem:[#allocation2 + $0x180] sm:$0xff]
        %v566 = vld [vmem:[#allocation2 + $0x190] sm:$0xff]
        %v567 = vld [vmem:[#allocation2 + $0x1a0] sm:$0xff]
        %v568 = vld [vmem:[#allocation2 + $0x1b0] sm:$0xff]
        %v569 = vld [vmem:[#allocation2 + $0x1e0] sm:$0xff]
        %v570 = vld [vmem:[#allocation2 + $0x1f0] sm:$0xff]
        %v571 = vld [vmem:[#allocation2 + $0x200] sm:$0xff]
        %v572 = vld [vmem:[#allocation2 + $0x210] sm:$0xff]
        %v573 = vld [vmem:[#allocation2 + $0x220] sm:$0xff]
        %v574 = vld [vmem:[#allocation2 + $0x230] sm:$0xff]
        %v575 = vld [vmem:[#allocation2 + $0x240] sm:$0xff]
        %v576 = vld [vmem:[#allocation2 + $0x250] sm:$0xff]
        %v577 = vld [vmem:[#allocation2 + $0x280] sm:$0xff]
        %v578 = vld [vmem:[#allocation2 + $0x290] sm:$0xff]
        %v579 = vld [vmem:[#allocation2 + $0x2a0] sm:$0xff]
        %v580 = vld [vmem:[#allocation2 + $0x2b0] sm:$0xff]
        %v581 = vld [vmem:[#allocation2 + $0x2c0] sm:$0xff]
        %v582 = vld [vmem:[#allocation2 + $0x2d0] sm:$0xff]
        %v583 = vld [vmem:[#allocation2 + $0x2e0] sm:$0xff]
        %v584 = vld [vmem:[#allocation2 + $0x2f0] sm:$0xff]
        %v585 = vld [vmem:[#allocation2 + $0x320] sm:$0xff]
        %v586 = vld [vmem:[#allocation2 + $0x330] sm:$0xff]
        %v587 = vld [vmem:[#allocation2 + $0x340] sm:$0xff]
        %v588 = vld [vmem:[#allocation2 + $0x350] sm:$0xff]
        %v589 = vld [vmem:[#allocation2 + $0x360] sm:$0xff]
        %v590 = vld [vmem:[#allocation2 + $0x370] sm:$0xff]
        %v591 = vld [vmem:[#allocation2 + $0x380] sm:$0xff]
        %v592 = vld [vmem:[#allocation2 + $0x390] sm:$0xff]
        %v593 = vld [vmem:[#allocation2 + $0x3c0] sm:$0xff]
        %v594 = vld [vmem:[#allocation2 + $0x3d0] sm:$0xff]
        %v595 = vld [vmem:[#allocation2 + $0x3e0] sm:$0xff]
        %v596 = vld [vmem:[#allocation2 + $0x3f0] sm:$0xff]
        %v597 = vld [vmem:[#allocation2 + $0x400] sm:$0xff]
        %v598 = vld [vmem:[#allocation2 + $0x410] sm:$0xff]
        %v599 = vld [vmem:[#allocation2 + $0x420] sm:$0xff]
        %v600 = vld [vmem:[#allocation2 + $0x430] sm:$0xff]
        %v601 = vld [vmem:[#allocation2 + $0x460] sm:$0xff]
        %v602 = vld [vmem:[#allocation2 + $0x470] sm:$0xff]
        %v603 = vld [vmem:[#allocation2 + $0x480] sm:$0xff]
        %v604 = vld [vmem:[#allocation2 + $0x490] sm:$0xff]
        %v605 = vld [vmem:[#allocation2 + $0x4a0] sm:$0xff]
        %v606 = vld [vmem:[#allocation2 + $0x4b0] sm:$0xff]
        %v607 = vld [vmem:[#allocation2 + $0x4c0] sm:$0xff]
        %v608 = vld [vmem:[#allocation2 + $0x4d0] sm:$0xff]
        %v609 = vperm.slane %v544, 0
        %v610 = vmul.f32 %v545, %v609
        %v611 = vmul.f32 %v546, %v609
        %v612 = vmul.f32 %v547, %v609
        %v613 = vmul.f32 %v548, %v609
        %v614 = vmul.f32 %v549, %v609
        %v615 = vmul.f32 %v550, %v609
        %v616 = vmul.f32 %v551, %v609
        %v617 = vmul.f32 %v552, %v609
        %v618 = vmul.f32 %v553, %v609
        %v619 = vmul.f32 %v554, %v609
        %v620 = vmul.f32 %v555, %v609
        %v621 = vmul.f32 %v556, %v609
        %v622 = vmul.f32 %v557, %v609
        %v623 = vmul.f32 %v558, %v609
        %v624 = vmul.f32 %v559, %v609
        %v625 = vmul.f32 %v560, %v609
        %v626 = vmul.f32 %v561, %v609
        %v627 = vmul.f32 %v562, %v609
        %v628 = vmul.f32 %v563, %v609
        %v629 = vmul.f32 %v564, %v609
        %v630 = vmul.f32 %v565, %v609
        %v631 = vmul.f32 %v566, %v609
        %v632 = vmul.f32 %v567, %v609
        %v633 = vmul.f32 %v568, %v609
        %v634 = vmul.f32 %v569, %v609
        %v635 = vmul.f32 %v570, %v609
        %v636 = vmul.f32 %v571, %v609
        %v637 = vmul.f32 %v572, %v609
        %v638 = vmul.f32 %v573, %v609
        %v639 = vmul.f32 %v574, %v609
        %v640 = vmul.f32 %v575, %v609
        %v641 = vmul.f32 %v576, %v609
        %v642 = vmul.f32 %v577, %v609
        %v643 = vmul.f32 %v578, %v609
        %v644 = vmul.f32 %v579, %v609
        %v645 = vmul.f32 %v580, %v609
        %v646 = vmul.f32 %v581, %v609
        %v647 = vmul.f32 %v582, %v609
        %v648 = vmul.f32 %v583, %v609
        %v649 = vmul.f32 %v584, %v609
        %v650 = vmul.f32 %v585, %v609
        %v651 = vmul.f32 %v586, %v609
        %v652 = vmul.f32 %v587, %v609
        %v653 = vmul.f32 %v588, %v609
        %v654 = vmul.f32 %v589, %v609
        %v655 = vmul.f32 %v590, %v609
        %v656 = vmul.f32 %v591, %v609
        %v657 = vmul.f32 %v592, %v609
        %v658 = vmul.f32 %v593, %v609
        %v659 = vmul.f32 %v594, %v609
        %v660 = vmul.f32 %v595, %v609
        %v661 = vmul.f32 %v596, %v609
        %v662 = vmul.f32 %v597, %v609
        %v663 = vmul.f32 %v598, %v609
        %v664 = vmul.f32 %v599, %v609
        %v665 = vmul.f32 %v600, %v609
        %v666 = vmul.f32 %v601, %v609
        %v667 = vmul.f32 %v602, %v609
        %v668 = vmul.f32 %v603, %v609
        %v669 = vmul.f32 %v604, %v609
        %v670 = vmul.f32 %v605, %v609
        %v671 = vmul.f32 %v606, %v609
        %v672 = vmul.f32 %v607, %v609
        %v673 = vmul.f32 %v608, %v609
        %v674 = vadd.f32 %v542, %v610
        %v675 = vadd.f32 %v542, %v611
        %v676 = vadd.f32 %v542, %v612
        %v677 = vadd.f32 %v542, %v613
        %v678 = vadd.f32 %v542, %v614
        %v679 = vadd.f32 %v542, %v615
        %v680 = vadd.f32 %v542, %v616
        %v681 = vadd.f32 %v542, %v617
        %v682 = vadd.f32 %v542, %v618
        %v683 = vadd.f32 %v542, %v619
        %v684 = vadd.f32 %v542, %v620
        %v685 = vadd.f32 %v542, %v621
        %v686 = vadd.f32 %v542, %v622
        %v687 = vadd.f32 %v542, %v623
        %v688 = vadd.f32 %v542, %v624
        %v689 = vadd.f32 %v542, %v625
        %v690 = vadd.f32 %v542, %v626
        %v691 = vadd.f32 %v542, %v627
        %v692 = vadd.f32 %v542, %v628
        %v693 = vadd.f32 %v542, %v629
        %v694 = vadd.f32 %v542, %v630
        %v695 = vadd.f32 %v542, %v631
        %v696 = vadd.f32 %v542, %v632
        %v697 = vadd.f32 %v542, %v633
        %v698 = vadd.f32 %v542, %v634
        %v699 = vadd.f32 %v542, %v635
        %v700 = vadd.f32 %v542, %v636
        %v701 = vadd.f32 %v542, %v637
        %v702 = vadd.f32 %v542, %v638
        %v703 = vadd.f32 %v542, %v639
        %v704 = vadd.f32 %v542, %v640
        %v705 = vadd.f32 %v542, %v641
        %v706 = vadd.f32 %v542, %v642
        %v707 = vadd.f32 %v542, %v643
        %v708 = vadd.f32 %v542, %v644
        %v709 = vadd.f32 %v542, %v645
        %v710 = vadd.f32 %v542, %v646
        %v711 = vadd.f32 %v542, %v647
        %v712 = vadd.f32 %v542, %v648
        %v713 = vadd.f32 %v542, %v649
        %v714 = vadd.f32 %v542, %v650
        %v715 = vadd.f32 %v542, %v651
        %v716 = vadd.f32 %v542, %v652
        %v717 = vadd.f32 %v542, %v653
        %v718 = vadd.f32 %v542, %v654
        %v719 = vadd.f32 %v542, %v655
        %v720 = vadd.f32 %v542, %v656
        %v721 = vadd.f32 %v542, %v657
        %v722 = vadd.f32 %v542, %v658
        %v723 = vadd.f32 %v542, %v659
        %v724 = vadd.f32 %v542, %v660
        %v725 = vadd.f32 %v542, %v661
        %v726 = vadd.f32 %v542, %v662
        %v727 = vadd.f32 %v542, %v663
        %v728 = vadd.f32 %v542, %v664
        %v729 = vadd.f32 %v542, %v665
        %v730 = vadd.f32 %v542, %v666
        %v731 = vadd.f32 %v542, %v667
        %v732 = vadd.f32 %v542, %v668
        %v733 = vadd.f32 %v542, %v669
        %v734 = vadd.f32 %v542, %v670
        %v735 = vadd.f32 %v542, %v671
        %v736 = vadd.f32 %v542, %v672
        %v737 = vadd.f32 %v542, %v673
        %v738 = vld [vmem:[#allocation6 + $0x1] sm:$0x1]
        %v739 = vld [vmem:[#allocation2 + $0x1] sm:$0xff]
        %v740 = vld [vmem:[#allocation2 + $0x11] sm:$0xff]
        %v741 = vld [vmem:[#allocation2 + $0x21] sm:$0xff]
        %v742 = vld [vmem:[#allocation2 + $0x31] sm:$0xff]
        %v743 = vld [vmem:[#allocation2 + $0x41] sm:$0xff]
        %v744 = vld [vmem:[#allocation2 + $0x51] sm:$0xff]
        %v745 = vld [vmem:[#allocation2 + $0x61] sm:$0xff]
        %v746 = vld [vmem:[#allocation2 + $0x71] sm:$0xff]
        %v747 = vld [vmem:[#allocation2 + $0xa1] sm:$0xff]
        %v748 = vld [vmem:[#allocation2 + $0xb1] sm:$0xff]
        %v749 = vld [vmem:[#allocation2 + $0xc1] sm:$0xff]
        %v750 = vld [vmem:[#allocation2 + $0xd1] sm:$0xff]
        %v751 = vld [vmem:[#allocation2 + $0xe1] sm:$0xff]
        %v752 = vld [vmem:[#allocation2 + $0xf1] sm:$0xff]
        %v753 = vld [vmem:[#allocation2 + $0x101] sm:$0xff]
        %v754 = vld [vmem:[#allocation2 + $0x111] sm:$0xff]
        %v755 = vld [vmem:[#allocation2 + $0x141] sm:$0xff]
        %v756 = vld [vmem:[#allocation2 + $0x151] sm:$0xff]
        %v757 = vld [vmem:[#allocation2 + $0x161] sm:$0xff]
        %v758 = vld [vmem:[#allocation2 + $0x171] sm:$0xff]
        %v759 = vld [vmem:[#allocation2 + $0x181] sm:$0xff]
        %v760 = vld [vmem:[#allocation2 + $0x191] sm:$0xff]
        %v761 = vld [vmem:[#allocation2 + $0x1a1] sm:$0xff]
        %v762 = vld [vmem:[#allocation2 + $0x1b1] sm:$0xff]
        %v763 = vld [vmem:[#allocation2 + $0x1e1] sm:$0xff]
        %v764 = vld [vmem:[#allocation2 + $0x1f1] sm:$0xff]
        %v765 = vld [vmem:[#allocation2 + $0x201] sm:$0xff]
        %v766 = vld [vmem:[#allocation2 + $0x211] sm:$0xff]
        %v767 = vld [vmem:[#allocation2 + $0x221] sm:$0xff]
        %v768 = vld [vmem:[#allocation2 + $0x231] sm:$0xff]
        %v769 = vld [vmem:[#allocation2 + $0x241] sm:$0xff]
        %v770 = vld [vmem:[#allocation2 + $0x251] sm:$0xff]
        %v771 = vld [vmem:[#allocation2 + $0x281] sm:$0xff]
        %v772 = vld [vmem:[#allocation2 + $0x291] sm:$0xff]
        %v773 = vld [vmem:[#allocation2 + $0x2a1] sm:$0xff]
        %v774 = vld [vmem:[#allocation2 + $0x2b1] sm:$0xff]
        %v775 = vld [vmem:[#allocation2 + $0x2c1] sm:$0xff]
        %v776 = vld [vmem:[#allocation2 + $0x2d1] sm:$0xff]
        %v777 = vld [vmem:[#allocation2 + $0x2e1] sm:$0xff]
        %v778 = vld [vmem:[#allocation2 + $0x2f1] sm:$0xff]
        %v779 = vld [vmem:[#allocation2 + $0x321] sm:$0xff]
        %v780 = vld [vmem:[#allocation2 + $0x331] sm:$0xff]
        %v781 = vld [vmem:[#allocation2 + $0x341] sm:$0xff]
        %v782 = vld [vmem:[#allocation2 + $0x351] sm:$0xff]
        %v783 = vld [vmem:[#allocation2 + $0x361] sm:$0xff]
        %v784 = vld [vmem:[#allocation2 + $0x371] sm:$0xff]
        %v785 = vld [vmem:[#allocation2 + $0x381] sm:$0xff]
        %v786 = vld [vmem:[#allocation2 + $0x391] sm:$0xff]
        %v787 = vld [vmem:[#allocation2 + $0x3c1] sm:$0xff]
        %v788 = vld [vmem:[#allocation2 + $0x3d1] sm:$0xff]
        %v789 = vld [vmem:[#allocation2 + $0x3e1] sm:$0xff]
        %v790 = vld [vmem:[#allocation2 + $0x3f1] sm:$0xff]
        %v791 = vld [vmem:[#allocation2 + $0x401] sm:$0xff]
        %v792 = vld [vmem:[#allocation2 + $0x411] sm:$0xff]
        %v793 = vld [vmem:[#allocation2 + $0x421] sm:$0xff]
        %v794 = vld [vmem:[#allocation2 + $0x431] sm:$0xff]
        %v795 = vld [vmem:[#allocation2 + $0x461] sm:$0xff]
        %v796 = vld [vmem:[#allocation2 + $0x471] sm:$0xff]
        %v797 = vld [vmem:[#allocation2 + $0x481] sm:$0xff]
        %v798 = vld [vmem:[#allocation2 + $0x491] sm:$0xff]
        %v799 = vld [vmem:[#allocation2 + $0x4a1] sm:$0xff]
        %v800 = vld [vmem:[#allocation2 + $0x4b1] sm:$0xff]
        %v801 = vld [vmem:[#allocation2 + $0x4c1] sm:$0xff]
        %v802 = vld [vmem:[#allocation2 + $0x4d1] sm:$0xff]
        %v803 = vperm.slane %v738, 0
        %v804 = vmul.f32 %v739, %v803
        %v805 = vmul.f32 %v740, %v803
        %v806 = vmul.f32 %v741, %v803
        %v807 = vmul.f32 %v742, %v803
        %v808 = vmul.f32 %v743, %v803
        %v809 = vmul.f32 %v744, %v803
        %v810 = vmul.f32 %v745, %v803
        %v811 = vmul.f32 %v746, %v803
        %v812 = vmul.f32 %v747, %v803
        %v813 = vmul.f32 %v748, %v803
        %v814 = vmul.f32 %v749, %v803
        %v815 = vmul.f32 %v750, %v803
        %v816 = vmul.f32 %v751, %v803
        %v817 = vmul.f32 %v752, %v803
        %v818 = vmul.f32 %v753, %v803
        %v819 = vmul.f32 %v754, %v803
        %v820 = vmul.f32 %v755, %v803
        %v821 = vmul.f32 %v756, %v803
        %v822 = vmul.f32 %v757, %v803
        %v823 = vmul.f32 %v758, %v803
        %v824 = vmul.f32 %v759, %v803
        %v825 = vmul.f32 %v760, %v803
        %v826 = vmul.f32 %v761, %v803
        %v827 = vmul.f32 %v762, %v803
        %v828 = vmul.f32 %v763, %v803
        %v829 = vmul.f32 %v764, %v803
        %v830 = vmul.f32 %v765, %v803
        %v831 = vmul.f32 %v766, %v803
        %v832 = vmul.f32 %v767, %v803
        %v833 = vmul.f32 %v768, %v803
        %v834 = vmul.f32 %v769, %v803
        %v835 = vmul.f32 %v770, %v803
        %v836 = vmul.f32 %v771, %v803
        %v837 = vmul.f32 %v772, %v803
        %v838 = vmul.f32 %v773, %v803
        %v839 = vmul.f32 %v774, %v803
        %v840 = vmul.f32 %v775, %v803
        %v841 = vmul.f32 %v776, %v803
        %v842 = vmul.f32 %v777, %v803
        %v843 = vmul.f32 %v778, %v803
        %v844 = vmul.f32 %v779, %v803
        %v845 = vmul.f32 %v780, %v803
        %v846 = vmul.f32 %v781, %v803
        %v847 = vmul.f32 %v782, %v803
        %v848 = vmul.f32 %v783, %v803
        %v849 = vmul.f32 %v784, %v803
        %v850 = vmul.f32 %v785, %v803
        %v851 = vmul.f32 %v786, %v803
        %v852 = vmul.f32 %v787, %v803
        %v853 = vmul.f32 %v788, %v803
        %v854 = vmul.f32 %v789, %v803
        %v855 = vmul.f32 %v790, %v803
        %v856 = vmul.f32 %v791, %v803
        %v857 = vmul.f32 %v792, %v803
        %v858 = vmul.f32 %v793, %v803
        %v859 = vmul.f32 %v794, %v803
        %v860 = vmul.f32 %v795, %v803
        %v861 = vmul.f32 %v796, %v803
        %v862 = vmul.f32 %v797, %v803
        %v863 = vmul.f32 %v798, %v803
        %v864 = vmul.f32 %v799, %v803
        %v865 = vmul.f32 %v800, %v803
        %v866 = vmul.f32 %v801, %v803
        %v867 = vmul.f32 %v802, %v803
        %v868 = vadd.f32 %v674, %v804
        %v869 = vadd.f32 %v675, %v805
        %v870 = vadd.f32 %v676, %v806
        %v871 = vadd.f32 %v677, %v807
        %v872 = vadd.f32 %v678, %v808
        %v873 = vadd.f32 %v679, %v809
        %v874 = vadd.f32 %v680, %v810
        %v875 = vadd.f32 %v681, %v811
        %v876 = vadd.f32 %v682, %v812
        %v877 = vadd.f32 %v683, %v813
        %v878 = vadd.f32 %v684, %v814
        %v879 = vadd.f32 %v685, %v815
        %v880 = vadd.f32 %v686, %v816
        %v881 = vadd.f32 %v687, %v817
        %v882 = vadd.f32 %v688, %v818
        %v883 = vadd.f32 %v689, %v819
        %v884 = vadd.f32 %v690, %v820
        %v885 = vadd.f32 %v691, %v821
        %v886 = vadd.f32 %v692, %v822
        %v887 = vadd.f32 %v693, %v823
        %v888 = vadd.f32 %v694, %v824
        %v889 = vadd.f32 %v695, %v825
        %v890 = vadd.f32 %v696, %v826
        %v891 = vadd.f32 %v697, %v827
        %v892 = vadd.f32 %v698, %v828
        %v893 = vadd.f32 %v699, %v829
        %v894 = vadd.f32 %v700, %v830
        %v895 = vadd.f32 %v701, %v831
        %v896 = vadd.f32 %v702, %v832
        %v897 = vadd.f32 %v703, %v833
        %v898 = vadd.f32 %v704, %v834
        %v899 = vadd.f32 %v705, %v835
        %v900 = vadd.f32 %v706, %v836
        %v901 = vadd.f32 %v707, %v837
        %v902 = vadd.f32 %v708, %v838
        %v903 = vadd.f32 %v709, %v839
        %v904 = vadd.f32 %v710, %v840
        %v905 = vadd.f32 %v711, %v841
        %v906 = vadd.f32 %v712, %v842
        %v907 = vadd.f32 %v713, %v843
        %v908 = vadd.f32 %v714, %v844
        %v909 = vadd.f32 %v715, %v845
        %v910 = vadd.f32 %v716, %v846
        %v911 = vadd.f32 %v717, %v847
        %v912 = vadd.f32 %v718, %v848
        %v913 = vadd.f32 %v719, %v849
        %v914 = vadd.f32 %v720, %v850
        %v915 = vadd.f32 %v721, %v851
        %v916 = vadd.f32 %v722, %v852
        %v917 = vadd.f32 %v723, %v853
        %v918 = vadd.f32 %v724, %v854
        %v919 = vadd.f32 %v725, %v855
        %v920 = vadd.f32 %v726, %v856
        %v921 = vadd.f32 %v727, %v857
        %v922 = vadd.f32 %v728, %v858
        %v923 = vadd.f32 %v729, %v859
        %v924 = vadd.f32 %v730, %v860
        %v925 = vadd.f32 %v731, %v861
        %v926 = vadd.f32 %v732, %v862
        %v927 = vadd.f32 %v733, %v863
        %v928 = vadd.f32 %v734, %v864
        %v929 = vadd.f32 %v735, %v865
        %v930 = vadd.f32 %v736, %v866
        %v931 = vadd.f32 %v737, %v867
        %v932 = vld [vmem:[#allocation6 + $0x2] sm:$0x1]
        %v933 = vld [vmem:[#allocation2 + $0x2] sm:$0xff]
        %v934 = vld [vmem:[#allocation2 + $0x12] sm:$0xff]
        %v935 = vld [vmem:[#allocation2 + $0x22] sm:$0xff]
        %v936 = vld [vmem:[#allocation2 + $0x32] sm:$0xff]
        %v937 = vld [vmem:[#allocation2 + $0x42] sm:$0xff]
        %v938 = vld [vmem:[#allocation2 + $0x52] sm:$0xff]
        %v939 = vld [vmem:[#allocation2 + $0x62] sm:$0xff]
        %v940 = vld [vmem:[#allocation2 + $0x72] sm:$0xff]
        %v941 = vld [vmem:[#allocation2 + $0xa2] sm:$0xff]
        %v942 = vld [vmem:[#allocation2 + $0xb2] sm:$0xff]
        %v943 = vld [vmem:[#allocation2 + $0xc2] sm:$0xff]
        %v944 = vld [vmem:[#allocation2 + $0xd2] sm:$0xff]
        %v945 = vld [vmem:[#allocation2 + $0xe2] sm:$0xff]
        %v946 = vld [vmem:[#allocation2 + $0xf2] sm:$0xff]
        %v947 = vld [vmem:[#allocation2 + $0x102] sm:$0xff]
        %v948 = vld [vmem:[#allocation2 + $0x112] sm:$0xff]
        %v949 = vld [vmem:[#allocation2 + $0x142] sm:$0xff]
        %v950 = vld [vmem:[#allocation2 + $0x152] sm:$0xff]
        %v951 = vld [vmem:[#allocation2 + $0x162] sm:$0xff]
        %v952 = vld [vmem:[#allocation2 + $0x172] sm:$0xff]
        %v953 = vld [vmem:[#allocation2 + $0x182] sm:$0xff]
        %v954 = vld [vmem:[#allocation2 + $0x192] sm:$0xff]
        %v955 = vld [vmem:[#allocation2 + $0x1a2] sm:$0xff]
        %v956 = vld [vmem:[#allocation2 + $0x1b2] sm:$0xff]
        %v957 = vld [vmem:[#allocation2 + $0x1e2] sm:$0xff]
        %v958 = vld [vmem:[#allocation2 + $0x1f2] sm:$0xff]
        %v959 = vld [vmem:[#allocation2 + $0x202] sm:$0xff]
        %v960 = vld [vmem:[#allocation2 + $0x212] sm:$0xff]
        %v961 = vld [vmem:[#allocation2 + $0x222] sm:$0xff]
        %v962 = vld [vmem:[#allocation2 + $0x232] sm:$0xff]
        %v963 = vld [vmem:[#allocation2 + $0x242] sm:$0xff]
        %v964 = vld [vmem:[#allocation2 + $0x252] sm:$0xff]
        %v965 = vld [vmem:[#allocation2 + $0x282] sm:$0xff]
        %v966 = vld [vmem:[#allocation2 + $0x292] sm:$0xff]
        %v967 = vld [vmem:[#allocation2 + $0x2a2] sm:$0xff]
        %v968 = vld [vmem:[#allocation2 + $0x2b2] sm:$0xff]
        %v969 = vld [vmem:[#allocation2 + $0x2c2] sm:$0xff]
        %v970 = vld [vmem:[#allocation2 + $0x2d2] sm:$0xff]
        %v971 = vld [vmem:[#allocation2 + $0x2e2] sm:$0xff]
        %v972 = vld [vmem:[#allocation2 + $0x2f2] sm:$0xff]
        %v973 = vld [vmem:[#allocation2 + $0x322] sm:$0xff]
        %v974 = vld [vmem:[#allocation2 + $0x332] sm:$0xff]
        %v975 = vld [vmem:[#allocation2 + $0x342] sm:$0xff]
        %v976 = vld [vmem:[#allocation2 + $0x352] sm:$0xff]
        %v977 = vld [vmem:[#allocation2 + $0x362] sm:$0xff]
        %v978 = vld [vmem:[#allocation2 + $0x372] sm:$0xff]
        %v979 = vld [vmem:[#allocation2 + $0x382] sm:$0xff]
        %v980 = vld [vmem:[#allocation2 + $0x392] sm:$0xff]
        %v981 = vld [vmem:[#allocation2 + $0x3c2] sm:$0xff]
        %v982 = vld [vmem:[#allocation2 + $0x3d2] sm:$0xff]
        %v983 = vld [vmem:[#allocation2 + $0x3e2] sm:$0xff]
        %v984 = vld [vmem:[#allocation2 + $0x3f2] sm:$0xff]
        %v985 = vld [vmem:[#allocation2 + $0x402] sm:$0xff]
        %v986 = vld [vmem:[#allocation2 + $0x412] sm:$0xff]
        %v987 = vld [vmem:[#allocation2 + $0x422] sm:$0xff]
        %v988 = vld [vmem:[#allocation2 + $0x432] sm:$0xff]
        %v989 = vld [vmem:[#allocation2 + $0x462] sm:$0xff]
        %v990 = vld [vmem:[#allocation2 + $0x472] sm:$0xff]
        %v991 = vld [vmem:[#allocation2 + $0x482] sm:$0xff]
        %v992 = vld [vmem:[#allocation2 + $0x492] sm:$0xff]
        %v993 = vld [vmem:[#allocation2 + $0x4a2] sm:$0xff]
        %v994 = vld [vmem:[#allocation2 + $0x4b2] sm:$0xff]
        %v995 = vld [vmem:[#allocation2 + $0x4c2] sm:$0xff]
        %v996 = vld [vmem:[#allocation2 + $0x4d2] sm:$0xff]
        %v997 = vperm.slane %v932, 0
        %v998 = vmul.f32 %v933, %v997
        %v999 = vmul.f32 %v934, %v997
        %v1000 = vmul.f32 %v935, %v997
        %v1001 = vmul.f32 %v936, %v997
        %v1002 = vmul.f32 %v937, %v997
        %v1003 = vmul.f32 %v938, %v997
        %v1004 = vmul.f32 %v939, %v997
        %v1005 = vmul.f32 %v940, %v997
        %v1006 = vmul.f32 %v941, %v997
        %v1007 = vmul.f32 %v942, %v997
        %v1008 = vmul.f32 %v943, %v997
        %v1009 = vmul.f32 %v944, %v997
        %v1010 = vmul.f32 %v945, %v997
        %v1011 = vmul.f32 %v946, %v997
        %v1012 = vmul.f32 %v947, %v997
        %v1013 = vmul.f32 %v948, %v997
        %v1014 = vmul.f32 %v949, %v997
        %v1015 = vmul.f32 %v950, %v997
        %v1016 = vmul.f32 %v951, %v997
        %v1017 = vmul.f32 %v952, %v997
        %v1018 = vmul.f32 %v953, %v997
        %v1019 = vmul.f32 %v954, %v997
        %v1020 = vmul.f32 %v955, %v997
        %v1021 = vmul.f32 %v956, %v997
        %v1022 = vmul.f32 %v957, %v997
        %v1023 = vmul.f32 %v958, %v997
        %v1024 = vmul.f32 %v959, %v997
        %v1025 = vmul.f32 %v960, %v997
        %v1026 = vmul.f32 %v961, %v997
        %v1027 = vmul.f32 %v962, %v997
        %v1028 = vmul.f32 %v963, %v997
        %v1029 = vmul.f32 %v964, %v997
        %v1030 = vmul.f32 %v965, %v997
        %v1031 = vmul.f32 %v966, %v997
        %v1032 = vmul.f32 %v967, %v997
        %v1033 = vmul.f32 %v968, %v997
        %v1034 = vmul.f32 %v969, %v997
        %v1035 = vmul.f32 %v970, %v997
        %v1036 = vmul.f32 %v971, %v997
        %v1037 = vmul.f32 %v972, %v997
        %v1038 = vmul.f32 %v973, %v997
        %v1039 = vmul.f32 %v974, %v997
        %v1040 = vmul.f32 %v975, %v997
        %v1041 = vmul.f32 %v976, %v997
        %v1042 = vmul.f32 %v977, %v997
        %v1043 = vmul.f32 %v978, %v997
        %v1044 = vmul.f32 %v979, %v997
        %v1045 = vmul.f32 %v980, %v997
        %v1046 = vmul.f32 %v981, %v997
        %v1047 = vmul.f32 %v982, %v997
        %v1048 = vmul.f32 %v983, %v997
        %v1049 = vmul.f32 %v984, %v997
        %v1050 = vmul.f32 %v985, %v997
        %v1051 = vmul.f32 %v986, %v997
        %v1052 = vmul.f32 %v987, %v997
        %v1053 = vmul.f32 %v988, %v997
        %v1054 = vmul.f32 %v989, %v997
        %v1055 = vmul.f32 %v990, %v997
        %v1056 = vmul.f32 %v991, %v997
        %v1057 = vmul.f32 %v992, %v997
        %v1058 = vmul.f32 %v993, %v997
        %v1059 = vmul.f32 %v994, %v997
        %v1060 = vmul.f32 %v995, %v997
        %v1061 = vmul.f32 %v996, %v997
        %v1062 = vadd.f32 %v868, %v998
        %v1063 = vadd.f32 %v869, %v999
        %v1064 = vadd.f32 %v870, %v1000
        %v1065 = vadd.f32 %v871, %v1001
        %v1066 = vadd.f32 %v872, %v1002
        %v1067 = vadd.f32 %v873, %v1003
        %v1068 = vadd.f32 %v874, %v1004
        %v1069 = vadd.f32 %v875, %v1005
        %v1070 = vadd.f32 %v876, %v1006
        %v1071 = vadd.f32 %v877, %v1007
        %v1072 = vadd.f32 %v878, %v1008
        %v1073 = vadd.f32 %v879, %v1009
        %v1074 = vadd.f32 %v880, %v1010
        %v1075 = vadd.f32 %v881, %v1011
        %v1076 = vadd.f32 %v882, %v1012
        %v1077 = vadd.f32 %v883, %v1013
        %v1078 = vadd.f32 %v884, %v1014
        %v1079 = vadd.f32 %v885, %v1015
        %v1080 = vadd.f32 %v886, %v1016
        %v1081 = vadd.f32 %v887, %v1017
        %v1082 = vadd.f32 %v888, %v1018
        %v1083 = vadd.f32 %v889, %v1019
        %v1084 = vadd.f32 %v890, %v1020
        %v1085 = vadd.f32 %v891, %v1021
        %v1086 = vadd.f32 %v892, %v1022
        %v1087 = vadd.f32 %v893, %v1023
        %v1088 = vadd.f32 %v894, %v1024
        %v1089 = vadd.f32 %v895, %v1025
        %v1090 = vadd.f32 %v896, %v1026
        %v1091 = vadd.f32 %v897, %v1027
        %v1092 = vadd.f32 %v898, %v1028
        %v1093 = vadd.f32 %v899, %v1029
        %v1094 = vadd.f32 %v900, %v1030
        %v1095 = vadd.f32 %v901, %v1031
        %v1096 = vadd.f32 %v902, %v1032
        %v1097 = vadd.f32 %v903, %v1033
        %v1098 = vadd.f32 %v904, %v1034
        %v1099 = vadd.f32 %v905, %v1035
        %v1100 = vadd.f32 %v906, %v1036
        %v1101 = vadd.f32 %v907, %v1037
        %v1102 = vadd.f32 %v908, %v1038
        %v1103 = vadd.f32 %v909, %v1039
        %v1104 = vadd.f32 %v910, %v1040
        %v1105 = vadd.f32 %v911, %v1041
        %v1106 = vadd.f32 %v912, %v1042
        %v1107 = vadd.f32 %v913, %v1043
        %v1108 = vadd.f32 %v914, %v1044
        %v1109 = vadd.f32 %v915, %v1045
        %v1110 = vadd.f32 %v916, %v1046
        %v1111 = vadd.f32 %v917, %v1047
        %v1112 = vadd.f32 %v918, %v1048
        %v1113 = vadd.f32 %v919, %v1049
        %v1114 = vadd.f32 %v920, %v1050
        %v1115 = vadd.f32 %v921, %v1051
        %v1116 = vadd.f32 %v922, %v1052
        %v1117 = vadd.f32 %v923, %v1053
        %v1118 = vadd.f32 %v924, %v1054
        %v1119 = vadd.f32 %v925, %v1055
        %v1120 = vadd.f32 %v926, %v1056
        %v1121 = vadd.f32 %v927, %v1057
        %v1122 = vadd.f32 %v928, %v1058
        %v1123 = vadd.f32 %v929, %v1059
        %v1124 = vadd.f32 %v930, %v1060
        %v1125 = vadd.f32 %v931, %v1061
        %v1126 = vld [vmem:[#allocation6 + $0x3] sm:$0x1]
        %s1127 = scalar_lea.vmem [#allocation2], 16
        %v1128 = vld [vmem:[%s1127] sm:$0xff]
        %v1129 = vld [vmem:[%s1127 + $0x10] sm:$0xff]
        %v1130 = vld [vmem:[%s1127 + $0x20] sm:$0xff]
        %v1131 = vld [vmem:[%s1127 + $0x30] sm:$0xff]
        %v1132 = vld [vmem:[%s1127 + $0x40] sm:$0xff]
        %v1133 = vld [vmem:[%s1127 + $0x50] sm:$0xff]
        %v1134 = vld [vmem:[%s1127 + $0x60] sm:$0xff]
        %v1135 = vld [vmem:[%s1127 + $0x70] sm:$0xff]
        %v1136 = vld [vmem:[%s1127 + $0xa0] sm:$0xff]
        %v1137 = vld [vmem:[%s1127 + $0xb0] sm:$0xff]
        %v1138 = vld [vmem:[%s1127 + $0xc0] sm:$0xff]
        %v1139 = vld [vmem:[%s1127 + $0xd0] sm:$0xff]
        %v1140 = vld [vmem:[%s1127 + $0xe0] sm:$0xff]
        %v1141 = vld [vmem:[%s1127 + $0xf0] sm:$0xff]
        %v1142 = vld [vmem:[%s1127 + $0x100] sm:$0xff]
        %v1143 = vld [vmem:[%s1127 + $0x110] sm:$0xff]
        %v1144 = vld [vmem:[%s1127 + $0x140] sm:$0xff]
        %v1145 = vld [vmem:[%s1127 + $0x150] sm:$0xff]
        %v1146 = vld [vmem:[%s1127 + $0x160] sm:$0xff]
        %v1147 = vld [vmem:[%s1127 + $0x170] sm:$0xff]
        %v1148 = vld [vmem:[%s1127 + $0x180] sm:$0xff]
        %v1149 = vld [vmem:[%s1127 + $0x190] sm:$0xff]
        %v1150 = vld [vmem:[%s1127 + $0x1a0] sm:$0xff]
        %v1151 = vld [vmem:[%s1127 + $0x1b0] sm:$0xff]
        %v1152 = vld [vmem:[%s1127 + $0x1e0] sm:$0xff]
        %v1153 = vld [vmem:[%s1127 + $0x1f0] sm:$0xff]
        %v1154 = vld [vmem:[%s1127 + $0x200] sm:$0xff]
        %v1155 = vld [vmem:[%s1127 + $0x210] sm:$0xff]
        %v1156 = vld [vmem:[%s1127 + $0x220] sm:$0xff]
        %v1157 = vld [vmem:[%s1127 + $0x230] sm:$0xff]
        %v1158 = vld [vmem:[%s1127 + $0x240] sm:$0xff]
        %v1159 = vld [vmem:[%s1127 + $0x250] sm:$0xff]
        %v1160 = vld [vmem:[%s1127 + $0x280] sm:$0xff]
        %v1161 = vld [vmem:[%s1127 + $0x290] sm:$0xff]
        %v1162 = vld [vmem:[%s1127 + $0x2a0] sm:$0xff]
        %v1163 = vld [vmem:[%s1127 + $0x2b0] sm:$0xff]
        %v1164 = vld [vmem:[%s1127 + $0x2c0] sm:$0xff]
        %v1165 = vld [vmem:[%s1127 + $0x2d0] sm:$0xff]
        %v1166 = vld [vmem:[%s1127 + $0x2e0] sm:$0xff]
        %v1167 = vld [vmem:[%s1127 + $0x2f0] sm:$0xff]
        %v1168 = vld [vmem:[%s1127 + $0x320] sm:$0xff]
        %v1169 = vld [vmem:[%s1127 + $0x330] sm:$0xff]
        %v1170 = vld [vmem:[%s1127 + $0x340] sm:$0xff]
        %v1171 = vld [vmem:[%s1127 + $0x350] sm:$0xff]
        %v1172 = vld [vmem:[%s1127 + $0x360] sm:$0xff]
        %v1173 = vld [vmem:[%s1127 + $0x370] sm:$0xff]
        %v1174 = vld [vmem:[%s1127 + $0x380] sm:$0xff]
        %v1175 = vld [vmem:[%s1127 + $0x390] sm:$0xff]
        %v1176 = vld [vmem:[%s1127 + $0x3c0] sm:$0xff]
        %v1177 = vld [vmem:[%s1127 + $0x3d0] sm:$0xff]
        %v1178 = vld [vmem:[%s1127 + $0x3e0] sm:$0xff]
        %v1179 = vld [vmem:[%s1127 + $0x3f0] sm:$0xff]
        %v1180 = vld [vmem:[%s1127 + $0x400] sm:$0xff]
        %v1181 = vld [vmem:[%s1127 + $0x410] sm:$0xff]
        %v1182 = vld [vmem:[%s1127 + $0x420] sm:$0xff]
        %v1183 = vld [vmem:[%s1127 + $0x430] sm:$0xff]
        %v1184 = vld [vmem:[%s1127 + $0x460] sm:$0xff]
        %v1185 = vld [vmem:[%s1127 + $0x470] sm:$0xff]
        %v1186 = vld [vmem:[%s1127 + $0x480] sm:$0xff]
        %v1187 = vld [vmem:[%s1127 + $0x490] sm:$0xff]
        %v1188 = vld [vmem:[%s1127 + $0x4a0] sm:$0xff]
        %v1189 = vld [vmem:[%s1127 + $0x4b0] sm:$0xff]
        %v1190 = vld [vmem:[%s1127 + $0x4c0] sm:$0xff]
        %v1191 = vld [vmem:[%s1127 + $0x4d0] sm:$0xff]
        %v1192 = vperm.slane %v1126, 0
        %v1193 = vmul.f32 %v1128, %v1192
        %v1194 = vmul.f32 %v1129, %v1192
        %v1195 = vmul.f32 %v1130, %v1192
        %v1196 = vmul.f32 %v1131, %v1192
        %v1197 = vmul.f32 %v1132, %v1192
        %v1198 = vmul.f32 %v1133, %v1192
        %v1199 = vmul.f32 %v1134, %v1192
        %v1200 = vmul.f32 %v1135, %v1192
        %v1201 = vmul.f32 %v1136, %v1192
        %v1202 = vmul.f32 %v1137, %v1192
        %v1203 = vmul.f32 %v1138, %v1192
        %v1204 = vmul.f32 %v1139, %v1192
        %v1205 = vmul.f32 %v1140, %v1192
        %v1206 = vmul.f32 %v1141, %v1192
        %v1207 = vmul.f32 %v1142, %v1192
        %v1208 = vmul.f32 %v1143, %v1192
        %v1209 = vmul.f32 %v1144, %v1192
        %v1210 = vmul.f32 %v1145, %v1192
        %v1211 = vmul.f32 %v1146, %v1192
        %v1212 = vmul.f32 %v1147, %v1192
        %v1213 = vmul.f32 %v1148, %v1192
        %v1214 = vmul.f32 %v1149, %v1192
        %v1215 = vmul.f32 %v1150, %v1192
        %v1216 = vmul.f32 %v1151, %v1192
        %v1217 = vmul.f32 %v1152, %v1192
        %v1218 = vmul.f32 %v1153, %v1192
        %v1219 = vmul.f32 %v1154, %v1192
        %v1220 = vmul.f32 %v1155, %v1192
        %v1221 = vmul.f32 %v1156, %v1192
        %v1222 = vmul.f32 %v1157, %v1192
        %v1223 = vmul.f32 %v1158, %v1192
        %v1224 = vmul.f32 %v1159, %v1192
        %v1225 = vmul.f32 %v1160, %v1192
        %v1226 = vmul.f32 %v1161, %v1192
        %v1227 = vmul.f32 %v1162, %v1192
        %v1228 = vmul.f32 %v1163, %v1192
        %v1229 = vmul.f32 %v1164, %v1192
        %v1230 = vmul.f32 %v1165, %v1192
        %v1231 = vmul.f32 %v1166, %v1192
        %v1232 = vmul.f32 %v1167, %v1192
        %v1233 = vmul.f32 %v1168, %v1192
        %v1234 = vmul.f32 %v1169, %v1192
        %v1235 = vmul.f32 %v1170, %v1192
        %v1236 = vmul.f32 %v1171, %v1192
        %v1237 = vmul.f32 %v1172, %v1192
        %v1238 = vmul.f32 %v1173, %v1192
        %v1239 = vmul.f32 %v1174, %v1192
        %v1240 = vmul.f32 %v1175, %v1192
        %v1241 = vmul.f32 %v1176, %v1192
        %v1242 = vmul.f32 %v1177, %v1192
        %v1243 = vmul.f32 %v1178, %v1192
        %v1244 = vmul.f32 %v1179, %v1192
        %v1245 = vmul.f32 %v1180, %v1192
        %v1246 = vmul.f32 %v1181, %v1192
        %v1247 = vmul.f32 %v1182, %v1192
        %v1248 = vmul.f32 %v1183, %v1192
        %v1249 = vmul.f32 %v1184, %v1192
        %v1250 = vmul.f32 %v1185, %v1192
        %v1251 = vmul.f32 %v1186, %v1192
        %v1252 = vmul.f32 %v1187, %v1192
        %v1253 = vmul.f32 %v1188, %v1192
        %v1254 = vmul.f32 %v1189, %v1192
        %v1255 = vmul.f32 %v1190, %v1192
        %v1256 = vmul.f32 %v1191, %v1192
        %v1257 = vadd.f32 %v1062, %v1193
        %v1258 = vadd.f32 %v1063, %v1194
        %v1259 = vadd.f32 %v1064, %v1195
        %v1260 = vadd.f32 %v1065, %v1196
        %v1261 = vadd.f32 %v1066, %v1197
        %v1262 = vadd.f32 %v1067, %v1198
        %v1263 = vadd.f32 %v1068, %v1199
        %v1264 = vadd.f32 %v1069, %v1200
        %v1265 = vadd.f32 %v1070, %v1201
        %v1266 = vadd.f32 %v1071, %v1202
        %v1267 = vadd.f32 %v1072, %v1203
        %v1268 = vadd.f32 %v1073, %v1204
        %v1269 = vadd.f32 %v1074, %v1205
        %v1270 = vadd.f32 %v1075, %v1206
        %v1271 = vadd.f32 %v1076, %v1207
        %v1272 = vadd.f32 %v1077, %v1208
        %v1273 = vadd.f32 %v1078, %v1209
        %v1274 = vadd.f32 %v1079, %v1210
        %v1275 = vadd.f32 %v1080, %v1211
        %v1276 = vadd.f32 %v1081, %v1212
        %v1277 = vadd.f32 %v1082, %v1213
        %v1278 = vadd.f32 %v1083, %v1214
        %v1279 = vadd.f32 %v1084, %v1215
        %v1280 = vadd.f32 %v1085, %v1216
        %v1281 = vadd.f32 %v1086, %v1217
        %v1282 = vadd.f32 %v1087, %v1218
        %v1283 = vadd.f32 %v1088, %v1219
        %v1284 = vadd.f32 %v1089, %v1220
        %v1285 = vadd.f32 %v1090, %v1221
        %v1286 = vadd.f32 %v1091, %v1222
        %v1287 = vadd.f32 %v1092, %v1223
        %v1288 = vadd.f32 %v1093, %v1224
        %v1289 = vadd.f32 %v1094, %v1225
        %v1290 = vadd.f32 %v1095, %v1226
        %v1291 = vadd.f32 %v1096, %v1227
        %v1292 = vadd.f32 %v1097, %v1228
        %v1293 = vadd.f32 %v1098, %v1229
        %v1294 = vadd.f32 %v1099, %v1230
        %v1295 = vadd.f32 %v1100, %v1231
        %v1296 = vadd.f32 %v1101, %v1232
        %v1297 = vadd.f32 %v1102, %v1233
        %v1298 = vadd.f32 %v1103, %v1234
        %v1299 = vadd.f32 %v1104, %v1235
        %v1300 = vadd.f32 %v1105, %v1236
        %v1301 = vadd.f32 %v1106, %v1237
        %v1302 = vadd.f32 %v1107, %v1238
        %v1303 = vadd.f32 %v1108, %v1239
        %v1304 = vadd.f32 %v1109, %v1240
        %v1305 = vadd.f32 %v1110, %v1241
        %v1306 = vadd.f32 %v1111, %v1242
        %v1307 = vadd.f32 %v1112, %v1243
        %v1308 = vadd.f32 %v1113, %v1244
        %v1309 = vadd.f32 %v1114, %v1245
        %v1310 = vadd.f32 %v1115, %v1246
        %v1311 = vadd.f32 %v1116, %v1247
        %v1312 = vadd.f32 %v1117, %v1248
        %v1313 = vadd.f32 %v1118, %v1249
        %v1314 = vadd.f32 %v1119, %v1250
        %v1315 = vadd.f32 %v1120, %v1251
        %v1316 = vadd.f32 %v1121, %v1252
        %v1317 = vadd.f32 %v1122, %v1253
        %v1318 = vadd.f32 %v1123, %v1254
        %v1319 = vadd.f32 %v1124, %v1255
        %v1320 = vadd.f32 %v1125, %v1256
        %v1321 = vld [vmem:[#allocation6 + $0x4] sm:$0x1]
        %v1322 = vld [vmem:[%s1127 + $0x1] sm:$0xff]
        %v1323 = vld [vmem:[%s1127 + $0x11] sm:$0xff]
        %v1324 = vld [vmem:[%s1127 + $0x21] sm:$0xff]
        %v1325 = vld [vmem:[%s1127 + $0x31] sm:$0xff]
        %v1326 = vld [vmem:[%s1127 + $0x41] sm:$0xff]
        %v1327 = vld [vmem:[%s1127 + $0x51] sm:$0xff]
        %v1328 = vld [vmem:[%s1127 + $0x61] sm:$0xff]
        %v1329 = vld [vmem:[%s1127 + $0x71] sm:$0xff]
        %v1330 = vld [vmem:[%s1127 + $0xa1] sm:$0xff]
        %v1331 = vld [vmem:[%s1127 + $0xb1] sm:$0xff]
        %v1332 = vld [vmem:[%s1127 + $0xc1] sm:$0xff]
        %v1333 = vld [vmem:[%s1127 + $0xd1] sm:$0xff]
        %v1334 = vld [vmem:[%s1127 + $0xe1] sm:$0xff]
        %v1335 = vld [vmem:[%s1127 + $0xf1] sm:$0xff]
        %v1336 = vld [vmem:[%s1127 + $0x101] sm:$0xff]
        %v1337 = vld [vmem:[%s1127 + $0x111] sm:$0xff]
        %v1338 = vld [vmem:[%s1127 + $0x141] sm:$0xff]
        %v1339 = vld [vmem:[%s1127 + $0x151] sm:$0xff]
        %v1340 = vld [vmem:[%s1127 + $0x161] sm:$0xff]
        %v1341 = vld [vmem:[%s1127 + $0x171] sm:$0xff]
        %v1342 = vld [vmem:[%s1127 + $0x181] sm:$0xff]
        %v1343 = vld [vmem:[%s1127 + $0x191] sm:$0xff]
        %v1344 = vld [vmem:[%s1127 + $0x1a1] sm:$0xff]
        %v1345 = vld [vmem:[%s1127 + $0x1b1] sm:$0xff]
        %v1346 = vld [vmem:[%s1127 + $0x1e1] sm:$0xff]
        %v1347 = vld [vmem:[%s1127 + $0x1f1] sm:$0xff]
        %v1348 = vld [vmem:[%s1127 + $0x201] sm:$0xff]
        %v1349 = vld [vmem:[%s1127 + $0x211] sm:$0xff]
        %v1350 = vld [vmem:[%s1127 + $0x221] sm:$0xff]
        %v1351 = vld [vmem:[%s1127 + $0x231] sm:$0xff]
        %v1352 = vld [vmem:[%s1127 + $0x241] sm:$0xff]
        %v1353 = vld [vmem:[%s1127 + $0x251] sm:$0xff]
        %v1354 = vld [vmem:[%s1127 + $0x281] sm:$0xff]
        %v1355 = vld [vmem:[%s1127 + $0x291] sm:$0xff]
        %v1356 = vld [vmem:[%s1127 + $0x2a1] sm:$0xff]
        %v1357 = vld [vmem:[%s1127 + $0x2b1] sm:$0xff]
        %v1358 = vld [vmem:[%s1127 + $0x2c1] sm:$0xff]
        %v1359 = vld [vmem:[%s1127 + $0x2d1] sm:$0xff]
        %v1360 = vld [vmem:[%s1127 + $0x2e1] sm:$0xff]
        %v1361 = vld [vmem:[%s1127 + $0x2f1] sm:$0xff]
        %v1362 = vld [vmem:[%s1127 + $0x321] sm:$0xff]
        %v1363 = vld [vmem:[%s1127 + $0x331] sm:$0xff]
        %v1364 = vld [vmem:[%s1127 + $0x341] sm:$0xff]
        %v1365 = vld [vmem:[%s1127 + $0x351] sm:$0xff]
        %v1366 = vld [vmem:[%s1127 + $0x361] sm:$0xff]
        %v1367 = vld [vmem:[%s1127 + $0x371] sm:$0xff]
        %v1368 = vld [vmem:[%s1127 + $0x381] sm:$0xff]
        %v1369 = vld [vmem:[%s1127 + $0x391] sm:$0xff]
        %v1370 = vld [vmem:[%s1127 + $0x3c1] sm:$0xff]
        %v1371 = vld [vmem:[%s1127 + $0x3d1] sm:$0xff]
        %v1372 = vld [vmem:[%s1127 + $0x3e1] sm:$0xff]
        %v1373 = vld [vmem:[%s1127 + $0x3f1] sm:$0xff]
        %v1374 = vld [vmem:[%s1127 + $0x401] sm:$0xff]
        %v1375 = vld [vmem:[%s1127 + $0x411] sm:$0xff]
        %v1376 = vld [vmem:[%s1127 + $0x421] sm:$0xff]
        %v1377 = vld [vmem:[%s1127 + $0x431] sm:$0xff]
        %v1378 = vld [vmem:[%s1127 + $0x461] sm:$0xff]
        %v1379 = vld [vmem:[%s1127 + $0x471] sm:$0xff]
        %v1380 = vld [vmem:[%s1127 + $0x481] sm:$0xff]
        %v1381 = vld [vmem:[%s1127 + $0x491] sm:$0xff]
        %v1382 = vld [vmem:[%s1127 + $0x4a1] sm:$0xff]
        %v1383 = vld [vmem:[%s1127 + $0x4b1] sm:$0xff]
        %v1384 = vld [vmem:[%s1127 + $0x4c1] sm:$0xff]
        %v1385 = vld [vmem:[%s1127 + $0x4d1] sm:$0xff]
        %v1386 = vperm.slane %v1321, 0
        %v1387 = vmul.f32 %v1322, %v1386
        %v1388 = vmul.f32 %v1323, %v1386
        %v1389 = vmul.f32 %v1324, %v1386
        %v1390 = vmul.f32 %v1325, %v1386
        %v1391 = vmul.f32 %v1326, %v1386
        %v1392 = vmul.f32 %v1327, %v1386
        %v1393 = vmul.f32 %v1328, %v1386
        %v1394 = vmul.f32 %v1329, %v1386
        %v1395 = vmul.f32 %v1330, %v1386
        %v1396 = vmul.f32 %v1331, %v1386
        %v1397 = vmul.f32 %v1332, %v1386
        %v1398 = vmul.f32 %v1333, %v1386
        %v1399 = vmul.f32 %v1334, %v1386
        %v1400 = vmul.f32 %v1335, %v1386
        %v1401 = vmul.f32 %v1336, %v1386
        %v1402 = vmul.f32 %v1337, %v1386
        %v1403 = vmul.f32 %v1338, %v1386
        %v1404 = vmul.f32 %v1339, %v1386
        %v1405 = vmul.f32 %v1340, %v1386
        %v1406 = vmul.f32 %v1341, %v1386
        %v1407 = vmul.f32 %v1342, %v1386
        %v1408 = vmul.f32 %v1343, %v1386
        %v1409 = vmul.f32 %v1344, %v1386
        %v1410 = vmul.f32 %v1345, %v1386
        %v1411 = vmul.f32 %v1346, %v1386
        %v1412 = vmul.f32 %v1347, %v1386
        %v1413 = vmul.f32 %v1348, %v1386
        %v1414 = vmul.f32 %v1349, %v1386
        %v1415 = vmul.f32 %v1350, %v1386
        %v1416 = vmul.f32 %v1351, %v1386
        %v1417 = vmul.f32 %v1352, %v1386
        %v1418 = vmul.f32 %v1353, %v1386
        %v1419 = vmul.f32 %v1354, %v1386
        %v1420 = vmul.f32 %v1355, %v1386
        %v1421 = vmul.f32 %v1356, %v1386
        %v1422 = vmul.f32 %v1357, %v1386
        %v1423 = vmul.f32 %v1358, %v1386
        %v1424 = vmul.f32 %v1359, %v1386
        %v1425 = vmul.f32 %v1360, %v1386
        %v1426 = vmul.f32 %v1361, %v1386
        %v1427 = vmul.f32 %v1362, %v1386
        %v1428 = vmul.f32 %v1363, %v1386
        %v1429 = vmul.f32 %v1364, %v1386
        %v1430 = vmul.f32 %v1365, %v1386
        %v1431 = vmul.f32 %v1366, %v1386
        %v1432 = vmul.f32 %v1367, %v1386
        %v1433 = vmul.f32 %v1368, %v1386
        %v1434 = vmul.f32 %v1369, %v1386
        %v1435 = vmul.f32 %v1370, %v1386
        %v1436 = vmul.f32 %v1371, %v1386
        %v1437 = vmul.f32 %v1372, %v1386
        %v1438 = vmul.f32 %v1373, %v1386
        %v1439 = vmul.f32 %v1374, %v1386
        %v1440 = vmul.f32 %v1375, %v1386
        %v1441 = vmul.f32 %v1376, %v1386
        %v1442 = vmul.f32 %v1377, %v1386
        %v1443 = vmul.f32 %v1378, %v1386
        %v1444 = vmul.f32 %v1379, %v1386
        %v1445 = vmul.f32 %v1380, %v1386
        %v1446 = vmul.f32 %v1381, %v1386
        %v1447 = vmul.f32 %v1382, %v1386
        %v1448 = vmul.f32 %v1383, %v1386
        %v1449 = vmul.f32 %v1384, %v1386
        %v1450 = vmul.f32 %v1385, %v1386
        %v1451 = vadd.f32 %v1257, %v1387
        %v1452 = vadd.f32 %v1258, %v1388
        %v1453 = vadd.f32 %v1259, %v1389
        %v1454 = vadd.f32 %v1260, %v1390
        %v1455 = vadd.f32 %v1261, %v1391
        %v1456 = vadd.f32 %v1262, %v1392
        %v1457 = vadd.f32 %v1263, %v1393
        %v1458 = vadd.f32 %v1264, %v1394
        %v1459 = vadd.f32 %v1265, %v1395
        %v1460 = vadd.f32 %v1266, %v1396
        %v1461 = vadd.f32 %v1267, %v1397
        %v1462 = vadd.f32 %v1268, %v1398
        %v1463 = vadd.f32 %v1269, %v1399
        %v1464 = vadd.f32 %v1270, %v1400
        %v1465 = vadd.f32 %v1271, %v1401
        %v1466 = vadd.f32 %v1272, %v1402
        %v1467 = vadd.f32 %v1273, %v1403
        %v1468 = vadd.f32 %v1274, %v1404
        %v1469 = vadd.f32 %v1275, %v1405
        %v1470 = vadd.f32 %v1276, %v1406
        %v1471 = vadd.f32 %v1277, %v1407
        %v1472 = vadd.f32 %v1278, %v1408
        %v1473 = vadd.f32 %v1279, %v1409
        %v1474 = vadd.f32 %v1280, %v1410
        %v1475 = vadd.f32 %v1281, %v1411
        %v1476 = vadd.f32 %v1282, %v1412
        %v1477 = vadd.f32 %v1283, %v1413
        %v1478 = vadd.f32 %v1284, %v1414
        %v1479 = vadd.f32 %v1285, %v1415
        %v1480 = vadd.f32 %v1286, %v1416
        %v1481 = vadd.f32 %v1287, %v1417
        %v1482 = vadd.f32 %v1288, %v1418
        %v1483 = vadd.f32 %v1289, %v1419
        %v1484 = vadd.f32 %v1290, %v1420
        %v1485 = vadd.f32 %v1291, %v1421
        %v1486 = vadd.f32 %v1292, %v1422
        %v1487 = vadd.f32 %v1293, %v1423
        %v1488 = vadd.f32 %v1294, %v1424
        %v1489 = vadd.f32 %v1295, %v1425
        %v1490 = vadd.f32 %v1296, %v1426
        %v1491 = vadd.f32 %v1297, %v1427
        %v1492 = vadd.f32 %v1298, %v1428
        %v1493 = vadd.f32 %v1299, %v1429
        %v1494 = vadd.f32 %v1300, %v1430
        %v1495 = vadd.f32 %v1301, %v1431
        %v1496 = vadd.f32 %v1302, %v1432
        %v1497 = vadd.f32 %v1303, %v1433
        %v1498 = vadd.f32 %v1304, %v1434
        %v1499 = vadd.f32 %v1305, %v1435
        %v1500 = vadd.f32 %v1306, %v1436
        %v1501 = vadd.f32 %v1307, %v1437
        %v1502 = vadd.f32 %v1308, %v1438
        %v1503 = vadd.f32 %v1309, %v1439
        %v1504 = vadd.f32 %v1310, %v1440
        %v1505 = vadd.f32 %v1311, %v1441
        %v1506 = vadd.f32 %v1312, %v1442
        %v1507 = vadd.f32 %v1313, %v1443
        %v1508 = vadd.f32 %v1314, %v1444
        %v1509 = vadd.f32 %v1315, %v1445
        %v1510 = vadd.f32 %v1316, %v1446
        %v1511 = vadd.f32 %v1317, %v1447
        %v1512 = vadd.f32 %v1318, %v1448
        %v1513 = vadd.f32 %v1319, %v1449
        %v1514 = vadd.f32 %v1320, %v1450
        %v1515 = vld [vmem:[#allocation6 + $0x5] sm:$0x1]
        %v1516 = vld [vmem:[%s1127 + $0x2] sm:$0xff]
        %v1517 = vld [vmem:[%s1127 + $0x12] sm:$0xff]
        %v1518 = vld [vmem:[%s1127 + $0x22] sm:$0xff]
        %v1519 = vld [vmem:[%s1127 + $0x32] sm:$0xff]
        %v1520 = vld [vmem:[%s1127 + $0x42] sm:$0xff]
        %v1521 = vld [vmem:[%s1127 + $0x52] sm:$0xff]
        %v1522 = vld [vmem:[%s1127 + $0x62] sm:$0xff]
        %v1523 = vld [vmem:[%s1127 + $0x72] sm:$0xff]
        %v1524 = vld [vmem:[%s1127 + $0xa2] sm:$0xff]
        %v1525 = vld [vmem:[%s1127 + $0xb2] sm:$0xff]
        %v1526 = vld [vmem:[%s1127 + $0xc2] sm:$0xff]
        %v1527 = vld [vmem:[%s1127 + $0xd2] sm:$0xff]
        %v1528 = vld [vmem:[%s1127 + $0xe2] sm:$0xff]
        %v1529 = vld [vmem:[%s1127 + $0xf2] sm:$0xff]
        %v1530 = vld [vmem:[%s1127 + $0x102] sm:$0xff]
        %v1531 = vld [vmem:[%s1127 + $0x112] sm:$0xff]
        %v1532 = vld [vmem:[%s1127 + $0x142] sm:$0xff]
        %v1533 = vld [vmem:[%s1127 + $0x152] sm:$0xff]
        %v1534 = vld [vmem:[%s1127 + $0x162] sm:$0xff]
        %v1535 = vld [vmem:[%s1127 + $0x172] sm:$0xff]
        %v1536 = vld [vmem:[%s1127 + $0x182] sm:$0xff]
        %v1537 = vld [vmem:[%s1127 + $0x192] sm:$0xff]
        %v1538 = vld [vmem:[%s1127 + $0x1a2] sm:$0xff]
        %v1539 = vld [vmem:[%s1127 + $0x1b2] sm:$0xff]
        %v1540 = vld [vmem:[%s1127 + $0x1e2] sm:$0xff]
        %v1541 = vld [vmem:[%s1127 + $0x1f2] sm:$0xff]
        %v1542 = vld [vmem:[%s1127 + $0x202] sm:$0xff]
        %v1543 = vld [vmem:[%s1127 + $0x212] sm:$0xff]
        %v1544 = vld [vmem:[%s1127 + $0x222] sm:$0xff]
        %v1545 = vld [vmem:[%s1127 + $0x232] sm:$0xff]
        %v1546 = vld [vmem:[%s1127 + $0x242] sm:$0xff]
        %v1547 = vld [vmem:[%s1127 + $0x252] sm:$0xff]
        %v1548 = vld [vmem:[%s1127 + $0x282] sm:$0xff]
        %v1549 = vld [vmem:[%s1127 + $0x292] sm:$0xff]
        %v1550 = vld [vmem:[%s1127 + $0x2a2] sm:$0xff]
        %v1551 = vld [vmem:[%s1127 + $0x2b2] sm:$0xff]
        %v1552 = vld [vmem:[%s1127 + $0x2c2] sm:$0xff]
        %v1553 = vld [vmem:[%s1127 + $0x2d2] sm:$0xff]
        %v1554 = vld [vmem:[%s1127 + $0x2e2] sm:$0xff]
        %v1555 = vld [vmem:[%s1127 + $0x2f2] sm:$0xff]
        %v1556 = vld [vmem:[%s1127 + $0x322] sm:$0xff]
        %v1557 = vld [vmem:[%s1127 + $0x332] sm:$0xff]
        %v1558 = vld [vmem:[%s1127 + $0x342] sm:$0xff]
        %v1559 = vld [vmem:[%s1127 + $0x352] sm:$0xff]
        %v1560 = vld [vmem:[%s1127 + $0x362] sm:$0xff]
        %v1561 = vld [vmem:[%s1127 + $0x372] sm:$0xff]
        %v1562 = vld [vmem:[%s1127 + $0x382] sm:$0xff]
        %v1563 = vld [vmem:[%s1127 + $0x392] sm:$0xff]
        %v1564 = vld [vmem:[%s1127 + $0x3c2] sm:$0xff]
        %v1565 = vld [vmem:[%s1127 + $0x3d2] sm:$0xff]
        %v1566 = vld [vmem:[%s1127 + $0x3e2] sm:$0xff]
        %v1567 = vld [vmem:[%s1127 + $0x3f2] sm:$0xff]
        %v1568 = vld [vmem:[%s1127 + $0x402] sm:$0xff]
        %v1569 = vld [vmem:[%s1127 + $0x412] sm:$0xff]
        %v1570 = vld [vmem:[%s1127 + $0x422] sm:$0xff]
        %v1571 = vld [vmem:[%s1127 + $0x432] sm:$0xff]
        %v1572 = vld [vmem:[%s1127 + $0x462] sm:$0xff]
        %v1573 = vld [vmem:[%s1127 + $0x472] sm:$0xff]
        %v1574 = vld [vmem:[%s1127 + $0x482] sm:$0xff]
        %v1575 = vld [vmem:[%s1127 + $0x492] sm:$0xff]
        %v1576 = vld [vmem:[%s1127 + $0x4a2] sm:$0xff]
        %v1577 = vld [vmem:[%s1127 + $0x4b2] sm:$0xff]
        %v1578 = vld [vmem:[%s1127 + $0x4c2] sm:$0xff]
        %v1579 = vld [vmem:[%s1127 + $0x4d2] sm:$0xff]
        %v1580 = vperm.slane %v1515, 0
        %v1581 = vmul.f32 %v1516, %v1580
        %v1582 = vmul.f32 %v1517, %v1580
        %v1583 = vmul.f32 %v1518, %v1580
        %v1584 = vmul.f32 %v1519, %v1580
        %v1585 = vmul.f32 %v1520, %v1580
        %v1586 = vmul.f32 %v1521, %v1580
        %v1587 = vmul.f32 %v1522, %v1580
        %v1588 = vmul.f32 %v1523, %v1580
        %v1589 = vmul.f32 %v1524, %v1580
        %v1590 = vmul.f32 %v1525, %v1580
        %v1591 = vmul.f32 %v1526, %v1580
        %v1592 = vmul.f32 %v1527, %v1580
        %v1593 = vmul.f32 %v1528, %v1580
        %v1594 = vmul.f32 %v1529, %v1580
        %v1595 = vmul.f32 %v1530, %v1580
        %v1596 = vmul.f32 %v1531, %v1580
        %v1597 = vmul.f32 %v1532, %v1580
        %v1598 = vmul.f32 %v1533, %v1580
        %v1599 = vmul.f32 %v1534, %v1580
        %v1600 = vmul.f32 %v1535, %v1580
        %v1601 = vmul.f32 %v1536, %v1580
        %v1602 = vmul.f32 %v1537, %v1580
        %v1603 = vmul.f32 %v1538, %v1580
        %v1604 = vmul.f32 %v1539, %v1580
        %v1605 = vmul.f32 %v1540, %v1580
        %v1606 = vmul.f32 %v1541, %v1580
        %v1607 = vmul.f32 %v1542, %v1580
        %v1608 = vmul.f32 %v1543, %v1580
        %v1609 = vmul.f32 %v1544, %v1580
        %v1610 = vmul.f32 %v1545, %v1580
        %v1611 = vmul.f32 %v1546, %v1580
        %v1612 = vmul.f32 %v1547, %v1580
        %v1613 = vmul.f32 %v1548, %v1580
        %v1614 = vmul.f32 %v1549, %v1580
        %v1615 = vmul.f32 %v1550, %v1580
        %v1616 = vmul.f32 %v1551, %v1580
        %v1617 = vmul.f32 %v1552, %v1580
        %v1618 = vmul.f32 %v1553, %v1580
        %v1619 = vmul.f32 %v1554, %v1580
        %v1620 = vmul.f32 %v1555, %v1580
        %v1621 = vmul.f32 %v1556, %v1580
        %v1622 = vmul.f32 %v1557, %v1580
        %v1623 = vmul.f32 %v1558, %v1580
        %v1624 = vmul.f32 %v1559, %v1580
        %v1625 = vmul.f32 %v1560, %v1580
        %v1626 = vmul.f32 %v1561, %v1580
        %v1627 = vmul.f32 %v1562, %v1580
        %v1628 = vmul.f32 %v1563, %v1580
        %v1629 = vmul.f32 %v1564, %v1580
        %v1630 = vmul.f32 %v1565, %v1580
        %v1631 = vmul.f32 %v1566, %v1580
        %v1632 = vmul.f32 %v1567, %v1580
        %v1633 = vmul.f32 %v1568, %v1580
        %v1634 = vmul.f32 %v1569, %v1580
        %v1635 = vmul.f32 %v1570, %v1580
        %v1636 = vmul.f32 %v1571, %v1580
        %v1637 = vmul.f32 %v1572, %v1580
        %v1638 = vmul.f32 %v1573, %v1580
        %v1639 = vmul.f32 %v1574, %v1580
        %v1640 = vmul.f32 %v1575, %v1580
        %v1641 = vmul.f32 %v1576, %v1580
        %v1642 = vmul.f32 %v1577, %v1580
        %v1643 = vmul.f32 %v1578, %v1580
        %v1644 = vmul.f32 %v1579, %v1580
        %v1645 = vadd.f32 %v1451, %v1581
        %v1646 = vadd.f32 %v1452, %v1582
        %v1647 = vadd.f32 %v1453, %v1583
        %v1648 = vadd.f32 %v1454, %v1584
        %v1649 = vadd.f32 %v1455, %v1585
        %v1650 = vadd.f32 %v1456, %v1586
        %v1651 = vadd.f32 %v1457, %v1587
        %v1652 = vadd.f32 %v1458, %v1588
        %v1653 = vadd.f32 %v1459, %v1589
        %v1654 = vadd.f32 %v1460, %v1590
        %v1655 = vadd.f32 %v1461, %v1591
        %v1656 = vadd.f32 %v1462, %v1592
        %v1657 = vadd.f32 %v1463, %v1593
        %v1658 = vadd.f32 %v1464, %v1594
        %v1659 = vadd.f32 %v1465, %v1595
        %v1660 = vadd.f32 %v1466, %v1596
        %v1661 = vadd.f32 %v1467, %v1597
        %v1662 = vadd.f32 %v1468, %v1598
        %v1663 = vadd.f32 %v1469, %v1599
        %v1664 = vadd.f32 %v1470, %v1600
        %v1665 = vadd.f32 %v1471, %v1601
        %v1666 = vadd.f32 %v1472, %v1602
        %v1667 = vadd.f32 %v1473, %v1603
        %v1668 = vadd.f32 %v1474, %v1604
        %v1669 = vadd.f32 %v1475, %v1605
        %v1670 = vadd.f32 %v1476, %v1606
        %v1671 = vadd.f32 %v1477, %v1607
        %v1672 = vadd.f32 %v1478, %v1608
        %v1673 = vadd.f32 %v1479, %v1609
        %v1674 = vadd.f32 %v1480, %v1610
        %v1675 = vadd.f32 %v1481, %v1611
        %v1676 = vadd.f32 %v1482, %v1612
        %v1677 = vadd.f32 %v1483, %v1613
        %v1678 = vadd.f32 %v1484, %v1614
        %v1679 = vadd.f32 %v1485, %v1615
        %v1680 = vadd.f32 %v1486, %v1616
        %v1681 = vadd.f32 %v1487, %v1617
        %v1682 = vadd.f32 %v1488, %v1618
        %v1683 = vadd.f32 %v1489, %v1619
        %v1684 = vadd.f32 %v1490, %v1620
        %v1685 = vadd.f32 %v1491, %v1621
        %v1686 = vadd.f32 %v1492, %v1622
        %v1687 = vadd.f32 %v1493, %v1623
        %v1688 = vadd.f32 %v1494, %v1624
        %v1689 = vadd.f32 %v1495, %v1625
        %v1690 = vadd.f32 %v1496, %v1626
        %v1691 = vadd.f32 %v1497, %v1627
        %v1692 = vadd.f32 %v1498, %v1628
        %v1693 = vadd.f32 %v1499, %v1629
        %v1694 = vadd.f32 %v1500, %v1630
        %v1695 = vadd.f32 %v1501, %v1631
        %v1696 = vadd.f32 %v1502, %v1632
        %v1697 = vadd.f32 %v1503, %v1633
        %v1698 = vadd.f32 %v1504, %v1634
        %v1699 = vadd.f32 %v1505, %v1635
        %v1700 = vadd.f32 %v1506, %v1636
        %v1701 = vadd.f32 %v1507, %v1637
        %v1702 = vadd.f32 %v1508, %v1638
        %v1703 = vadd.f32 %v1509, %v1639
        %v1704 = vadd.f32 %v1510, %v1640
        %v1705 = vadd.f32 %v1511, %v1641
        %v1706 = vadd.f32 %v1512, %v1642
        %v1707 = vadd.f32 %v1513, %v1643
        %v1708 = vadd.f32 %v1514, %v1644
        %v1709 = vld [vmem:[#allocation6 + $0x6] sm:$0x1]
        %s1710 = scalar_lea.vmem [#allocation2], 32
        %v1711 = vld [vmem:[%s1710] sm:$0xff]
        %v1712 = vld [vmem:[%s1710 + $0x10] sm:$0xff]
        %v1713 = vld [vmem:[%s1710 + $0x20] sm:$0xff]
        %v1714 = vld [vmem:[%s1710 + $0x30] sm:$0xff]
        %v1715 = vld [vmem:[%s1710 + $0x40] sm:$0xff]
        %v1716 = vld [vmem:[%s1710 + $0x50] sm:$0xff]
        %v1717 = vld [vmem:[%s1710 + $0x60] sm:$0xff]
        %v1718 = vld [vmem:[%s1710 + $0x70] sm:$0xff]
        %v1719 = vld [vmem:[%s1710 + $0xa0] sm:$0xff]
        %v1720 = vld [vmem:[%s1710 + $0xb0] sm:$0xff]
        %v1721 = vld [vmem:[%s1710 + $0xc0] sm:$0xff]
        %v1722 = vld [vmem:[%s1710 + $0xd0] sm:$0xff]
        %v1723 = vld [vmem:[%s1710 + $0xe0] sm:$0xff]
        %v1724 = vld [vmem:[%s1710 + $0xf0] sm:$0xff]
        %v1725 = vld [vmem:[%s1710 + $0x100] sm:$0xff]
        %v1726 = vld [vmem:[%s1710 + $0x110] sm:$0xff]
        %v1727 = vld [vmem:[%s1710 + $0x140] sm:$0xff]
        %v1728 = vld [vmem:[%s1710 + $0x150] sm:$0xff]
        %v1729 = vld [vmem:[%s1710 + $0x160] sm:$0xff]
        %v1730 = vld [vmem:[%s1710 + $0x170] sm:$0xff]
        %v1731 = vld [vmem:[%s1710 + $0x180] sm:$0xff]
        %v1732 = vld [vmem:[%s1710 + $0x190] sm:$0xff]
        %v1733 = vld [vmem:[%s1710 + $0x1a0] sm:$0xff]
        %v1734 = vld [vmem:[%s1710 + $0x1b0] sm:$0xff]
        %v1735 = vld [vmem:[%s1710 + $0x1e0] sm:$0xff]
        %v1736 = vld [vmem:[%s1710 + $0x1f0] sm:$0xff]
        %v1737 = vld [vmem:[%s1710 + $0x200] sm:$0xff]
        %v1738 = vld [vmem:[%s1710 + $0x210] sm:$0xff]
        %v1739 = vld [vmem:[%s1710 + $0x220] sm:$0xff]
        %v1740 = vld [vmem:[%s1710 + $0x230] sm:$0xff]
        %v1741 = vld [vmem:[%s1710 + $0x240] sm:$0xff]
        %v1742 = vld [vmem:[%s1710 + $0x250] sm:$0xff]
        %v1743 = vld [vmem:[%s1710 + $0x280] sm:$0xff]
        %v1744 = vld [vmem:[%s1710 + $0x290] sm:$0xff]
        %v1745 = vld [vmem:[%s1710 + $0x2a0] sm:$0xff]
        %v1746 = vld [vmem:[%s1710 + $0x2b0] sm:$0xff]
        %v1747 = vld [vmem:[%s1710 + $0x2c0] sm:$0xff]
        %v1748 = vld [vmem:[%s1710 + $0x2d0] sm:$0xff]
        %v1749 = vld [vmem:[%s1710 + $0x2e0] sm:$0xff]
        %v1750 = vld [vmem:[%s1710 + $0x2f0] sm:$0xff]
        %v1751 = vld [vmem:[%s1710 + $0x320] sm:$0xff]
        %v1752 = vld [vmem:[%s1710 + $0x330] sm:$0xff]
        %v1753 = vld [vmem:[%s1710 + $0x340] sm:$0xff]
        %v1754 = vld [vmem:[%s1710 + $0x350] sm:$0xff]
        %v1755 = vld [vmem:[%s1710 + $0x360] sm:$0xff]
        %v1756 = vld [vmem:[%s1710 + $0x370] sm:$0xff]
        %v1757 = vld [vmem:[%s1710 + $0x380] sm:$0xff]
        %v1758 = vld [vmem:[%s1710 + $0x390] sm:$0xff]
        %v1759 = vld [vmem:[%s1710 + $0x3c0] sm:$0xff]
        %v1760 = vld [vmem:[%s1710 + $0x3d0] sm:$0xff]
        %v1761 = vld [vmem:[%s1710 + $0x3e0] sm:$0xff]
        %v1762 = vld [vmem:[%s1710 + $0x3f0] sm:$0xff]
        %v1763 = vld [vmem:[%s1710 + $0x400] sm:$0xff]
        %v1764 = vld [vmem:[%s1710 + $0x410] sm:$0xff]
        %v1765 = vld [vmem:[%s1710 + $0x420] sm:$0xff]
        %v1766 = vld [vmem:[%s1710 + $0x430] sm:$0xff]
        %v1767 = vld [vmem:[%s1710 + $0x460] sm:$0xff]
        %v1768 = vld [vmem:[%s1710 + $0x470] sm:$0xff]
        %v1769 = vld [vmem:[%s1710 + $0x480] sm:$0xff]
        %v1770 = vld [vmem:[%s1710 + $0x490] sm:$0xff]
        %v1771 = vld [vmem:[%s1710 + $0x4a0] sm:$0xff]
        %v1772 = vld [vmem:[%s1710 + $0x4b0] sm:$0xff]
        %v1773 = vld [vmem:[%s1710 + $0x4c0] sm:$0xff]
        %v1774 = vld [vmem:[%s1710 + $0x4d0] sm:$0xff]
        %v1775 = vperm.slane %v1709, 0
        %v1776 = vmul.f32 %v1711, %v1775
        %v1777 = vmul.f32 %v1712, %v1775
        %v1778 = vmul.f32 %v1713, %v1775
        %v1779 = vmul.f32 %v1714, %v1775
        %v1780 = vmul.f32 %v1715, %v1775
        %v1781 = vmul.f32 %v1716, %v1775
        %v1782 = vmul.f32 %v1717, %v1775
        %v1783 = vmul.f32 %v1718, %v1775
        %v1784 = vmul.f32 %v1719, %v1775
        %v1785 = vmul.f32 %v1720, %v1775
        %v1786 = vmul.f32 %v1721, %v1775
        %v1787 = vmul.f32 %v1722, %v1775
        %v1788 = vmul.f32 %v1723, %v1775
        %v1789 = vmul.f32 %v1724, %v1775
        %v1790 = vmul.f32 %v1725, %v1775
        %v1791 = vmul.f32 %v1726, %v1775
        %v1792 = vmul.f32 %v1727, %v1775
        %v1793 = vmul.f32 %v1728, %v1775
        %v1794 = vmul.f32 %v1729, %v1775
        %v1795 = vmul.f32 %v1730, %v1775
        %v1796 = vmul.f32 %v1731, %v1775
        %v1797 = vmul.f32 %v1732, %v1775
        %v1798 = vmul.f32 %v1733, %v1775
        %v1799 = vmul.f32 %v1734, %v1775
        %v1800 = vmul.f32 %v1735, %v1775
        %v1801 = vmul.f32 %v1736, %v1775
        %v1802 = vmul.f32 %v1737, %v1775
        %v1803 = vmul.f32 %v1738, %v1775
        %v1804 = vmul.f32 %v1739, %v1775
        %v1805 = vmul.f32 %v1740, %v1775
        %v1806 = vmul.f32 %v1741, %v1775
        %v1807 = vmul.f32 %v1742, %v1775
        %v1808 = vmul.f32 %v1743, %v1775
        %v1809 = vmul.f32 %v1744, %v1775
        %v1810 = vmul.f32 %v1745, %v1775
        %v1811 = vmul.f32 %v1746, %v1775
        %v1812 = vmul.f32 %v1747, %v1775
        %v1813 = vmul.f32 %v1748, %v1775
        %v1814 = vmul.f32 %v1749, %v1775
        %v1815 = vmul.f32 %v1750, %v1775
        %v1816 = vmul.f32 %v1751, %v1775
        %v1817 = vmul.f32 %v1752, %v1775
        %v1818 = vmul.f32 %v1753, %v1775
        %v1819 = vmul.f32 %v1754, %v1775
        %v1820 = vmul.f32 %v1755, %v1775
        %v1821 = vmul.f32 %v1756, %v1775
        %v1822 = vmul.f32 %v1757, %v1775
        %v1823 = vmul.f32 %v1758, %v1775
        %v1824 = vmul.f32 %v1759, %v1775
        %v1825 = vmul.f32 %v1760, %v1775
        %v1826 = vmul.f32 %v1761, %v1775
        %v1827 = vmul.f32 %v1762, %v1775
        %v1828 = vmul.f32 %v1763, %v1775
        %v1829 = vmul.f32 %v1764, %v1775
        %v1830 = vmul.f32 %v1765, %v1775
        %v1831 = vmul.f32 %v1766, %v1775
        %v1832 = vmul.f32 %v1767, %v1775
        %v1833 = vmul.f32 %v1768, %v1775
        %v1834 = vmul.f32 %v1769, %v1775
        %v1835 = vmul.f32 %v1770, %v1775
        %v1836 = vmul.f32 %v1771, %v1775
        %v1837 = vmul.f32 %v1772, %v1775
        %v1838 = vmul.f32 %v1773, %v1775
        %v1839 = vmul.f32 %v1774, %v1775
        %v1840 = vadd.f32 %v1645, %v1776
        %v1841 = vadd.f32 %v1646, %v1777
        %v1842 = vadd.f32 %v1647, %v1778
        %v1843 = vadd.f32 %v1648, %v1779
        %v1844 = vadd.f32 %v1649, %v1780
        %v1845 = vadd.f32 %v1650, %v1781
        %v1846 = vadd.f32 %v1651, %v1782
        %v1847 = vadd.f32 %v1652, %v1783
        %v1848 = vadd.f32 %v1653, %v1784
        %v1849 = vadd.f32 %v1654, %v1785
        %v1850 = vadd.f32 %v1655, %v1786
        %v1851 = vadd.f32 %v1656, %v1787
        %v1852 = vadd.f32 %v1657, %v1788
        %v1853 = vadd.f32 %v1658, %v1789
        %v1854 = vadd.f32 %v1659, %v1790
        %v1855 = vadd.f32 %v1660, %v1791
        %v1856 = vadd.f32 %v1661, %v1792
        %v1857 = vadd.f32 %v1662, %v1793
        %v1858 = vadd.f32 %v1663, %v1794
        %v1859 = vadd.f32 %v1664, %v1795
        %v1860 = vadd.f32 %v1665, %v1796
        %v1861 = vadd.f32 %v1666, %v1797
        %v1862 = vadd.f32 %v1667, %v1798
        %v1863 = vadd.f32 %v1668, %v1799
        %v1864 = vadd.f32 %v1669, %v1800
        %v1865 = vadd.f32 %v1670, %v1801
        %v1866 = vadd.f32 %v1671, %v1802
        %v1867 = vadd.f32 %v1672, %v1803
        %v1868 = vadd.f32 %v1673, %v1804
        %v1869 = vadd.f32 %v1674, %v1805
        %v1870 = vadd.f32 %v1675, %v1806
        %v1871 = vadd.f32 %v1676, %v1807
        %v1872 = vadd.f32 %v1677, %v1808
        %v1873 = vadd.f32 %v1678, %v1809
        %v1874 = vadd.f32 %v1679, %v1810
        %v1875 = vadd.f32 %v1680, %v1811
        %v1876 = vadd.f32 %v1681, %v1812
        %v1877 = vadd.f32 %v1682, %v1813
        %v1878 = vadd.f32 %v1683, %v1814
        %v1879 = vadd.f32 %v1684, %v1815
        %v1880 = vadd.f32 %v1685, %v1816
        %v1881 = vadd.f32 %v1686, %v1817
        %v1882 = vadd.f32 %v1687, %v1818
        %v1883 = vadd.f32 %v1688, %v1819
        %v1884 = vadd.f32 %v1689, %v1820
        %v1885 = vadd.f32 %v1690, %v1821
        %v1886 = vadd.f32 %v1691, %v1822
        %v1887 = vadd.f32 %v1692, %v1823
        %v1888 = vadd.f32 %v1693, %v1824
        %v1889 = vadd.f32 %v1694, %v1825
        %v1890 = vadd.f32 %v1695, %v1826
        %v1891 = vadd.f32 %v1696, %v1827
        %v1892 = vadd.f32 %v1697, %v1828
        %v1893 = vadd.f32 %v1698, %v1829
        %v1894 = vadd.f32 %v1699, %v1830
        %v1895 = vadd.f32 %v1700, %v1831
        %v1896 = vadd.f32 %v1701, %v1832
        %v1897 = vadd.f32 %v1702, %v1833
        %v1898 = vadd.f32 %v1703, %v1834
        %v1899 = vadd.f32 %v1704, %v1835
        %v1900 = vadd.f32 %v1705, %v1836
        %v1901 = vadd.f32 %v1706, %v1837
        %v1902 = vadd.f32 %v1707, %v1838
        %v1903 = vadd.f32 %v1708, %v1839
        %v1904 = vld [vmem:[#allocation6 + $0x7] sm:$0x1]
        %v1905 = vld [vmem:[%s1710 + $0x1] sm:$0xff]
        %v1906 = vld [vmem:[%s1710 + $0x11] sm:$0xff]
        %v1907 = vld [vmem:[%s1710 + $0x21] sm:$0xff]
        %v1908 = vld [vmem:[%s1710 + $0x31] sm:$0xff]
        %v1909 = vld [vmem:[%s1710 + $0x41] sm:$0xff]
        %v1910 = vld [vmem:[%s1710 + $0x51] sm:$0xff]
        %v1911 = vld [vmem:[%s1710 + $0x61] sm:$0xff]
        %v1912 = vld [vmem:[%s1710 + $0x71] sm:$0xff]
        %v1913 = vld [vmem:[%s1710 + $0xa1] sm:$0xff]
        %v1914 = vld [vmem:[%s1710 + $0xb1] sm:$0xff]
        %v1915 = vld [vmem:[%s1710 + $0xc1] sm:$0xff]
        %v1916 = vld [vmem:[%s1710 + $0xd1] sm:$0xff]
        %v1917 = vld [vmem:[%s1710 + $0xe1] sm:$0xff]
        %v1918 = vld [vmem:[%s1710 + $0xf1] sm:$0xff]
        %v1919 = vld [vmem:[%s1710 + $0x101] sm:$0xff]
        %v1920 = vld [vmem:[%s1710 + $0x111] sm:$0xff]
        %v1921 = vld [vmem:[%s1710 + $0x141] sm:$0xff]
        %v1922 = vld [vmem:[%s1710 + $0x151] sm:$0xff]
        %v1923 = vld [vmem:[%s1710 + $0x161] sm:$0xff]
        %v1924 = vld [vmem:[%s1710 + $0x171] sm:$0xff]
        %v1925 = vld [vmem:[%s1710 + $0x181] sm:$0xff]
        %v1926 = vld [vmem:[%s1710 + $0x191] sm:$0xff]
        %v1927 = vld [vmem:[%s1710 + $0x1a1] sm:$0xff]
        %v1928 = vld [vmem:[%s1710 + $0x1b1] sm:$0xff]
        %v1929 = vld [vmem:[%s1710 + $0x1e1] sm:$0xff]
        %v1930 = vld [vmem:[%s1710 + $0x1f1] sm:$0xff]
        %v1931 = vld [vmem:[%s1710 + $0x201] sm:$0xff]
        %v1932 = vld [vmem:[%s1710 + $0x211] sm:$0xff]
        %v1933 = vld [vmem:[%s1710 + $0x221] sm:$0xff]
        %v1934 = vld [vmem:[%s1710 + $0x231] sm:$0xff]
        %v1935 = vld [vmem:[%s1710 + $0x241] sm:$0xff]
        %v1936 = vld [vmem:[%s1710 + $0x251] sm:$0xff]
        %v1937 = vld [vmem:[%s1710 + $0x281] sm:$0xff]
        %v1938 = vld [vmem:[%s1710 + $0x291] sm:$0xff]
        %v1939 = vld [vmem:[%s1710 + $0x2a1] sm:$0xff]
        %v1940 = vld [vmem:[%s1710 + $0x2b1] sm:$0xff]
        %v1941 = vld [vmem:[%s1710 + $0x2c1] sm:$0xff]
        %v1942 = vld [vmem:[%s1710 + $0x2d1] sm:$0xff]
        %v1943 = vld [vmem:[%s1710 + $0x2e1] sm:$0xff]
        %v1944 = vld [vmem:[%s1710 + $0x2f1] sm:$0xff]
        %v1945 = vld [vmem:[%s1710 + $0x321] sm:$0xff]
        %v1946 = vld [vmem:[%s1710 + $0x331] sm:$0xff]
        %v1947 = vld [vmem:[%s1710 + $0x341] sm:$0xff]
        %v1948 = vld [vmem:[%s1710 + $0x351] sm:$0xff]
        %v1949 = vld [vmem:[%s1710 + $0x361] sm:$0xff]
        %v1950 = vld [vmem:[%s1710 + $0x371] sm:$0xff]
        %v1951 = vld [vmem:[%s1710 + $0x381] sm:$0xff]
        %v1952 = vld [vmem:[%s1710 + $0x391] sm:$0xff]
        %v1953 = vld [vmem:[%s1710 + $0x3c1] sm:$0xff]
        %v1954 = vld [vmem:[%s1710 + $0x3d1] sm:$0xff]
        %v1955 = vld [vmem:[%s1710 + $0x3e1] sm:$0xff]
        %v1956 = vld [vmem:[%s1710 + $0x3f1] sm:$0xff]
        %v1957 = vld [vmem:[%s1710 + $0x401] sm:$0xff]
        %v1958 = vld [vmem:[%s1710 + $0x411] sm:$0xff]
        %v1959 = vld [vmem:[%s1710 + $0x421] sm:$0xff]
        %v1960 = vld [vmem:[%s1710 + $0x431] sm:$0xff]
        %v1961 = vld [vmem:[%s1710 + $0x461] sm:$0xff]
        %v1962 = vld [vmem:[%s1710 + $0x471] sm:$0xff]
        %v1963 = vld [vmem:[%s1710 + $0x481] sm:$0xff]
        %v1964 = vld [vmem:[%s1710 + $0x491] sm:$0xff]
        %v1965 = vld [vmem:[%s1710 + $0x4a1] sm:$0xff]
        %v1966 = vld [vmem:[%s1710 + $0x4b1] sm:$0xff]
        %v1967 = vld [vmem:[%s1710 + $0x4c1] sm:$0xff]
        %v1968 = vld [vmem:[%s1710 + $0x4d1] sm:$0xff]
        %v1969 = vperm.slane %v1904, 0
        %v1970 = vmul.f32 %v1905, %v1969
        %v1971 = vmul.f32 %v1906, %v1969
        %v1972 = vmul.f32 %v1907, %v1969
        %v1973 = vmul.f32 %v1908, %v1969
        %v1974 = vmul.f32 %v1909, %v1969
        %v1975 = vmul.f32 %v1910, %v1969
        %v1976 = vmul.f32 %v1911, %v1969
        %v1977 = vmul.f32 %v1912, %v1969
        %v1978 = vmul.f32 %v1913, %v1969
        %v1979 = vmul.f32 %v1914, %v1969
        %v1980 = vmul.f32 %v1915, %v1969
        %v1981 = vmul.f32 %v1916, %v1969
        %v1982 = vmul.f32 %v1917, %v1969
        %v1983 = vmul.f32 %v1918, %v1969
        %v1984 = vmul.f32 %v1919, %v1969
        %v1985 = vmul.f32 %v1920, %v1969
        %v1986 = vmul.f32 %v1921, %v1969
        %v1987 = vmul.f32 %v1922, %v1969
        %v1988 = vmul.f32 %v1923, %v1969
        %v1989 = vmul.f32 %v1924, %v1969
        %v1990 = vmul.f32 %v1925, %v1969
        %v1991 = vmul.f32 %v1926, %v1969
        %v1992 = vmul.f32 %v1927, %v1969
        %v1993 = vmul.f32 %v1928, %v1969
        %v1994 = vmul.f32 %v1929, %v1969
        %v1995 = vmul.f32 %v1930, %v1969
        %v1996 = vmul.f32 %v1931, %v1969
        %v1997 = vmul.f32 %v1932, %v1969
        %v1998 = vmul.f32 %v1933, %v1969
        %v1999 = vmul.f32 %v1934, %v1969
        %v2000 = vmul.f32 %v1935, %v1969
        %v2001 = vmul.f32 %v1936, %v1969
        %v2002 = vmul.f32 %v1937, %v1969
        %v2003 = vmul.f32 %v1938, %v1969
        %v2004 = vmul.f32 %v1939, %v1969
        %v2005 = vmul.f32 %v1940, %v1969
        %v2006 = vmul.f32 %v1941, %v1969
        %v2007 = vmul.f32 %v1942, %v1969
        %v2008 = vmul.f32 %v1943, %v1969
        %v2009 = vmul.f32 %v1944, %v1969
        %v2010 = vmul.f32 %v1945, %v1969
        %v2011 = vmul.f32 %v1946, %v1969
        %v2012 = vmul.f32 %v1947, %v1969
        %v2013 = vmul.f32 %v1948, %v1969
        %v2014 = vmul.f32 %v1949, %v1969
        %v2015 = vmul.f32 %v1950, %v1969
        %v2016 = vmul.f32 %v1951, %v1969
        %v2017 = vmul.f32 %v1952, %v1969
        %v2018 = vmul.f32 %v1953, %v1969
        %v2019 = vmul.f32 %v1954, %v1969
        %v2020 = vmul.f32 %v1955, %v1969
        %v2021 = vmul.f32 %v1956, %v1969
        %v2022 = vmul.f32 %v1957, %v1969
        %v2023 = vmul.f32 %v1958, %v1969
        %v2024 = vmul.f32 %v1959, %v1969
        %v2025 = vmul.f32 %v1960, %v1969
        %v2026 = vmul.f32 %v1961, %v1969
        %v2027 = vmul.f32 %v1962, %v1969
        %v2028 = vmul.f32 %v1963, %v1969
        %v2029 = vmul.f32 %v1964, %v1969
        %v2030 = vmul.f32 %v1965, %v1969
        %v2031 = vmul.f32 %v1966, %v1969
        %v2032 = vmul.f32 %v1967, %v1969
        %v2033 = vmul.f32 %v1968, %v1969
        %v2034 = vadd.f32 %v1840, %v1970
        %v2035 = vadd.f32 %v1841, %v1971
        %v2036 = vadd.f32 %v1842, %v1972
        %v2037 = vadd.f32 %v1843, %v1973
        %v2038 = vadd.f32 %v1844, %v1974
        %v2039 = vadd.f32 %v1845, %v1975
        %v2040 = vadd.f32 %v1846, %v1976
        %v2041 = vadd.f32 %v1847, %v1977
        %v2042 = vadd.f32 %v1848, %v1978
        %v2043 = vadd.f32 %v1849, %v1979
        %v2044 = vadd.f32 %v1850, %v1980
        %v2045 = vadd.f32 %v1851, %v1981
        %v2046 = vadd.f32 %v1852, %v1982
        %v2047 = vadd.f32 %v1853, %v1983
        %v2048 = vadd.f32 %v1854, %v1984
        %v2049 = vadd.f32 %v1855, %v1985
        %v2050 = vadd.f32 %v1856, %v1986
        %v2051 = vadd.f32 %v1857, %v1987
        %v2052 = vadd.f32 %v1858, %v1988
        %v2053 = vadd.f32 %v1859, %v1989
        %v2054 = vadd.f32 %v1860, %v1990
        %v2055 = vadd.f32 %v1861, %v1991
        %v2056 = vadd.f32 %v1862, %v1992
        %v2057 = vadd.f32 %v1863, %v1993
        %v2058 = vadd.f32 %v1864, %v1994
        %v2059 = vadd.f32 %v1865, %v1995
        %v2060 = vadd.f32 %v1866, %v1996
        %v2061 = vadd.f32 %v1867, %v1997
        %v2062 = vadd.f32 %v1868, %v1998
        %v2063 = vadd.f32 %v1869, %v1999
        %v2064 = vadd.f32 %v1870, %v2000
        %v2065 = vadd.f32 %v1871, %v2001
        %v2066 = vadd.f32 %v1872, %v2002
        %v2067 = vadd.f32 %v1873, %v2003
        %v2068 = vadd.f32 %v1874, %v2004
        %v2069 = vadd.f32 %v1875, %v2005
        %v2070 = vadd.f32 %v1876, %v2006
        %v2071 = vadd.f32 %v1877, %v2007
        %v2072 = vadd.f32 %v1878, %v2008
        %v2073 = vadd.f32 %v1879, %v2009
        %v2074 = vadd.f32 %v1880, %v2010
        %v2075 = vadd.f32 %v1881, %v2011
        %v2076 = vadd.f32 %v1882, %v2012
        %v2077 = vadd.f32 %v1883, %v2013
        %v2078 = vadd.f32 %v1884, %v2014
        %v2079 = vadd.f32 %v1885, %v2015
        %v2080 = vadd.f32 %v1886, %v2016
        %v2081 = vadd.f32 %v1887, %v2017
        %v2082 = vadd.f32 %v1888, %v2018
        %v2083 = vadd.f32 %v1889, %v2019
        %v2084 = vadd.f32 %v1890, %v2020
        %v2085 = vadd.f32 %v1891, %v2021
        %v2086 = vadd.f32 %v1892, %v2022
        %v2087 = vadd.f32 %v1893, %v2023
        %v2088 = vadd.f32 %v1894, %v2024
        %v2089 = vadd.f32 %v1895, %v2025
        %v2090 = vadd.f32 %v1896, %v2026
        %v2091 = vadd.f32 %v1897, %v2027
        %v2092 = vadd.f32 %v1898, %v2028
        %v2093 = vadd.f32 %v1899, %v2029
        %v2094 = vadd.f32 %v1900, %v2030
        %v2095 = vadd.f32 %v1901, %v2031
        %v2096 = vadd.f32 %v1902, %v2032
        %v2097 = vadd.f32 %v1903, %v2033
        %v2098 = vld [vmem:[#allocation6 + $0x8] sm:$0x1]
        %v2099 = vld [vmem:[%s1710 + $0x2] sm:$0xff]
        %v2100 = vld [vmem:[%s1710 + $0x12] sm:$0xff]
        %v2101 = vld [vmem:[%s1710 + $0x22] sm:$0xff]
        %v2102 = vld [vmem:[%s1710 + $0x32] sm:$0xff]
        %v2103 = vld [vmem:[%s1710 + $0x42] sm:$0xff]
        %v2104 = vld [vmem:[%s1710 + $0x52] sm:$0xff]
        %v2105 = vld [vmem:[%s1710 + $0x62] sm:$0xff]
        %v2106 = vld [vmem:[%s1710 + $0x72] sm:$0xff]
        %v2107 = vld [vmem:[%s1710 + $0xa2] sm:$0xff]
        %v2108 = vld [vmem:[%s1710 + $0xb2] sm:$0xff]
        %v2109 = vld [vmem:[%s1710 + $0xc2] sm:$0xff]
        %v2110 = vld [vmem:[%s1710 + $0xd2] sm:$0xff]
        %v2111 = vld [vmem:[%s1710 + $0xe2] sm:$0xff]
        %v2112 = vld [vmem:[%s1710 + $0xf2] sm:$0xff]
        %v2113 = vld [vmem:[%s1710 + $0x102] sm:$0xff]
        %v2114 = vld [vmem:[%s1710 + $0x112] sm:$0xff]
        %v2115 = vld [vmem:[%s1710 + $0x142] sm:$0xff]
        %v2116 = vld [vmem:[%s1710 + $0x152] sm:$0xff]
        %v2117 = vld [vmem:[%s1710 + $0x162] sm:$0xff]
        %v2118 = vld [vmem:[%s1710 + $0x172] sm:$0xff]
        %v2119 = vld [vmem:[%s1710 + $0x182] sm:$0xff]
        %v2120 = vld [vmem:[%s1710 + $0x192] sm:$0xff]
        %v2121 = vld [vmem:[%s1710 + $0x1a2] sm:$0xff]
        %v2122 = vld [vmem:[%s1710 + $0x1b2] sm:$0xff]
        %v2123 = vld [vmem:[%s1710 + $0x1e2] sm:$0xff]
        %v2124 = vld [vmem:[%s1710 + $0x1f2] sm:$0xff]
        %v2125 = vld [vmem:[%s1710 + $0x202] sm:$0xff]
        %v2126 = vld [vmem:[%s1710 + $0x212] sm:$0xff]
        %v2127 = vld [vmem:[%s1710 + $0x222] sm:$0xff]
        %v2128 = vld [vmem:[%s1710 + $0x232] sm:$0xff]
        %v2129 = vld [vmem:[%s1710 + $0x242] sm:$0xff]
        %v2130 = vld [vmem:[%s1710 + $0x252] sm:$0xff]
        %v2131 = vld [vmem:[%s1710 + $0x282] sm:$0xff]
        %v2132 = vld [vmem:[%s1710 + $0x292] sm:$0xff]
        %v2133 = vld [vmem:[%s1710 + $0x2a2] sm:$0xff]
        %v2134 = vld [vmem:[%s1710 + $0x2b2] sm:$0xff]
        %v2135 = vld [vmem:[%s1710 + $0x2c2] sm:$0xff]
        %v2136 = vld [vmem:[%s1710 + $0x2d2] sm:$0xff]
        %v2137 = vld [vmem:[%s1710 + $0x2e2] sm:$0xff]
        %v2138 = vld [vmem:[%s1710 + $0x2f2] sm:$0xff]
        %v2139 = vld [vmem:[%s1710 + $0x322] sm:$0xff]
        %v2140 = vld [vmem:[%s1710 + $0x332] sm:$0xff]
        %v2141 = vld [vmem:[%s1710 + $0x342] sm:$0xff]
        %v2142 = vld [vmem:[%s1710 + $0x352] sm:$0xff]
        %v2143 = vld [vmem:[%s1710 + $0x362] sm:$0xff]
        %v2144 = vld [vmem:[%s1710 + $0x372] sm:$0xff]
        %v2145 = vld [vmem:[%s1710 + $0x382] sm:$0xff]
        %v2146 = vld [vmem:[%s1710 + $0x392] sm:$0xff]
        %v2147 = vld [vmem:[%s1710 + $0x3c2] sm:$0xff]
        %v2148 = vld [vmem:[%s1710 + $0x3d2] sm:$0xff]
        %v2149 = vld [vmem:[%s1710 + $0x3e2] sm:$0xff]
        %v2150 = vld [vmem:[%s1710 + $0x3f2] sm:$0xff]
        %v2151 = vld [vmem:[%s1710 + $0x402] sm:$0xff]
        %v2152 = vld [vmem:[%s1710 + $0x412] sm:$0xff]
        %v2153 = vld [vmem:[%s1710 + $0x422] sm:$0xff]
        %v2154 = vld [vmem:[%s1710 + $0x432] sm:$0xff]
        %v2155 = vld [vmem:[%s1710 + $0x462] sm:$0xff]
        %v2156 = vld [vmem:[%s1710 + $0x472] sm:$0xff]
        %v2157 = vld [vmem:[%s1710 + $0x482] sm:$0xff]
        %v2158 = vld [vmem:[%s1710 + $0x492] sm:$0xff]
        %v2159 = vld [vmem:[%s1710 + $0x4a2] sm:$0xff]
        %v2160 = vld [vmem:[%s1710 + $0x4b2] sm:$0xff]
        %v2161 = vld [vmem:[%s1710 + $0x4c2] sm:$0xff]
        %v2162 = vld [vmem:[%s1710 + $0x4d2] sm:$0xff]
        %v2163 = vperm.slane %v2098, 0
        %v2164 = vmul.f32 %v2099, %v2163
        %v2165 = vmul.f32 %v2100, %v2163
        %v2166 = vmul.f32 %v2101, %v2163
        %v2167 = vmul.f32 %v2102, %v2163
        %v2168 = vmul.f32 %v2103, %v2163
        %v2169 = vmul.f32 %v2104, %v2163
        %v2170 = vmul.f32 %v2105, %v2163
        %v2171 = vmul.f32 %v2106, %v2163
        %v2172 = vmul.f32 %v2107, %v2163
        %v2173 = vmul.f32 %v2108, %v2163
        %v2174 = vmul.f32 %v2109, %v2163
        %v2175 = vmul.f32 %v2110, %v2163
        %v2176 = vmul.f32 %v2111, %v2163
        %v2177 = vmul.f32 %v2112, %v2163
        %v2178 = vmul.f32 %v2113, %v2163
        %v2179 = vmul.f32 %v2114, %v2163
        %v2180 = vmul.f32 %v2115, %v2163
        %v2181 = vmul.f32 %v2116, %v2163
        %v2182 = vmul.f32 %v2117, %v2163
        %v2183 = vmul.f32 %v2118, %v2163
        %v2184 = vmul.f32 %v2119, %v2163
        %v2185 = vmul.f32 %v2120, %v2163
        %v2186 = vmul.f32 %v2121, %v2163
        %v2187 = vmul.f32 %v2122, %v2163
        %v2188 = vmul.f32 %v2123, %v2163
        %v2189 = vmul.f32 %v2124, %v2163
        %v2190 = vmul.f32 %v2125, %v2163
        %v2191 = vmul.f32 %v2126, %v2163
        %v2192 = vmul.f32 %v2127, %v2163
        %v2193 = vmul.f32 %v2128, %v2163
        %v2194 = vmul.f32 %v2129, %v2163
        %v2195 = vmul.f32 %v2130, %v2163
        %v2196 = vmul.f32 %v2131, %v2163
        %v2197 = vmul.f32 %v2132, %v2163
        %v2198 = vmul.f32 %v2133, %v2163
        %v2199 = vmul.f32 %v2134, %v2163
        %v2200 = vmul.f32 %v2135, %v2163
        %v2201 = vmul.f32 %v2136, %v2163
        %v2202 = vmul.f32 %v2137, %v2163
        %v2203 = vmul.f32 %v2138, %v2163
        %v2204 = vmul.f32 %v2139, %v2163
        %v2205 = vmul.f32 %v2140, %v2163
        %v2206 = vmul.f32 %v2141, %v2163
        %v2207 = vmul.f32 %v2142, %v2163
        %v2208 = vmul.f32 %v2143, %v2163
        %v2209 = vmul.f32 %v2144, %v2163
        %v2210 = vmul.f32 %v2145, %v2163
        %v2211 = vmul.f32 %v2146, %v2163
        %v2212 = vmul.f32 %v2147, %v2163
        %v2213 = vmul.f32 %v2148, %v2163
        %v2214 = vmul.f32 %v2149, %v2163
        %v2215 = vmul.f32 %v2150, %v2163
        %v2216 = vmul.f32 %v2151, %v2163
        %v2217 = vmul.f32 %v2152, %v2163
        %v2218 = vmul.f32 %v2153, %v2163
        %v2219 = vmul.f32 %v2154, %v2163
        %v2220 = vmul.f32 %v2155, %v2163
        %v2221 = vmul.f32 %v2156, %v2163
        %v2222 = vmul.f32 %v2157, %v2163
        %v2223 = vmul.f32 %v2158, %v2163
        %v2224 = vmul.f32 %v2159, %v2163
        %v2225 = vmul.f32 %v2160, %v2163
        %v2226 = vmul.f32 %v2161, %v2163
        %v2227 = vmul.f32 %v2162, %v2163
        %v2228 = vadd.f32 %v2034, %v2164
        %v2229 = vadd.f32 %v2035, %v2165
        %v2230 = vadd.f32 %v2036, %v2166
        %v2231 = vadd.f32 %v2037, %v2167
        %v2232 = vadd.f32 %v2038, %v2168
        %v2233 = vadd.f32 %v2039, %v2169
        %v2234 = vadd.f32 %v2040, %v2170
        %v2235 = vadd.f32 %v2041, %v2171
        %v2236 = vadd.f32 %v2042, %v2172
        %v2237 = vadd.f32 %v2043, %v2173
        %v2238 = vadd.f32 %v2044, %v2174
        %v2239 = vadd.f32 %v2045, %v2175
        %v2240 = vadd.f32 %v2046, %v2176
        %v2241 = vadd.f32 %v2047, %v2177
        %v2242 = vadd.f32 %v2048, %v2178
        %v2243 = vadd.f32 %v2049, %v2179
        %v2244 = vadd.f32 %v2050, %v2180
        %v2245 = vadd.f32 %v2051, %v2181
        %v2246 = vadd.f32 %v2052, %v2182
        %v2247 = vadd.f32 %v2053, %v2183
        %v2248 = vadd.f32 %v2054, %v2184
        %v2249 = vadd.f32 %v2055, %v2185
        %v2250 = vadd.f32 %v2056, %v2186
        %v2251 = vadd.f32 %v2057, %v2187
        %v2252 = vadd.f32 %v2058, %v2188
        %v2253 = vadd.f32 %v2059, %v2189
        %v2254 = vadd.f32 %v2060, %v2190
        %v2255 = vadd.f32 %v2061, %v2191
        %v2256 = vadd.f32 %v2062, %v2192
        %v2257 = vadd.f32 %v2063, %v2193
        %v2258 = vadd.f32 %v2064, %v2194
        %v2259 = vadd.f32 %v2065, %v2195
        %v2260 = vadd.f32 %v2066, %v2196
        %v2261 = vadd.f32 %v2067, %v2197
        %v2262 = vadd.f32 %v2068, %v2198
        %v2263 = vadd.f32 %v2069, %v2199
        %v2264 = vadd.f32 %v2070, %v2200
        %v2265 = vadd.f32 %v2071, %v2201
        %v2266 = vadd.f32 %v2072, %v2202
        %v2267 = vadd.f32 %v2073, %v2203
        %v2268 = vadd.f32 %v2074, %v2204
        %v2269 = vadd.f32 %v2075, %v2205
        %v2270 = vadd.f32 %v2076, %v2206
        %v2271 = vadd.f32 %v2077, %v2207
        %v2272 = vadd.f32 %v2078, %v2208
        %v2273 = vadd.f32 %v2079, %v2209
        %v2274 = vadd.f32 %v2080, %v2210
        %v2275 = vadd.f32 %v2081, %v2211
        %v2276 = vadd.f32 %v2082, %v2212
        %v2277 = vadd.f32 %v2083, %v2213
        %v2278 = vadd.f32 %v2084, %v2214
        %v2279 = vadd.f32 %v2085, %v2215
        %v2280 = vadd.f32 %v2086, %v2216
        %v2281 = vadd.f32 %v2087, %v2217
        %v2282 = vadd.f32 %v2088, %v2218
        %v2283 = vadd.f32 %v2089, %v2219
        %v2284 = vadd.f32 %v2090, %v2220
        %v2285 = vadd.f32 %v2091, %v2221
        %v2286 = vadd.f32 %v2092, %v2222
        %v2287 = vadd.f32 %v2093, %v2223
        %v2288 = vadd.f32 %v2094, %v2224
        %v2289 = vadd.f32 %v2095, %v2225
        %v2290 = vadd.f32 %v2096, %v2226
        %v2291 = vadd.f32 %v2097, %v2227
        %v2292 = vld [vmem:[#allocation6 + $0x9] sm:$0x1]
        %v2293 = vld [vmem:[%s249] sm:$0xff]
        %v2294 = vld [vmem:[%s249 + $0x10] sm:$0xff]
        %v2295 = vld [vmem:[%s249 + $0x20] sm:$0xff]
        %v2296 = vld [vmem:[%s249 + $0x30] sm:$0xff]
        %v2297 = vld [vmem:[%s249 + $0x40] sm:$0xff]
        %v2298 = vld [vmem:[%s249 + $0x50] sm:$0xff]
        %v2299 = vld [vmem:[%s249 + $0x60] sm:$0xff]
        %v2300 = vld [vmem:[%s249 + $0x70] sm:$0xff]
        %v2301 = vld [vmem:[%s249 + $0xa0] sm:$0xff]
        %v2302 = vld [vmem:[%s249 + $0xb0] sm:$0xff]
        %v2303 = vld [vmem:[%s249 + $0xc0] sm:$0xff]
        %v2304 = vld [vmem:[%s249 + $0xd0] sm:$0xff]
        %v2305 = vld [vmem:[%s249 + $0xe0] sm:$0xff]
        %v2306 = vld [vmem:[%s249 + $0xf0] sm:$0xff]
        %v2307 = vld [vmem:[%s249 + $0x100] sm:$0xff]
        %v2308 = vld [vmem:[%s249 + $0x110] sm:$0xff]
        %v2309 = vld [vmem:[%s249 + $0x140] sm:$0xff]
        %v2310 = vld [vmem:[%s249 + $0x150] sm:$0xff]
        %v2311 = vld [vmem:[%s249 + $0x160] sm:$0xff]
        %v2312 = vld [vmem:[%s249 + $0x170] sm:$0xff]
        %v2313 = vld [vmem:[%s249 + $0x180] sm:$0xff]
        %v2314 = vld [vmem:[%s249 + $0x190] sm:$0xff]
        %v2315 = vld [vmem:[%s249 + $0x1a0] sm:$0xff]
        %v2316 = vld [vmem:[%s249 + $0x1b0] sm:$0xff]
        %v2317 = vld [vmem:[%s249 + $0x1e0] sm:$0xff]
        %v2318 = vld [vmem:[%s249 + $0x1f0] sm:$0xff]
        %v2319 = vld [vmem:[%s249 + $0x200] sm:$0xff]
        %v2320 = vld [vmem:[%s249 + $0x210] sm:$0xff]
        %v2321 = vld [vmem:[%s249 + $0x220] sm:$0xff]
        %v2322 = vld [vmem:[%s249 + $0x230] sm:$0xff]
        %v2323 = vld [vmem:[%s249 + $0x240] sm:$0xff]
        %v2324 = vld [vmem:[%s249 + $0x250] sm:$0xff]
        %v2325 = vld [vmem:[%s249 + $0x280] sm:$0xff]
        %v2326 = vld [vmem:[%s249 + $0x290] sm:$0xff]
        %v2327 = vld [vmem:[%s249 + $0x2a0] sm:$0xff]
        %v2328 = vld [vmem:[%s249 + $0x2b0] sm:$0xff]
        %v2329 = vld [vmem:[%s249 + $0x2c0] sm:$0xff]
        %v2330 = vld [vmem:[%s249 + $0x2d0] sm:$0xff]
        %v2331 = vld [vmem:[%s249 + $0x2e0] sm:$0xff]
        %v2332 = vld [vmem:[%s249 + $0x2f0] sm:$0xff]
        %v2333 = vld [vmem:[%s249 + $0x320] sm:$0xff]
        %v2334 = vld [vmem:[%s249 + $0x330] sm:$0xff]
        %v2335 = vld [vmem:[%s249 + $0x340] sm:$0xff]
        %v2336 = vld [vmem:[%s249 + $0x350] sm:$0xff]
        %v2337 = vld [vmem:[%s249 + $0x360] sm:$0xff]
        %v2338 = vld [vmem:[%s249 + $0x370] sm:$0xff]
        %v2339 = vld [vmem:[%s249 + $0x380] sm:$0xff]
        %v2340 = vld [vmem:[%s249 + $0x390] sm:$0xff]
        %v2341 = vld [vmem:[%s249 + $0x3c0] sm:$0xff]
        %v2342 = vld [vmem:[%s249 + $0x3d0] sm:$0xff]
        %v2343 = vld [vmem:[%s249 + $0x3e0] sm:$0xff]
        %v2344 = vld [vmem:[%s249 + $0x3f0] sm:$0xff]
        %v2345 = vld [vmem:[%s249 + $0x400] sm:$0xff]
        %v2346 = vld [vmem:[%s249 + $0x410] sm:$0xff]
        %v2347 = vld [vmem:[%s249 + $0x420] sm:$0xff]
        %v2348 = vld [vmem:[%s249 + $0x430] sm:$0xff]
        %v2349 = vld [vmem:[%s249 + $0x460] sm:$0xff]
        %v2350 = vld [vmem:[%s249 + $0x470] sm:$0xff]
        %v2351 = vld [vmem:[%s249 + $0x480] sm:$0xff]
        %v2352 = vld [vmem:[%s249 + $0x490] sm:$0xff]
        %v2353 = vld [vmem:[%s249 + $0x4a0] sm:$0xff]
        %v2354 = vld [vmem:[%s249 + $0x4b0] sm:$0xff]
        %v2355 = vld [vmem:[%s249 + $0x4c0] sm:$0xff]
        %v2356 = vld [vmem:[%s249 + $0x4d0] sm:$0xff]
        %v2357 = vperm.slane %v2292, 0
        %v2358 = vmul.f32 %v2293, %v2357
        %v2359 = vmul.f32 %v2294, %v2357
        %v2360 = vmul.f32 %v2295, %v2357
        %v2361 = vmul.f32 %v2296, %v2357
        %v2362 = vmul.f32 %v2297, %v2357
        %v2363 = vmul.f32 %v2298, %v2357
        %v2364 = vmul.f32 %v2299, %v2357
        %v2365 = vmul.f32 %v2300, %v2357
        %v2366 = vmul.f32 %v2301, %v2357
        %v2367 = vmul.f32 %v2302, %v2357
        %v2368 = vmul.f32 %v2303, %v2357
        %v2369 = vmul.f32 %v2304, %v2357
        %v2370 = vmul.f32 %v2305, %v2357
        %v2371 = vmul.f32 %v2306, %v2357
        %v2372 = vmul.f32 %v2307, %v2357
        %v2373 = vmul.f32 %v2308, %v2357
        %v2374 = vmul.f32 %v2309, %v2357
        %v2375 = vmul.f32 %v2310, %v2357
        %v2376 = vmul.f32 %v2311, %v2357
        %v2377 = vmul.f32 %v2312, %v2357
        %v2378 = vmul.f32 %v2313, %v2357
        %v2379 = vmul.f32 %v2314, %v2357
        %v2380 = vmul.f32 %v2315, %v2357
        %v2381 = vmul.f32 %v2316, %v2357
        %v2382 = vmul.f32 %v2317, %v2357
        %v2383 = vmul.f32 %v2318, %v2357
        %v2384 = vmul.f32 %v2319, %v2357
        %v2385 = vmul.f32 %v2320, %v2357
        %v2386 = vmul.f32 %v2321, %v2357
        %v2387 = vmul.f32 %v2322, %v2357
        %v2388 = vmul.f32 %v2323, %v2357
        %v2389 = vmul.f32 %v2324, %v2357
        %v2390 = vmul.f32 %v2325, %v2357
        %v2391 = vmul.f32 %v2326, %v2357
        %v2392 = vmul.f32 %v2327, %v2357
        %v2393 = vmul.f32 %v2328, %v2357
        %v2394 = vmul.f32 %v2329, %v2357
        %v2395 = vmul.f32 %v2330, %v2357
        %v2396 = vmul.f32 %v2331, %v2357
        %v2397 = vmul.f32 %v2332, %v2357
        %v2398 = vmul.f32 %v2333, %v2357
        %v2399 = vmul.f32 %v2334, %v2357
        %v2400 = vmul.f32 %v2335, %v2357
        %v2401 = vmul.f32 %v2336, %v2357
        %v2402 = vmul.f32 %v2337, %v2357
        %v2403 = vmul.f32 %v2338, %v2357
        %v2404 = vmul.f32 %v2339, %v2357
        %v2405 = vmul.f32 %v2340, %v2357
        %v2406 = vmul.f32 %v2341, %v2357
        %v2407 = vmul.f32 %v2342, %v2357
        %v2408 = vmul.f32 %v2343, %v2357
        %v2409 = vmul.f32 %v2344, %v2357
        %v2410 = vmul.f32 %v2345, %v2357
        %v2411 = vmul.f32 %v2346, %v2357
        %v2412 = vmul.f32 %v2347, %v2357
        %v2413 = vmul.f32 %v2348, %v2357
        %v2414 = vmul.f32 %v2349, %v2357
        %v2415 = vmul.f32 %v2350, %v2357
        %v2416 = vmul.f32 %v2351, %v2357
        %v2417 = vmul.f32 %v2352, %v2357
        %v2418 = vmul.f32 %v2353, %v2357
        %v2419 = vmul.f32 %v2354, %v2357
        %v2420 = vmul.f32 %v2355, %v2357
        %v2421 = vmul.f32 %v2356, %v2357
        %v2422 = vadd.f32 %v2228, %v2358
        %v2423 = vadd.f32 %v2229, %v2359
        %v2424 = vadd.f32 %v2230, %v2360
        %v2425 = vadd.f32 %v2231, %v2361
        %v2426 = vadd.f32 %v2232, %v2362
        %v2427 = vadd.f32 %v2233, %v2363
        %v2428 = vadd.f32 %v2234, %v2364
        %v2429 = vadd.f32 %v2235, %v2365
        %v2430 = vadd.f32 %v2236, %v2366
        %v2431 = vadd.f32 %v2237, %v2367
        %v2432 = vadd.f32 %v2238, %v2368
        %v2433 = vadd.f32 %v2239, %v2369
        %v2434 = vadd.f32 %v2240, %v2370
        %v2435 = vadd.f32 %v2241, %v2371
        %v2436 = vadd.f32 %v2242, %v2372
        %v2437 = vadd.f32 %v2243, %v2373
        %v2438 = vadd.f32 %v2244, %v2374
        %v2439 = vadd.f32 %v2245, %v2375
        %v2440 = vadd.f32 %v2246, %v2376
        %v2441 = vadd.f32 %v2247, %v2377
        %v2442 = vadd.f32 %v2248, %v2378
        %v2443 = vadd.f32 %v2249, %v2379
        %v2444 = vadd.f32 %v2250, %v2380
        %v2445 = vadd.f32 %v2251, %v2381
        %v2446 = vadd.f32 %v2252, %v2382
        %v2447 = vadd.f32 %v2253, %v2383
        %v2448 = vadd.f32 %v2254, %v2384
        %v2449 = vadd.f32 %v2255, %v2385
        %v2450 = vadd.f32 %v2256, %v2386
        %v2451 = vadd.f32 %v2257, %v2387
        %v2452 = vadd.f32 %v2258, %v2388
        %v2453 = vadd.f32 %v2259, %v2389
        %v2454 = vadd.f32 %v2260, %v2390
        %v2455 = vadd.f32 %v2261, %v2391
        %v2456 = vadd.f32 %v2262, %v2392
        %v2457 = vadd.f32 %v2263, %v2393
        %v2458 = vadd.f32 %v2264, %v2394
        %v2459 = vadd.f32 %v2265, %v2395
        %v2460 = vadd.f32 %v2266, %v2396
        %v2461 = vadd.f32 %v2267, %v2397
        %v2462 = vadd.f32 %v2268, %v2398
        %v2463 = vadd.f32 %v2269, %v2399
        %v2464 = vadd.f32 %v2270, %v2400
        %v2465 = vadd.f32 %v2271, %v2401
        %v2466 = vadd.f32 %v2272, %v2402
        %v2467 = vadd.f32 %v2273, %v2403
        %v2468 = vadd.f32 %v2274, %v2404
        %v2469 = vadd.f32 %v2275, %v2405
        %v2470 = vadd.f32 %v2276, %v2406
        %v2471 = vadd.f32 %v2277, %v2407
        %v2472 = vadd.f32 %v2278, %v2408
        %v2473 = vadd.f32 %v2279, %v2409
        %v2474 = vadd.f32 %v2280, %v2410
        %v2475 = vadd.f32 %v2281, %v2411
        %v2476 = vadd.f32 %v2282, %v2412
        %v2477 = vadd.f32 %v2283, %v2413
        %v2478 = vadd.f32 %v2284, %v2414
        %v2479 = vadd.f32 %v2285, %v2415
        %v2480 = vadd.f32 %v2286, %v2416
        %v2481 = vadd.f32 %v2287, %v2417
        %v2482 = vadd.f32 %v2288, %v2418
        %v2483 = vadd.f32 %v2289, %v2419
        %v2484 = vadd.f32 %v2290, %v2420
        %v2485 = vadd.f32 %v2291, %v2421
        %v2486 = vld [vmem:[#allocation6 + $0xa] sm:$0x1]
        %v2487 = vld [vmem:[%s249 + $0x1] sm:$0xff]
        %v2488 = vld [vmem:[%s249 + $0x11] sm:$0xff]
        %v2489 = vld [vmem:[%s249 + $0x21] sm:$0xff]
        %v2490 = vld [vmem:[%s249 + $0x31] sm:$0xff]
        %v2491 = vld [vmem:[%s249 + $0x41] sm:$0xff]
        %v2492 = vld [vmem:[%s249 + $0x51] sm:$0xff]
        %v2493 = vld [vmem:[%s249 + $0x61] sm:$0xff]
        %v2494 = vld [vmem:[%s249 + $0x71] sm:$0xff]
        %v2495 = vld [vmem:[%s249 + $0xa1] sm:$0xff]
        %v2496 = vld [vmem:[%s249 + $0xb1] sm:$0xff]
        %v2497 = vld [vmem:[%s249 + $0xc1] sm:$0xff]
        %v2498 = vld [vmem:[%s249 + $0xd1] sm:$0xff]
        %v2499 = vld [vmem:[%s249 + $0xe1] sm:$0xff]
        %v2500 = vld [vmem:[%s249 + $0xf1] sm:$0xff]
        %v2501 = vld [vmem:[%s249 + $0x101] sm:$0xff]
        %v2502 = vld [vmem:[%s249 + $0x111] sm:$0xff]
        %v2503 = vld [vmem:[%s249 + $0x141] sm:$0xff]
        %v2504 = vld [vmem:[%s249 + $0x151] sm:$0xff]
        %v2505 = vld [vmem:[%s249 + $0x161] sm:$0xff]
        %v2506 = vld [vmem:[%s249 + $0x171] sm:$0xff]
        %v2507 = vld [vmem:[%s249 + $0x181] sm:$0xff]
        %v2508 = vld [vmem:[%s249 + $0x191] sm:$0xff]
        %v2509 = vld [vmem:[%s249 + $0x1a1] sm:$0xff]
        %v2510 = vld [vmem:[%s249 + $0x1b1] sm:$0xff]
        %v2511 = vld [vmem:[%s249 + $0x1e1] sm:$0xff]
        %v2512 = vld [vmem:[%s249 + $0x1f1] sm:$0xff]
        %v2513 = vld [vmem:[%s249 + $0x201] sm:$0xff]
        %v2514 = vld [vmem:[%s249 + $0x211] sm:$0xff]
        %v2515 = vld [vmem:[%s249 + $0x221] sm:$0xff]
        %v2516 = vld [vmem:[%s249 + $0x231] sm:$0xff]
        %v2517 = vld [vmem:[%s249 + $0x241] sm:$0xff]
        %v2518 = vld [vmem:[%s249 + $0x251] sm:$0xff]
        %v2519 = vld [vmem:[%s249 + $0x281] sm:$0xff]
        %v2520 = vld [vmem:[%s249 + $0x291] sm:$0xff]
        %v2521 = vld [vmem:[%s249 + $0x2a1] sm:$0xff]
        %v2522 = vld [vmem:[%s249 + $0x2b1] sm:$0xff]
        %v2523 = vld [vmem:[%s249 + $0x2c1] sm:$0xff]
        %v2524 = vld [vmem:[%s249 + $0x2d1] sm:$0xff]
        %v2525 = vld [vmem:[%s249 + $0x2e1] sm:$0xff]
        %v2526 = vld [vmem:[%s249 + $0x2f1] sm:$0xff]
        %v2527 = vld [vmem:[%s249 + $0x321] sm:$0xff]
        %v2528 = vld [vmem:[%s249 + $0x331] sm:$0xff]
        %v2529 = vld [vmem:[%s249 + $0x341] sm:$0xff]
        %v2530 = vld [vmem:[%s249 + $0x351] sm:$0xff]
        %v2531 = vld [vmem:[%s249 + $0x361] sm:$0xff]
        %v2532 = vld [vmem:[%s249 + $0x371] sm:$0xff]
        %v2533 = vld [vmem:[%s249 + $0x381] sm:$0xff]
        %v2534 = vld [vmem:[%s249 + $0x391] sm:$0xff]
        %v2535 = vld [vmem:[%s249 + $0x3c1] sm:$0xff]
        %v2536 = vld [vmem:[%s249 + $0x3d1] sm:$0xff]
        %v2537 = vld [vmem:[%s249 + $0x3e1] sm:$0xff]
        %v2538 = vld [vmem:[%s249 + $0x3f1] sm:$0xff]
        %v2539 = vld [vmem:[%s249 + $0x401] sm:$0xff]
        %v2540 = vld [vmem:[%s249 + $0x411] sm:$0xff]
        %v2541 = vld [vmem:[%s249 + $0x421] sm:$0xff]
        %v2542 = vld [vmem:[%s249 + $0x431] sm:$0xff]
        %v2543 = vld [vmem:[%s249 + $0x461] sm:$0xff]
        %v2544 = vld [vmem:[%s249 + $0x471] sm:$0xff]
        %v2545 = vld [vmem:[%s249 + $0x481] sm:$0xff]
        %v2546 = vld [vmem:[%s249 + $0x491] sm:$0xff]
        %v2547 = vld [vmem:[%s249 + $0x4a1] sm:$0xff]
        %v2548 = vld [vmem:[%s249 + $0x4b1] sm:$0xff]
        %v2549 = vld [vmem:[%s249 + $0x4c1] sm:$0xff]
        %v2550 = vld [vmem:[%s249 + $0x4d1] sm:$0xff]
        %v2551 = vperm.slane %v2486, 0
        %v2552 = vmul.f32 %v2487, %v2551
        %v2553 = vmul.f32 %v2488, %v2551
        %v2554 = vmul.f32 %v2489, %v2551
        %v2555 = vmul.f32 %v2490, %v2551
        %v2556 = vmul.f32 %v2491, %v2551
        %v2557 = vmul.f32 %v2492, %v2551
        %v2558 = vmul.f32 %v2493, %v2551
        %v2559 = vmul.f32 %v2494, %v2551
        %v2560 = vmul.f32 %v2495, %v2551
        %v2561 = vmul.f32 %v2496, %v2551
        %v2562 = vmul.f32 %v2497, %v2551
        %v2563 = vmul.f32 %v2498, %v2551
        %v2564 = vmul.f32 %v2499, %v2551
        %v2565 = vmul.f32 %v2500, %v2551
        %v2566 = vmul.f32 %v2501, %v2551
        %v2567 = vmul.f32 %v2502, %v2551
        %v2568 = vmul.f32 %v2503, %v2551
        %v2569 = vmul.f32 %v2504, %v2551
        %v2570 = vmul.f32 %v2505, %v2551
        %v2571 = vmul.f32 %v2506, %v2551
        %v2572 = vmul.f32 %v2507, %v2551
        %v2573 = vmul.f32 %v2508, %v2551
        %v2574 = vmul.f32 %v2509, %v2551
        %v2575 = vmul.f32 %v2510, %v2551
        %v2576 = vmul.f32 %v2511, %v2551
        %v2577 = vmul.f32 %v2512, %v2551
        %v2578 = vmul.f32 %v2513, %v2551
        %v2579 = vmul.f32 %v2514, %v2551
        %v2580 = vmul.f32 %v2515, %v2551
        %v2581 = vmul.f32 %v2516, %v2551
        %v2582 = vmul.f32 %v2517, %v2551
        %v2583 = vmul.f32 %v2518, %v2551
        %v2584 = vmul.f32 %v2519, %v2551
        %v2585 = vmul.f32 %v2520, %v2551
        %v2586 = vmul.f32 %v2521, %v2551
        %v2587 = vmul.f32 %v2522, %v2551
        %v2588 = vmul.f32 %v2523, %v2551
        %v2589 = vmul.f32 %v2524, %v2551
        %v2590 = vmul.f32 %v2525, %v2551
        %v2591 = vmul.f32 %v2526, %v2551
        %v2592 = vmul.f32 %v2527, %v2551
        %v2593 = vmul.f32 %v2528, %v2551
        %v2594 = vmul.f32 %v2529, %v2551
        %v2595 = vmul.f32 %v2530, %v2551
        %v2596 = vmul.f32 %v2531, %v2551
        %v2597 = vmul.f32 %v2532, %v2551
        %v2598 = vmul.f32 %v2533, %v2551
        %v2599 = vmul.f32 %v2534, %v2551
        %v2600 = vmul.f32 %v2535, %v2551
        %v2601 = vmul.f32 %v2536, %v2551
        %v2602 = vmul.f32 %v2537, %v2551
        %v2603 = vmul.f32 %v2538, %v2551
        %v2604 = vmul.f32 %v2539, %v2551
        %v2605 = vmul.f32 %v2540, %v2551
        %v2606 = vmul.f32 %v2541, %v2551
        %v2607 = vmul.f32 %v2542, %v2551
        %v2608 = vmul.f32 %v2543, %v2551
        %v2609 = vmul.f32 %v2544, %v2551
        %v2610 = vmul.f32 %v2545, %v2551
        %v2611 = vmul.f32 %v2546, %v2551
        %v2612 = vmul.f32 %v2547, %v2551
        %v2613 = vmul.f32 %v2548, %v2551
        %v2614 = vmul.f32 %v2549, %v2551
        %v2615 = vmul.f32 %v2550, %v2551
        %v2616 = vadd.f32 %v2422, %v2552
        %v2617 = vadd.f32 %v2423, %v2553
        %v2618 = vadd.f32 %v2424, %v2554
        %v2619 = vadd.f32 %v2425, %v2555
        %v2620 = vadd.f32 %v2426, %v2556
        %v2621 = vadd.f32 %v2427, %v2557
        %v2622 = vadd.f32 %v2428, %v2558
        %v2623 = vadd.f32 %v2429, %v2559
        %v2624 = vadd.f32 %v2430, %v2560
        %v2625 = vadd.f32 %v2431, %v2561
        %v2626 = vadd.f32 %v2432, %v2562
        %v2627 = vadd.f32 %v2433, %v2563
        %v2628 = vadd.f32 %v2434, %v2564
        %v2629 = vadd.f32 %v2435, %v2565
        %v2630 = vadd.f32 %v2436, %v2566
        %v2631 = vadd.f32 %v2437, %v2567
        %v2632 = vadd.f32 %v2438, %v2568
        %v2633 = vadd.f32 %v2439, %v2569
        %v2634 = vadd.f32 %v2440, %v2570
        %v2635 = vadd.f32 %v2441, %v2571
        %v2636 = vadd.f32 %v2442, %v2572
        %v2637 = vadd.f32 %v2443, %v2573
        %v2638 = vadd.f32 %v2444, %v2574
        %v2639 = vadd.f32 %v2445, %v2575
        %v2640 = vadd.f32 %v2446, %v2576
        %v2641 = vadd.f32 %v2447, %v2577
        %v2642 = vadd.f32 %v2448, %v2578
        %v2643 = vadd.f32 %v2449, %v2579
        %v2644 = vadd.f32 %v2450, %v2580
        %v2645 = vadd.f32 %v2451, %v2581
        %v2646 = vadd.f32 %v2452, %v2582
        %v2647 = vadd.f32 %v2453, %v2583
        %v2648 = vadd.f32 %v2454, %v2584
        %v2649 = vadd.f32 %v2455, %v2585
        %v2650 = vadd.f32 %v2456, %v2586
        %v2651 = vadd.f32 %v2457, %v2587
        %v2652 = vadd.f32 %v2458, %v2588
        %v2653 = vadd.f32 %v2459, %v2589
        %v2654 = vadd.f32 %v2460, %v2590
        %v2655 = vadd.f32 %v2461, %v2591
        %v2656 = vadd.f32 %v2462, %v2592
        %v2657 = vadd.f32 %v2463, %v2593
        %v2658 = vadd.f32 %v2464, %v2594
        %v2659 = vadd.f32 %v2465, %v2595
        %v2660 = vadd.f32 %v2466, %v2596
        %v2661 = vadd.f32 %v2467, %v2597
        %v2662 = vadd.f32 %v2468, %v2598
        %v2663 = vadd.f32 %v2469, %v2599
        %v2664 = vadd.f32 %v2470, %v2600
        %v2665 = vadd.f32 %v2471, %v2601
        %v2666 = vadd.f32 %v2472, %v2602
        %v2667 = vadd.f32 %v2473, %v2603
        %v2668 = vadd.f32 %v2474, %v2604
        %v2669 = vadd.f32 %v2475, %v2605
        %v2670 = vadd.f32 %v2476, %v2606
        %v2671 = vadd.f32 %v2477, %v2607
        %v2672 = vadd.f32 %v2478, %v2608
        %v2673 = vadd.f32 %v2479, %v2609
        %v2674 = vadd.f32 %v2480, %v2610
        %v2675 = vadd.f32 %v2481, %v2611
        %v2676 = vadd.f32 %v2482, %v2612
        %v2677 = vadd.f32 %v2483, %v2613
        %v2678 = vadd.f32 %v2484, %v2614
        %v2679 = vadd.f32 %v2485, %v2615
        %v2680 = vld [vmem:[#allocation6 + $0xb] sm:$0x1]
        %v2681 = vld [vmem:[%s249 + $0x2] sm:$0xff]
        %v2682 = vld [vmem:[%s249 + $0x12] sm:$0xff]
        %v2683 = vld [vmem:[%s249 + $0x22] sm:$0xff]
        %v2684 = vld [vmem:[%s249 + $0x32] sm:$0xff]
        %v2685 = vld [vmem:[%s249 + $0x42] sm:$0xff]
        %v2686 = vld [vmem:[%s249 + $0x52] sm:$0xff]
        %v2687 = vld [vmem:[%s249 + $0x62] sm:$0xff]
        %v2688 = vld [vmem:[%s249 + $0x72] sm:$0xff]
        %v2689 = vld [vmem:[%s249 + $0xa2] sm:$0xff]
        %v2690 = vld [vmem:[%s249 + $0xb2] sm:$0xff]
        %v2691 = vld [vmem:[%s249 + $0xc2] sm:$0xff]
        %v2692 = vld [vmem:[%s249 + $0xd2] sm:$0xff]
        %v2693 = vld [vmem:[%s249 + $0xe2] sm:$0xff]
        %v2694 = vld [vmem:[%s249 + $0xf2] sm:$0xff]
        %v2695 = vld [vmem:[%s249 + $0x102] sm:$0xff]
        %v2696 = vld [vmem:[%s249 + $0x112] sm:$0xff]
        %v2697 = vld [vmem:[%s249 + $0x142] sm:$0xff]
        %v2698 = vld [vmem:[%s249 + $0x152] sm:$0xff]
        %v2699 = vld [vmem:[%s249 + $0x162] sm:$0xff]
        %v2700 = vld [vmem:[%s249 + $0x172] sm:$0xff]
        %v2701 = vld [vmem:[%s249 + $0x182] sm:$0xff]
        %v2702 = vld [vmem:[%s249 + $0x192] sm:$0xff]
        %v2703 = vld [vmem:[%s249 + $0x1a2] sm:$0xff]
        %v2704 = vld [vmem:[%s249 + $0x1b2] sm:$0xff]
        %v2705 = vld [vmem:[%s249 + $0x1e2] sm:$0xff]
        %v2706 = vld [vmem:[%s249 + $0x1f2] sm:$0xff]
        %v2707 = vld [vmem:[%s249 + $0x202] sm:$0xff]
        %v2708 = vld [vmem:[%s249 + $0x212] sm:$0xff]
        %v2709 = vld [vmem:[%s249 + $0x222] sm:$0xff]
        %v2710 = vld [vmem:[%s249 + $0x232] sm:$0xff]
        %v2711 = vld [vmem:[%s249 + $0x242] sm:$0xff]
        %v2712 = vld [vmem:[%s249 + $0x252] sm:$0xff]
        %v2713 = vld [vmem:[%s249 + $0x282] sm:$0xff]
        %v2714 = vld [vmem:[%s249 + $0x292] sm:$0xff]
        %v2715 = vld [vmem:[%s249 + $0x2a2] sm:$0xff]
        %v2716 = vld [vmem:[%s249 + $0x2b2] sm:$0xff]
        %v2717 = vld [vmem:[%s249 + $0x2c2] sm:$0xff]
        %v2718 = vld [vmem:[%s249 + $0x2d2] sm:$0xff]
        %v2719 = vld [vmem:[%s249 + $0x2e2] sm:$0xff]
        %v2720 = vld [vmem:[%s249 + $0x2f2] sm:$0xff]
        %v2721 = vld [vmem:[%s249 + $0x322] sm:$0xff]
        %v2722 = vld [vmem:[%s249 + $0x332] sm:$0xff]
        %v2723 = vld [vmem:[%s249 + $0x342] sm:$0xff]
        %v2724 = vld [vmem:[%s249 + $0x352] sm:$0xff]
        %v2725 = vld [vmem:[%s249 + $0x362] sm:$0xff]
        %v2726 = vld [vmem:[%s249 + $0x372] sm:$0xff]
        %v2727 = vld [vmem:[%s249 + $0x382] sm:$0xff]
        %v2728 = vld [vmem:[%s249 + $0x392] sm:$0xff]
        %v2729 = vld [vmem:[%s249 + $0x3c2] sm:$0xff]
        %v2730 = vld [vmem:[%s249 + $0x3d2] sm:$0xff]
        %v2731 = vld [vmem:[%s249 + $0x3e2] sm:$0xff]
        %v2732 = vld [vmem:[%s249 + $0x3f2] sm:$0xff]
        %v2733 = vld [vmem:[%s249 + $0x402] sm:$0xff]
        %v2734 = vld [vmem:[%s249 + $0x412] sm:$0xff]
        %v2735 = vld [vmem:[%s249 + $0x422] sm:$0xff]
        %v2736 = vld [vmem:[%s249 + $0x432] sm:$0xff]
        %v2737 = vld [vmem:[%s249 + $0x462] sm:$0xff]
        %v2738 = vld [vmem:[%s249 + $0x472] sm:$0xff]
        %v2739 = vld [vmem:[%s249 + $0x482] sm:$0xff]
        %v2740 = vld [vmem:[%s249 + $0x492] sm:$0xff]
        %v2741 = vld [vmem:[%s249 + $0x4a2] sm:$0xff]
        %v2742 = vld [vmem:[%s249 + $0x4b2] sm:$0xff]
        %v2743 = vld [vmem:[%s249 + $0x4c2] sm:$0xff]
        %v2744 = vld [vmem:[%s249 + $0x4d2] sm:$0xff]
        %v2745 = vperm.slane %v2680, 0
        %v2746 = vmul.f32 %v2681, %v2745
        %v2747 = vmul.f32 %v2682, %v2745
        %v2748 = vmul.f32 %v2683, %v2745
        %v2749 = vmul.f32 %v2684, %v2745
        %v2750 = vmul.f32 %v2685, %v2745
        %v2751 = vmul.f32 %v2686, %v2745
        %v2752 = vmul.f32 %v2687, %v2745
        %v2753 = vmul.f32 %v2688, %v2745
        %v2754 = vmul.f32 %v2689, %v2745
        %v2755 = vmul.f32 %v2690, %v2745
        %v2756 = vmul.f32 %v2691, %v2745
        %v2757 = vmul.f32 %v2692, %v2745
        %v2758 = vmul.f32 %v2693, %v2745
        %v2759 = vmul.f32 %v2694, %v2745
        %v2760 = vmul.f32 %v2695, %v2745
        %v2761 = vmul.f32 %v2696, %v2745
        %v2762 = vmul.f32 %v2697, %v2745
        %v2763 = vmul.f32 %v2698, %v2745
        %v2764 = vmul.f32 %v2699, %v2745
        %v2765 = vmul.f32 %v2700, %v2745
        %v2766 = vmul.f32 %v2701, %v2745
        %v2767 = vmul.f32 %v2702, %v2745
        %v2768 = vmul.f32 %v2703, %v2745
        %v2769 = vmul.f32 %v2704, %v2745
        %v2770 = vmul.f32 %v2705, %v2745
        %v2771 = vmul.f32 %v2706, %v2745
        %v2772 = vmul.f32 %v2707, %v2745
        %v2773 = vmul.f32 %v2708, %v2745
        %v2774 = vmul.f32 %v2709, %v2745
        %v2775 = vmul.f32 %v2710, %v2745
        %v2776 = vmul.f32 %v2711, %v2745
        %v2777 = vmul.f32 %v2712, %v2745
        %v2778 = vmul.f32 %v2713, %v2745
        %v2779 = vmul.f32 %v2714, %v2745
        %v2780 = vmul.f32 %v2715, %v2745
        %v2781 = vmul.f32 %v2716, %v2745
        %v2782 = vmul.f32 %v2717, %v2745
        %v2783 = vmul.f32 %v2718, %v2745
        %v2784 = vmul.f32 %v2719, %v2745
        %v2785 = vmul.f32 %v2720, %v2745
        %v2786 = vmul.f32 %v2721, %v2745
        %v2787 = vmul.f32 %v2722, %v2745
        %v2788 = vmul.f32 %v2723, %v2745
        %v2789 = vmul.f32 %v2724, %v2745
        %v2790 = vmul.f32 %v2725, %v2745
        %v2791 = vmul.f32 %v2726, %v2745
        %v2792 = vmul.f32 %v2727, %v2745
        %v2793 = vmul.f32 %v2728, %v2745
        %v2794 = vmul.f32 %v2729, %v2745
        %v2795 = vmul.f32 %v2730, %v2745
        %v2796 = vmul.f32 %v2731, %v2745
        %v2797 = vmul.f32 %v2732, %v2745
        %v2798 = vmul.f32 %v2733, %v2745
        %v2799 = vmul.f32 %v2734, %v2745
        %v2800 = vmul.f32 %v2735, %v2745
        %v2801 = vmul.f32 %v2736, %v2745
        %v2802 = vmul.f32 %v2737, %v2745
        %v2803 = vmul.f32 %v2738, %v2745
        %v2804 = vmul.f32 %v2739, %v2745
        %v2805 = vmul.f32 %v2740, %v2745
        %v2806 = vmul.f32 %v2741, %v2745
        %v2807 = vmul.f32 %v2742, %v2745
        %v2808 = vmul.f32 %v2743, %v2745
        %v2809 = vmul.f32 %v2744, %v2745
        %v2810 = vadd.f32 %v2616, %v2746
        %v2811 = vadd.f32 %v2617, %v2747
        %v2812 = vadd.f32 %v2618, %v2748
        %v2813 = vadd.f32 %v2619, %v2749
        %v2814 = vadd.f32 %v2620, %v2750
        %v2815 = vadd.f32 %v2621, %v2751
        %v2816 = vadd.f32 %v2622, %v2752
        %v2817 = vadd.f32 %v2623, %v2753
        %v2818 = vadd.f32 %v2624, %v2754
        %v2819 = vadd.f32 %v2625, %v2755
        %v2820 = vadd.f32 %v2626, %v2756
        %v2821 = vadd.f32 %v2627, %v2757
        %v2822 = vadd.f32 %v2628, %v2758
        %v2823 = vadd.f32 %v2629, %v2759
        %v2824 = vadd.f32 %v2630, %v2760
        %v2825 = vadd.f32 %v2631, %v2761
        %v2826 = vadd.f32 %v2632, %v2762
        %v2827 = vadd.f32 %v2633, %v2763
        %v2828 = vadd.f32 %v2634, %v2764
        %v2829 = vadd.f32 %v2635, %v2765
        %v2830 = vadd.f32 %v2636, %v2766
        %v2831 = vadd.f32 %v2637, %v2767
        %v2832 = vadd.f32 %v2638, %v2768
        %v2833 = vadd.f32 %v2639, %v2769
        %v2834 = vadd.f32 %v2640, %v2770
        %v2835 = vadd.f32 %v2641, %v2771
        %v2836 = vadd.f32 %v2642, %v2772
        %v2837 = vadd.f32 %v2643, %v2773
        %v2838 = vadd.f32 %v2644, %v2774
        %v2839 = vadd.f32 %v2645, %v2775
        %v2840 = vadd.f32 %v2646, %v2776
        %v2841 = vadd.f32 %v2647, %v2777
        %v2842 = vadd.f32 %v2648, %v2778
        %v2843 = vadd.f32 %v2649, %v2779
        %v2844 = vadd.f32 %v2650, %v2780
        %v2845 = vadd.f32 %v2651, %v2781
        %v2846 = vadd.f32 %v2652, %v2782
        %v2847 = vadd.f32 %v2653, %v2783
        %v2848 = vadd.f32 %v2654, %v2784
        %v2849 = vadd.f32 %v2655, %v2785
        %v2850 = vadd.f32 %v2656, %v2786
        %v2851 = vadd.f32 %v2657, %v2787
        %v2852 = vadd.f32 %v2658, %v2788
        %v2853 = vadd.f32 %v2659, %v2789
        %v2854 = vadd.f32 %v2660, %v2790
        %v2855 = vadd.f32 %v2661, %v2791
        %v2856 = vadd.f32 %v2662, %v2792
        %v2857 = vadd.f32 %v2663, %v2793
        %v2858 = vadd.f32 %v2664, %v2794
        %v2859 = vadd.f32 %v2665, %v2795
        %v2860 = vadd.f32 %v2666, %v2796
        %v2861 = vadd.f32 %v2667, %v2797
        %v2862 = vadd.f32 %v2668, %v2798
        %v2863 = vadd.f32 %v2669, %v2799
        %v2864 = vadd.f32 %v2670, %v2800
        %v2865 = vadd.f32 %v2671, %v2801
        %v2866 = vadd.f32 %v2672, %v2802
        %v2867 = vadd.f32 %v2673, %v2803
        %v2868 = vadd.f32 %v2674, %v2804
        %v2869 = vadd.f32 %v2675, %v2805
        %v2870 = vadd.f32 %v2676, %v2806
        %v2871 = vadd.f32 %v2677, %v2807
        %v2872 = vadd.f32 %v2678, %v2808
        %v2873 = vadd.f32 %v2679, %v2809
        %v2874 = vld [vmem:[#allocation6 + $0xc] sm:$0x1]
        %v2875 = vld [vmem:[%s283] sm:$0xff]
        %v2876 = vld [vmem:[%s283 + $0x10] sm:$0xff]
        %v2877 = vld [vmem:[%s283 + $0x20] sm:$0xff]
        %v2878 = vld [vmem:[%s283 + $0x30] sm:$0xff]
        %v2879 = vld [vmem:[%s283 + $0x40] sm:$0xff]
        %v2880 = vld [vmem:[%s283 + $0x50] sm:$0xff]
        %v2881 = vld [vmem:[%s283 + $0x60] sm:$0xff]
        %v2882 = vld [vmem:[%s283 + $0x70] sm:$0xff]
        %v2883 = vld [vmem:[%s283 + $0xa0] sm:$0xff]
        %v2884 = vld [vmem:[%s283 + $0xb0] sm:$0xff]
        %v2885 = vld [vmem:[%s283 + $0xc0] sm:$0xff]
        %v2886 = vld [vmem:[%s283 + $0xd0] sm:$0xff]
        %v2887 = vld [vmem:[%s283 + $0xe0] sm:$0xff]
        %v2888 = vld [vmem:[%s283 + $0xf0] sm:$0xff]
        %v2889 = vld [vmem:[%s283 + $0x100] sm:$0xff]
        %v2890 = vld [vmem:[%s283 + $0x110] sm:$0xff]
        %v2891 = vld [vmem:[%s283 + $0x140] sm:$0xff]
        %v2892 = vld [vmem:[%s283 + $0x150] sm:$0xff]
        %v2893 = vld [vmem:[%s283 + $0x160] sm:$0xff]
        %v2894 = vld [vmem:[%s283 + $0x170] sm:$0xff]
        %v2895 = vld [vmem:[%s283 + $0x180] sm:$0xff]
        %v2896 = vld [vmem:[%s283 + $0x190] sm:$0xff]
        %v2897 = vld [vmem:[%s283 + $0x1a0] sm:$0xff]
        %v2898 = vld [vmem:[%s283 + $0x1b0] sm:$0xff]
        %v2899 = vld [vmem:[%s283 + $0x1e0] sm:$0xff]
        %v2900 = vld [vmem:[%s283 + $0x1f0] sm:$0xff]
        %v2901 = vld [vmem:[%s283 + $0x200] sm:$0xff]
        %v2902 = vld [vmem:[%s283 + $0x210] sm:$0xff]
        %v2903 = vld [vmem:[%s283 + $0x220] sm:$0xff]
        %v2904 = vld [vmem:[%s283 + $0x230] sm:$0xff]
        %v2905 = vld [vmem:[%s283 + $0x240] sm:$0xff]
        %v2906 = vld [vmem:[%s283 + $0x250] sm:$0xff]
        %v2907 = vld [vmem:[%s283 + $0x280] sm:$0xff]
        %v2908 = vld [vmem:[%s283 + $0x290] sm:$0xff]
        %v2909 = vld [vmem:[%s283 + $0x2a0] sm:$0xff]
        %v2910 = vld [vmem:[%s283 + $0x2b0] sm:$0xff]
        %v2911 = vld [vmem:[%s283 + $0x2c0] sm:$0xff]
        %v2912 = vld [vmem:[%s283 + $0x2d0] sm:$0xff]
        %v2913 = vld [vmem:[%s283 + $0x2e0] sm:$0xff]
        %v2914 = vld [vmem:[%s283 + $0x2f0] sm:$0xff]
        %v2915 = vld [vmem:[%s283 + $0x320] sm:$0xff]
        %v2916 = vld [vmem:[%s283 + $0x330] sm:$0xff]
        %v2917 = vld [vmem:[%s283 + $0x340] sm:$0xff]
        %v2918 = vld [vmem:[%s283 + $0x350] sm:$0xff]
        %v2919 = vld [vmem:[%s283 + $0x360] sm:$0xff]
        %v2920 = vld [vmem:[%s283 + $0x370] sm:$0xff]
        %v2921 = vld [vmem:[%s283 + $0x380] sm:$0xff]
        %v2922 = vld [vmem:[%s283 + $0x390] sm:$0xff]
        %v2923 = vld [vmem:[%s283 + $0x3c0] sm:$0xff]
        %v2924 = vld [vmem:[%s283 + $0x3d0] sm:$0xff]
        %v2925 = vld [vmem:[%s283 + $0x3e0] sm:$0xff]
        %v2926 = vld [vmem:[%s283 + $0x3f0] sm:$0xff]
        %v2927 = vld [vmem:[%s283 + $0x400] sm:$0xff]
        %v2928 = vld [vmem:[%s283 + $0x410] sm:$0xff]
        %v2929 = vld [vmem:[%s283 + $0x420] sm:$0xff]
        %v2930 = vld [vmem:[%s283 + $0x430] sm:$0xff]
        %v2931 = vld [vmem:[%s283 + $0x460] sm:$0xff]
        %v2932 = vld [vmem:[%s283 + $0x470] sm:$0xff]
        %v2933 = vld [vmem:[%s283 + $0x480] sm:$0xff]
        %v2934 = vld [vmem:[%s283 + $0x490] sm:$0xff]
        %v2935 = vld [vmem:[%s283 + $0x4a0] sm:$0xff]
        %v2936 = vld [vmem:[%s283 + $0x4b0] sm:$0xff]
        %v2937 = vld [vmem:[%s283 + $0x4c0] sm:$0xff]
        %v2938 = vld [vmem:[%s283 + $0x4d0] sm:$0xff]
        %v2939 = vperm.slane %v2874, 0
        %v2940 = vmul.f32 %v2875, %v2939
        %v2941 = vmul.f32 %v2876, %v2939
        %v2942 = vmul.f32 %v2877, %v2939
        %v2943 = vmul.f32 %v2878, %v2939
        %v2944 = vmul.f32 %v2879, %v2939
        %v2945 = vmul.f32 %v2880, %v2939
        %v2946 = vmul.f32 %v2881, %v2939
        %v2947 = vmul.f32 %v2882, %v2939
        %v2948 = vmul.f32 %v2883, %v2939
        %v2949 = vmul.f32 %v2884, %v2939
        %v2950 = vmul.f32 %v2885, %v2939
        %v2951 = vmul.f32 %v2886, %v2939
        %v2952 = vmul.f32 %v2887, %v2939
        %v2953 = vmul.f32 %v2888, %v2939
        %v2954 = vmul.f32 %v2889, %v2939
        %v2955 = vmul.f32 %v2890, %v2939
        %v2956 = vmul.f32 %v2891, %v2939
        %v2957 = vmul.f32 %v2892, %v2939
        %v2958 = vmul.f32 %v2893, %v2939
        %v2959 = vmul.f32 %v2894, %v2939
        %v2960 = vmul.f32 %v2895, %v2939
        %v2961 = vmul.f32 %v2896, %v2939
        %v2962 = vmul.f32 %v2897, %v2939
        %v2963 = vmul.f32 %v2898, %v2939
        %v2964 = vmul.f32 %v2899, %v2939
        %v2965 = vmul.f32 %v2900, %v2939
        %v2966 = vmul.f32 %v2901, %v2939
        %v2967 = vmul.f32 %v2902, %v2939
        %v2968 = vmul.f32 %v2903, %v2939
        %v2969 = vmul.f32 %v2904, %v2939
        %v2970 = vmul.f32 %v2905, %v2939
        %v2971 = vmul.f32 %v2906, %v2939
        %v2972 = vmul.f32 %v2907, %v2939
        %v2973 = vmul.f32 %v2908, %v2939
        %v2974 = vmul.f32 %v2909, %v2939
        %v2975 = vmul.f32 %v2910, %v2939
        %v2976 = vmul.f32 %v2911, %v2939
        %v2977 = vmul.f32 %v2912, %v2939
        %v2978 = vmul.f32 %v2913, %v2939
        %v2979 = vmul.f32 %v2914, %v2939
        %v2980 = vmul.f32 %v2915, %v2939
        %v2981 = vmul.f32 %v2916, %v2939
        %v2982 = vmul.f32 %v2917, %v2939
        %v2983 = vmul.f32 %v2918, %v2939
        %v2984 = vmul.f32 %v2919, %v2939
        %v2985 = vmul.f32 %v2920, %v2939
        %v2986 = vmul.f32 %v2921, %v2939
        %v2987 = vmul.f32 %v2922, %v2939
        %v2988 = vmul.f32 %v2923, %v2939
        %v2989 = vmul.f32 %v2924, %v2939
        %v2990 = vmul.f32 %v2925, %v2939
        %v2991 = vmul.f32 %v2926, %v2939
        %v2992 = vmul.f32 %v2927, %v2939
        %v2993 = vmul.f32 %v2928, %v2939
        %v2994 = vmul.f32 %v2929, %v2939
        %v2995 = vmul.f32 %v2930, %v2939
        %v2996 = vmul.f32 %v2931, %v2939
        %v2997 = vmul.f32 %v2932, %v2939
        %v2998 = vmul.f32 %v2933, %v2939
        %v2999 = vmul.f32 %v2934, %v2939
        %v3000 = vmul.f32 %v2935, %v2939
        %v3001 = vmul.f32 %v2936, %v2939
        %v3002 = vmul.f32 %v2937, %v2939
        %v3003 = vmul.f32 %v2938, %v2939
        %v3004 = vadd.f32 %v2810, %v2940
        %v3005 = vadd.f32 %v2811, %v2941
        %v3006 = vadd.f32 %v2812, %v2942
        %v3007 = vadd.f32 %v2813, %v2943
        %v3008 = vadd.f32 %v2814, %v2944
        %v3009 = vadd.f32 %v2815, %v2945
        %v3010 = vadd.f32 %v2816, %v2946
        %v3011 = vadd.f32 %v2817, %v2947
        %v3012 = vadd.f32 %v2818, %v2948
        %v3013 = vadd.f32 %v2819, %v2949
        %v3014 = vadd.f32 %v2820, %v2950
        %v3015 = vadd.f32 %v2821, %v2951
        %v3016 = vadd.f32 %v2822, %v2952
        %v3017 = vadd.f32 %v2823, %v2953
        %v3018 = vadd.f32 %v2824, %v2954
        %v3019 = vadd.f32 %v2825, %v2955
        %v3020 = vadd.f32 %v2826, %v2956
        %v3021 = vadd.f32 %v2827, %v2957
        %v3022 = vadd.f32 %v2828, %v2958
        %v3023 = vadd.f32 %v2829, %v2959
        %v3024 = vadd.f32 %v2830, %v2960
        %v3025 = vadd.f32 %v2831, %v2961
        %v3026 = vadd.f32 %v2832, %v2962
        %v3027 = vadd.f32 %v2833, %v2963
        %v3028 = vadd.f32 %v2834, %v2964
        %v3029 = vadd.f32 %v2835, %v2965
        %v3030 = vadd.f32 %v2836, %v2966
        %v3031 = vadd.f32 %v2837, %v2967
        %v3032 = vadd.f32 %v2838, %v2968
        %v3033 = vadd.f32 %v2839, %v2969
        %v3034 = vadd.f32 %v2840, %v2970
        %v3035 = vadd.f32 %v2841, %v2971
        %v3036 = vadd.f32 %v2842, %v2972
        %v3037 = vadd.f32 %v2843, %v2973
        %v3038 = vadd.f32 %v2844, %v2974
        %v3039 = vadd.f32 %v2845, %v2975
        %v3040 = vadd.f32 %v2846, %v2976
        %v3041 = vadd.f32 %v2847, %v2977
        %v3042 = vadd.f32 %v2848, %v2978
        %v3043 = vadd.f32 %v2849, %v2979
        %v3044 = vadd.f32 %v2850, %v2980
        %v3045 = vadd.f32 %v2851, %v2981
        %v3046 = vadd.f32 %v2852, %v2982
        %v3047 = vadd.f32 %v2853, %v2983
        %v3048 = vadd.f32 %v2854, %v2984
        %v3049 = vadd.f32 %v2855, %v2985
        %v3050 = vadd.f32 %v2856, %v2986
        %v3051 = vadd.f32 %v2857, %v2987
        %v3052 = vadd.f32 %v2858, %v2988
        %v3053 = vadd.f32 %v2859, %v2989
        %v3054 = vadd.f32 %v2860, %v2990
        %v3055 = vadd.f32 %v2861, %v2991
        %v3056 = vadd.f32 %v2862, %v2992
        %v3057 = vadd.f32 %v2863, %v2993
        %v3058 = vadd.f32 %v2864, %v2994
        %v3059 = vadd.f32 %v2865, %v2995
        %v3060 = vadd.f32 %v2866, %v2996
        %v3061 = vadd.f32 %v2867, %v2997
        %v3062 = vadd.f32 %v2868, %v2998
        %v3063 = vadd.f32 %v2869, %v2999
        %v3064 = vadd.f32 %v2870, %v3000
        %v3065 = vadd.f32 %v2871, %v3001
        %v3066 = vadd.f32 %v2872, %v3002
        %v3067 = vadd.f32 %v2873, %v3003
        %v3068 = vld [vmem:[#allocation6 + $0xd] sm:$0x1]
        %v3069 = vld [vmem:[%s283 + $0x1] sm:$0xff]
        %v3070 = vld [vmem:[%s283 + $0x11] sm:$0xff]
        %v3071 = vld [vmem:[%s283 + $0x21] sm:$0xff]
        %v3072 = vld [vmem:[%s283 + $0x31] sm:$0xff]
        %v3073 = vld [vmem:[%s283 + $0x41] sm:$0xff]
        %v3074 = vld [vmem:[%s283 + $0x51] sm:$0xff]
        %v3075 = vld [vmem:[%s283 + $0x61] sm:$0xff]
        %v3076 = vld [vmem:[%s283 + $0x71] sm:$0xff]
        %v3077 = vld [vmem:[%s283 + $0xa1] sm:$0xff]
        %v3078 = vld [vmem:[%s283 + $0xb1] sm:$0xff]
        %v3079 = vld [vmem:[%s283 + $0xc1] sm:$0xff]
        %v3080 = vld [vmem:[%s283 + $0xd1] sm:$0xff]
        %v3081 = vld [vmem:[%s283 + $0xe1] sm:$0xff]
        %v3082 = vld [vmem:[%s283 + $0xf1] sm:$0xff]
        %v3083 = vld [vmem:[%s283 + $0x101] sm:$0xff]
        %v3084 = vld [vmem:[%s283 + $0x111] sm:$0xff]
        %v3085 = vld [vmem:[%s283 + $0x141] sm:$0xff]
        %v3086 = vld [vmem:[%s283 + $0x151] sm:$0xff]
        %v3087 = vld [vmem:[%s283 + $0x161] sm:$0xff]
        %v3088 = vld [vmem:[%s283 + $0x171] sm:$0xff]
        %v3089 = vld [vmem:[%s283 + $0x181] sm:$0xff]
        %v3090 = vld [vmem:[%s283 + $0x191] sm:$0xff]
        %v3091 = vld [vmem:[%s283 + $0x1a1] sm:$0xff]
        %v3092 = vld [vmem:[%s283 + $0x1b1] sm:$0xff]
        %v3093 = vld [vmem:[%s283 + $0x1e1] sm:$0xff]
        %v3094 = vld [vmem:[%s283 + $0x1f1] sm:$0xff]
        %v3095 = vld [vmem:[%s283 + $0x201] sm:$0xff]
        %v3096 = vld [vmem:[%s283 + $0x211] sm:$0xff]
        %v3097 = vld [vmem:[%s283 + $0x221] sm:$0xff]
        %v3098 = vld [vmem:[%s283 + $0x231] sm:$0xff]
        %v3099 = vld [vmem:[%s283 + $0x241] sm:$0xff]
        %v3100 = vld [vmem:[%s283 + $0x251] sm:$0xff]
        %v3101 = vld [vmem:[%s283 + $0x281] sm:$0xff]
        %v3102 = vld [vmem:[%s283 + $0x291] sm:$0xff]
        %v3103 = vld [vmem:[%s283 + $0x2a1] sm:$0xff]
        %v3104 = vld [vmem:[%s283 + $0x2b1] sm:$0xff]
        %v3105 = vld [vmem:[%s283 + $0x2c1] sm:$0xff]
        %v3106 = vld [vmem:[%s283 + $0x2d1] sm:$0xff]
        %v3107 = vld [vmem:[%s283 + $0x2e1] sm:$0xff]
        %v3108 = vld [vmem:[%s283 + $0x2f1] sm:$0xff]
        %v3109 = vld [vmem:[%s283 + $0x321] sm:$0xff]
        %v3110 = vld [vmem:[%s283 + $0x331] sm:$0xff]
        %v3111 = vld [vmem:[%s283 + $0x341] sm:$0xff]
        %v3112 = vld [vmem:[%s283 + $0x351] sm:$0xff]
        %v3113 = vld [vmem:[%s283 + $0x361] sm:$0xff]
        %v3114 = vld [vmem:[%s283 + $0x371] sm:$0xff]
        %v3115 = vld [vmem:[%s283 + $0x381] sm:$0xff]
        %v3116 = vld [vmem:[%s283 + $0x391] sm:$0xff]
        %v3117 = vld [vmem:[%s283 + $0x3c1] sm:$0xff]
        %v3118 = vld [vmem:[%s283 + $0x3d1] sm:$0xff]
        %v3119 = vld [vmem:[%s283 + $0x3e1] sm:$0xff]
        %v3120 = vld [vmem:[%s283 + $0x3f1] sm:$0xff]
        %v3121 = vld [vmem:[%s283 + $0x401] sm:$0xff]
        %v3122 = vld [vmem:[%s283 + $0x411] sm:$0xff]
        %v3123 = vld [vmem:[%s283 + $0x421] sm:$0xff]
        %v3124 = vld [vmem:[%s283 + $0x431] sm:$0xff]
        %v3125 = vld [vmem:[%s283 + $0x461] sm:$0xff]
        %v3126 = vld [vmem:[%s283 + $0x471] sm:$0xff]
        %v3127 = vld [vmem:[%s283 + $0x481] sm:$0xff]
        %v3128 = vld [vmem:[%s283 + $0x491] sm:$0xff]
        %v3129 = vld [vmem:[%s283 + $0x4a1] sm:$0xff]
        %v3130 = vld [vmem:[%s283 + $0x4b1] sm:$0xff]
        %v3131 = vld [vmem:[%s283 + $0x4c1] sm:$0xff]
        %v3132 = vld [vmem:[%s283 + $0x4d1] sm:$0xff]
        %v3133 = vperm.slane %v3068, 0
        %v3134 = vmul.f32 %v3069, %v3133
        %v3135 = vmul.f32 %v3070, %v3133
        %v3136 = vmul.f32 %v3071, %v3133
        %v3137 = vmul.f32 %v3072, %v3133
        %v3138 = vmul.f32 %v3073, %v3133
        %v3139 = vmul.f32 %v3074, %v3133
        %v3140 = vmul.f32 %v3075, %v3133
        %v3141 = vmul.f32 %v3076, %v3133
        %v3142 = vmul.f32 %v3077, %v3133
        %v3143 = vmul.f32 %v3078, %v3133
        %v3144 = vmul.f32 %v3079, %v3133
        %v3145 = vmul.f32 %v3080, %v3133
        %v3146 = vmul.f32 %v3081, %v3133
        %v3147 = vmul.f32 %v3082, %v3133
        %v3148 = vmul.f32 %v3083, %v3133
        %v3149 = vmul.f32 %v3084, %v3133
        %v3150 = vmul.f32 %v3085, %v3133
        %v3151 = vmul.f32 %v3086, %v3133
        %v3152 = vmul.f32 %v3087, %v3133
        %v3153 = vmul.f32 %v3088, %v3133
        %v3154 = vmul.f32 %v3089, %v3133
        %v3155 = vmul.f32 %v3090, %v3133
        %v3156 = vmul.f32 %v3091, %v3133
        %v3157 = vmul.f32 %v3092, %v3133
        %v3158 = vmul.f32 %v3093, %v3133
        %v3159 = vmul.f32 %v3094, %v3133
        %v3160 = vmul.f32 %v3095, %v3133
        %v3161 = vmul.f32 %v3096, %v3133
        %v3162 = vmul.f32 %v3097, %v3133
        %v3163 = vmul.f32 %v3098, %v3133
        %v3164 = vmul.f32 %v3099, %v3133
        %v3165 = vmul.f32 %v3100, %v3133
        %v3166 = vmul.f32 %v3101, %v3133
        %v3167 = vmul.f32 %v3102, %v3133
        %v3168 = vmul.f32 %v3103, %v3133
        %v3169 = vmul.f32 %v3104, %v3133
        %v3170 = vmul.f32 %v3105, %v3133
        %v3171 = vmul.f32 %v3106, %v3133
        %v3172 = vmul.f32 %v3107, %v3133
        %v3173 = vmul.f32 %v3108, %v3133
        %v3174 = vmul.f32 %v3109, %v3133
        %v3175 = vmul.f32 %v3110, %v3133
        %v3176 = vmul.f32 %v3111, %v3133
        %v3177 = vmul.f32 %v3112, %v3133
        %v3178 = vmul.f32 %v3113, %v3133
        %v3179 = vmul.f32 %v3114, %v3133
        %v3180 = vmul.f32 %v3115, %v3133
        %v3181 = vmul.f32 %v3116, %v3133
        %v3182 = vmul.f32 %v3117, %v3133
        %v3183 = vmul.f32 %v3118, %v3133
        %v3184 = vmul.f32 %v3119, %v3133
        %v3185 = vmul.f32 %v3120, %v3133
        %v3186 = vmul.f32 %v3121, %v3133
        %v3187 = vmul.f32 %v3122, %v3133
        %v3188 = vmul.f32 %v3123, %v3133
        %v3189 = vmul.f32 %v3124, %v3133
        %v3190 = vmul.f32 %v3125, %v3133
        %v3191 = vmul.f32 %v3126, %v3133
        %v3192 = vmul.f32 %v3127, %v3133
        %v3193 = vmul.f32 %v3128, %v3133
        %v3194 = vmul.f32 %v3129, %v3133
        %v3195 = vmul.f32 %v3130, %v3133
        %v3196 = vmul.f32 %v3131, %v3133
        %v3197 = vmul.f32 %v3132, %v3133
        %v3198 = vadd.f32 %v3004, %v3134
        %v3199 = vadd.f32 %v3005, %v3135
        %v3200 = vadd.f32 %v3006, %v3136
        %v3201 = vadd.f32 %v3007, %v3137
        %v3202 = vadd.f32 %v3008, %v3138
        %v3203 = vadd.f32 %v3009, %v3139
        %v3204 = vadd.f32 %v3010, %v3140
        %v3205 = vadd.f32 %v3011, %v3141
        %v3206 = vadd.f32 %v3012, %v3142
        %v3207 = vadd.f32 %v3013, %v3143
        %v3208 = vadd.f32 %v3014, %v3144
        %v3209 = vadd.f32 %v3015, %v3145
        %v3210 = vadd.f32 %v3016, %v3146
        %v3211 = vadd.f32 %v3017, %v3147
        %v3212 = vadd.f32 %v3018, %v3148
        %v3213 = vadd.f32 %v3019, %v3149
        %v3214 = vadd.f32 %v3020, %v3150
        %v3215 = vadd.f32 %v3021, %v3151
        %v3216 = vadd.f32 %v3022, %v3152
        %v3217 = vadd.f32 %v3023, %v3153
        %v3218 = vadd.f32 %v3024, %v3154
        %v3219 = vadd.f32 %v3025, %v3155
        %v3220 = vadd.f32 %v3026, %v3156
        %v3221 = vadd.f32 %v3027, %v3157
        %v3222 = vadd.f32 %v3028, %v3158
        %v3223 = vadd.f32 %v3029, %v3159
        %v3224 = vadd.f32 %v3030, %v3160
        %v3225 = vadd.f32 %v3031, %v3161
        %v3226 = vadd.f32 %v3032, %v3162
        %v3227 = vadd.f32 %v3033, %v3163
        %v3228 = vadd.f32 %v3034, %v3164
        %v3229 = vadd.f32 %v3035, %v3165
        %v3230 = vadd.f32 %v3036, %v3166
        %v3231 = vadd.f32 %v3037, %v3167
        %v3232 = vadd.f32 %v3038, %v3168
        %v3233 = vadd.f32 %v3039, %v3169
        %v3234 = vadd.f32 %v3040, %v3170
        %v3235 = vadd.f32 %v3041, %v3171
        %v3236 = vadd.f32 %v3042, %v3172
        %v3237 = vadd.f32 %v3043, %v3173
        %v3238 = vadd.f32 %v3044, %v3174
        %v3239 = vadd.f32 %v3045, %v3175
        %v3240 = vadd.f32 %v3046, %v3176
        %v3241 = vadd.f32 %v3047, %v3177
        %v3242 = vadd.f32 %v3048, %v3178
        %v3243 = vadd.f32 %v3049, %v3179
        %v3244 = vadd.f32 %v3050, %v3180
        %v3245 = vadd.f32 %v3051, %v3181
        %v3246 = vadd.f32 %v3052, %v3182
        %v3247 = vadd.f32 %v3053, %v3183
        %v3248 = vadd.f32 %v3054, %v3184
        %v3249 = vadd.f32 %v3055, %v3185
        %v3250 = vadd.f32 %v3056, %v3186
        %v3251 = vadd.f32 %v3057, %v3187
        %v3252 = vadd.f32 %v3058, %v3188
        %v3253 = vadd.f32 %v3059, %v3189
        %v3254 = vadd.f32 %v3060, %v3190
        %v3255 = vadd.f32 %v3061, %v3191
        %v3256 = vadd.f32 %v3062, %v3192
        %v3257 = vadd.f32 %v3063, %v3193
        %v3258 = vadd.f32 %v3064, %v3194
        %v3259 = vadd.f32 %v3065, %v3195
        %v3260 = vadd.f32 %v3066, %v3196
        %v3261 = vadd.f32 %v3067, %v3197
        %v3262 = vld [vmem:[#allocation6 + $0xe] sm:$0x1]
        %v3263 = vld [vmem:[%s283 + $0x2] sm:$0xff]
        %v3264 = vld [vmem:[%s283 + $0x12] sm:$0xff]
        %v3265 = vld [vmem:[%s283 + $0x22] sm:$0xff]
        %v3266 = vld [vmem:[%s283 + $0x32] sm:$0xff]
        %v3267 = vld [vmem:[%s283 + $0x42] sm:$0xff]
        %v3268 = vld [vmem:[%s283 + $0x52] sm:$0xff]
        %v3269 = vld [vmem:[%s283 + $0x62] sm:$0xff]
        %v3270 = vld [vmem:[%s283 + $0x72] sm:$0xff]
        %v3271 = vld [vmem:[%s283 + $0xa2] sm:$0xff]
        %v3272 = vld [vmem:[%s283 + $0xb2] sm:$0xff]
        %v3273 = vld [vmem:[%s283 + $0xc2] sm:$0xff]
        %v3274 = vld [vmem:[%s283 + $0xd2] sm:$0xff]
        %v3275 = vld [vmem:[%s283 + $0xe2] sm:$0xff]
        %v3276 = vld [vmem:[%s283 + $0xf2] sm:$0xff]
        %v3277 = vld [vmem:[%s283 + $0x102] sm:$0xff]
        %v3278 = vld [vmem:[%s283 + $0x112] sm:$0xff]
        %v3279 = vld [vmem:[%s283 + $0x142] sm:$0xff]
        %v3280 = vld [vmem:[%s283 + $0x152] sm:$0xff]
        %v3281 = vld [vmem:[%s283 + $0x162] sm:$0xff]
        %v3282 = vld [vmem:[%s283 + $0x172] sm:$0xff]
        %v3283 = vld [vmem:[%s283 + $0x182] sm:$0xff]
        %v3284 = vld [vmem:[%s283 + $0x192] sm:$0xff]
        %v3285 = vld [vmem:[%s283 + $0x1a2] sm:$0xff]
        %v3286 = vld [vmem:[%s283 + $0x1b2] sm:$0xff]
        %v3287 = vld [vmem:[%s283 + $0x1e2] sm:$0xff]
        %v3288 = vld [vmem:[%s283 + $0x1f2] sm:$0xff]
        %v3289 = vld [vmem:[%s283 + $0x202] sm:$0xff]
        %v3290 = vld [vmem:[%s283 + $0x212] sm:$0xff]
        %v3291 = vld [vmem:[%s283 + $0x222] sm:$0xff]
        %v3292 = vld [vmem:[%s283 + $0x232] sm:$0xff]
        %v3293 = vld [vmem:[%s283 + $0x242] sm:$0xff]
        %v3294 = vld [vmem:[%s283 + $0x252] sm:$0xff]
        %v3295 = vld [vmem:[%s283 + $0x282] sm:$0xff]
        %v3296 = vld [vmem:[%s283 + $0x292] sm:$0xff]
        %v3297 = vld [vmem:[%s283 + $0x2a2] sm:$0xff]
        %v3298 = vld [vmem:[%s283 + $0x2b2] sm:$0xff]
        %v3299 = vld [vmem:[%s283 + $0x2c2] sm:$0xff]
        %v3300 = vld [vmem:[%s283 + $0x2d2] sm:$0xff]
        %v3301 = vld [vmem:[%s283 + $0x2e2] sm:$0xff]
        %v3302 = vld [vmem:[%s283 + $0x2f2] sm:$0xff]
        %v3303 = vld [vmem:[%s283 + $0x322] sm:$0xff]
        %v3304 = vld [vmem:[%s283 + $0x332] sm:$0xff]
        %v3305 = vld [vmem:[%s283 + $0x342] sm:$0xff]
        %v3306 = vld [vmem:[%s283 + $0x352] sm:$0xff]
        %v3307 = vld [vmem:[%s283 + $0x362] sm:$0xff]
        %v3308 = vld [vmem:[%s283 + $0x372] sm:$0xff]
        %v3309 = vld [vmem:[%s283 + $0x382] sm:$0xff]
        %v3310 = vld [vmem:[%s283 + $0x392] sm:$0xff]
        %v3311 = vld [vmem:[%s283 + $0x3c2] sm:$0xff]
        %v3312 = vld [vmem:[%s283 + $0x3d2] sm:$0xff]
        %v3313 = vld [vmem:[%s283 + $0x3e2] sm:$0xff]
        %v3314 = vld [vmem:[%s283 + $0x3f2] sm:$0xff]
        %v3315 = vld [vmem:[%s283 + $0x402] sm:$0xff]
        %v3316 = vld [vmem:[%s283 + $0x412] sm:$0xff]
        %v3317 = vld [vmem:[%s283 + $0x422] sm:$0xff]
        %v3318 = vld [vmem:[%s283 + $0x432] sm:$0xff]
        %v3319 = vld [vmem:[%s283 + $0x462] sm:$0xff]
        %v3320 = vld [vmem:[%s283 + $0x472] sm:$0xff]
        %v3321 = vld [vmem:[%s283 + $0x482] sm:$0xff]
        %v3322 = vld [vmem:[%s283 + $0x492] sm:$0xff]
        %v3323 = vld [vmem:[%s283 + $0x4a2] sm:$0xff]
        %v3324 = vld [vmem:[%s283 + $0x4b2] sm:$0xff]
        %v3325 = vld [vmem:[%s283 + $0x4c2] sm:$0xff]
        %v3326 = vld [vmem:[%s283 + $0x4d2] sm:$0xff]
        %v3327 = vperm.slane %v3262, 0
        %v3328 = vmul.f32 %v3263, %v3327
        %v3329 = vmul.f32 %v3264, %v3327
        %v3330 = vmul.f32 %v3265, %v3327
        %v3331 = vmul.f32 %v3266, %v3327
        %v3332 = vmul.f32 %v3267, %v3327
        %v3333 = vmul.f32 %v3268, %v3327
        %v3334 = vmul.f32 %v3269, %v3327
        %v3335 = vmul.f32 %v3270, %v3327
        %v3336 = vmul.f32 %v3271, %v3327
        %v3337 = vmul.f32 %v3272, %v3327
        %v3338 = vmul.f32 %v3273, %v3327
        %v3339 = vmul.f32 %v3274, %v3327
        %v3340 = vmul.f32 %v3275, %v3327
        %v3341 = vmul.f32 %v3276, %v3327
        %v3342 = vmul.f32 %v3277, %v3327
        %v3343 = vmul.f32 %v3278, %v3327
        %v3344 = vmul.f32 %v3279, %v3327
        %v3345 = vmul.f32 %v3280, %v3327
        %v3346 = vmul.f32 %v3281, %v3327
        %v3347 = vmul.f32 %v3282, %v3327
        %v3348 = vmul.f32 %v3283, %v3327
        %v3349 = vmul.f32 %v3284, %v3327
        %v3350 = vmul.f32 %v3285, %v3327
        %v3351 = vmul.f32 %v3286, %v3327
        %v3352 = vmul.f32 %v3287, %v3327
        %v3353 = vmul.f32 %v3288, %v3327
        %v3354 = vmul.f32 %v3289, %v3327
        %v3355 = vmul.f32 %v3290, %v3327
        %v3356 = vmul.f32 %v3291, %v3327
        %v3357 = vmul.f32 %v3292, %v3327
        %v3358 = vmul.f32 %v3293, %v3327
        %v3359 = vmul.f32 %v3294, %v3327
        %v3360 = vmul.f32 %v3295, %v3327
        %v3361 = vmul.f32 %v3296, %v3327
        %v3362 = vmul.f32 %v3297, %v3327
        %v3363 = vmul.f32 %v3298, %v3327
        %v3364 = vmul.f32 %v3299, %v3327
        %v3365 = vmul.f32 %v3300, %v3327
        %v3366 = vmul.f32 %v3301, %v3327
        %v3367 = vmul.f32 %v3302, %v3327
        %v3368 = vmul.f32 %v3303, %v3327
        %v3369 = vmul.f32 %v3304, %v3327
        %v3370 = vmul.f32 %v3305, %v3327
        %v3371 = vmul.f32 %v3306, %v3327
        %v3372 = vmul.f32 %v3307, %v3327
        %v3373 = vmul.f32 %v3308, %v3327
        %v3374 = vmul.f32 %v3309, %v3327
        %v3375 = vmul.f32 %v3310, %v3327
        %v3376 = vmul.f32 %v3311, %v3327
        %v3377 = vmul.f32 %v3312, %v3327
        %v3378 = vmul.f32 %v3313, %v3327
        %v3379 = vmul.f32 %v3314, %v3327
        %v3380 = vmul.f32 %v3315, %v3327
        %v3381 = vmul.f32 %v3316, %v3327
        %v3382 = vmul.f32 %v3317, %v3327
        %v3383 = vmul.f32 %v3318, %v3327
        %v3384 = vmul.f32 %v3319, %v3327
        %v3385 = vmul.f32 %v3320, %v3327
        %v3386 = vmul.f32 %v3321, %v3327
        %v3387 = vmul.f32 %v3322, %v3327
        %v3388 = vmul.f32 %v3323, %v3327
        %v3389 = vmul.f32 %v3324, %v3327
        %v3390 = vmul.f32 %v3325, %v3327
        %v3391 = vmul.f32 %v3326, %v3327
        %v3392 = vadd.f32 %v3198, %v3328
        %v3393 = vadd.f32 %v3199, %v3329
        %v3394 = vadd.f32 %v3200, %v3330
        %v3395 = vadd.f32 %v3201, %v3331
        %v3396 = vadd.f32 %v3202, %v3332
        %v3397 = vadd.f32 %v3203, %v3333
        %v3398 = vadd.f32 %v3204, %v3334
        %v3399 = vadd.f32 %v3205, %v3335
        %v3400 = vadd.f32 %v3206, %v3336
        %v3401 = vadd.f32 %v3207, %v3337
        %v3402 = vadd.f32 %v3208, %v3338
        %v3403 = vadd.f32 %v3209, %v3339
        %v3404 = vadd.f32 %v3210, %v3340
        %v3405 = vadd.f32 %v3211, %v3341
        %v3406 = vadd.f32 %v3212, %v3342
        %v3407 = vadd.f32 %v3213, %v3343
        %v3408 = vadd.f32 %v3214, %v3344
        %v3409 = vadd.f32 %v3215, %v3345
        %v3410 = vadd.f32 %v3216, %v3346
        %v3411 = vadd.f32 %v3217, %v3347
        %v3412 = vadd.f32 %v3218, %v3348
        %v3413 = vadd.f32 %v3219, %v3349
        %v3414 = vadd.f32 %v3220, %v3350
        %v3415 = vadd.f32 %v3221, %v3351
        %v3416 = vadd.f32 %v3222, %v3352
        %v3417 = vadd.f32 %v3223, %v3353
        %v3418 = vadd.f32 %v3224, %v3354
        %v3419 = vadd.f32 %v3225, %v3355
        %v3420 = vadd.f32 %v3226, %v3356
        %v3421 = vadd.f32 %v3227, %v3357
        %v3422 = vadd.f32 %v3228, %v3358
        %v3423 = vadd.f32 %v3229, %v3359
        %v3424 = vadd.f32 %v3230, %v3360
        %v3425 = vadd.f32 %v3231, %v3361
        %v3426 = vadd.f32 %v3232, %v3362
        %v3427 = vadd.f32 %v3233, %v3363
        %v3428 = vadd.f32 %v3234, %v3364
        %v3429 = vadd.f32 %v3235, %v3365
        %v3430 = vadd.f32 %v3236, %v3366
        %v3431 = vadd.f32 %v3237, %v3367
        %v3432 = vadd.f32 %v3238, %v3368
        %v3433 = vadd.f32 %v3239, %v3369
        %v3434 = vadd.f32 %v3240, %v3370
        %v3435 = vadd.f32 %v3241, %v3371
        %v3436 = vadd.f32 %v3242, %v3372
        %v3437 = vadd.f32 %v3243, %v3373
        %v3438 = vadd.f32 %v3244, %v3374
        %v3439 = vadd.f32 %v3245, %v3375
        %v3440 = vadd.f32 %v3246, %v3376
        %v3441 = vadd.f32 %v3247, %v3377
        %v3442 = vadd.f32 %v3248, %v3378
        %v3443 = vadd.f32 %v3249, %v3379
        %v3444 = vadd.f32 %v3250, %v3380
        %v3445 = vadd.f32 %v3251, %v3381
        %v3446 = vadd.f32 %v3252, %v3382
        %v3447 = vadd.f32 %v3253, %v3383
        %v3448 = vadd.f32 %v3254, %v3384
        %v3449 = vadd.f32 %v3255, %v3385
        %v3450 = vadd.f32 %v3256, %v3386
        %v3451 = vadd.f32 %v3257, %v3387
        %v3452 = vadd.f32 %v3258, %v3388
        %v3453 = vadd.f32 %v3259, %v3389
        %v3454 = vadd.f32 %v3260, %v3390
        %v3455 = vadd.f32 %v3261, %v3391
        %v3456 = vld [vmem:[#allocation6 + $0xf] sm:$0x1]
        %s3457 = scalar_lea.vmem [#allocation2], 192
        %v3458 = vld [vmem:[%s3457] sm:$0xff]
        %v3459 = vld [vmem:[%s3457 + $0x10] sm:$0xff]
        %v3460 = vld [vmem:[%s3457 + $0x20] sm:$0xff]
        %v3461 = vld [vmem:[%s3457 + $0x30] sm:$0xff]
        %v3462 = vld [vmem:[%s3457 + $0x40] sm:$0xff]
        %v3463 = vld [vmem:[%s3457 + $0x50] sm:$0xff]
        %v3464 = vld [vmem:[%s3457 + $0x60] sm:$0xff]
        %v3465 = vld [vmem:[%s3457 + $0x70] sm:$0xff]
        %v3466 = vld [vmem:[%s3457 + $0xa0] sm:$0xff]
        %v3467 = vld [vmem:[%s3457 + $0xb0] sm:$0xff]
        %v3468 = vld [vmem:[%s3457 + $0xc0] sm:$0xff]
        %v3469 = vld [vmem:[%s3457 + $0xd0] sm:$0xff]
        %v3470 = vld [vmem:[%s3457 + $0xe0] sm:$0xff]
        %v3471 = vld [vmem:[%s3457 + $0xf0] sm:$0xff]
        %v3472 = vld [vmem:[%s3457 + $0x100] sm:$0xff]
        %v3473 = vld [vmem:[%s3457 + $0x110] sm:$0xff]
        %v3474 = vld [vmem:[%s3457 + $0x140] sm:$0xff]
        %v3475 = vld [vmem:[%s3457 + $0x150] sm:$0xff]
        %v3476 = vld [vmem:[%s3457 + $0x160] sm:$0xff]
        %v3477 = vld [vmem:[%s3457 + $0x170] sm:$0xff]
        %v3478 = vld [vmem:[%s3457 + $0x180] sm:$0xff]
        %v3479 = vld [vmem:[%s3457 + $0x190] sm:$0xff]
        %v3480 = vld [vmem:[%s3457 + $0x1a0] sm:$0xff]
        %v3481 = vld [vmem:[%s3457 + $0x1b0] sm:$0xff]
        %v3482 = vld [vmem:[%s3457 + $0x1e0] sm:$0xff]
        %v3483 = vld [vmem:[%s3457 + $0x1f0] sm:$0xff]
        %v3484 = vld [vmem:[%s3457 + $0x200] sm:$0xff]
        %v3485 = vld [vmem:[%s3457 + $0x210] sm:$0xff]
        %v3486 = vld [vmem:[%s3457 + $0x220] sm:$0xff]
        %v3487 = vld [vmem:[%s3457 + $0x230] sm:$0xff]
        %v3488 = vld [vmem:[%s3457 + $0x240] sm:$0xff]
        %v3489 = vld [vmem:[%s3457 + $0x250] sm:$0xff]
        %v3490 = vld [vmem:[%s3457 + $0x280] sm:$0xff]
        %v3491 = vld [vmem:[%s3457 + $0x290] sm:$0xff]
        %v3492 = vld [vmem:[%s3457 + $0x2a0] sm:$0xff]
        %v3493 = vld [vmem:[%s3457 + $0x2b0] sm:$0xff]
        %v3494 = vld [vmem:[%s3457 + $0x2c0] sm:$0xff]
        %v3495 = vld [vmem:[%s3457 + $0x2d0] sm:$0xff]
        %v3496 = vld [vmem:[%s3457 + $0x2e0] sm:$0xff]
        %v3497 = vld [vmem:[%s3457 + $0x2f0] sm:$0xff]
        %v3498 = vld [vmem:[%s3457 + $0x320] sm:$0xff]
        %v3499 = vld [vmem:[%s3457 + $0x330] sm:$0xff]
        %v3500 = vld [vmem:[%s3457 + $0x340] sm:$0xff]
        %v3501 = vld [vmem:[%s3457 + $0x350] sm:$0xff]
        %v3502 = vld [vmem:[%s3457 + $0x360] sm:$0xff]
        %v3503 = vld [vmem:[%s3457 + $0x370] sm:$0xff]
        %v3504 = vld [vmem:[%s3457 + $0x380] sm:$0xff]
        %v3505 = vld [vmem:[%s3457 + $0x390] sm:$0xff]
        %v3506 = vld [vmem:[%s3457 + $0x3c0] sm:$0xff]
        %v3507 = vld [vmem:[%s3457 + $0x3d0] sm:$0xff]
        %v3508 = vld [vmem:[%s3457 + $0x3e0] sm:$0xff]
        %v3509 = vld [vmem:[%s3457 + $0x3f0] sm:$0xff]
        %v3510 = vld [vmem:[%s3457 + $0x400] sm:$0xff]
        %v3511 = vld [vmem:[%s3457 + $0x410] sm:$0xff]
        %v3512 = vld [vmem:[%s3457 + $0x420] sm:$0xff]
        %v3513 = vld [vmem:[%s3457 + $0x430] sm:$0xff]
        %v3514 = vld [vmem:[%s3457 + $0x460] sm:$0xff]
        %v3515 = vld [vmem:[%s3457 + $0x470] sm:$0xff]
        %v3516 = vld [vmem:[%s3457 + $0x480] sm:$0xff]
        %v3517 = vld [vmem:[%s3457 + $0x490] sm:$0xff]
        %v3518 = vld [vmem:[%s3457 + $0x4a0] sm:$0xff]
        %v3519 = vld [vmem:[%s3457 + $0x4b0] sm:$0xff]
        %v3520 = vld [vmem:[%s3457 + $0x4c0] sm:$0xff]
        %v3521 = vld [vmem:[%s3457 + $0x4d0] sm:$0xff]
        %v3522 = vperm.slane %v3456, 0
        %v3523 = vmul.f32 %v3458, %v3522
        %v3524 = vmul.f32 %v3459, %v3522
        %v3525 = vmul.f32 %v3460, %v3522
        %v3526 = vmul.f32 %v3461, %v3522
        %v3527 = vmul.f32 %v3462, %v3522
        %v3528 = vmul.f32 %v3463, %v3522
        %v3529 = vmul.f32 %v3464, %v3522
        %v3530 = vmul.f32 %v3465, %v3522
        %v3531 = vmul.f32 %v3466, %v3522
        %v3532 = vmul.f32 %v3467, %v3522
        %v3533 = vmul.f32 %v3468, %v3522
        %v3534 = vmul.f32 %v3469, %v3522
        %v3535 = vmul.f32 %v3470, %v3522
        %v3536 = vmul.f32 %v3471, %v3522
        %v3537 = vmul.f32 %v3472, %v3522
        %v3538 = vmul.f32 %v3473, %v3522
        %v3539 = vmul.f32 %v3474, %v3522
        %v3540 = vmul.f32 %v3475, %v3522
        %v3541 = vmul.f32 %v3476, %v3522
        %v3542 = vmul.f32 %v3477, %v3522
        %v3543 = vmul.f32 %v3478, %v3522
        %v3544 = vmul.f32 %v3479, %v3522
        %v3545 = vmul.f32 %v3480, %v3522
        %v3546 = vmul.f32 %v3481, %v3522
        %v3547 = vmul.f32 %v3482, %v3522
        %v3548 = vmul.f32 %v3483, %v3522
        %v3549 = vmul.f32 %v3484, %v3522
        %v3550 = vmul.f32 %v3485, %v3522
        %v3551 = vmul.f32 %v3486, %v3522
        %v3552 = vmul.f32 %v3487, %v3522
        %v3553 = vmul.f32 %v3488, %v3522
        %v3554 = vmul.f32 %v3489, %v3522
        %v3555 = vmul.f32 %v3490, %v3522
        %v3556 = vmul.f32 %v3491, %v3522
        %v3557 = vmul.f32 %v3492, %v3522
        %v3558 = vmul.f32 %v3493, %v3522
        %v3559 = vmul.f32 %v3494, %v3522
        %v3560 = vmul.f32 %v3495, %v3522
        %v3561 = vmul.f32 %v3496, %v3522
        %v3562 = vmul.f32 %v3497, %v3522
        %v3563 = vmul.f32 %v3498, %v3522
        %v3564 = vmul.f32 %v3499, %v3522
        %v3565 = vmul.f32 %v3500, %v3522
        %v3566 = vmul.f32 %v3501, %v3522
        %v3567 = vmul.f32 %v3502, %v3522
        %v3568 = vmul.f32 %v3503, %v3522
        %v3569 = vmul.f32 %v3504, %v3522
        %v3570 = vmul.f32 %v3505, %v3522
        %v3571 = vmul.f32 %v3506, %v3522
        %v3572 = vmul.f32 %v3507, %v3522
        %v3573 = vmul.f32 %v3508, %v3522
        %v3574 = vmul.f32 %v3509, %v3522
        %v3575 = vmul.f32 %v3510, %v3522
        %v3576 = vmul.f32 %v3511, %v3522
        %v3577 = vmul.f32 %v3512, %v3522
        %v3578 = vmul.f32 %v3513, %v3522
        %v3579 = vmul.f32 %v3514, %v3522
        %v3580 = vmul.f32 %v3515, %v3522
        %v3581 = vmul.f32 %v3516, %v3522
        %v3582 = vmul.f32 %v3517, %v3522
        %v3583 = vmul.f32 %v3518, %v3522
        %v3584 = vmul.f32 %v3519, %v3522
        %v3585 = vmul.f32 %v3520, %v3522
        %v3586 = vmul.f32 %v3521, %v3522
        %v3587 = vadd.f32 %v3392, %v3523
        %v3588 = vadd.f32 %v3393, %v3524
        %v3589 = vadd.f32 %v3394, %v3525
        %v3590 = vadd.f32 %v3395, %v3526
        %v3591 = vadd.f32 %v3396, %v3527
        %v3592 = vadd.f32 %v3397, %v3528
        %v3593 = vadd.f32 %v3398, %v3529
        %v3594 = vadd.f32 %v3399, %v3530
        %v3595 = vadd.f32 %v3400, %v3531
        %v3596 = vadd.f32 %v3401, %v3532
        %v3597 = vadd.f32 %v3402, %v3533
        %v3598 = vadd.f32 %v3403, %v3534
        %v3599 = vadd.f32 %v3404, %v3535
        %v3600 = vadd.f32 %v3405, %v3536
        %v3601 = vadd.f32 %v3406, %v3537
        %v3602 = vadd.f32 %v3407, %v3538
        %v3603 = vadd.f32 %v3408, %v3539
        %v3604 = vadd.f32 %v3409, %v3540
        %v3605 = vadd.f32 %v3410, %v3541
        %v3606 = vadd.f32 %v3411, %v3542
        %v3607 = vadd.f32 %v3412, %v3543
        %v3608 = vadd.f32 %v3413, %v3544
        %v3609 = vadd.f32 %v3414, %v3545
        %v3610 = vadd.f32 %v3415, %v3546
        %v3611 = vadd.f32 %v3416, %v3547
        %v3612 = vadd.f32 %v3417, %v3548
        %v3613 = vadd.f32 %v3418, %v3549
        %v3614 = vadd.f32 %v3419, %v3550
        %v3615 = vadd.f32 %v3420, %v3551
        %v3616 = vadd.f32 %v3421, %v3552
        %v3617 = vadd.f32 %v3422, %v3553
        %v3618 = vadd.f32 %v3423, %v3554
        %v3619 = vadd.f32 %v3424, %v3555
        %v3620 = vadd.f32 %v3425, %v3556
        %v3621 = vadd.f32 %v3426, %v3557
        %v3622 = vadd.f32 %v3427, %v3558
        %v3623 = vadd.f32 %v3428, %v3559
        %v3624 = vadd.f32 %v3429, %v3560
        %v3625 = vadd.f32 %v3430, %v3561
        %v3626 = vadd.f32 %v3431, %v3562
        %v3627 = vadd.f32 %v3432, %v3563
        %v3628 = vadd.f32 %v3433, %v3564
        %v3629 = vadd.f32 %v3434, %v3565
        %v3630 = vadd.f32 %v3435, %v3566
        %v3631 = vadd.f32 %v3436, %v3567
        %v3632 = vadd.f32 %v3437, %v3568
        %v3633 = vadd.f32 %v3438, %v3569
        %v3634 = vadd.f32 %v3439, %v3570
        %v3635 = vadd.f32 %v3440, %v3571
        %v3636 = vadd.f32 %v3441, %v3572
        %v3637 = vadd.f32 %v3442, %v3573
        %v3638 = vadd.f32 %v3443, %v3574
        %v3639 = vadd.f32 %v3444, %v3575
        %v3640 = vadd.f32 %v3445, %v3576
        %v3641 = vadd.f32 %v3446, %v3577
        %v3642 = vadd.f32 %v3447, %v3578
        %v3643 = vadd.f32 %v3448, %v3579
        %v3644 = vadd.f32 %v3449, %v3580
        %v3645 = vadd.f32 %v3450, %v3581
        %v3646 = vadd.f32 %v3451, %v3582
        %v3647 = vadd.f32 %v3452, %v3583
        %v3648 = vadd.f32 %v3453, %v3584
        %v3649 = vadd.f32 %v3454, %v3585
        %v3650 = vadd.f32 %v3455, %v3586
        %v3651 = vld [vmem:[#allocation6 + $0x10] sm:$0x1]
        %v3652 = vld [vmem:[%s3457 + $0x1] sm:$0xff]
        %v3653 = vld [vmem:[%s3457 + $0x11] sm:$0xff]
        %v3654 = vld [vmem:[%s3457 + $0x21] sm:$0xff]
        %v3655 = vld [vmem:[%s3457 + $0x31] sm:$0xff]
        %v3656 = vld [vmem:[%s3457 + $0x41] sm:$0xff]
        %v3657 = vld [vmem:[%s3457 + $0x51] sm:$0xff]
        %v3658 = vld [vmem:[%s3457 + $0x61] sm:$0xff]
        %v3659 = vld [vmem:[%s3457 + $0x71] sm:$0xff]
        %v3660 = vld [vmem:[%s3457 + $0xa1] sm:$0xff]
        %v3661 = vld [vmem:[%s3457 + $0xb1] sm:$0xff]
        %v3662 = vld [vmem:[%s3457 + $0xc1] sm:$0xff]
        %v3663 = vld [vmem:[%s3457 + $0xd1] sm:$0xff]
        %v3664 = vld [vmem:[%s3457 + $0xe1] sm:$0xff]
        %v3665 = vld [vmem:[%s3457 + $0xf1] sm:$0xff]
        %v3666 = vld [vmem:[%s3457 + $0x101] sm:$0xff]
        %v3667 = vld [vmem:[%s3457 + $0x111] sm:$0xff]
        %v3668 = vld [vmem:[%s3457 + $0x141] sm:$0xff]
        %v3669 = vld [vmem:[%s3457 + $0x151] sm:$0xff]
        %v3670 = vld [vmem:[%s3457 + $0x161] sm:$0xff]
        %v3671 = vld [vmem:[%s3457 + $0x171] sm:$0xff]
        %v3672 = vld [vmem:[%s3457 + $0x181] sm:$0xff]
        %v3673 = vld [vmem:[%s3457 + $0x191] sm:$0xff]
        %v3674 = vld [vmem:[%s3457 + $0x1a1] sm:$0xff]
        %v3675 = vld [vmem:[%s3457 + $0x1b1] sm:$0xff]
        %v3676 = vld [vmem:[%s3457 + $0x1e1] sm:$0xff]
        %v3677 = vld [vmem:[%s3457 + $0x1f1] sm:$0xff]
        %v3678 = vld [vmem:[%s3457 + $0x201] sm:$0xff]
        %v3679 = vld [vmem:[%s3457 + $0x211] sm:$0xff]
        %v3680 = vld [vmem:[%s3457 + $0x221] sm:$0xff]
        %v3681 = vld [vmem:[%s3457 + $0x231] sm:$0xff]
        %v3682 = vld [vmem:[%s3457 + $0x241] sm:$0xff]
        %v3683 = vld [vmem:[%s3457 + $0x251] sm:$0xff]
        %v3684 = vld [vmem:[%s3457 + $0x281] sm:$0xff]
        %v3685 = vld [vmem:[%s3457 + $0x291] sm:$0xff]
        %v3686 = vld [vmem:[%s3457 + $0x2a1] sm:$0xff]
        %v3687 = vld [vmem:[%s3457 + $0x2b1] sm:$0xff]
        %v3688 = vld [vmem:[%s3457 + $0x2c1] sm:$0xff]
        %v3689 = vld [vmem:[%s3457 + $0x2d1] sm:$0xff]
        %v3690 = vld [vmem:[%s3457 + $0x2e1] sm:$0xff]
        %v3691 = vld [vmem:[%s3457 + $0x2f1] sm:$0xff]
        %v3692 = vld [vmem:[%s3457 + $0x321] sm:$0xff]
        %v3693 = vld [vmem:[%s3457 + $0x331] sm:$0xff]
        %v3694 = vld [vmem:[%s3457 + $0x341] sm:$0xff]
        %v3695 = vld [vmem:[%s3457 + $0x351] sm:$0xff]
        %v3696 = vld [vmem:[%s3457 + $0x361] sm:$0xff]
        %v3697 = vld [vmem:[%s3457 + $0x371] sm:$0xff]
        %v3698 = vld [vmem:[%s3457 + $0x381] sm:$0xff]
        %v3699 = vld [vmem:[%s3457 + $0x391] sm:$0xff]
        %v3700 = vld [vmem:[%s3457 + $0x3c1] sm:$0xff]
        %v3701 = vld [vmem:[%s3457 + $0x3d1] sm:$0xff]
        %v3702 = vld [vmem:[%s3457 + $0x3e1] sm:$0xff]
        %v3703 = vld [vmem:[%s3457 + $0x3f1] sm:$0xff]
        %v3704 = vld [vmem:[%s3457 + $0x401] sm:$0xff]
        %v3705 = vld [vmem:[%s3457 + $0x411] sm:$0xff]
        %v3706 = vld [vmem:[%s3457 + $0x421] sm:$0xff]
        %v3707 = vld [vmem:[%s3457 + $0x431] sm:$0xff]
        %v3708 = vld [vmem:[%s3457 + $0x461] sm:$0xff]
        %v3709 = vld [vmem:[%s3457 + $0x471] sm:$0xff]
        %v3710 = vld [vmem:[%s3457 + $0x481] sm:$0xff]
        %v3711 = vld [vmem:[%s3457 + $0x491] sm:$0xff]
        %v3712 = vld [vmem:[%s3457 + $0x4a1] sm:$0xff]
        %v3713 = vld [vmem:[%s3457 + $0x4b1] sm:$0xff]
        %v3714 = vld [vmem:[%s3457 + $0x4c1] sm:$0xff]
        %v3715 = vld [vmem:[%s3457 + $0x4d1] sm:$0xff]
        %v3716 = vperm.slane %v3651, 0
        %v3717 = vmul.f32 %v3652, %v3716
        %v3718 = vmul.f32 %v3653, %v3716
        %v3719 = vmul.f32 %v3654, %v3716
        %v3720 = vmul.f32 %v3655, %v3716
        %v3721 = vmul.f32 %v3656, %v3716
        %v3722 = vmul.f32 %v3657, %v3716
        %v3723 = vmul.f32 %v3658, %v3716
        %v3724 = vmul.f32 %v3659, %v3716
        %v3725 = vmul.f32 %v3660, %v3716
        %v3726 = vmul.f32 %v3661, %v3716
        %v3727 = vmul.f32 %v3662, %v3716
        %v3728 = vmul.f32 %v3663, %v3716
        %v3729 = vmul.f32 %v3664, %v3716
        %v3730 = vmul.f32 %v3665, %v3716
        %v3731 = vmul.f32 %v3666, %v3716
        %v3732 = vmul.f32 %v3667, %v3716
        %v3733 = vmul.f32 %v3668, %v3716
        %v3734 = vmul.f32 %v3669, %v3716
        %v3735 = vmul.f32 %v3670, %v3716
        %v3736 = vmul.f32 %v3671, %v3716
        %v3737 = vmul.f32 %v3672, %v3716
        %v3738 = vmul.f32 %v3673, %v3716
        %v3739 = vmul.f32 %v3674, %v3716
        %v3740 = vmul.f32 %v3675, %v3716
        %v3741 = vmul.f32 %v3676, %v3716
        %v3742 = vmul.f32 %v3677, %v3716
        %v3743 = vmul.f32 %v3678, %v3716
        %v3744 = vmul.f32 %v3679, %v3716
        %v3745 = vmul.f32 %v3680, %v3716
        %v3746 = vmul.f32 %v3681, %v3716
        %v3747 = vmul.f32 %v3682, %v3716
        %v3748 = vmul.f32 %v3683, %v3716
        %v3749 = vmul.f32 %v3684, %v3716
        %v3750 = vmul.f32 %v3685, %v3716
        %v3751 = vmul.f32 %v3686, %v3716
        %v3752 = vmul.f32 %v3687, %v3716
        %v3753 = vmul.f32 %v3688, %v3716
        %v3754 = vmul.f32 %v3689, %v3716
        %v3755 = vmul.f32 %v3690, %v3716
        %v3756 = vmul.f32 %v3691, %v3716
        %v3757 = vmul.f32 %v3692, %v3716
        %v3758 = vmul.f32 %v3693, %v3716
        %v3759 = vmul.f32 %v3694, %v3716
        %v3760 = vmul.f32 %v3695, %v3716
        %v3761 = vmul.f32 %v3696, %v3716
        %v3762 = vmul.f32 %v3697, %v3716
        %v3763 = vmul.f32 %v3698, %v3716
        %v3764 = vmul.f32 %v3699, %v3716
        %v3765 = vmul.f32 %v3700, %v3716
        %v3766 = vmul.f32 %v3701, %v3716
        %v3767 = vmul.f32 %v3702, %v3716
        %v3768 = vmul.f32 %v3703, %v3716
        %v3769 = vmul.f32 %v3704, %v3716
        %v3770 = vmul.f32 %v3705, %v3716
        %v3771 = vmul.f32 %v3706, %v3716
        %v3772 = vmul.f32 %v3707, %v3716
        %v3773 = vmul.f32 %v3708, %v3716
        %v3774 = vmul.f32 %v3709, %v3716
        %v3775 = vmul.f32 %v3710, %v3716
        %v3776 = vmul.f32 %v3711, %v3716
        %v3777 = vmul.f32 %v3712, %v3716
        %v3778 = vmul.f32 %v3713, %v3716
        %v3779 = vmul.f32 %v3714, %v3716
        %v3780 = vmul.f32 %v3715, %v3716
        %v3781 = vadd.f32 %v3587, %v3717
        %v3782 = vadd.f32 %v3588, %v3718
        %v3783 = vadd.f32 %v3589, %v3719
        %v3784 = vadd.f32 %v3590, %v3720
        %v3785 = vadd.f32 %v3591, %v3721
        %v3786 = vadd.f32 %v3592, %v3722
        %v3787 = vadd.f32 %v3593, %v3723
        %v3788 = vadd.f32 %v3594, %v3724
        %v3789 = vadd.f32 %v3595, %v3725
        %v3790 = vadd.f32 %v3596, %v3726
        %v3791 = vadd.f32 %v3597, %v3727
        %v3792 = vadd.f32 %v3598, %v3728
        %v3793 = vadd.f32 %v3599, %v3729
        %v3794 = vadd.f32 %v3600, %v3730
        %v3795 = vadd.f32 %v3601, %v3731
        %v3796 = vadd.f32 %v3602, %v3732
        %v3797 = vadd.f32 %v3603, %v3733
        %v3798 = vadd.f32 %v3604, %v3734
        %v3799 = vadd.f32 %v3605, %v3735
        %v3800 = vadd.f32 %v3606, %v3736
        %v3801 = vadd.f32 %v3607, %v3737
        %v3802 = vadd.f32 %v3608, %v3738
        %v3803 = vadd.f32 %v3609, %v3739
        %v3804 = vadd.f32 %v3610, %v3740
        %v3805 = vadd.f32 %v3611, %v3741
        %v3806 = vadd.f32 %v3612, %v3742
        %v3807 = vadd.f32 %v3613, %v3743
        %v3808 = vadd.f32 %v3614, %v3744
        %v3809 = vadd.f32 %v3615, %v3745
        %v3810 = vadd.f32 %v3616, %v3746
        %v3811 = vadd.f32 %v3617, %v3747
        %v3812 = vadd.f32 %v3618, %v3748
        %v3813 = vadd.f32 %v3619, %v3749
        %v3814 = vadd.f32 %v3620, %v3750
        %v3815 = vadd.f32 %v3621, %v3751
        %v3816 = vadd.f32 %v3622, %v3752
        %v3817 = vadd.f32 %v3623, %v3753
        %v3818 = vadd.f32 %v3624, %v3754
        %v3819 = vadd.f32 %v3625, %v3755
        %v3820 = vadd.f32 %v3626, %v3756
        %v3821 = vadd.f32 %v3627, %v3757
        %v3822 = vadd.f32 %v3628, %v3758
        %v3823 = vadd.f32 %v3629, %v3759
        %v3824 = vadd.f32 %v3630, %v3760
        %v3825 = vadd.f32 %v3631, %v3761
        %v3826 = vadd.f32 %v3632, %v3762
        %v3827 = vadd.f32 %v3633, %v3763
        %v3828 = vadd.f32 %v3634, %v3764
        %v3829 = vadd.f32 %v3635, %v3765
        %v3830 = vadd.f32 %v3636, %v3766
        %v3831 = vadd.f32 %v3637, %v3767
        %v3832 = vadd.f32 %v3638, %v3768
        %v3833 = vadd.f32 %v3639, %v3769
        %v3834 = vadd.f32 %v3640, %v3770
        %v3835 = vadd.f32 %v3641, %v3771
        %v3836 = vadd.f32 %v3642, %v3772
        %v3837 = vadd.f32 %v3643, %v3773
        %v3838 = vadd.f32 %v3644, %v3774
        %v3839 = vadd.f32 %v3645, %v3775
        %v3840 = vadd.f32 %v3646, %v3776
        %v3841 = vadd.f32 %v3647, %v3777
        %v3842 = vadd.f32 %v3648, %v3778
        %v3843 = vadd.f32 %v3649, %v3779
        %v3844 = vadd.f32 %v3650, %v3780
        %v3845 = vld [vmem:[#allocation6 + $0x11] sm:$0x1]
        %v3846 = vld [vmem:[%s3457 + $0x2] sm:$0xff]
        %v3847 = vld [vmem:[%s3457 + $0x12] sm:$0xff]
        %v3848 = vld [vmem:[%s3457 + $0x22] sm:$0xff]
        %v3849 = vld [vmem:[%s3457 + $0x32] sm:$0xff]
        %v3850 = vld [vmem:[%s3457 + $0x42] sm:$0xff]
        %v3851 = vld [vmem:[%s3457 + $0x52] sm:$0xff]
        %v3852 = vld [vmem:[%s3457 + $0x62] sm:$0xff]
        %v3853 = vld [vmem:[%s3457 + $0x72] sm:$0xff]
        %v3854 = vld [vmem:[%s3457 + $0xa2] sm:$0xff]
        %v3855 = vld [vmem:[%s3457 + $0xb2] sm:$0xff]
        %v3856 = vld [vmem:[%s3457 + $0xc2] sm:$0xff]
        %v3857 = vld [vmem:[%s3457 + $0xd2] sm:$0xff]
        %v3858 = vld [vmem:[%s3457 + $0xe2] sm:$0xff]
        %v3859 = vld [vmem:[%s3457 + $0xf2] sm:$0xff]
        %v3860 = vld [vmem:[%s3457 + $0x102] sm:$0xff]
        %v3861 = vld [vmem:[%s3457 + $0x112] sm:$0xff]
        %v3862 = vld [vmem:[%s3457 + $0x142] sm:$0xff]
        %v3863 = vld [vmem:[%s3457 + $0x152] sm:$0xff]
        %v3864 = vld [vmem:[%s3457 + $0x162] sm:$0xff]
        %v3865 = vld [vmem:[%s3457 + $0x172] sm:$0xff]
        %v3866 = vld [vmem:[%s3457 + $0x182] sm:$0xff]
        %v3867 = vld [vmem:[%s3457 + $0x192] sm:$0xff]
        %v3868 = vld [vmem:[%s3457 + $0x1a2] sm:$0xff]
        %v3869 = vld [vmem:[%s3457 + $0x1b2] sm:$0xff]
        %v3870 = vld [vmem:[%s3457 + $0x1e2] sm:$0xff]
        %v3871 = vld [vmem:[%s3457 + $0x1f2] sm:$0xff]
        %v3872 = vld [vmem:[%s3457 + $0x202] sm:$0xff]
        %v3873 = vld [vmem:[%s3457 + $0x212] sm:$0xff]
        %v3874 = vld [vmem:[%s3457 + $0x222] sm:$0xff]
        %v3875 = vld [vmem:[%s3457 + $0x232] sm:$0xff]
        %v3876 = vld [vmem:[%s3457 + $0x242] sm:$0xff]
        %v3877 = vld [vmem:[%s3457 + $0x252] sm:$0xff]
        %v3878 = vld [vmem:[%s3457 + $0x282] sm:$0xff]
        %v3879 = vld [vmem:[%s3457 + $0x292] sm:$0xff]
        %v3880 = vld [vmem:[%s3457 + $0x2a2] sm:$0xff]
        %v3881 = vld [vmem:[%s3457 + $0x2b2] sm:$0xff]
        %v3882 = vld [vmem:[%s3457 + $0x2c2] sm:$0xff]
        %v3883 = vld [vmem:[%s3457 + $0x2d2] sm:$0xff]
        %v3884 = vld [vmem:[%s3457 + $0x2e2] sm:$0xff]
        %v3885 = vld [vmem:[%s3457 + $0x2f2] sm:$0xff]
        %v3886 = vld [vmem:[%s3457 + $0x322] sm:$0xff]
        %v3887 = vld [vmem:[%s3457 + $0x332] sm:$0xff]
        %v3888 = vld [vmem:[%s3457 + $0x342] sm:$0xff]
        %v3889 = vld [vmem:[%s3457 + $0x352] sm:$0xff]
        %v3890 = vld [vmem:[%s3457 + $0x362] sm:$0xff]
        %v3891 = vld [vmem:[%s3457 + $0x372] sm:$0xff]
        %v3892 = vld [vmem:[%s3457 + $0x382] sm:$0xff]
        %v3893 = vld [vmem:[%s3457 + $0x392] sm:$0xff]
        %v3894 = vld [vmem:[%s3457 + $0x3c2] sm:$0xff]
        %v3895 = vld [vmem:[%s3457 + $0x3d2] sm:$0xff]
        %v3896 = vld [vmem:[%s3457 + $0x3e2] sm:$0xff]
        %v3897 = vld [vmem:[%s3457 + $0x3f2] sm:$0xff]
        %v3898 = vld [vmem:[%s3457 + $0x402] sm:$0xff]
        %v3899 = vld [vmem:[%s3457 + $0x412] sm:$0xff]
        %v3900 = vld [vmem:[%s3457 + $0x422] sm:$0xff]
        %v3901 = vld [vmem:[%s3457 + $0x432] sm:$0xff]
        %v3902 = vld [vmem:[%s3457 + $0x462] sm:$0xff]
        %v3903 = vld [vmem:[%s3457 + $0x472] sm:$0xff]
        %v3904 = vld [vmem:[%s3457 + $0x482] sm:$0xff]
        %v3905 = vld [vmem:[%s3457 + $0x492] sm:$0xff]
        %v3906 = vld [vmem:[%s3457 + $0x4a2] sm:$0xff]
        %v3907 = vld [vmem:[%s3457 + $0x4b2] sm:$0xff]
        %v3908 = vld [vmem:[%s3457 + $0x4c2] sm:$0xff]
        %v3909 = vld [vmem:[%s3457 + $0x4d2] sm:$0xff]
        %v3910 = vperm.slane %v3845, 0
        %v3911 = vmul.f32 %v3846, %v3910
        %v3912 = vmul.f32 %v3847, %v3910
        %v3913 = vmul.f32 %v3848, %v3910
        %v3914 = vmul.f32 %v3849, %v3910
        %v3915 = vmul.f32 %v3850, %v3910
        %v3916 = vmul.f32 %v3851, %v3910
        %v3917 = vmul.f32 %v3852, %v3910
        %v3918 = vmul.f32 %v3853, %v3910
        %v3919 = vmul.f32 %v3854, %v3910
        %v3920 = vmul.f32 %v3855, %v3910
        %v3921 = vmul.f32 %v3856, %v3910
        %v3922 = vmul.f32 %v3857, %v3910
        %v3923 = vmul.f32 %v3858, %v3910
        %v3924 = vmul.f32 %v3859, %v3910
        %v3925 = vmul.f32 %v3860, %v3910
        %v3926 = vmul.f32 %v3861, %v3910
        %v3927 = vmul.f32 %v3862, %v3910
        %v3928 = vmul.f32 %v3863, %v3910
        %v3929 = vmul.f32 %v3864, %v3910
        %v3930 = vmul.f32 %v3865, %v3910
        %v3931 = vmul.f32 %v3866, %v3910
        %v3932 = vmul.f32 %v3867, %v3910
        %v3933 = vmul.f32 %v3868, %v3910
        %v3934 = vmul.f32 %v3869, %v3910
        %v3935 = vmul.f32 %v3870, %v3910
        %v3936 = vmul.f32 %v3871, %v3910
        %v3937 = vmul.f32 %v3872, %v3910
        %v3938 = vmul.f32 %v3873, %v3910
        %v3939 = vmul.f32 %v3874, %v3910
        %v3940 = vmul.f32 %v3875, %v3910
        %v3941 = vmul.f32 %v3876, %v3910
        %v3942 = vmul.f32 %v3877, %v3910
        %v3943 = vmul.f32 %v3878, %v3910
        %v3944 = vmul.f32 %v3879, %v3910
        %v3945 = vmul.f32 %v3880, %v3910
        %v3946 = vmul.f32 %v3881, %v3910
        %v3947 = vmul.f32 %v3882, %v3910
        %v3948 = vmul.f32 %v3883, %v3910
        %v3949 = vmul.f32 %v3884, %v3910
        %v3950 = vmul.f32 %v3885, %v3910
        %v3951 = vmul.f32 %v3886, %v3910
        %v3952 = vmul.f32 %v3887, %v3910
        %v3953 = vmul.f32 %v3888, %v3910
        %v3954 = vmul.f32 %v3889, %v3910
        %v3955 = vmul.f32 %v3890, %v3910
        %v3956 = vmul.f32 %v3891, %v3910
        %v3957 = vmul.f32 %v3892, %v3910
        %v3958 = vmul.f32 %v3893, %v3910
        %v3959 = vmul.f32 %v3894, %v3910
        %v3960 = vmul.f32 %v3895, %v3910
        %v3961 = vmul.f32 %v3896, %v3910
        %v3962 = vmul.f32 %v3897, %v3910
        %v3963 = vmul.f32 %v3898, %v3910
        %v3964 = vmul.f32 %v3899, %v3910
        %v3965 = vmul.f32 %v3900, %v3910
        %v3966 = vmul.f32 %v3901, %v3910
        %v3967 = vmul.f32 %v3902, %v3910
        %v3968 = vmul.f32 %v3903, %v3910
        %v3969 = vmul.f32 %v3904, %v3910
        %v3970 = vmul.f32 %v3905, %v3910
        %v3971 = vmul.f32 %v3906, %v3910
        %v3972 = vmul.f32 %v3907, %v3910
        %v3973 = vmul.f32 %v3908, %v3910
        %v3974 = vmul.f32 %v3909, %v3910
        %v3975 = vadd.f32 %v3781, %v3911
        %v3976 = vadd.f32 %v3782, %v3912
        %v3977 = vadd.f32 %v3783, %v3913
        %v3978 = vadd.f32 %v3784, %v3914
        %v3979 = vadd.f32 %v3785, %v3915
        %v3980 = vadd.f32 %v3786, %v3916
        %v3981 = vadd.f32 %v3787, %v3917
        %v3982 = vadd.f32 %v3788, %v3918
        %v3983 = vadd.f32 %v3789, %v3919
        %v3984 = vadd.f32 %v3790, %v3920
        %v3985 = vadd.f32 %v3791, %v3921
        %v3986 = vadd.f32 %v3792, %v3922
        %v3987 = vadd.f32 %v3793, %v3923
        %v3988 = vadd.f32 %v3794, %v3924
        %v3989 = vadd.f32 %v3795, %v3925
        %v3990 = vadd.f32 %v3796, %v3926
        %v3991 = vadd.f32 %v3797, %v3927
        %v3992 = vadd.f32 %v3798, %v3928
        %v3993 = vadd.f32 %v3799, %v3929
        %v3994 = vadd.f32 %v3800, %v3930
        %v3995 = vadd.f32 %v3801, %v3931
        %v3996 = vadd.f32 %v3802, %v3932
        %v3997 = vadd.f32 %v3803, %v3933
        %v3998 = vadd.f32 %v3804, %v3934
        %v3999 = vadd.f32 %v3805, %v3935
        %v4000 = vadd.f32 %v3806, %v3936
        %v4001 = vadd.f32 %v3807, %v3937
        %v4002 = vadd.f32 %v3808, %v3938
        %v4003 = vadd.f32 %v3809, %v3939
        %v4004 = vadd.f32 %v3810, %v3940
        %v4005 = vadd.f32 %v3811, %v3941
        %v4006 = vadd.f32 %v3812, %v3942
        %v4007 = vadd.f32 %v3813, %v3943
        %v4008 = vadd.f32 %v3814, %v3944
        %v4009 = vadd.f32 %v3815, %v3945
        %v4010 = vadd.f32 %v3816, %v3946
        %v4011 = vadd.f32 %v3817, %v3947
        %v4012 = vadd.f32 %v3818, %v3948
        %v4013 = vadd.f32 %v3819, %v3949
        %v4014 = vadd.f32 %v3820, %v3950
        %v4015 = vadd.f32 %v3821, %v3951
        %v4016 = vadd.f32 %v3822, %v3952
        %v4017 = vadd.f32 %v3823, %v3953
        %v4018 = vadd.f32 %v3824, %v3954
        %v4019 = vadd.f32 %v3825, %v3955
        %v4020 = vadd.f32 %v3826, %v3956
        %v4021 = vadd.f32 %v3827, %v3957
        %v4022 = vadd.f32 %v3828, %v3958
        %v4023 = vadd.f32 %v3829, %v3959
        %v4024 = vadd.f32 %v3830, %v3960
        %v4025 = vadd.f32 %v3831, %v3961
        %v4026 = vadd.f32 %v3832, %v3962
        %v4027 = vadd.f32 %v3833, %v3963
        %v4028 = vadd.f32 %v3834, %v3964
        %v4029 = vadd.f32 %v3835, %v3965
        %v4030 = vadd.f32 %v3836, %v3966
        %v4031 = vadd.f32 %v3837, %v3967
        %v4032 = vadd.f32 %v3838, %v3968
        %v4033 = vadd.f32 %v3839, %v3969
        %v4034 = vadd.f32 %v3840, %v3970
        %v4035 = vadd.f32 %v3841, %v3971
        %v4036 = vadd.f32 %v3842, %v3972
        %v4037 = vadd.f32 %v3843, %v3973
        %v4038 = vadd.f32 %v3844, %v3974
        %v4039 = vld [vmem:[#allocation6 + $0x12] sm:$0x1]
        %s4040 = scalar_lea.vmem [#allocation2], 320
        %v4041 = vld [vmem:[%s4040] sm:$0xff]
        %v4042 = vld [vmem:[%s4040 + $0x10] sm:$0xff]
        %v4043 = vld [vmem:[%s4040 + $0x20] sm:$0xff]
        %v4044 = vld [vmem:[%s4040 + $0x30] sm:$0xff]
        %v4045 = vld [vmem:[%s4040 + $0x40] sm:$0xff]
        %v4046 = vld [vmem:[%s4040 + $0x50] sm:$0xff]
        %v4047 = vld [vmem:[%s4040 + $0x60] sm:$0xff]
        %v4048 = vld [vmem:[%s4040 + $0x70] sm:$0xff]
        %v4049 = vld [vmem:[%s4040 + $0xa0] sm:$0xff]
        %v4050 = vld [vmem:[%s4040 + $0xb0] sm:$0xff]
        %v4051 = vld [vmem:[%s4040 + $0xc0] sm:$0xff]
        %v4052 = vld [vmem:[%s4040 + $0xd0] sm:$0xff]
        %v4053 = vld [vmem:[%s4040 + $0xe0] sm:$0xff]
        %v4054 = vld [vmem:[%s4040 + $0xf0] sm:$0xff]
        %v4055 = vld [vmem:[%s4040 + $0x100] sm:$0xff]
        %v4056 = vld [vmem:[%s4040 + $0x110] sm:$0xff]
        %v4057 = vld [vmem:[%s4040 + $0x140] sm:$0xff]
        %v4058 = vld [vmem:[%s4040 + $0x150] sm:$0xff]
        %v4059 = vld [vmem:[%s4040 + $0x160] sm:$0xff]
        %v4060 = vld [vmem:[%s4040 + $0x170] sm:$0xff]
        %v4061 = vld [vmem:[%s4040 + $0x180] sm:$0xff]
        %v4062 = vld [vmem:[%s4040 + $0x190] sm:$0xff]
        %v4063 = vld [vmem:[%s4040 + $0x1a0] sm:$0xff]
        %v4064 = vld [vmem:[%s4040 + $0x1b0] sm:$0xff]
        %v4065 = vld [vmem:[%s4040 + $0x1e0] sm:$0xff]
        %v4066 = vld [vmem:[%s4040 + $0x1f0] sm:$0xff]
        %v4067 = vld [vmem:[%s4040 + $0x200] sm:$0xff]
        %v4068 = vld [vmem:[%s4040 + $0x210] sm:$0xff]
        %v4069 = vld [vmem:[%s4040 + $0x220] sm:$0xff]
        %v4070 = vld [vmem:[%s4040 + $0x230] sm:$0xff]
        %v4071 = vld [vmem:[%s4040 + $0x240] sm:$0xff]
        %v4072 = vld [vmem:[%s4040 + $0x250] sm:$0xff]
        %v4073 = vld [vmem:[%s4040 + $0x280] sm:$0xff]
        %v4074 = vld [vmem:[%s4040 + $0x290] sm:$0xff]
        %v4075 = vld [vmem:[%s4040 + $0x2a0] sm:$0xff]
        %v4076 = vld [vmem:[%s4040 + $0x2b0] sm:$0xff]
        %v4077 = vld [vmem:[%s4040 + $0x2c0] sm:$0xff]
        %v4078 = vld [vmem:[%s4040 + $0x2d0] sm:$0xff]
        %v4079 = vld [vmem:[%s4040 + $0x2e0] sm:$0xff]
        %v4080 = vld [vmem:[%s4040 + $0x2f0] sm:$0xff]
        %v4081 = vld [vmem:[%s4040 + $0x320] sm:$0xff]
        %v4082 = vld [vmem:[%s4040 + $0x330] sm:$0xff]
        %v4083 = vld [vmem:[%s4040 + $0x340] sm:$0xff]
        %v4084 = vld [vmem:[%s4040 + $0x350] sm:$0xff]
        %v4085 = vld [vmem:[%s4040 + $0x360] sm:$0xff]
        %v4086 = vld [vmem:[%s4040 + $0x370] sm:$0xff]
        %v4087 = vld [vmem:[%s4040 + $0x380] sm:$0xff]
        %v4088 = vld [vmem:[%s4040 + $0x390] sm:$0xff]
        %v4089 = vld [vmem:[%s4040 + $0x3c0] sm:$0xff]
        %v4090 = vld [vmem:[%s4040 + $0x3d0] sm:$0xff]
        %v4091 = vld [vmem:[%s4040 + $0x3e0] sm:$0xff]
        %v4092 = vld [vmem:[%s4040 + $0x3f0] sm:$0xff]
        %v4093 = vld [vmem:[%s4040 + $0x400] sm:$0xff]
        %v4094 = vld [vmem:[%s4040 + $0x410] sm:$0xff]
        %v4095 = vld [vmem:[%s4040 + $0x420] sm:$0xff]
        %v4096 = vld [vmem:[%s4040 + $0x430] sm:$0xff]
        %v4097 = vld [vmem:[%s4040 + $0x460] sm:$0xff]
        %v4098 = vld [vmem:[%s4040 + $0x470] sm:$0xff]
        %v4099 = vld [vmem:[%s4040 + $0x480] sm:$0xff]
        %v4100 = vld [vmem:[%s4040 + $0x490] sm:$0xff]
        %v4101 = vld [vmem:[%s4040 + $0x4a0] sm:$0xff]
        %v4102 = vld [vmem:[%s4040 + $0x4b0] sm:$0xff]
        %v4103 = vld [vmem:[%s4040 + $0x4c0] sm:$0xff]
        %v4104 = vld [vmem:[%s4040 + $0x4d0] sm:$0xff]
        %v4105 = vperm.slane %v4039, 0
        %v4106 = vmul.f32 %v4041, %v4105
        %v4107 = vmul.f32 %v4042, %v4105
        %v4108 = vmul.f32 %v4043, %v4105
        %v4109 = vmul.f32 %v4044, %v4105
        %v4110 = vmul.f32 %v4045, %v4105
        %v4111 = vmul.f32 %v4046, %v4105
        %v4112 = vmul.f32 %v4047, %v4105
        %v4113 = vmul.f32 %v4048, %v4105
        %v4114 = vmul.f32 %v4049, %v4105
        %v4115 = vmul.f32 %v4050, %v4105
        %v4116 = vmul.f32 %v4051, %v4105
        %v4117 = vmul.f32 %v4052, %v4105
        %v4118 = vmul.f32 %v4053, %v4105
        %v4119 = vmul.f32 %v4054, %v4105
        %v4120 = vmul.f32 %v4055, %v4105
        %v4121 = vmul.f32 %v4056, %v4105
        %v4122 = vmul.f32 %v4057, %v4105
        %v4123 = vmul.f32 %v4058, %v4105
        %v4124 = vmul.f32 %v4059, %v4105
        %v4125 = vmul.f32 %v4060, %v4105
        %v4126 = vmul.f32 %v4061, %v4105
        %v4127 = vmul.f32 %v4062, %v4105
        %v4128 = vmul.f32 %v4063, %v4105
        %v4129 = vmul.f32 %v4064, %v4105
        %v4130 = vmul.f32 %v4065, %v4105
        %v4131 = vmul.f32 %v4066, %v4105
        %v4132 = vmul.f32 %v4067, %v4105
        %v4133 = vmul.f32 %v4068, %v4105
        %v4134 = vmul.f32 %v4069, %v4105
        %v4135 = vmul.f32 %v4070, %v4105
        %v4136 = vmul.f32 %v4071, %v4105
        %v4137 = vmul.f32 %v4072, %v4105
        %v4138 = vmul.f32 %v4073, %v4105
        %v4139 = vmul.f32 %v4074, %v4105
        %v4140 = vmul.f32 %v4075, %v4105
        %v4141 = vmul.f32 %v4076, %v4105
        %v4142 = vmul.f32 %v4077, %v4105
        %v4143 = vmul.f32 %v4078, %v4105
        %v4144 = vmul.f32 %v4079, %v4105
        %v4145 = vmul.f32 %v4080, %v4105
        %v4146 = vmul.f32 %v4081, %v4105
        %v4147 = vmul.f32 %v4082, %v4105
        %v4148 = vmul.f32 %v4083, %v4105
        %v4149 = vmul.f32 %v4084, %v4105
        %v4150 = vmul.f32 %v4085, %v4105
        %v4151 = vmul.f32 %v4086, %v4105
        %v4152 = vmul.f32 %v4087, %v4105
        %v4153 = vmul.f32 %v4088, %v4105
        %v4154 = vmul.f32 %v4089, %v4105
        %v4155 = vmul.f32 %v4090, %v4105
        %v4156 = vmul.f32 %v4091, %v4105
        %v4157 = vmul.f32 %v4092, %v4105
        %v4158 = vmul.f32 %v4093, %v4105
        %v4159 = vmul.f32 %v4094, %v4105
        %v4160 = vmul.f32 %v4095, %v4105
        %v4161 = vmul.f32 %v4096, %v4105
        %v4162 = vmul.f32 %v4097, %v4105
        %v4163 = vmul.f32 %v4098, %v4105
        %v4164 = vmul.f32 %v4099, %v4105
        %v4165 = vmul.f32 %v4100, %v4105
        %v4166 = vmul.f32 %v4101, %v4105
        %v4167 = vmul.f32 %v4102, %v4105
        %v4168 = vmul.f32 %v4103, %v4105
        %v4169 = vmul.f32 %v4104, %v4105
        %v4170 = vadd.f32 %v3975, %v4106
        %v4171 = vadd.f32 %v3976, %v4107
        %v4172 = vadd.f32 %v3977, %v4108
        %v4173 = vadd.f32 %v3978, %v4109
        %v4174 = vadd.f32 %v3979, %v4110
        %v4175 = vadd.f32 %v3980, %v4111
        %v4176 = vadd.f32 %v3981, %v4112
        %v4177 = vadd.f32 %v3982, %v4113
        %v4178 = vadd.f32 %v3983, %v4114
        %v4179 = vadd.f32 %v3984, %v4115
        %v4180 = vadd.f32 %v3985, %v4116
        %v4181 = vadd.f32 %v3986, %v4117
        %v4182 = vadd.f32 %v3987, %v4118
        %v4183 = vadd.f32 %v3988, %v4119
        %v4184 = vadd.f32 %v3989, %v4120
        %v4185 = vadd.f32 %v3990, %v4121
        %v4186 = vadd.f32 %v3991, %v4122
        %v4187 = vadd.f32 %v3992, %v4123
        %v4188 = vadd.f32 %v3993, %v4124
        %v4189 = vadd.f32 %v3994, %v4125
        %v4190 = vadd.f32 %v3995, %v4126
        %v4191 = vadd.f32 %v3996, %v4127
        %v4192 = vadd.f32 %v3997, %v4128
        %v4193 = vadd.f32 %v3998, %v4129
        %v4194 = vadd.f32 %v3999, %v4130
        %v4195 = vadd.f32 %v4000, %v4131
        %v4196 = vadd.f32 %v4001, %v4132
        %v4197 = vadd.f32 %v4002, %v4133
        %v4198 = vadd.f32 %v4003, %v4134
        %v4199 = vadd.f32 %v4004, %v4135
        %v4200 = vadd.f32 %v4005, %v4136
        %v4201 = vadd.f32 %v4006, %v4137
        %v4202 = vadd.f32 %v4007, %v4138
        %v4203 = vadd.f32 %v4008, %v4139
        %v4204 = vadd.f32 %v4009, %v4140
        %v4205 = vadd.f32 %v4010, %v4141
        %v4206 = vadd.f32 %v4011, %v4142
        %v4207 = vadd.f32 %v4012, %v4143
        %v4208 = vadd.f32 %v4013, %v4144
        %v4209 = vadd.f32 %v4014, %v4145
        %v4210 = vadd.f32 %v4015, %v4146
        %v4211 = vadd.f32 %v4016, %v4147
        %v4212 = vadd.f32 %v4017, %v4148
        %v4213 = vadd.f32 %v4018, %v4149
        %v4214 = vadd.f32 %v4019, %v4150
        %v4215 = vadd.f32 %v4020, %v4151
        %v4216 = vadd.f32 %v4021, %v4152
        %v4217 = vadd.f32 %v4022, %v4153
        %v4218 = vadd.f32 %v4023, %v4154
        %v4219 = vadd.f32 %v4024, %v4155
        %v4220 = vadd.f32 %v4025, %v4156
        %v4221 = vadd.f32 %v4026, %v4157
        %v4222 = vadd.f32 %v4027, %v4158
        %v4223 = vadd.f32 %v4028, %v4159
        %v4224 = vadd.f32 %v4029, %v4160
        %v4225 = vadd.f32 %v4030, %v4161
        %v4226 = vadd.f32 %v4031, %v4162
        %v4227 = vadd.f32 %v4032, %v4163
        %v4228 = vadd.f32 %v4033, %v4164
        %v4229 = vadd.f32 %v4034, %v4165
        %v4230 = vadd.f32 %v4035, %v4166
        %v4231 = vadd.f32 %v4036, %v4167
        %v4232 = vadd.f32 %v4037, %v4168
        %v4233 = vadd.f32 %v4038, %v4169
        %v4234 = vld [vmem:[#allocation6 + $0x13] sm:$0x1]
        %v4235 = vld [vmem:[%s4040 + $0x1] sm:$0xff]
        %v4236 = vld [vmem:[%s4040 + $0x11] sm:$0xff]
        %v4237 = vld [vmem:[%s4040 + $0x21] sm:$0xff]
        %v4238 = vld [vmem:[%s4040 + $0x31] sm:$0xff]
        %v4239 = vld [vmem:[%s4040 + $0x41] sm:$0xff]
        %v4240 = vld [vmem:[%s4040 + $0x51] sm:$0xff]
        %v4241 = vld [vmem:[%s4040 + $0x61] sm:$0xff]
        %v4242 = vld [vmem:[%s4040 + $0x71] sm:$0xff]
        %v4243 = vld [vmem:[%s4040 + $0xa1] sm:$0xff]
        %v4244 = vld [vmem:[%s4040 + $0xb1] sm:$0xff]
        %v4245 = vld [vmem:[%s4040 + $0xc1] sm:$0xff]
        %v4246 = vld [vmem:[%s4040 + $0xd1] sm:$0xff]
        %v4247 = vld [vmem:[%s4040 + $0xe1] sm:$0xff]
        %v4248 = vld [vmem:[%s4040 + $0xf1] sm:$0xff]
        %v4249 = vld [vmem:[%s4040 + $0x101] sm:$0xff]
        %v4250 = vld [vmem:[%s4040 + $0x111] sm:$0xff]
        %v4251 = vld [vmem:[%s4040 + $0x141] sm:$0xff]
        %v4252 = vld [vmem:[%s4040 + $0x151] sm:$0xff]
        %v4253 = vld [vmem:[%s4040 + $0x161] sm:$0xff]
        %v4254 = vld [vmem:[%s4040 + $0x171] sm:$0xff]
        %v4255 = vld [vmem:[%s4040 + $0x181] sm:$0xff]
        %v4256 = vld [vmem:[%s4040 + $0x191] sm:$0xff]
        %v4257 = vld [vmem:[%s4040 + $0x1a1] sm:$0xff]
        %v4258 = vld [vmem:[%s4040 + $0x1b1] sm:$0xff]
        %v4259 = vld [vmem:[%s4040 + $0x1e1] sm:$0xff]
        %v4260 = vld [vmem:[%s4040 + $0x1f1] sm:$0xff]
        %v4261 = vld [vmem:[%s4040 + $0x201] sm:$0xff]
        %v4262 = vld [vmem:[%s4040 + $0x211] sm:$0xff]
        %v4263 = vld [vmem:[%s4040 + $0x221] sm:$0xff]
        %v4264 = vld [vmem:[%s4040 + $0x231] sm:$0xff]
        %v4265 = vld [vmem:[%s4040 + $0x241] sm:$0xff]
        %v4266 = vld [vmem:[%s4040 + $0x251] sm:$0xff]
        %v4267 = vld [vmem:[%s4040 + $0x281] sm:$0xff]
        %v4268 = vld [vmem:[%s4040 + $0x291] sm:$0xff]
        %v4269 = vld [vmem:[%s4040 + $0x2a1] sm:$0xff]
        %v4270 = vld [vmem:[%s4040 + $0x2b1] sm:$0xff]
        %v4271 = vld [vmem:[%s4040 + $0x2c1] sm:$0xff]
        %v4272 = vld [vmem:[%s4040 + $0x2d1] sm:$0xff]
        %v4273 = vld [vmem:[%s4040 + $0x2e1] sm:$0xff]
        %v4274 = vld [vmem:[%s4040 + $0x2f1] sm:$0xff]
        %v4275 = vld [vmem:[%s4040 + $0x321] sm:$0xff]
        %v4276 = vld [vmem:[%s4040 + $0x331] sm:$0xff]
        %v4277 = vld [vmem:[%s4040 + $0x341] sm:$0xff]
        %v4278 = vld [vmem:[%s4040 + $0x351] sm:$0xff]
        %v4279 = vld [vmem:[%s4040 + $0x361] sm:$0xff]
        %v4280 = vld [vmem:[%s4040 + $0x371] sm:$0xff]
        %v4281 = vld [vmem:[%s4040 + $0x381] sm:$0xff]
        %v4282 = vld [vmem:[%s4040 + $0x391] sm:$0xff]
        %v4283 = vld [vmem:[%s4040 + $0x3c1] sm:$0xff]
        %v4284 = vld [vmem:[%s4040 + $0x3d1] sm:$0xff]
        %v4285 = vld [vmem:[%s4040 + $0x3e1] sm:$0xff]
        %v4286 = vld [vmem:[%s4040 + $0x3f1] sm:$0xff]
        %v4287 = vld [vmem:[%s4040 + $0x401] sm:$0xff]
        %v4288 = vld [vmem:[%s4040 + $0x411] sm:$0xff]
        %v4289 = vld [vmem:[%s4040 + $0x421] sm:$0xff]
        %v4290 = vld [vmem:[%s4040 + $0x431] sm:$0xff]
        %v4291 = vld [vmem:[%s4040 + $0x461] sm:$0xff]
        %v4292 = vld [vmem:[%s4040 + $0x471] sm:$0xff]
        %v4293 = vld [vmem:[%s4040 + $0x481] sm:$0xff]
        %v4294 = vld [vmem:[%s4040 + $0x491] sm:$0xff]
        %v4295 = vld [vmem:[%s4040 + $0x4a1] sm:$0xff]
        %v4296 = vld [vmem:[%s4040 + $0x4b1] sm:$0xff]
        %v4297 = vld [vmem:[%s4040 + $0x4c1] sm:$0xff]
        %v4298 = vld [vmem:[%s4040 + $0x4d1] sm:$0xff]
        %v4299 = vperm.slane %v4234, 0
        %v4300 = vmul.f32 %v4235, %v4299
        %v4301 = vmul.f32 %v4236, %v4299
        %v4302 = vmul.f32 %v4237, %v4299
        %v4303 = vmul.f32 %v4238, %v4299
        %v4304 = vmul.f32 %v4239, %v4299
        %v4305 = vmul.f32 %v4240, %v4299
        %v4306 = vmul.f32 %v4241, %v4299
        %v4307 = vmul.f32 %v4242, %v4299
        %v4308 = vmul.f32 %v4243, %v4299
        %v4309 = vmul.f32 %v4244, %v4299
        %v4310 = vmul.f32 %v4245, %v4299
        %v4311 = vmul.f32 %v4246, %v4299
        %v4312 = vmul.f32 %v4247, %v4299
        %v4313 = vmul.f32 %v4248, %v4299
        %v4314 = vmul.f32 %v4249, %v4299
        %v4315 = vmul.f32 %v4250, %v4299
        %v4316 = vmul.f32 %v4251, %v4299
        %v4317 = vmul.f32 %v4252, %v4299
        %v4318 = vmul.f32 %v4253, %v4299
        %v4319 = vmul.f32 %v4254, %v4299
        %v4320 = vmul.f32 %v4255, %v4299
        %v4321 = vmul.f32 %v4256, %v4299
        %v4322 = vmul.f32 %v4257, %v4299
        %v4323 = vmul.f32 %v4258, %v4299
        %v4324 = vmul.f32 %v4259, %v4299
        %v4325 = vmul.f32 %v4260, %v4299
        %v4326 = vmul.f32 %v4261, %v4299
        %v4327 = vmul.f32 %v4262, %v4299
        %v4328 = vmul.f32 %v4263, %v4299
        %v4329 = vmul.f32 %v4264, %v4299
        %v4330 = vmul.f32 %v4265, %v4299
        %v4331 = vmul.f32 %v4266, %v4299
        %v4332 = vmul.f32 %v4267, %v4299
        %v4333 = vmul.f32 %v4268, %v4299
        %v4334 = vmul.f32 %v4269, %v4299
        %v4335 = vmul.f32 %v4270, %v4299
        %v4336 = vmul.f32 %v4271, %v4299
        %v4337 = vmul.f32 %v4272, %v4299
        %v4338 = vmul.f32 %v4273, %v4299
        %v4339 = vmul.f32 %v4274, %v4299
        %v4340 = vmul.f32 %v4275, %v4299
        %v4341 = vmul.f32 %v4276, %v4299
        %v4342 = vmul.f32 %v4277, %v4299
        %v4343 = vmul.f32 %v4278, %v4299
        %v4344 = vmul.f32 %v4279, %v4299
        %v4345 = vmul.f32 %v4280, %v4299
        %v4346 = vmul.f32 %v4281, %v4299
        %v4347 = vmul.f32 %v4282, %v4299
        %v4348 = vmul.f32 %v4283, %v4299
        %v4349 = vmul.f32 %v4284, %v4299
        %v4350 = vmul.f32 %v4285, %v4299
        %v4351 = vmul.f32 %v4286, %v4299
        %v4352 = vmul.f32 %v4287, %v4299
        %v4353 = vmul.f32 %v4288, %v4299
        %v4354 = vmul.f32 %v4289, %v4299
        %v4355 = vmul.f32 %v4290, %v4299
        %v4356 = vmul.f32 %v4291, %v4299
        %v4357 = vmul.f32 %v4292, %v4299
        %v4358 = vmul.f32 %v4293, %v4299
        %v4359 = vmul.f32 %v4294, %v4299
        %v4360 = vmul.f32 %v4295, %v4299
        %v4361 = vmul.f32 %v4296, %v4299
        %v4362 = vmul.f32 %v4297, %v4299
        %v4363 = vmul.f32 %v4298, %v4299
        %v4364 = vadd.f32 %v4170, %v4300
        %v4365 = vadd.f32 %v4171, %v4301
        %v4366 = vadd.f32 %v4172, %v4302
        %v4367 = vadd.f32 %v4173, %v4303
        %v4368 = vadd.f32 %v4174, %v4304
        %v4369 = vadd.f32 %v4175, %v4305
        %v4370 = vadd.f32 %v4176, %v4306
        %v4371 = vadd.f32 %v4177, %v4307
        %v4372 = vadd.f32 %v4178, %v4308
        %v4373 = vadd.f32 %v4179, %v4309
        %v4374 = vadd.f32 %v4180, %v4310
        %v4375 = vadd.f32 %v4181, %v4311
        %v4376 = vadd.f32 %v4182, %v4312
        %v4377 = vadd.f32 %v4183, %v4313
        %v4378 = vadd.f32 %v4184, %v4314
        %v4379 = vadd.f32 %v4185, %v4315
        %v4380 = vadd.f32 %v4186, %v4316
        %v4381 = vadd.f32 %v4187, %v4317
        %v4382 = vadd.f32 %v4188, %v4318
        %v4383 = vadd.f32 %v4189, %v4319
        %v4384 = vadd.f32 %v4190, %v4320
        %v4385 = vadd.f32 %v4191, %v4321
        %v4386 = vadd.f32 %v4192, %v4322
        %v4387 = vadd.f32 %v4193, %v4323
        %v4388 = vadd.f32 %v4194, %v4324
        %v4389 = vadd.f32 %v4195, %v4325
        %v4390 = vadd.f32 %v4196, %v4326
        %v4391 = vadd.f32 %v4197, %v4327
        %v4392 = vadd.f32 %v4198, %v4328
        %v4393 = vadd.f32 %v4199, %v4329
        %v4394 = vadd.f32 %v4200, %v4330
        %v4395 = vadd.f32 %v4201, %v4331
        %v4396 = vadd.f32 %v4202, %v4332
        %v4397 = vadd.f32 %v4203, %v4333
        %v4398 = vadd.f32 %v4204, %v4334
        %v4399 = vadd.f32 %v4205, %v4335
        %v4400 = vadd.f32 %v4206, %v4336
        %v4401 = vadd.f32 %v4207, %v4337
        %v4402 = vadd.f32 %v4208, %v4338
        %v4403 = vadd.f32 %v4209, %v4339
        %v4404 = vadd.f32 %v4210, %v4340
        %v4405 = vadd.f32 %v4211, %v4341
        %v4406 = vadd.f32 %v4212, %v4342
        %v4407 = vadd.f32 %v4213, %v4343
        %v4408 = vadd.f32 %v4214, %v4344
        %v4409 = vadd.f32 %v4215, %v4345
        %v4410 = vadd.f32 %v4216, %v4346
        %v4411 = vadd.f32 %v4217, %v4347
        %v4412 = vadd.f32 %v4218, %v4348
        %v4413 = vadd.f32 %v4219, %v4349
        %v4414 = vadd.f32 %v4220, %v4350
        %v4415 = vadd.f32 %v4221, %v4351
        %v4416 = vadd.f32 %v4222, %v4352
        %v4417 = vadd.f32 %v4223, %v4353
        %v4418 = vadd.f32 %v4224, %v4354
        %v4419 = vadd.f32 %v4225, %v4355
        %v4420 = vadd.f32 %v4226, %v4356
        %v4421 = vadd.f32 %v4227, %v4357
        %v4422 = vadd.f32 %v4228, %v4358
        %v4423 = vadd.f32 %v4229, %v4359
        %v4424 = vadd.f32 %v4230, %v4360
        %v4425 = vadd.f32 %v4231, %v4361
        %v4426 = vadd.f32 %v4232, %v4362
        %v4427 = vadd.f32 %v4233, %v4363
        %v4428 = vld [vmem:[#allocation6 + $0x14] sm:$0x1]
        %v4429 = vld [vmem:[%s4040 + $0x2] sm:$0xff]
        %v4430 = vld [vmem:[%s4040 + $0x12] sm:$0xff]
        %v4431 = vld [vmem:[%s4040 + $0x22] sm:$0xff]
        %v4432 = vld [vmem:[%s4040 + $0x32] sm:$0xff]
        %v4433 = vld [vmem:[%s4040 + $0x42] sm:$0xff]
        %v4434 = vld [vmem:[%s4040 + $0x52] sm:$0xff]
        %v4435 = vld [vmem:[%s4040 + $0x62] sm:$0xff]
        %v4436 = vld [vmem:[%s4040 + $0x72] sm:$0xff]
        %v4437 = vld [vmem:[%s4040 + $0xa2] sm:$0xff]
        %v4438 = vld [vmem:[%s4040 + $0xb2] sm:$0xff]
        %v4439 = vld [vmem:[%s4040 + $0xc2] sm:$0xff]
        %v4440 = vld [vmem:[%s4040 + $0xd2] sm:$0xff]
        %v4441 = vld [vmem:[%s4040 + $0xe2] sm:$0xff]
        %v4442 = vld [vmem:[%s4040 + $0xf2] sm:$0xff]
        %v4443 = vld [vmem:[%s4040 + $0x102] sm:$0xff]
        %v4444 = vld [vmem:[%s4040 + $0x112] sm:$0xff]
        %v4445 = vld [vmem:[%s4040 + $0x142] sm:$0xff]
        %v4446 = vld [vmem:[%s4040 + $0x152] sm:$0xff]
        %v4447 = vld [vmem:[%s4040 + $0x162] sm:$0xff]
        %v4448 = vld [vmem:[%s4040 + $0x172] sm:$0xff]
        %v4449 = vld [vmem:[%s4040 + $0x182] sm:$0xff]
        %v4450 = vld [vmem:[%s4040 + $0x192] sm:$0xff]
        %v4451 = vld [vmem:[%s4040 + $0x1a2] sm:$0xff]
        %v4452 = vld [vmem:[%s4040 + $0x1b2] sm:$0xff]
        %v4453 = vld [vmem:[%s4040 + $0x1e2] sm:$0xff]
        %v4454 = vld [vmem:[%s4040 + $0x1f2] sm:$0xff]
        %v4455 = vld [vmem:[%s4040 + $0x202] sm:$0xff]
        %v4456 = vld [vmem:[%s4040 + $0x212] sm:$0xff]
        %v4457 = vld [vmem:[%s4040 + $0x222] sm:$0xff]
        %v4458 = vld [vmem:[%s4040 + $0x232] sm:$0xff]
        %v4459 = vld [vmem:[%s4040 + $0x242] sm:$0xff]
        %v4460 = vld [vmem:[%s4040 + $0x252] sm:$0xff]
        %v4461 = vld [vmem:[%s4040 + $0x282] sm:$0xff]
        %v4462 = vld [vmem:[%s4040 + $0x292] sm:$0xff]
        %v4463 = vld [vmem:[%s4040 + $0x2a2] sm:$0xff]
        %v4464 = vld [vmem:[%s4040 + $0x2b2] sm:$0xff]
        %v4465 = vld [vmem:[%s4040 + $0x2c2] sm:$0xff]
        %v4466 = vld [vmem:[%s4040 + $0x2d2] sm:$0xff]
        %v4467 = vld [vmem:[%s4040 + $0x2e2] sm:$0xff]
        %v4468 = vld [vmem:[%s4040 + $0x2f2] sm:$0xff]
        %v4469 = vld [vmem:[%s4040 + $0x322] sm:$0xff]
        %v4470 = vld [vmem:[%s4040 + $0x332] sm:$0xff]
        %v4471 = vld [vmem:[%s4040 + $0x342] sm:$0xff]
        %v4472 = vld [vmem:[%s4040 + $0x352] sm:$0xff]
        %v4473 = vld [vmem:[%s4040 + $0x362] sm:$0xff]
        %v4474 = vld [vmem:[%s4040 + $0x372] sm:$0xff]
        %v4475 = vld [vmem:[%s4040 + $0x382] sm:$0xff]
        %v4476 = vld [vmem:[%s4040 + $0x392] sm:$0xff]
        %v4477 = vld [vmem:[%s4040 + $0x3c2] sm:$0xff]
        %v4478 = vld [vmem:[%s4040 + $0x3d2] sm:$0xff]
        %v4479 = vld [vmem:[%s4040 + $0x3e2] sm:$0xff]
        %v4480 = vld [vmem:[%s4040 + $0x3f2] sm:$0xff]
        %v4481 = vld [vmem:[%s4040 + $0x402] sm:$0xff]
        %v4482 = vld [vmem:[%s4040 + $0x412] sm:$0xff]
        %v4483 = vld [vmem:[%s4040 + $0x422] sm:$0xff]
        %v4484 = vld [vmem:[%s4040 + $0x432] sm:$0xff]
        %v4485 = vld [vmem:[%s4040 + $0x462] sm:$0xff]
        %v4486 = vld [vmem:[%s4040 + $0x472] sm:$0xff]
        %v4487 = vld [vmem:[%s4040 + $0x482] sm:$0xff]
        %v4488 = vld [vmem:[%s4040 + $0x492] sm:$0xff]
        %v4489 = vld [vmem:[%s4040 + $0x4a2] sm:$0xff]
        %v4490 = vld [vmem:[%s4040 + $0x4b2] sm:$0xff]
        %v4491 = vld [vmem:[%s4040 + $0x4c2] sm:$0xff]
        %v4492 = vld [vmem:[%s4040 + $0x4d2] sm:$0xff]
        %v4493 = vperm.slane %v4428, 0
        %v4494 = vmul.f32 %v4429, %v4493
        %v4495 = vmul.f32 %v4430, %v4493
        %v4496 = vmul.f32 %v4431, %v4493
        %v4497 = vmul.f32 %v4432, %v4493
        %v4498 = vmul.f32 %v4433, %v4493
        %v4499 = vmul.f32 %v4434, %v4493
        %v4500 = vmul.f32 %v4435, %v4493
        %v4501 = vmul.f32 %v4436, %v4493
        %v4502 = vmul.f32 %v4437, %v4493
        %v4503 = vmul.f32 %v4438, %v4493
        %v4504 = vmul.f32 %v4439, %v4493
        %v4505 = vmul.f32 %v4440, %v4493
        %v4506 = vmul.f32 %v4441, %v4493
        %v4507 = vmul.f32 %v4442, %v4493
        %v4508 = vmul.f32 %v4443, %v4493
        %v4509 = vmul.f32 %v4444, %v4493
        %v4510 = vmul.f32 %v4445, %v4493
        %v4511 = vmul.f32 %v4446, %v4493
        %v4512 = vmul.f32 %v4447, %v4493
        %v4513 = vmul.f32 %v4448, %v4493
        %v4514 = vmul.f32 %v4449, %v4493
        %v4515 = vmul.f32 %v4450, %v4493
        %v4516 = vmul.f32 %v4451, %v4493
        %v4517 = vmul.f32 %v4452, %v4493
        %v4518 = vmul.f32 %v4453, %v4493
        %v4519 = vmul.f32 %v4454, %v4493
        %v4520 = vmul.f32 %v4455, %v4493
        %v4521 = vmul.f32 %v4456, %v4493
        %v4522 = vmul.f32 %v4457, %v4493
        %v4523 = vmul.f32 %v4458, %v4493
        %v4524 = vmul.f32 %v4459, %v4493
        %v4525 = vmul.f32 %v4460, %v4493
        %v4526 = vmul.f32 %v4461, %v4493
        %v4527 = vmul.f32 %v4462, %v4493
        %v4528 = vmul.f32 %v4463, %v4493
        %v4529 = vmul.f32 %v4464, %v4493
        %v4530 = vmul.f32 %v4465, %v4493
        %v4531 = vmul.f32 %v4466, %v4493
        %v4532 = vmul.f32 %v4467, %v4493
        %v4533 = vmul.f32 %v4468, %v4493
        %v4534 = vmul.f32 %v4469, %v4493
        %v4535 = vmul.f32 %v4470, %v4493
        %v4536 = vmul.f32 %v4471, %v4493
        %v4537 = vmul.f32 %v4472, %v4493
        %v4538 = vmul.f32 %v4473, %v4493
        %v4539 = vmul.f32 %v4474, %v4493
        %v4540 = vmul.f32 %v4475, %v4493
        %v4541 = vmul.f32 %v4476, %v4493
        %v4542 = vmul.f32 %v4477, %v4493
        %v4543 = vmul.f32 %v4478, %v4493
        %v4544 = vmul.f32 %v4479, %v4493
        %v4545 = vmul.f32 %v4480, %v4493
        %v4546 = vmul.f32 %v4481, %v4493
        %v4547 = vmul.f32 %v4482, %v4493
        %v4548 = vmul.f32 %v4483, %v4493
        %v4549 = vmul.f32 %v4484, %v4493
        %v4550 = vmul.f32 %v4485, %v4493
        %v4551 = vmul.f32 %v4486, %v4493
        %v4552 = vmul.f32 %v4487, %v4493
        %v4553 = vmul.f32 %v4488, %v4493
        %v4554 = vmul.f32 %v4489, %v4493
        %v4555 = vmul.f32 %v4490, %v4493
        %v4556 = vmul.f32 %v4491, %v4493
        %v4557 = vmul.f32 %v4492, %v4493
        %v4558 = vadd.f32 %v4364, %v4494
        %v4559 = vadd.f32 %v4365, %v4495
        %v4560 = vadd.f32 %v4366, %v4496
        %v4561 = vadd.f32 %v4367, %v4497
        %v4562 = vadd.f32 %v4368, %v4498
        %v4563 = vadd.f32 %v4369, %v4499
        %v4564 = vadd.f32 %v4370, %v4500
        %v4565 = vadd.f32 %v4371, %v4501
        %v4566 = vadd.f32 %v4372, %v4502
        %v4567 = vadd.f32 %v4373, %v4503
        %v4568 = vadd.f32 %v4374, %v4504
        %v4569 = vadd.f32 %v4375, %v4505
        %v4570 = vadd.f32 %v4376, %v4506
        %v4571 = vadd.f32 %v4377, %v4507
        %v4572 = vadd.f32 %v4378, %v4508
        %v4573 = vadd.f32 %v4379, %v4509
        %v4574 = vadd.f32 %v4380, %v4510
        %v4575 = vadd.f32 %v4381, %v4511
        %v4576 = vadd.f32 %v4382, %v4512
        %v4577 = vadd.f32 %v4383, %v4513
        %v4578 = vadd.f32 %v4384, %v4514
        %v4579 = vadd.f32 %v4385, %v4515
        %v4580 = vadd.f32 %v4386, %v4516
        %v4581 = vadd.f32 %v4387, %v4517
        %v4582 = vadd.f32 %v4388, %v4518
        %v4583 = vadd.f32 %v4389, %v4519
        %v4584 = vadd.f32 %v4390, %v4520
        %v4585 = vadd.f32 %v4391, %v4521
        %v4586 = vadd.f32 %v4392, %v4522
        %v4587 = vadd.f32 %v4393, %v4523
        %v4588 = vadd.f32 %v4394, %v4524
        %v4589 = vadd.f32 %v4395, %v4525
        %v4590 = vadd.f32 %v4396, %v4526
        %v4591 = vadd.f32 %v4397, %v4527
        %v4592 = vadd.f32 %v4398, %v4528
        %v4593 = vadd.f32 %v4399, %v4529
        %v4594 = vadd.f32 %v4400, %v4530
        %v4595 = vadd.f32 %v4401, %v4531
        %v4596 = vadd.f32 %v4402, %v4532
        %v4597 = vadd.f32 %v4403, %v4533
        %v4598 = vadd.f32 %v4404, %v4534
        %v4599 = vadd.f32 %v4405, %v4535
        %v4600 = vadd.f32 %v4406, %v4536
        %v4601 = vadd.f32 %v4407, %v4537
        %v4602 = vadd.f32 %v4408, %v4538
        %v4603 = vadd.f32 %v4409, %v4539
        %v4604 = vadd.f32 %v4410, %v4540
        %v4605 = vadd.f32 %v4411, %v4541
        %v4606 = vadd.f32 %v4412, %v4542
        %v4607 = vadd.f32 %v4413, %v4543
        %v4608 = vadd.f32 %v4414, %v4544
        %v4609 = vadd.f32 %v4415, %v4545
        %v4610 = vadd.f32 %v4416, %v4546
        %v4611 = vadd.f32 %v4417, %v4547
        %v4612 = vadd.f32 %v4418, %v4548
        %v4613 = vadd.f32 %v4419, %v4549
        %v4614 = vadd.f32 %v4420, %v4550
        %v4615 = vadd.f32 %v4421, %v4551
        %v4616 = vadd.f32 %v4422, %v4552
        %v4617 = vadd.f32 %v4423, %v4553
        %v4618 = vadd.f32 %v4424, %v4554
        %v4619 = vadd.f32 %v4425, %v4555
        %v4620 = vadd.f32 %v4426, %v4556
        %v4621 = vadd.f32 %v4427, %v4557
        %v4622 = vld [vmem:[#allocation6 + $0x15] sm:$0x1]
        %s4623 = scalar_lea.vmem [#allocation2], 336
        %v4624 = vld [vmem:[%s4623] sm:$0xff]
        %v4625 = vld [vmem:[%s4623 + $0x10] sm:$0xff]
        %v4626 = vld [vmem:[%s4623 + $0x20] sm:$0xff]
        %v4627 = vld [vmem:[%s4623 + $0x30] sm:$0xff]
        %v4628 = vld [vmem:[%s4623 + $0x40] sm:$0xff]
        %v4629 = vld [vmem:[%s4623 + $0x50] sm:$0xff]
        %v4630 = vld [vmem:[%s4623 + $0x60] sm:$0xff]
        %v4631 = vld [vmem:[%s4623 + $0x70] sm:$0xff]
        %v4632 = vld [vmem:[%s4623 + $0xa0] sm:$0xff]
        %v4633 = vld [vmem:[%s4623 + $0xb0] sm:$0xff]
        %v4634 = vld [vmem:[%s4623 + $0xc0] sm:$0xff]
        %v4635 = vld [vmem:[%s4623 + $0xd0] sm:$0xff]
        %v4636 = vld [vmem:[%s4623 + $0xe0] sm:$0xff]
        %v4637 = vld [vmem:[%s4623 + $0xf0] sm:$0xff]
        %v4638 = vld [vmem:[%s4623 + $0x100] sm:$0xff]
        %v4639 = vld [vmem:[%s4623 + $0x110] sm:$0xff]
        %v4640 = vld [vmem:[%s4623 + $0x140] sm:$0xff]
        %v4641 = vld [vmem:[%s4623 + $0x150] sm:$0xff]
        %v4642 = vld [vmem:[%s4623 + $0x160] sm:$0xff]
        %v4643 = vld [vmem:[%s4623 + $0x170] sm:$0xff]
        %v4644 = vld [vmem:[%s4623 + $0x180] sm:$0xff]
        %v4645 = vld [vmem:[%s4623 + $0x190] sm:$0xff]
        %v4646 = vld [vmem:[%s4623 + $0x1a0] sm:$0xff]
        %v4647 = vld [vmem:[%s4623 + $0x1b0] sm:$0xff]
        %v4648 = vld [vmem:[%s4623 + $0x1e0] sm:$0xff]
        %v4649 = vld [vmem:[%s4623 + $0x1f0] sm:$0xff]
        %v4650 = vld [vmem:[%s4623 + $0x200] sm:$0xff]
        %v4651 = vld [vmem:[%s4623 + $0x210] sm:$0xff]
        %v4652 = vld [vmem:[%s4623 + $0x220] sm:$0xff]
        %v4653 = vld [vmem:[%s4623 + $0x230] sm:$0xff]
        %v4654 = vld [vmem:[%s4623 + $0x240] sm:$0xff]
        %v4655 = vld [vmem:[%s4623 + $0x250] sm:$0xff]
        %v4656 = vld [vmem:[%s4623 + $0x280] sm:$0xff]
        %v4657 = vld [vmem:[%s4623 + $0x290] sm:$0xff]
        %v4658 = vld [vmem:[%s4623 + $0x2a0] sm:$0xff]
        %v4659 = vld [vmem:[%s4623 + $0x2b0] sm:$0xff]
        %v4660 = vld [vmem:[%s4623 + $0x2c0] sm:$0xff]
        %v4661 = vld [vmem:[%s4623 + $0x2d0] sm:$0xff]
        %v4662 = vld [vmem:[%s4623 + $0x2e0] sm:$0xff]
        %v4663 = vld [vmem:[%s4623 + $0x2f0] sm:$0xff]
        %v4664 = vld [vmem:[%s4623 + $0x320] sm:$0xff]
        %v4665 = vld [vmem:[%s4623 + $0x330] sm:$0xff]
        %v4666 = vld [vmem:[%s4623 + $0x340] sm:$0xff]
        %v4667 = vld [vmem:[%s4623 + $0x350] sm:$0xff]
        %v4668 = vld [vmem:[%s4623 + $0x360] sm:$0xff]
        %v4669 = vld [vmem:[%s4623 + $0x370] sm:$0xff]
        %v4670 = vld [vmem:[%s4623 + $0x380] sm:$0xff]
        %v4671 = vld [vmem:[%s4623 + $0x390] sm:$0xff]
        %v4672 = vld [vmem:[%s4623 + $0x3c0] sm:$0xff]
        %v4673 = vld [vmem:[%s4623 + $0x3d0] sm:$0xff]
        %v4674 = vld [vmem:[%s4623 + $0x3e0] sm:$0xff]
        %v4675 = vld [vmem:[%s4623 + $0x3f0] sm:$0xff]
        %v4676 = vld [vmem:[%s4623 + $0x400] sm:$0xff]
        %v4677 = vld [vmem:[%s4623 + $0x410] sm:$0xff]
        %v4678 = vld [vmem:[%s4623 + $0x420] sm:$0xff]
        %v4679 = vld [vmem:[%s4623 + $0x430] sm:$0xff]
        %v4680 = vld [vmem:[%s4623 + $0x460] sm:$0xff]
        %v4681 = vld [vmem:[%s4623 + $0x470] sm:$0xff]
        %v4682 = vld [vmem:[%s4623 + $0x480] sm:$0xff]
        %v4683 = vld [vmem:[%s4623 + $0x490] sm:$0xff]
        %v4684 = vld [vmem:[%s4623 + $0x4a0] sm:$0xff]
        %v4685 = vld [vmem:[%s4623 + $0x4b0] sm:$0xff]
        %v4686 = vld [vmem:[%s4623 + $0x4c0] sm:$0xff]
        %v4687 = vld [vmem:[%s4623 + $0x4d0] sm:$0xff]
        %v4688 = vperm.slane %v4622, 0
        %v4689 = vmul.f32 %v4624, %v4688
        %v4690 = vmul.f32 %v4625, %v4688
        %v4691 = vmul.f32 %v4626, %v4688
        %v4692 = vmul.f32 %v4627, %v4688
        %v4693 = vmul.f32 %v4628, %v4688
        %v4694 = vmul.f32 %v4629, %v4688
        %v4695 = vmul.f32 %v4630, %v4688
        %v4696 = vmul.f32 %v4631, %v4688
        %v4697 = vmul.f32 %v4632, %v4688
        %v4698 = vmul.f32 %v4633, %v4688
        %v4699 = vmul.f32 %v4634, %v4688
        %v4700 = vmul.f32 %v4635, %v4688
        %v4701 = vmul.f32 %v4636, %v4688
        %v4702 = vmul.f32 %v4637, %v4688
        %v4703 = vmul.f32 %v4638, %v4688
        %v4704 = vmul.f32 %v4639, %v4688
        %v4705 = vmul.f32 %v4640, %v4688
        %v4706 = vmul.f32 %v4641, %v4688
        %v4707 = vmul.f32 %v4642, %v4688
        %v4708 = vmul.f32 %v4643, %v4688
        %v4709 = vmul.f32 %v4644, %v4688
        %v4710 = vmul.f32 %v4645, %v4688
        %v4711 = vmul.f32 %v4646, %v4688
        %v4712 = vmul.f32 %v4647, %v4688
        %v4713 = vmul.f32 %v4648, %v4688
        %v4714 = vmul.f32 %v4649, %v4688
        %v4715 = vmul.f32 %v4650, %v4688
        %v4716 = vmul.f32 %v4651, %v4688
        %v4717 = vmul.f32 %v4652, %v4688
        %v4718 = vmul.f32 %v4653, %v4688
        %v4719 = vmul.f32 %v4654, %v4688
        %v4720 = vmul.f32 %v4655, %v4688
        %v4721 = vmul.f32 %v4656, %v4688
        %v4722 = vmul.f32 %v4657, %v4688
        %v4723 = vmul.f32 %v4658, %v4688
        %v4724 = vmul.f32 %v4659, %v4688
        %v4725 = vmul.f32 %v4660, %v4688
        %v4726 = vmul.f32 %v4661, %v4688
        %v4727 = vmul.f32 %v4662, %v4688
        %v4728 = vmul.f32 %v4663, %v4688
        %v4729 = vmul.f32 %v4664, %v4688
        %v4730 = vmul.f32 %v4665, %v4688
        %v4731 = vmul.f32 %v4666, %v4688
        %v4732 = vmul.f32 %v4667, %v4688
        %v4733 = vmul.f32 %v4668, %v4688
        %v4734 = vmul.f32 %v4669, %v4688
        %v4735 = vmul.f32 %v4670, %v4688
        %v4736 = vmul.f32 %v4671, %v4688
        %v4737 = vmul.f32 %v4672, %v4688
        %v4738 = vmul.f32 %v4673, %v4688
        %v4739 = vmul.f32 %v4674, %v4688
        %v4740 = vmul.f32 %v4675, %v4688
        %v4741 = vmul.f32 %v4676, %v4688
        %v4742 = vmul.f32 %v4677, %v4688
        %v4743 = vmul.f32 %v4678, %v4688
        %v4744 = vmul.f32 %v4679, %v4688
        %v4745 = vmul.f32 %v4680, %v4688
        %v4746 = vmul.f32 %v4681, %v4688
        %v4747 = vmul.f32 %v4682, %v4688
        %v4748 = vmul.f32 %v4683, %v4688
        %v4749 = vmul.f32 %v4684, %v4688
        %v4750 = vmul.f32 %v4685, %v4688
        %v4751 = vmul.f32 %v4686, %v4688
        %v4752 = vmul.f32 %v4687, %v4688
        %v4753 = vadd.f32 %v4558, %v4689
        %v4754 = vadd.f32 %v4559, %v4690
        %v4755 = vadd.f32 %v4560, %v4691
        %v4756 = vadd.f32 %v4561, %v4692
        %v4757 = vadd.f32 %v4562, %v4693
        %v4758 = vadd.f32 %v4563, %v4694
        %v4759 = vadd.f32 %v4564, %v4695
        %v4760 = vadd.f32 %v4565, %v4696
        %v4761 = vadd.f32 %v4566, %v4697
        %v4762 = vadd.f32 %v4567, %v4698
        %v4763 = vadd.f32 %v4568, %v4699
        %v4764 = vadd.f32 %v4569, %v4700
        %v4765 = vadd.f32 %v4570, %v4701
        %v4766 = vadd.f32 %v4571, %v4702
        %v4767 = vadd.f32 %v4572, %v4703
        %v4768 = vadd.f32 %v4573, %v4704
        %v4769 = vadd.f32 %v4574, %v4705
        %v4770 = vadd.f32 %v4575, %v4706
        %v4771 = vadd.f32 %v4576, %v4707
        %v4772 = vadd.f32 %v4577, %v4708
        %v4773 = vadd.f32 %v4578, %v4709
        %v4774 = vadd.f32 %v4579, %v4710
        %v4775 = vadd.f32 %v4580, %v4711
        %v4776 = vadd.f32 %v4581, %v4712
        %v4777 = vadd.f32 %v4582, %v4713
        %v4778 = vadd.f32 %v4583, %v4714
        %v4779 = vadd.f32 %v4584, %v4715
        %v4780 = vadd.f32 %v4585, %v4716
        %v4781 = vadd.f32 %v4586, %v4717
        %v4782 = vadd.f32 %v4587, %v4718
        %v4783 = vadd.f32 %v4588, %v4719
        %v4784 = vadd.f32 %v4589, %v4720
        %v4785 = vadd.f32 %v4590, %v4721
        %v4786 = vadd.f32 %v4591, %v4722
        %v4787 = vadd.f32 %v4592, %v4723
        %v4788 = vadd.f32 %v4593, %v4724
        %v4789 = vadd.f32 %v4594, %v4725
        %v4790 = vadd.f32 %v4595, %v4726
        %v4791 = vadd.f32 %v4596, %v4727
        %v4792 = vadd.f32 %v4597, %v4728
        %v4793 = vadd.f32 %v4598, %v4729
        %v4794 = vadd.f32 %v4599, %v4730
        %v4795 = vadd.f32 %v4600, %v4731
        %v4796 = vadd.f32 %v4601, %v4732
        %v4797 = vadd.f32 %v4602, %v4733
        %v4798 = vadd.f32 %v4603, %v4734
        %v4799 = vadd.f32 %v4604, %v4735
        %v4800 = vadd.f32 %v4605, %v4736
        %v4801 = vadd.f32 %v4606, %v4737
        %v4802 = vadd.f32 %v4607, %v4738
        %v4803 = vadd.f32 %v4608, %v4739
        %v4804 = vadd.f32 %v4609, %v4740
        %v4805 = vadd.f32 %v4610, %v4741
        %v4806 = vadd.f32 %v4611, %v4742
        %v4807 = vadd.f32 %v4612, %v4743
        %v4808 = vadd.f32 %v4613, %v4744
        %v4809 = vadd.f32 %v4614, %v4745
        %v4810 = vadd.f32 %v4615, %v4746
        %v4811 = vadd.f32 %v4616, %v4747
        %v4812 = vadd.f32 %v4617, %v4748
        %v4813 = vadd.f32 %v4618, %v4749
        %v4814 = vadd.f32 %v4619, %v4750
        %v4815 = vadd.f32 %v4620, %v4751
        %v4816 = vadd.f32 %v4621, %v4752
        %v4817 = vld [vmem:[#allocation6 + $0x16] sm:$0x1]
        %v4818 = vld [vmem:[%s4623 + $0x1] sm:$0xff]
        %v4819 = vld [vmem:[%s4623 + $0x11] sm:$0xff]
        %v4820 = vld [vmem:[%s4623 + $0x21] sm:$0xff]
        %v4821 = vld [vmem:[%s4623 + $0x31] sm:$0xff]
        %v4822 = vld [vmem:[%s4623 + $0x41] sm:$0xff]
        %v4823 = vld [vmem:[%s4623 + $0x51] sm:$0xff]
        %v4824 = vld [vmem:[%s4623 + $0x61] sm:$0xff]
        %v4825 = vld [vmem:[%s4623 + $0x71] sm:$0xff]
        %v4826 = vld [vmem:[%s4623 + $0xa1] sm:$0xff]
        %v4827 = vld [vmem:[%s4623 + $0xb1] sm:$0xff]
        %v4828 = vld [vmem:[%s4623 + $0xc1] sm:$0xff]
        %v4829 = vld [vmem:[%s4623 + $0xd1] sm:$0xff]
        %v4830 = vld [vmem:[%s4623 + $0xe1] sm:$0xff]
        %v4831 = vld [vmem:[%s4623 + $0xf1] sm:$0xff]
        %v4832 = vld [vmem:[%s4623 + $0x101] sm:$0xff]
        %v4833 = vld [vmem:[%s4623 + $0x111] sm:$0xff]
        %v4834 = vld [vmem:[%s4623 + $0x141] sm:$0xff]
        %v4835 = vld [vmem:[%s4623 + $0x151] sm:$0xff]
        %v4836 = vld [vmem:[%s4623 + $0x161] sm:$0xff]
        %v4837 = vld [vmem:[%s4623 + $0x171] sm:$0xff]
        %v4838 = vld [vmem:[%s4623 + $0x181] sm:$0xff]
        %v4839 = vld [vmem:[%s4623 + $0x191] sm:$0xff]
        %v4840 = vld [vmem:[%s4623 + $0x1a1] sm:$0xff]
        %v4841 = vld [vmem:[%s4623 + $0x1b1] sm:$0xff]
        %v4842 = vld [vmem:[%s4623 + $0x1e1] sm:$0xff]
        %v4843 = vld [vmem:[%s4623 + $0x1f1] sm:$0xff]
        %v4844 = vld [vmem:[%s4623 + $0x201] sm:$0xff]
        %v4845 = vld [vmem:[%s4623 + $0x211] sm:$0xff]
        %v4846 = vld [vmem:[%s4623 + $0x221] sm:$0xff]
        %v4847 = vld [vmem:[%s4623 + $0x231] sm:$0xff]
        %v4848 = vld [vmem:[%s4623 + $0x241] sm:$0xff]
        %v4849 = vld [vmem:[%s4623 + $0x251] sm:$0xff]
        %v4850 = vld [vmem:[%s4623 + $0x281] sm:$0xff]
        %v4851 = vld [vmem:[%s4623 + $0x291] sm:$0xff]
        %v4852 = vld [vmem:[%s4623 + $0x2a1] sm:$0xff]
        %v4853 = vld [vmem:[%s4623 + $0x2b1] sm:$0xff]
        %v4854 = vld [vmem:[%s4623 + $0x2c1] sm:$0xff]
        %v4855 = vld [vmem:[%s4623 + $0x2d1] sm:$0xff]
        %v4856 = vld [vmem:[%s4623 + $0x2e1] sm:$0xff]
        %v4857 = vld [vmem:[%s4623 + $0x2f1] sm:$0xff]
        %v4858 = vld [vmem:[%s4623 + $0x321] sm:$0xff]
        %v4859 = vld [vmem:[%s4623 + $0x331] sm:$0xff]
        %v4860 = vld [vmem:[%s4623 + $0x341] sm:$0xff]
        %v4861 = vld [vmem:[%s4623 + $0x351] sm:$0xff]
        %v4862 = vld [vmem:[%s4623 + $0x361] sm:$0xff]
        %v4863 = vld [vmem:[%s4623 + $0x371] sm:$0xff]
        %v4864 = vld [vmem:[%s4623 + $0x381] sm:$0xff]
        %v4865 = vld [vmem:[%s4623 + $0x391] sm:$0xff]
        %v4866 = vld [vmem:[%s4623 + $0x3c1] sm:$0xff]
        %v4867 = vld [vmem:[%s4623 + $0x3d1] sm:$0xff]
        %v4868 = vld [vmem:[%s4623 + $0x3e1] sm:$0xff]
        %v4869 = vld [vmem:[%s4623 + $0x3f1] sm:$0xff]
        %v4870 = vld [vmem:[%s4623 + $0x401] sm:$0xff]
        %v4871 = vld [vmem:[%s4623 + $0x411] sm:$0xff]
        %v4872 = vld [vmem:[%s4623 + $0x421] sm:$0xff]
        %v4873 = vld [vmem:[%s4623 + $0x431] sm:$0xff]
        %v4874 = vld [vmem:[%s4623 + $0x461] sm:$0xff]
        %v4875 = vld [vmem:[%s4623 + $0x471] sm:$0xff]
        %v4876 = vld [vmem:[%s4623 + $0x481] sm:$0xff]
        %v4877 = vld [vmem:[%s4623 + $0x491] sm:$0xff]
        %v4878 = vld [vmem:[%s4623 + $0x4a1] sm:$0xff]
        %v4879 = vld [vmem:[%s4623 + $0x4b1] sm:$0xff]
        %v4880 = vld [vmem:[%s4623 + $0x4c1] sm:$0xff]
        %v4881 = vld [vmem:[%s4623 + $0x4d1] sm:$0xff]
        %v4882 = vperm.slane %v4817, 0
        %v4883 = vmul.f32 %v4818, %v4882
        %v4884 = vmul.f32 %v4819, %v4882
        %v4885 = vmul.f32 %v4820, %v4882
        %v4886 = vmul.f32 %v4821, %v4882
        %v4887 = vmul.f32 %v4822, %v4882
        %v4888 = vmul.f32 %v4823, %v4882
        %v4889 = vmul.f32 %v4824, %v4882
        %v4890 = vmul.f32 %v4825, %v4882
        %v4891 = vmul.f32 %v4826, %v4882
        %v4892 = vmul.f32 %v4827, %v4882
        %v4893 = vmul.f32 %v4828, %v4882
        %v4894 = vmul.f32 %v4829, %v4882
        %v4895 = vmul.f32 %v4830, %v4882
        %v4896 = vmul.f32 %v4831, %v4882
        %v4897 = vmul.f32 %v4832, %v4882
        %v4898 = vmul.f32 %v4833, %v4882
        %v4899 = vmul.f32 %v4834, %v4882
        %v4900 = vmul.f32 %v4835, %v4882
        %v4901 = vmul.f32 %v4836, %v4882
        %v4902 = vmul.f32 %v4837, %v4882
        %v4903 = vmul.f32 %v4838, %v4882
        %v4904 = vmul.f32 %v4839, %v4882
        %v4905 = vmul.f32 %v4840, %v4882
        %v4906 = vmul.f32 %v4841, %v4882
        %v4907 = vmul.f32 %v4842, %v4882
        %v4908 = vmul.f32 %v4843, %v4882
        %v4909 = vmul.f32 %v4844, %v4882
        %v4910 = vmul.f32 %v4845, %v4882
        %v4911 = vmul.f32 %v4846, %v4882
        %v4912 = vmul.f32 %v4847, %v4882
        %v4913 = vmul.f32 %v4848, %v4882
        %v4914 = vmul.f32 %v4849, %v4882
        %v4915 = vmul.f32 %v4850, %v4882
        %v4916 = vmul.f32 %v4851, %v4882
        %v4917 = vmul.f32 %v4852, %v4882
        %v4918 = vmul.f32 %v4853, %v4882
        %v4919 = vmul.f32 %v4854, %v4882
        %v4920 = vmul.f32 %v4855, %v4882
        %v4921 = vmul.f32 %v4856, %v4882
        %v4922 = vmul.f32 %v4857, %v4882
        %v4923 = vmul.f32 %v4858, %v4882
        %v4924 = vmul.f32 %v4859, %v4882
        %v4925 = vmul.f32 %v4860, %v4882
        %v4926 = vmul.f32 %v4861, %v4882
        %v4927 = vmul.f32 %v4862, %v4882
        %v4928 = vmul.f32 %v4863, %v4882
        %v4929 = vmul.f32 %v4864, %v4882
        %v4930 = vmul.f32 %v4865, %v4882
        %v4931 = vmul.f32 %v4866, %v4882
        %v4932 = vmul.f32 %v4867, %v4882
        %v4933 = vmul.f32 %v4868, %v4882
        %v4934 = vmul.f32 %v4869, %v4882
        %v4935 = vmul.f32 %v4870, %v4882
        %v4936 = vmul.f32 %v4871, %v4882
        %v4937 = vmul.f32 %v4872, %v4882
        %v4938 = vmul.f32 %v4873, %v4882
        %v4939 = vmul.f32 %v4874, %v4882
        %v4940 = vmul.f32 %v4875, %v4882
        %v4941 = vmul.f32 %v4876, %v4882
        %v4942 = vmul.f32 %v4877, %v4882
        %v4943 = vmul.f32 %v4878, %v4882
        %v4944 = vmul.f32 %v4879, %v4882
        %v4945 = vmul.f32 %v4880, %v4882
        %v4946 = vmul.f32 %v4881, %v4882
        %v4947 = vadd.f32 %v4753, %v4883
        %v4948 = vadd.f32 %v4754, %v4884
        %v4949 = vadd.f32 %v4755, %v4885
        %v4950 = vadd.f32 %v4756, %v4886
        %v4951 = vadd.f32 %v4757, %v4887
        %v4952 = vadd.f32 %v4758, %v4888
        %v4953 = vadd.f32 %v4759, %v4889
        %v4954 = vadd.f32 %v4760, %v4890
        %v4955 = vadd.f32 %v4761, %v4891
        %v4956 = vadd.f32 %v4762, %v4892
        %v4957 = vadd.f32 %v4763, %v4893
        %v4958 = vadd.f32 %v4764, %v4894
        %v4959 = vadd.f32 %v4765, %v4895
        %v4960 = vadd.f32 %v4766, %v4896
        %v4961 = vadd.f32 %v4767, %v4897
        %v4962 = vadd.f32 %v4768, %v4898
        %v4963 = vadd.f32 %v4769, %v4899
        %v4964 = vadd.f32 %v4770, %v4900
        %v4965 = vadd.f32 %v4771, %v4901
        %v4966 = vadd.f32 %v4772, %v4902
        %v4967 = vadd.f32 %v4773, %v4903
        %v4968 = vadd.f32 %v4774, %v4904
        %v4969 = vadd.f32 %v4775, %v4905
        %v4970 = vadd.f32 %v4776, %v4906
        %v4971 = vadd.f32 %v4777, %v4907
        %v4972 = vadd.f32 %v4778, %v4908
        %v4973 = vadd.f32 %v4779, %v4909
        %v4974 = vadd.f32 %v4780, %v4910
        %v4975 = vadd.f32 %v4781, %v4911
        %v4976 = vadd.f32 %v4782, %v4912
        %v4977 = vadd.f32 %v4783, %v4913
        %v4978 = vadd.f32 %v4784, %v4914
        %v4979 = vadd.f32 %v4785, %v4915
        %v4980 = vadd.f32 %v4786, %v4916
        %v4981 = vadd.f32 %v4787, %v4917
        %v4982 = vadd.f32 %v4788, %v4918
        %v4983 = vadd.f32 %v4789, %v4919
        %v4984 = vadd.f32 %v4790, %v4920
        %v4985 = vadd.f32 %v4791, %v4921
        %v4986 = vadd.f32 %v4792, %v4922
        %v4987 = vadd.f32 %v4793, %v4923
        %v4988 = vadd.f32 %v4794, %v4924
        %v4989 = vadd.f32 %v4795, %v4925
        %v4990 = vadd.f32 %v4796, %v4926
        %v4991 = vadd.f32 %v4797, %v4927
        %v4992 = vadd.f32 %v4798, %v4928
        %v4993 = vadd.f32 %v4799, %v4929
        %v4994 = vadd.f32 %v4800, %v4930
        %v4995 = vadd.f32 %v4801, %v4931
        %v4996 = vadd.f32 %v4802, %v4932
        %v4997 = vadd.f32 %v4803, %v4933
        %v4998 = vadd.f32 %v4804, %v4934
        %v4999 = vadd.f32 %v4805, %v4935
        %v5000 = vadd.f32 %v4806, %v4936
        %v5001 = vadd.f32 %v4807, %v4937
        %v5002 = vadd.f32 %v4808, %v4938
        %v5003 = vadd.f32 %v4809, %v4939
        %v5004 = vadd.f32 %v4810, %v4940
        %v5005 = vadd.f32 %v4811, %v4941
        %v5006 = vadd.f32 %v4812, %v4942
        %v5007 = vadd.f32 %v4813, %v4943
        %v5008 = vadd.f32 %v4814, %v4944
        %v5009 = vadd.f32 %v4815, %v4945
        %v5010 = vadd.f32 %v4816, %v4946
        %v5011 = vld [vmem:[#allocation6 + $0x17] sm:$0x1]
        %v5012 = vld [vmem:[%s4623 + $0x2] sm:$0xff]
        %v5013 = vld [vmem:[%s4623 + $0x12] sm:$0xff]
        %v5014 = vld [vmem:[%s4623 + $0x22] sm:$0xff]
        %v5015 = vld [vmem:[%s4623 + $0x32] sm:$0xff]
        %v5016 = vld [vmem:[%s4623 + $0x42] sm:$0xff]
        %v5017 = vld [vmem:[%s4623 + $0x52] sm:$0xff]
        %v5018 = vld [vmem:[%s4623 + $0x62] sm:$0xff]
        %v5019 = vld [vmem:[%s4623 + $0x72] sm:$0xff]
        %v5020 = vld [vmem:[%s4623 + $0xa2] sm:$0xff]
        %v5021 = vld [vmem:[%s4623 + $0xb2] sm:$0xff]
        %v5022 = vld [vmem:[%s4623 + $0xc2] sm:$0xff]
        %v5023 = vld [vmem:[%s4623 + $0xd2] sm:$0xff]
        %v5024 = vld [vmem:[%s4623 + $0xe2] sm:$0xff]
        %v5025 = vld [vmem:[%s4623 + $0xf2] sm:$0xff]
        %v5026 = vld [vmem:[%s4623 + $0x102] sm:$0xff]
        %v5027 = vld [vmem:[%s4623 + $0x112] sm:$0xff]
        %v5028 = vld [vmem:[%s4623 + $0x142] sm:$0xff]
        %v5029 = vld [vmem:[%s4623 + $0x152] sm:$0xff]
        %v5030 = vld [vmem:[%s4623 + $0x162] sm:$0xff]
        %v5031 = vld [vmem:[%s4623 + $0x172] sm:$0xff]
        %v5032 = vld [vmem:[%s4623 + $0x182] sm:$0xff]
        %v5033 = vld [vmem:[%s4623 + $0x192] sm:$0xff]
        %v5034 = vld [vmem:[%s4623 + $0x1a2] sm:$0xff]
        %v5035 = vld [vmem:[%s4623 + $0x1b2] sm:$0xff]
        %v5036 = vld [vmem:[%s4623 + $0x1e2] sm:$0xff]
        %v5037 = vld [vmem:[%s4623 + $0x1f2] sm:$0xff]
        %v5038 = vld [vmem:[%s4623 + $0x202] sm:$0xff]
        %v5039 = vld [vmem:[%s4623 + $0x212] sm:$0xff]
        %v5040 = vld [vmem:[%s4623 + $0x222] sm:$0xff]
        %v5041 = vld [vmem:[%s4623 + $0x232] sm:$0xff]
        %v5042 = vld [vmem:[%s4623 + $0x242] sm:$0xff]
        %v5043 = vld [vmem:[%s4623 + $0x252] sm:$0xff]
        %v5044 = vld [vmem:[%s4623 + $0x282] sm:$0xff]
        %v5045 = vld [vmem:[%s4623 + $0x292] sm:$0xff]
        %v5046 = vld [vmem:[%s4623 + $0x2a2] sm:$0xff]
        %v5047 = vld [vmem:[%s4623 + $0x2b2] sm:$0xff]
        %v5048 = vld [vmem:[%s4623 + $0x2c2] sm:$0xff]
        %v5049 = vld [vmem:[%s4623 + $0x2d2] sm:$0xff]
        %v5050 = vld [vmem:[%s4623 + $0x2e2] sm:$0xff]
        %v5051 = vld [vmem:[%s4623 + $0x2f2] sm:$0xff]
        %v5052 = vld [vmem:[%s4623 + $0x322] sm:$0xff]
        %v5053 = vld [vmem:[%s4623 + $0x332] sm:$0xff]
        %v5054 = vld [vmem:[%s4623 + $0x342] sm:$0xff]
        %v5055 = vld [vmem:[%s4623 + $0x352] sm:$0xff]
        %v5056 = vld [vmem:[%s4623 + $0x362] sm:$0xff]
        %v5057 = vld [vmem:[%s4623 + $0x372] sm:$0xff]
        %v5058 = vld [vmem:[%s4623 + $0x382] sm:$0xff]
        %v5059 = vld [vmem:[%s4623 + $0x392] sm:$0xff]
        %v5060 = vld [vmem:[%s4623 + $0x3c2] sm:$0xff]
        %v5061 = vld [vmem:[%s4623 + $0x3d2] sm:$0xff]
        %v5062 = vld [vmem:[%s4623 + $0x3e2] sm:$0xff]
        %v5063 = vld [vmem:[%s4623 + $0x3f2] sm:$0xff]
        %v5064 = vld [vmem:[%s4623 + $0x402] sm:$0xff]
        %v5065 = vld [vmem:[%s4623 + $0x412] sm:$0xff]
        %v5066 = vld [vmem:[%s4623 + $0x422] sm:$0xff]
        %v5067 = vld [vmem:[%s4623 + $0x432] sm:$0xff]
        %v5068 = vld [vmem:[%s4623 + $0x462] sm:$0xff]
        %v5069 = vld [vmem:[%s4623 + $0x472] sm:$0xff]
        %v5070 = vld [vmem:[%s4623 + $0x482] sm:$0xff]
        %v5071 = vld [vmem:[%s4623 + $0x492] sm:$0xff]
        %v5072 = vld [vmem:[%s4623 + $0x4a2] sm:$0xff]
        %v5073 = vld [vmem:[%s4623 + $0x4b2] sm:$0xff]
        %v5074 = vld [vmem:[%s4623 + $0x4c2] sm:$0xff]
        %v5075 = vld [vmem:[%s4623 + $0x4d2] sm:$0xff]
        %v5076 = vperm.slane %v5011, 0
        %v5077 = vmul.f32 %v5012, %v5076
        %v5078 = vmul.f32 %v5013, %v5076
        %v5079 = vmul.f32 %v5014, %v5076
        %v5080 = vmul.f32 %v5015, %v5076
        %v5081 = vmul.f32 %v5016, %v5076
        %v5082 = vmul.f32 %v5017, %v5076
        %v5083 = vmul.f32 %v5018, %v5076
        %v5084 = vmul.f32 %v5019, %v5076
        %v5085 = vmul.f32 %v5020, %v5076
        %v5086 = vmul.f32 %v5021, %v5076
        %v5087 = vmul.f32 %v5022, %v5076
        %v5088 = vmul.f32 %v5023, %v5076
        %v5089 = vmul.f32 %v5024, %v5076
        %v5090 = vmul.f32 %v5025, %v5076
        %v5091 = vmul.f32 %v5026, %v5076
        %v5092 = vmul.f32 %v5027, %v5076
        %v5093 = vmul.f32 %v5028, %v5076
        %v5094 = vmul.f32 %v5029, %v5076
        %v5095 = vmul.f32 %v5030, %v5076
        %v5096 = vmul.f32 %v5031, %v5076
        %v5097 = vmul.f32 %v5032, %v5076
        %v5098 = vmul.f32 %v5033, %v5076
        %v5099 = vmul.f32 %v5034, %v5076
        %v5100 = vmul.f32 %v5035, %v5076
        %v5101 = vmul.f32 %v5036, %v5076
        %v5102 = vmul.f32 %v5037, %v5076
        %v5103 = vmul.f32 %v5038, %v5076
        %v5104 = vmul.f32 %v5039, %v5076
        %v5105 = vmul.f32 %v5040, %v5076
        %v5106 = vmul.f32 %v5041, %v5076
        %v5107 = vmul.f32 %v5042, %v5076
        %v5108 = vmul.f32 %v5043, %v5076
        %v5109 = vmul.f32 %v5044, %v5076
        %v5110 = vmul.f32 %v5045, %v5076
        %v5111 = vmul.f32 %v5046, %v5076
        %v5112 = vmul.f32 %v5047, %v5076
        %v5113 = vmul.f32 %v5048, %v5076
        %v5114 = vmul.f32 %v5049, %v5076
        %v5115 = vmul.f32 %v5050, %v5076
        %v5116 = vmul.f32 %v5051, %v5076
        %v5117 = vmul.f32 %v5052, %v5076
        %v5118 = vmul.f32 %v5053, %v5076
        %v5119 = vmul.f32 %v5054, %v5076
        %v5120 = vmul.f32 %v5055, %v5076
        %v5121 = vmul.f32 %v5056, %v5076
        %v5122 = vmul.f32 %v5057, %v5076
        %v5123 = vmul.f32 %v5058, %v5076
        %v5124 = vmul.f32 %v5059, %v5076
        %v5125 = vmul.f32 %v5060, %v5076
        %v5126 = vmul.f32 %v5061, %v5076
        %v5127 = vmul.f32 %v5062, %v5076
        %v5128 = vmul.f32 %v5063, %v5076
        %v5129 = vmul.f32 %v5064, %v5076
        %v5130 = vmul.f32 %v5065, %v5076
        %v5131 = vmul.f32 %v5066, %v5076
        %v5132 = vmul.f32 %v5067, %v5076
        %v5133 = vmul.f32 %v5068, %v5076
        %v5134 = vmul.f32 %v5069, %v5076
        %v5135 = vmul.f32 %v5070, %v5076
        %v5136 = vmul.f32 %v5071, %v5076
        %v5137 = vmul.f32 %v5072, %v5076
        %v5138 = vmul.f32 %v5073, %v5076
        %v5139 = vmul.f32 %v5074, %v5076
        %v5140 = vmul.f32 %v5075, %v5076
        %v5141 = vadd.f32 %v4947, %v5077
        %v5142 = vadd.f32 %v4948, %v5078
        %v5143 = vadd.f32 %v4949, %v5079
        %v5144 = vadd.f32 %v4950, %v5080
        %v5145 = vadd.f32 %v4951, %v5081
        %v5146 = vadd.f32 %v4952, %v5082
        %v5147 = vadd.f32 %v4953, %v5083
        %v5148 = vadd.f32 %v4954, %v5084
        %v5149 = vadd.f32 %v4955, %v5085
        %v5150 = vadd.f32 %v4956, %v5086
        %v5151 = vadd.f32 %v4957, %v5087
        %v5152 = vadd.f32 %v4958, %v5088
        %v5153 = vadd.f32 %v4959, %v5089
        %v5154 = vadd.f32 %v4960, %v5090
        %v5155 = vadd.f32 %v4961, %v5091
        %v5156 = vadd.f32 %v4962, %v5092
        %v5157 = vadd.f32 %v4963, %v5093
        %v5158 = vadd.f32 %v4964, %v5094
        %v5159 = vadd.f32 %v4965, %v5095
        %v5160 = vadd.f32 %v4966, %v5096
        %v5161 = vadd.f32 %v4967, %v5097
        %v5162 = vadd.f32 %v4968, %v5098
        %v5163 = vadd.f32 %v4969, %v5099
        %v5164 = vadd.f32 %v4970, %v5100
        %v5165 = vadd.f32 %v4971, %v5101
        %v5166 = vadd.f32 %v4972, %v5102
        %v5167 = vadd.f32 %v4973, %v5103
        %v5168 = vadd.f32 %v4974, %v5104
        %v5169 = vadd.f32 %v4975, %v5105
        %v5170 = vadd.f32 %v4976, %v5106
        %v5171 = vadd.f32 %v4977, %v5107
        %v5172 = vadd.f32 %v4978, %v5108
        %v5173 = vadd.f32 %v4979, %v5109
        %v5174 = vadd.f32 %v4980, %v5110
        %v5175 = vadd.f32 %v4981, %v5111
        %v5176 = vadd.f32 %v4982, %v5112
        %v5177 = vadd.f32 %v4983, %v5113
        %v5178 = vadd.f32 %v4984, %v5114
        %v5179 = vadd.f32 %v4985, %v5115
        %v5180 = vadd.f32 %v4986, %v5116
        %v5181 = vadd.f32 %v4987, %v5117
        %v5182 = vadd.f32 %v4988, %v5118
        %v5183 = vadd.f32 %v4989, %v5119
        %v5184 = vadd.f32 %v4990, %v5120
        %v5185 = vadd.f32 %v4991, %v5121
        %v5186 = vadd.f32 %v4992, %v5122
        %v5187 = vadd.f32 %v4993, %v5123
        %v5188 = vadd.f32 %v4994, %v5124
        %v5189 = vadd.f32 %v4995, %v5125
        %v5190 = vadd.f32 %v4996, %v5126
        %v5191 = vadd.f32 %v4997, %v5127
        %v5192 = vadd.f32 %v4998, %v5128
        %v5193 = vadd.f32 %v4999, %v5129
        %v5194 = vadd.f32 %v5000, %v5130
        %v5195 = vadd.f32 %v5001, %v5131
        %v5196 = vadd.f32 %v5002, %v5132
        %v5197 = vadd.f32 %v5003, %v5133
        %v5198 = vadd.f32 %v5004, %v5134
        %v5199 = vadd.f32 %v5005, %v5135
        %v5200 = vadd.f32 %v5006, %v5136
        %v5201 = vadd.f32 %v5007, %v5137
        %v5202 = vadd.f32 %v5008, %v5138
        %v5203 = vadd.f32 %v5009, %v5139
        %v5204 = vadd.f32 %v5010, %v5140
        %v5205 = vld [vmem:[#allocation6 + $0x18] sm:$0x1]
        %s5206 = scalar_lea.vmem [#allocation2], 352
        %v5207 = vld [vmem:[%s5206] sm:$0xff]
        %v5208 = vld [vmem:[%s5206 + $0x10] sm:$0xff]
        %v5209 = vld [vmem:[%s5206 + $0x20] sm:$0xff]
        %v5210 = vld [vmem:[%s5206 + $0x30] sm:$0xff]
        %v5211 = vld [vmem:[%s5206 + $0x40] sm:$0xff]
        %v5212 = vld [vmem:[%s5206 + $0x50] sm:$0xff]
        %v5213 = vld [vmem:[%s5206 + $0x60] sm:$0xff]
        %v5214 = vld [vmem:[%s5206 + $0x70] sm:$0xff]
        %v5215 = vld [vmem:[%s5206 + $0xa0] sm:$0xff]
        %v5216 = vld [vmem:[%s5206 + $0xb0] sm:$0xff]
        %v5217 = vld [vmem:[%s5206 + $0xc0] sm:$0xff]
        %v5218 = vld [vmem:[%s5206 + $0xd0] sm:$0xff]
        %v5219 = vld [vmem:[%s5206 + $0xe0] sm:$0xff]
        %v5220 = vld [vmem:[%s5206 + $0xf0] sm:$0xff]
        %v5221 = vld [vmem:[%s5206 + $0x100] sm:$0xff]
        %v5222 = vld [vmem:[%s5206 + $0x110] sm:$0xff]
        %v5223 = vld [vmem:[%s5206 + $0x140] sm:$0xff]
        %v5224 = vld [vmem:[%s5206 + $0x150] sm:$0xff]
        %v5225 = vld [vmem:[%s5206 + $0x160] sm:$0xff]
        %v5226 = vld [vmem:[%s5206 + $0x170] sm:$0xff]
        %v5227 = vld [vmem:[%s5206 + $0x180] sm:$0xff]
        %v5228 = vld [vmem:[%s5206 + $0x190] sm:$0xff]
        %v5229 = vld [vmem:[%s5206 + $0x1a0] sm:$0xff]
        %v5230 = vld [vmem:[%s5206 + $0x1b0] sm:$0xff]
        %v5231 = vld [vmem:[%s5206 + $0x1e0] sm:$0xff]
        %v5232 = vld [vmem:[%s5206 + $0x1f0] sm:$0xff]
        %v5233 = vld [vmem:[%s5206 + $0x200] sm:$0xff]
        %v5234 = vld [vmem:[%s5206 + $0x210] sm:$0xff]
        %v5235 = vld [vmem:[%s5206 + $0x220] sm:$0xff]
        %v5236 = vld [vmem:[%s5206 + $0x230] sm:$0xff]
        %v5237 = vld [vmem:[%s5206 + $0x240] sm:$0xff]
        %v5238 = vld [vmem:[%s5206 + $0x250] sm:$0xff]
        %v5239 = vld [vmem:[%s5206 + $0x280] sm:$0xff]
        %v5240 = vld [vmem:[%s5206 + $0x290] sm:$0xff]
        %v5241 = vld [vmem:[%s5206 + $0x2a0] sm:$0xff]
        %v5242 = vld [vmem:[%s5206 + $0x2b0] sm:$0xff]
        %v5243 = vld [vmem:[%s5206 + $0x2c0] sm:$0xff]
        %v5244 = vld [vmem:[%s5206 + $0x2d0] sm:$0xff]
        %v5245 = vld [vmem:[%s5206 + $0x2e0] sm:$0xff]
        %v5246 = vld [vmem:[%s5206 + $0x2f0] sm:$0xff]
        %v5247 = vld [vmem:[%s5206 + $0x320] sm:$0xff]
        %v5248 = vld [vmem:[%s5206 + $0x330] sm:$0xff]
        %v5249 = vld [vmem:[%s5206 + $0x340] sm:$0xff]
        %v5250 = vld [vmem:[%s5206 + $0x350] sm:$0xff]
        %v5251 = vld [vmem:[%s5206 + $0x360] sm:$0xff]
        %v5252 = vld [vmem:[%s5206 + $0x370] sm:$0xff]
        %v5253 = vld [vmem:[%s5206 + $0x380] sm:$0xff]
        %v5254 = vld [vmem:[%s5206 + $0x390] sm:$0xff]
        %v5255 = vld [vmem:[%s5206 + $0x3c0] sm:$0xff]
        %v5256 = vld [vmem:[%s5206 + $0x3d0] sm:$0xff]
        %v5257 = vld [vmem:[%s5206 + $0x3e0] sm:$0xff]
        %v5258 = vld [vmem:[%s5206 + $0x3f0] sm:$0xff]
        %v5259 = vld [vmem:[%s5206 + $0x400] sm:$0xff]
        %v5260 = vld [vmem:[%s5206 + $0x410] sm:$0xff]
        %v5261 = vld [vmem:[%s5206 + $0x420] sm:$0xff]
        %v5262 = vld [vmem:[%s5206 + $0x430] sm:$0xff]
        %v5263 = vld [vmem:[%s5206 + $0x460] sm:$0xff]
        %v5264 = vld [vmem:[%s5206 + $0x470] sm:$0xff]
        %v5265 = vld [vmem:[%s5206 + $0x480] sm:$0xff]
        %v5266 = vld [vmem:[%s5206 + $0x490] sm:$0xff]
        %v5267 = vld [vmem:[%s5206 + $0x4a0] sm:$0xff]
        %v5268 = vld [vmem:[%s5206 + $0x4b0] sm:$0xff]
        %v5269 = vld [vmem:[%s5206 + $0x4c0] sm:$0xff]
        %v5270 = vld [vmem:[%s5206 + $0x4d0] sm:$0xff]
        %v5271 = vperm.slane %v5205, 0
        %v5272 = vmul.f32 %v5207, %v5271
        %v5273 = vmul.f32 %v5208, %v5271
        %v5274 = vmul.f32 %v5209, %v5271
        %v5275 = vmul.f32 %v5210, %v5271
        %v5276 = vmul.f32 %v5211, %v5271
        %v5277 = vmul.f32 %v5212, %v5271
        %v5278 = vmul.f32 %v5213, %v5271
        %v5279 = vmul.f32 %v5214, %v5271
        %v5280 = vmul.f32 %v5215, %v5271
        %v5281 = vmul.f32 %v5216, %v5271
        %v5282 = vmul.f32 %v5217, %v5271
        %v5283 = vmul.f32 %v5218, %v5271
        %v5284 = vmul.f32 %v5219, %v5271
        %v5285 = vmul.f32 %v5220, %v5271
        %v5286 = vmul.f32 %v5221, %v5271
        %v5287 = vmul.f32 %v5222, %v5271
        %v5288 = vmul.f32 %v5223, %v5271
        %v5289 = vmul.f32 %v5224, %v5271
        %v5290 = vmul.f32 %v5225, %v5271
        %v5291 = vmul.f32 %v5226, %v5271
        %v5292 = vmul.f32 %v5227, %v5271
        %v5293 = vmul.f32 %v5228, %v5271
        %v5294 = vmul.f32 %v5229, %v5271
        %v5295 = vmul.f32 %v5230, %v5271
        %v5296 = vmul.f32 %v5231, %v5271
        %v5297 = vmul.f32 %v5232, %v5271
        %v5298 = vmul.f32 %v5233, %v5271
        %v5299 = vmul.f32 %v5234, %v5271
        %v5300 = vmul.f32 %v5235, %v5271
        %v5301 = vmul.f32 %v5236, %v5271
        %v5302 = vmul.f32 %v5237, %v5271
        %v5303 = vmul.f32 %v5238, %v5271
        %v5304 = vmul.f32 %v5239, %v5271
        %v5305 = vmul.f32 %v5240, %v5271
        %v5306 = vmul.f32 %v5241, %v5271
        %v5307 = vmul.f32 %v5242, %v5271
        %v5308 = vmul.f32 %v5243, %v5271
        %v5309 = vmul.f32 %v5244, %v5271
        %v5310 = vmul.f32 %v5245, %v5271
        %v5311 = vmul.f32 %v5246, %v5271
        %v5312 = vmul.f32 %v5247, %v5271
        %v5313 = vmul.f32 %v5248, %v5271
        %v5314 = vmul.f32 %v5249, %v5271
        %v5315 = vmul.f32 %v5250, %v5271
        %v5316 = vmul.f32 %v5251, %v5271
        %v5317 = vmul.f32 %v5252, %v5271
        %v5318 = vmul.f32 %v5253, %v5271
        %v5319 = vmul.f32 %v5254, %v5271
        %v5320 = vmul.f32 %v5255, %v5271
        %v5321 = vmul.f32 %v5256, %v5271
        %v5322 = vmul.f32 %v5257, %v5271
        %v5323 = vmul.f32 %v5258, %v5271
        %v5324 = vmul.f32 %v5259, %v5271
        %v5325 = vmul.f32 %v5260, %v5271
        %v5326 = vmul.f32 %v5261, %v5271
        %v5327 = vmul.f32 %v5262, %v5271
        %v5328 = vmul.f32 %v5263, %v5271
        %v5329 = vmul.f32 %v5264, %v5271
        %v5330 = vmul.f32 %v5265, %v5271
        %v5331 = vmul.f32 %v5266, %v5271
        %v5332 = vmul.f32 %v5267, %v5271
        %v5333 = vmul.f32 %v5268, %v5271
        %v5334 = vmul.f32 %v5269, %v5271
        %v5335 = vmul.f32 %v5270, %v5271
        %v5336 = vadd.f32 %v5141, %v5272
        %v5337 = vadd.f32 %v5142, %v5273
        %v5338 = vadd.f32 %v5143, %v5274
        %v5339 = vadd.f32 %v5144, %v5275
        %v5340 = vadd.f32 %v5145, %v5276
        %v5341 = vadd.f32 %v5146, %v5277
        %v5342 = vadd.f32 %v5147, %v5278
        %v5343 = vadd.f32 %v5148, %v5279
        %v5344 = vadd.f32 %v5149, %v5280
        %v5345 = vadd.f32 %v5150, %v5281
        %v5346 = vadd.f32 %v5151, %v5282
        %v5347 = vadd.f32 %v5152, %v5283
        %v5348 = vadd.f32 %v5153, %v5284
        %v5349 = vadd.f32 %v5154, %v5285
        %v5350 = vadd.f32 %v5155, %v5286
        %v5351 = vadd.f32 %v5156, %v5287
        %v5352 = vadd.f32 %v5157, %v5288
        %v5353 = vadd.f32 %v5158, %v5289
        %v5354 = vadd.f32 %v5159, %v5290
        %v5355 = vadd.f32 %v5160, %v5291
        %v5356 = vadd.f32 %v5161, %v5292
        %v5357 = vadd.f32 %v5162, %v5293
        %v5358 = vadd.f32 %v5163, %v5294
        %v5359 = vadd.f32 %v5164, %v5295
        %v5360 = vadd.f32 %v5165, %v5296
        %v5361 = vadd.f32 %v5166, %v5297
        %v5362 = vadd.f32 %v5167, %v5298
        %v5363 = vadd.f32 %v5168, %v5299
        %v5364 = vadd.f32 %v5169, %v5300
        %v5365 = vadd.f32 %v5170, %v5301
        %v5366 = vadd.f32 %v5171, %v5302
        %v5367 = vadd.f32 %v5172, %v5303
        %v5368 = vadd.f32 %v5173, %v5304
        %v5369 = vadd.f32 %v5174, %v5305
        %v5370 = vadd.f32 %v5175, %v5306
        %v5371 = vadd.f32 %v5176, %v5307
        %v5372 = vadd.f32 %v5177, %v5308
        %v5373 = vadd.f32 %v5178, %v5309
        %v5374 = vadd.f32 %v5179, %v5310
        %v5375 = vadd.f32 %v5180, %v5311
        %v5376 = vadd.f32 %v5181, %v5312
        %v5377 = vadd.f32 %v5182, %v5313
        %v5378 = vadd.f32 %v5183, %v5314
        %v5379 = vadd.f32 %v5184, %v5315
        %v5380 = vadd.f32 %v5185, %v5316
        %v5381 = vadd.f32 %v5186, %v5317
        %v5382 = vadd.f32 %v5187, %v5318
        %v5383 = vadd.f32 %v5188, %v5319
        %v5384 = vadd.f32 %v5189, %v5320
        %v5385 = vadd.f32 %v5190, %v5321
        %v5386 = vadd.f32 %v5191, %v5322
        %v5387 = vadd.f32 %v5192, %v5323
        %v5388 = vadd.f32 %v5193, %v5324
        %v5389 = vadd.f32 %v5194, %v5325
        %v5390 = vadd.f32 %v5195, %v5326
        %v5391 = vadd.f32 %v5196, %v5327
        %v5392 = vadd.f32 %v5197, %v5328
        %v5393 = vadd.f32 %v5198, %v5329
        %v5394 = vadd.f32 %v5199, %v5330
        %v5395 = vadd.f32 %v5200, %v5331
        %v5396 = vadd.f32 %v5201, %v5332
        %v5397 = vadd.f32 %v5202, %v5333
        %v5398 = vadd.f32 %v5203, %v5334
        %v5399 = vadd.f32 %v5204, %v5335
        %v5400 = vld [vmem:[#allocation6 + $0x19] sm:$0x1]
        %v5401 = vld [vmem:[%s5206 + $0x1] sm:$0xff]
        %v5402 = vld [vmem:[%s5206 + $0x11] sm:$0xff]
        %v5403 = vld [vmem:[%s5206 + $0x21] sm:$0xff]
        %v5404 = vld [vmem:[%s5206 + $0x31] sm:$0xff]
        %v5405 = vld [vmem:[%s5206 + $0x41] sm:$0xff]
        %v5406 = vld [vmem:[%s5206 + $0x51] sm:$0xff]
        %v5407 = vld [vmem:[%s5206 + $0x61] sm:$0xff]
        %v5408 = vld [vmem:[%s5206 + $0x71] sm:$0xff]
        %v5409 = vld [vmem:[%s5206 + $0xa1] sm:$0xff]
        %v5410 = vld [vmem:[%s5206 + $0xb1] sm:$0xff]
        %v5411 = vld [vmem:[%s5206 + $0xc1] sm:$0xff]
        %v5412 = vld [vmem:[%s5206 + $0xd1] sm:$0xff]
        %v5413 = vld [vmem:[%s5206 + $0xe1] sm:$0xff]
        %v5414 = vld [vmem:[%s5206 + $0xf1] sm:$0xff]
        %v5415 = vld [vmem:[%s5206 + $0x101] sm:$0xff]
        %v5416 = vld [vmem:[%s5206 + $0x111] sm:$0xff]
        %v5417 = vld [vmem:[%s5206 + $0x141] sm:$0xff]
        %v5418 = vld [vmem:[%s5206 + $0x151] sm:$0xff]
        %v5419 = vld [vmem:[%s5206 + $0x161] sm:$0xff]
        %v5420 = vld [vmem:[%s5206 + $0x171] sm:$0xff]
        %v5421 = vld [vmem:[%s5206 + $0x181] sm:$0xff]
        %v5422 = vld [vmem:[%s5206 + $0x191] sm:$0xff]
        %v5423 = vld [vmem:[%s5206 + $0x1a1] sm:$0xff]
        %v5424 = vld [vmem:[%s5206 + $0x1b1] sm:$0xff]
        %v5425 = vld [vmem:[%s5206 + $0x1e1] sm:$0xff]
        %v5426 = vld [vmem:[%s5206 + $0x1f1] sm:$0xff]
        %v5427 = vld [vmem:[%s5206 + $0x201] sm:$0xff]
        %v5428 = vld [vmem:[%s5206 + $0x211] sm:$0xff]
        %v5429 = vld [vmem:[%s5206 + $0x221] sm:$0xff]
        %v5430 = vld [vmem:[%s5206 + $0x231] sm:$0xff]
        %v5431 = vld [vmem:[%s5206 + $0x241] sm:$0xff]
        %v5432 = vld [vmem:[%s5206 + $0x251] sm:$0xff]
        %v5433 = vld [vmem:[%s5206 + $0x281] sm:$0xff]
        %v5434 = vld [vmem:[%s5206 + $0x291] sm:$0xff]
        %v5435 = vld [vmem:[%s5206 + $0x2a1] sm:$0xff]
        %v5436 = vld [vmem:[%s5206 + $0x2b1] sm:$0xff]
        %v5437 = vld [vmem:[%s5206 + $0x2c1] sm:$0xff]
        %v5438 = vld [vmem:[%s5206 + $0x2d1] sm:$0xff]
        %v5439 = vld [vmem:[%s5206 + $0x2e1] sm:$0xff]
        %v5440 = vld [vmem:[%s5206 + $0x2f1] sm:$0xff]
        %v5441 = vld [vmem:[%s5206 + $0x321] sm:$0xff]
        %v5442 = vld [vmem:[%s5206 + $0x331] sm:$0xff]
        %v5443 = vld [vmem:[%s5206 + $0x341] sm:$0xff]
        %v5444 = vld [vmem:[%s5206 + $0x351] sm:$0xff]
        %v5445 = vld [vmem:[%s5206 + $0x361] sm:$0xff]
        %v5446 = vld [vmem:[%s5206 + $0x371] sm:$0xff]
        %v5447 = vld [vmem:[%s5206 + $0x381] sm:$0xff]
        %v5448 = vld [vmem:[%s5206 + $0x391] sm:$0xff]
        %v5449 = vld [vmem:[%s5206 + $0x3c1] sm:$0xff]
        %v5450 = vld [vmem:[%s5206 + $0x3d1] sm:$0xff]
        %v5451 = vld [vmem:[%s5206 + $0x3e1] sm:$0xff]
        %v5452 = vld [vmem:[%s5206 + $0x3f1] sm:$0xff]
        %v5453 = vld [vmem:[%s5206 + $0x401] sm:$0xff]
        %v5454 = vld [vmem:[%s5206 + $0x411] sm:$0xff]
        %v5455 = vld [vmem:[%s5206 + $0x421] sm:$0xff]
        %v5456 = vld [vmem:[%s5206 + $0x431] sm:$0xff]
        %v5457 = vld [vmem:[%s5206 + $0x461] sm:$0xff]
        %v5458 = vld [vmem:[%s5206 + $0x471] sm:$0xff]
        %v5459 = vld [vmem:[%s5206 + $0x481] sm:$0xff]
        %v5460 = vld [vmem:[%s5206 + $0x491] sm:$0xff]
        %v5461 = vld [vmem:[%s5206 + $0x4a1] sm:$0xff]
        %v5462 = vld [vmem:[%s5206 + $0x4b1] sm:$0xff]
        %v5463 = vld [vmem:[%s5206 + $0x4c1] sm:$0xff]
        %v5464 = vld [vmem:[%s5206 + $0x4d1] sm:$0xff]
        %v5465 = vperm.slane %v5400, 0
        %v5466 = vmul.f32 %v5401, %v5465
        %v5467 = vmul.f32 %v5402, %v5465
        %v5468 = vmul.f32 %v5403, %v5465
        %v5469 = vmul.f32 %v5404, %v5465
        %v5470 = vmul.f32 %v5405, %v5465
        %v5471 = vmul.f32 %v5406, %v5465
        %v5472 = vmul.f32 %v5407, %v5465
        %v5473 = vmul.f32 %v5408, %v5465
        %v5474 = vmul.f32 %v5409, %v5465
        %v5475 = vmul.f32 %v5410, %v5465
        %v5476 = vmul.f32 %v5411, %v5465
        %v5477 = vmul.f32 %v5412, %v5465
        %v5478 = vmul.f32 %v5413, %v5465
        %v5479 = vmul.f32 %v5414, %v5465
        %v5480 = vmul.f32 %v5415, %v5465
        %v5481 = vmul.f32 %v5416, %v5465
        %v5482 = vmul.f32 %v5417, %v5465
        %v5483 = vmul.f32 %v5418, %v5465
        %v5484 = vmul.f32 %v5419, %v5465
        %v5485 = vmul.f32 %v5420, %v5465
        %v5486 = vmul.f32 %v5421, %v5465
        %v5487 = vmul.f32 %v5422, %v5465
        %v5488 = vmul.f32 %v5423, %v5465
        %v5489 = vmul.f32 %v5424, %v5465
        %v5490 = vmul.f32 %v5425, %v5465
        %v5491 = vmul.f32 %v5426, %v5465
        %v5492 = vmul.f32 %v5427, %v5465
        %v5493 = vmul.f32 %v5428, %v5465
        %v5494 = vmul.f32 %v5429, %v5465
        %v5495 = vmul.f32 %v5430, %v5465
        %v5496 = vmul.f32 %v5431, %v5465
        %v5497 = vmul.f32 %v5432, %v5465
        %v5498 = vmul.f32 %v5433, %v5465
        %v5499 = vmul.f32 %v5434, %v5465
        %v5500 = vmul.f32 %v5435, %v5465
        %v5501 = vmul.f32 %v5436, %v5465
        %v5502 = vmul.f32 %v5437, %v5465
        %v5503 = vmul.f32 %v5438, %v5465
        %v5504 = vmul.f32 %v5439, %v5465
        %v5505 = vmul.f32 %v5440, %v5465
        %v5506 = vmul.f32 %v5441, %v5465
        %v5507 = vmul.f32 %v5442, %v5465
        %v5508 = vmul.f32 %v5443, %v5465
        %v5509 = vmul.f32 %v5444, %v5465
        %v5510 = vmul.f32 %v5445, %v5465
        %v5511 = vmul.f32 %v5446, %v5465
        %v5512 = vmul.f32 %v5447, %v5465
        %v5513 = vmul.f32 %v5448, %v5465
        %v5514 = vmul.f32 %v5449, %v5465
        %v5515 = vmul.f32 %v5450, %v5465
        %v5516 = vmul.f32 %v5451, %v5465
        %v5517 = vmul.f32 %v5452, %v5465
        %v5518 = vmul.f32 %v5453, %v5465
        %v5519 = vmul.f32 %v5454, %v5465
        %v5520 = vmul.f32 %v5455, %v5465
        %v5521 = vmul.f32 %v5456, %v5465
        %v5522 = vmul.f32 %v5457, %v5465
        %v5523 = vmul.f32 %v5458, %v5465
        %v5524 = vmul.f32 %v5459, %v5465
        %v5525 = vmul.f32 %v5460, %v5465
        %v5526 = vmul.f32 %v5461, %v5465
        %v5527 = vmul.f32 %v5462, %v5465
        %v5528 = vmul.f32 %v5463, %v5465
        %v5529 = vmul.f32 %v5464, %v5465
        %v5530 = vadd.f32 %v5336, %v5466
        %v5531 = vadd.f32 %v5337, %v5467
        %v5532 = vadd.f32 %v5338, %v5468
        %v5533 = vadd.f32 %v5339, %v5469
        %v5534 = vadd.f32 %v5340, %v5470
        %v5535 = vadd.f32 %v5341, %v5471
        %v5536 = vadd.f32 %v5342, %v5472
        %v5537 = vadd.f32 %v5343, %v5473
        %v5538 = vadd.f32 %v5344, %v5474
        %v5539 = vadd.f32 %v5345, %v5475
        %v5540 = vadd.f32 %v5346, %v5476
        %v5541 = vadd.f32 %v5347, %v5477
        %v5542 = vadd.f32 %v5348, %v5478
        %v5543 = vadd.f32 %v5349, %v5479
        %v5544 = vadd.f32 %v5350, %v5480
        %v5545 = vadd.f32 %v5351, %v5481
        %v5546 = vadd.f32 %v5352, %v5482
        %v5547 = vadd.f32 %v5353, %v5483
        %v5548 = vadd.f32 %v5354, %v5484
        %v5549 = vadd.f32 %v5355, %v5485
        %v5550 = vadd.f32 %v5356, %v5486
        %v5551 = vadd.f32 %v5357, %v5487
        %v5552 = vadd.f32 %v5358, %v5488
        %v5553 = vadd.f32 %v5359, %v5489
        %v5554 = vadd.f32 %v5360, %v5490
        %v5555 = vadd.f32 %v5361, %v5491
        %v5556 = vadd.f32 %v5362, %v5492
        %v5557 = vadd.f32 %v5363, %v5493
        %v5558 = vadd.f32 %v5364, %v5494
        %v5559 = vadd.f32 %v5365, %v5495
        %v5560 = vadd.f32 %v5366, %v5496
        %v5561 = vadd.f32 %v5367, %v5497
        %v5562 = vadd.f32 %v5368, %v5498
        %v5563 = vadd.f32 %v5369, %v5499
        %v5564 = vadd.f32 %v5370, %v5500
        %v5565 = vadd.f32 %v5371, %v5501
        %v5566 = vadd.f32 %v5372, %v5502
        %v5567 = vadd.f32 %v5373, %v5503
        %v5568 = vadd.f32 %v5374, %v5504
        %v5569 = vadd.f32 %v5375, %v5505
        %v5570 = vadd.f32 %v5376, %v5506
        %v5571 = vadd.f32 %v5377, %v5507
        %v5572 = vadd.f32 %v5378, %v5508
        %v5573 = vadd.f32 %v5379, %v5509
        %v5574 = vadd.f32 %v5380, %v5510
        %v5575 = vadd.f32 %v5381, %v5511
        %v5576 = vadd.f32 %v5382, %v5512
        %v5577 = vadd.f32 %v5383, %v5513
        %v5578 = vadd.f32 %v5384, %v5514
        %v5579 = vadd.f32 %v5385, %v5515
        %v5580 = vadd.f32 %v5386, %v5516
        %v5581 = vadd.f32 %v5387, %v5517
        %v5582 = vadd.f32 %v5388, %v5518
        %v5583 = vadd.f32 %v5389, %v5519
        %v5584 = vadd.f32 %v5390, %v5520
        %v5585 = vadd.f32 %v5391, %v5521
        %v5586 = vadd.f32 %v5392, %v5522
        %v5587 = vadd.f32 %v5393, %v5523
        %v5588 = vadd.f32 %v5394, %v5524
        %v5589 = vadd.f32 %v5395, %v5525
        %v5590 = vadd.f32 %v5396, %v5526
        %v5591 = vadd.f32 %v5397, %v5527
        %v5592 = vadd.f32 %v5398, %v5528
        %v5593 = vadd.f32 %v5399, %v5529
        %v5594 = vld [vmem:[#allocation6 + $0x1a] sm:$0x1]
        %v5595 = vld [vmem:[%s5206 + $0x2] sm:$0xff]
        %v5596 = vld [vmem:[%s5206 + $0x12] sm:$0xff]
        %v5597 = vld [vmem:[%s5206 + $0x22] sm:$0xff]
        %v5598 = vld [vmem:[%s5206 + $0x32] sm:$0xff]
        %v5599 = vld [vmem:[%s5206 + $0x42] sm:$0xff]
        %v5600 = vld [vmem:[%s5206 + $0x52] sm:$0xff]
        %v5601 = vld [vmem:[%s5206 + $0x62] sm:$0xff]
        %v5602 = vld [vmem:[%s5206 + $0x72] sm:$0xff]
        %v5603 = vld [vmem:[%s5206 + $0xa2] sm:$0xff]
        %v5604 = vld [vmem:[%s5206 + $0xb2] sm:$0xff]
        %v5605 = vld [vmem:[%s5206 + $0xc2] sm:$0xff]
        %v5606 = vld [vmem:[%s5206 + $0xd2] sm:$0xff]
        %v5607 = vld [vmem:[%s5206 + $0xe2] sm:$0xff]
        %v5608 = vld [vmem:[%s5206 + $0xf2] sm:$0xff]
        %v5609 = vld [vmem:[%s5206 + $0x102] sm:$0xff]
        %v5610 = vld [vmem:[%s5206 + $0x112] sm:$0xff]
        %v5611 = vld [vmem:[%s5206 + $0x142] sm:$0xff]
        %v5612 = vld [vmem:[%s5206 + $0x152] sm:$0xff]
        %v5613 = vld [vmem:[%s5206 + $0x162] sm:$0xff]
        %v5614 = vld [vmem:[%s5206 + $0x172] sm:$0xff]
        %v5615 = vld [vmem:[%s5206 + $0x182] sm:$0xff]
        %v5616 = vld [vmem:[%s5206 + $0x192] sm:$0xff]
        %v5617 = vld [vmem:[%s5206 + $0x1a2] sm:$0xff]
        %v5618 = vld [vmem:[%s5206 + $0x1b2] sm:$0xff]
        %v5619 = vld [vmem:[%s5206 + $0x1e2] sm:$0xff]
        %v5620 = vld [vmem:[%s5206 + $0x1f2] sm:$0xff]
        %v5621 = vld [vmem:[%s5206 + $0x202] sm:$0xff]
        %v5622 = vld [vmem:[%s5206 + $0x212] sm:$0xff]
        %v5623 = vld [vmem:[%s5206 + $0x222] sm:$0xff]
        %v5624 = vld [vmem:[%s5206 + $0x232] sm:$0xff]
        %v5625 = vld [vmem:[%s5206 + $0x242] sm:$0xff]
        %v5626 = vld [vmem:[%s5206 + $0x252] sm:$0xff]
        %v5627 = vld [vmem:[%s5206 + $0x282] sm:$0xff]
        %v5628 = vld [vmem:[%s5206 + $0x292] sm:$0xff]
        %v5629 = vld [vmem:[%s5206 + $0x2a2] sm:$0xff]
        %v5630 = vld [vmem:[%s5206 + $0x2b2] sm:$0xff]
        %v5631 = vld [vmem:[%s5206 + $0x2c2] sm:$0xff]
        %v5632 = vld [vmem:[%s5206 + $0x2d2] sm:$0xff]
        %v5633 = vld [vmem:[%s5206 + $0x2e2] sm:$0xff]
        %v5634 = vld [vmem:[%s5206 + $0x2f2] sm:$0xff]
        %v5635 = vld [vmem:[%s5206 + $0x322] sm:$0xff]
        %v5636 = vld [vmem:[%s5206 + $0x332] sm:$0xff]
        %v5637 = vld [vmem:[%s5206 + $0x342] sm:$0xff]
        %v5638 = vld [vmem:[%s5206 + $0x352] sm:$0xff]
        %v5639 = vld [vmem:[%s5206 + $0x362] sm:$0xff]
        %v5640 = vld [vmem:[%s5206 + $0x372] sm:$0xff]
        %v5641 = vld [vmem:[%s5206 + $0x382] sm:$0xff]
        %v5642 = vld [vmem:[%s5206 + $0x392] sm:$0xff]
        %v5643 = vld [vmem:[%s5206 + $0x3c2] sm:$0xff]
        %v5644 = vld [vmem:[%s5206 + $0x3d2] sm:$0xff]
        %v5645 = vld [vmem:[%s5206 + $0x3e2] sm:$0xff]
        %v5646 = vld [vmem:[%s5206 + $0x3f2] sm:$0xff]
        %v5647 = vld [vmem:[%s5206 + $0x402] sm:$0xff]
        %v5648 = vld [vmem:[%s5206 + $0x412] sm:$0xff]
        %v5649 = vld [vmem:[%s5206 + $0x422] sm:$0xff]
        %v5650 = vld [vmem:[%s5206 + $0x432] sm:$0xff]
        %v5651 = vld [vmem:[%s5206 + $0x462] sm:$0xff]
        %v5652 = vld [vmem:[%s5206 + $0x472] sm:$0xff]
        %v5653 = vld [vmem:[%s5206 + $0x482] sm:$0xff]
        %v5654 = vld [vmem:[%s5206 + $0x492] sm:$0xff]
        %v5655 = vld [vmem:[%s5206 + $0x4a2] sm:$0xff]
        %v5656 = vld [vmem:[%s5206 + $0x4b2] sm:$0xff]
        %v5657 = vld [vmem:[%s5206 + $0x4c2] sm:$0xff]
        %v5658 = vld [vmem:[%s5206 + $0x4d2] sm:$0xff]
        %v5659 = vperm.slane %v5594, 0
        %v5660 = vmul.f32 %v5595, %v5659
        %v5661 = vmul.f32 %v5596, %v5659
        %v5662 = vmul.f32 %v5597, %v5659
        %v5663 = vmul.f32 %v5598, %v5659
        %v5664 = vmul.f32 %v5599, %v5659
        %v5665 = vmul.f32 %v5600, %v5659
        %v5666 = vmul.f32 %v5601, %v5659
        %v5667 = vmul.f32 %v5602, %v5659
        %v5668 = vmul.f32 %v5603, %v5659
        %v5669 = vmul.f32 %v5604, %v5659
        %v5670 = vmul.f32 %v5605, %v5659
        %v5671 = vmul.f32 %v5606, %v5659
        %v5672 = vmul.f32 %v5607, %v5659
        %v5673 = vmul.f32 %v5608, %v5659
        %v5674 = vmul.f32 %v5609, %v5659
        %v5675 = vmul.f32 %v5610, %v5659
        %v5676 = vmul.f32 %v5611, %v5659
        %v5677 = vmul.f32 %v5612, %v5659
        %v5678 = vmul.f32 %v5613, %v5659
        %v5679 = vmul.f32 %v5614, %v5659
        %v5680 = vmul.f32 %v5615, %v5659
        %v5681 = vmul.f32 %v5616, %v5659
        %v5682 = vmul.f32 %v5617, %v5659
        %v5683 = vmul.f32 %v5618, %v5659
        %v5684 = vmul.f32 %v5619, %v5659
        %v5685 = vmul.f32 %v5620, %v5659
        %v5686 = vmul.f32 %v5621, %v5659
        %v5687 = vmul.f32 %v5622, %v5659
        %v5688 = vmul.f32 %v5623, %v5659
        %v5689 = vmul.f32 %v5624, %v5659
        %v5690 = vmul.f32 %v5625, %v5659
        %v5691 = vmul.f32 %v5626, %v5659
        %v5692 = vmul.f32 %v5627, %v5659
        %v5693 = vmul.f32 %v5628, %v5659
        %v5694 = vmul.f32 %v5629, %v5659
        %v5695 = vmul.f32 %v5630, %v5659
        %v5696 = vmul.f32 %v5631, %v5659
        %v5697 = vmul.f32 %v5632, %v5659
        %v5698 = vmul.f32 %v5633, %v5659
        %v5699 = vmul.f32 %v5634, %v5659
        %v5700 = vmul.f32 %v5635, %v5659
        %v5701 = vmul.f32 %v5636, %v5659
        %v5702 = vmul.f32 %v5637, %v5659
        %v5703 = vmul.f32 %v5638, %v5659
        %v5704 = vmul.f32 %v5639, %v5659
        %v5705 = vmul.f32 %v5640, %v5659
        %v5706 = vmul.f32 %v5641, %v5659
        %v5707 = vmul.f32 %v5642, %v5659
        %v5708 = vmul.f32 %v5643, %v5659
        %v5709 = vmul.f32 %v5644, %v5659
        %v5710 = vmul.f32 %v5645, %v5659
        %v5711 = vmul.f32 %v5646, %v5659
        %v5712 = vmul.f32 %v5647, %v5659
        %v5713 = vmul.f32 %v5648, %v5659
        %v5714 = vmul.f32 %v5649, %v5659
        %v5715 = vmul.f32 %v5650, %v5659
        %v5716 = vmul.f32 %v5651, %v5659
        %v5717 = vmul.f32 %v5652, %v5659
        %v5718 = vmul.f32 %v5653, %v5659
        %v5719 = vmul.f32 %v5654, %v5659
        %v5720 = vmul.f32 %v5655, %v5659
        %v5721 = vmul.f32 %v5656, %v5659
        %v5722 = vmul.f32 %v5657, %v5659
        %v5723 = vmul.f32 %v5658, %v5659
        %v5724 = vadd.f32 %v5530, %v5660
        %v5725 = vadd.f32 %v5531, %v5661
        %v5726 = vadd.f32 %v5532, %v5662
        %v5727 = vadd.f32 %v5533, %v5663
        %v5728 = vadd.f32 %v5534, %v5664
        %v5729 = vadd.f32 %v5535, %v5665
        %v5730 = vadd.f32 %v5536, %v5666
        %v5731 = vadd.f32 %v5537, %v5667
        %v5732 = vadd.f32 %v5538, %v5668
        %v5733 = vadd.f32 %v5539, %v5669
        %v5734 = vadd.f32 %v5540, %v5670
        %v5735 = vadd.f32 %v5541, %v5671
        %v5736 = vadd.f32 %v5542, %v5672
        %v5737 = vadd.f32 %v5543, %v5673
        %v5738 = vadd.f32 %v5544, %v5674
        %v5739 = vadd.f32 %v5545, %v5675
        %v5740 = vadd.f32 %v5546, %v5676
        %v5741 = vadd.f32 %v5547, %v5677
        %v5742 = vadd.f32 %v5548, %v5678
        %v5743 = vadd.f32 %v5549, %v5679
        %v5744 = vadd.f32 %v5550, %v5680
        %v5745 = vadd.f32 %v5551, %v5681
        %v5746 = vadd.f32 %v5552, %v5682
        %v5747 = vadd.f32 %v5553, %v5683
        %v5748 = vadd.f32 %v5554, %v5684
        %v5749 = vadd.f32 %v5555, %v5685
        %v5750 = vadd.f32 %v5556, %v5686
        %v5751 = vadd.f32 %v5557, %v5687
        %v5752 = vadd.f32 %v5558, %v5688
        %v5753 = vadd.f32 %v5559, %v5689
        %v5754 = vadd.f32 %v5560, %v5690
        %v5755 = vadd.f32 %v5561, %v5691
        %v5756 = vadd.f32 %v5562, %v5692
        %v5757 = vadd.f32 %v5563, %v5693
        %v5758 = vadd.f32 %v5564, %v5694
        %v5759 = vadd.f32 %v5565, %v5695
        %v5760 = vadd.f32 %v5566, %v5696
        %v5761 = vadd.f32 %v5567, %v5697
        %v5762 = vadd.f32 %v5568, %v5698
        %v5763 = vadd.f32 %v5569, %v5699
        %v5764 = vadd.f32 %v5570, %v5700
        %v5765 = vadd.f32 %v5571, %v5701
        %v5766 = vadd.f32 %v5572, %v5702
        %v5767 = vadd.f32 %v5573, %v5703
        %v5768 = vadd.f32 %v5574, %v5704
        %v5769 = vadd.f32 %v5575, %v5705
        %v5770 = vadd.f32 %v5576, %v5706
        %v5771 = vadd.f32 %v5577, %v5707
        %v5772 = vadd.f32 %v5578, %v5708
        %v5773 = vadd.f32 %v5579, %v5709
        %v5774 = vadd.f32 %v5580, %v5710
        %v5775 = vadd.f32 %v5581, %v5711
        %v5776 = vadd.f32 %v5582, %v5712
        %v5777 = vadd.f32 %v5583, %v5713
        %v5778 = vadd.f32 %v5584, %v5714
        %v5779 = vadd.f32 %v5585, %v5715
        %v5780 = vadd.f32 %v5586, %v5716
        %v5781 = vadd.f32 %v5587, %v5717
        %v5782 = vadd.f32 %v5588, %v5718
        %v5783 = vadd.f32 %v5589, %v5719
        %v5784 = vadd.f32 %v5590, %v5720
        %v5785 = vadd.f32 %v5591, %v5721
        %v5786 = vadd.f32 %v5592, %v5722
        %v5787 = vadd.f32 %v5593, %v5723
        %5788 = vst [vmem:[%s207] sm:$0xff] %v5724
        %5789 = vst [vmem:[%s207 + $0x8] sm:$0xff] %v5725
        %5790 = vst [vmem:[%s207 + $0x10] sm:$0xff] %v5726
        %5791 = vst [vmem:[%s207 + $0x18] sm:$0xff] %v5727
        %5792 = vst [vmem:[%s207 + $0x20] sm:$0xff] %v5728
        %5793 = vst [vmem:[%s207 + $0x28] sm:$0xff] %v5729
        %5794 = vst [vmem:[%s207 + $0x30] sm:$0xff] %v5730
        %5795 = vst [vmem:[%s207 + $0x38] sm:$0xff] %v5731
        %5796 = vst [vmem:[%s207 + $0x40] sm:$0xff] %v5732
        %5797 = vst [vmem:[%s207 + $0x48] sm:$0xff] %v5733
        %5798 = vst [vmem:[%s207 + $0x50] sm:$0xff] %v5734
        %5799 = vst [vmem:[%s207 + $0x58] sm:$0xff] %v5735
        %5800 = vst [vmem:[%s207 + $0x60] sm:$0xff] %v5736
        %5801 = vst [vmem:[%s207 + $0x68] sm:$0xff] %v5737
        %5802 = vst [vmem:[%s207 + $0x70] sm:$0xff] %v5738
        %5803 = vst [vmem:[%s207 + $0x78] sm:$0xff] %v5739
        %5804 = vst [vmem:[%s207 + $0x80] sm:$0xff] %v5740
        %5805 = vst [vmem:[%s207 + $0x88] sm:$0xff] %v5741
        %5806 = vst [vmem:[%s207 + $0x90] sm:$0xff] %v5742
        %5807 = vst [vmem:[%s207 + $0x98] sm:$0xff] %v5743
        %5808 = vst [vmem:[%s207 + $0xa0] sm:$0xff] %v5744
        %5809 = vst [vmem:[%s207 + $0xa8] sm:$0xff] %v5745
        %5810 = vst [vmem:[%s207 + $0xb0] sm:$0xff] %v5746
        %5811 = vst [vmem:[%s207 + $0xb8] sm:$0xff] %v5747
        %5812 = vst [vmem:[%s207 + $0xc0] sm:$0xff] %v5748
        %5813 = vst [vmem:[%s207 + $0xc8] sm:$0xff] %v5749
        %5814 = vst [vmem:[%s207 + $0xd0] sm:$0xff] %v5750
        %5815 = vst [vmem:[%s207 + $0xd8] sm:$0xff] %v5751
        %5816 = vst [vmem:[%s207 + $0xe0] sm:$0xff] %v5752
        %5817 = vst [vmem:[%s207 + $0xe8] sm:$0xff] %v5753
        %5818 = vst [vmem:[%s207 + $0xf0] sm:$0xff] %v5754
        %5819 = vst [vmem:[%s207 + $0xf8] sm:$0xff] %v5755
        %5820 = vst [vmem:[%s207 + $0x100] sm:$0xff] %v5756
        %5821 = vst [vmem:[%s207 + $0x108] sm:$0xff] %v5757
        %5822 = vst [vmem:[%s207 + $0x110] sm:$0xff] %v5758
        %5823 = vst [vmem:[%s207 + $0x118] sm:$0xff] %v5759
        %5824 = vst [vmem:[%s207 + $0x120] sm:$0xff] %v5760
        %5825 = vst [vmem:[%s207 + $0x128] sm:$0xff] %v5761
        %5826 = vst [vmem:[%s207 + $0x130] sm:$0xff] %v5762
        %5827 = vst [vmem:[%s207 + $0x138] sm:$0xff] %v5763
        %5828 = vst [vmem:[%s207 + $0x140] sm:$0xff] %v5764
        %5829 = vst [vmem:[%s207 + $0x148] sm:$0xff] %v5765
        %5830 = vst [vmem:[%s207 + $0x150] sm:$0xff] %v5766
        %5831 = vst [vmem:[%s207 + $0x158] sm:$0xff] %v5767
        %5832 = vst [vmem:[%s207 + $0x160] sm:$0xff] %v5768
        %5833 = vst [vmem:[%s207 + $0x168] sm:$0xff] %v5769
        %5834 = vst [vmem:[%s207 + $0x170] sm:$0xff] %v5770
        %5835 = vst [vmem:[%s207 + $0x178] sm:$0xff] %v5771
        %5836 = vst [vmem:[%s207 + $0x180] sm:$0xff] %v5772
        %5837 = vst [vmem:[%s207 + $0x188] sm:$0xff] %v5773
        %5838 = vst [vmem:[%s207 + $0x190] sm:$0xff] %v5774
        %5839 = vst [vmem:[%s207 + $0x198] sm:$0xff] %v5775
        %5840 = vst [vmem:[%s207 + $0x1a0] sm:$0xff] %v5776
        %5841 = vst [vmem:[%s207 + $0x1a8] sm:$0xff] %v5777
        %5842 = vst [vmem:[%s207 + $0x1b0] sm:$0xff] %v5778
        %5843 = vst [vmem:[%s207 + $0x1b8] sm:$0xff] %v5779
        %5844 = vst [vmem:[%s207 + $0x1c0] sm:$0xff] %v5780
        %5845 = vst [vmem:[%s207 + $0x1c8] sm:$0xff] %v5781
        %5846 = vst [vmem:[%s207 + $0x1d0] sm:$0xff] %v5782
        %5847 = vst [vmem:[%s207 + $0x1d8] sm:$0xff] %v5783
        %5848 = vst [vmem:[%s207 + $0x1e0] sm:$0xff] %v5784
        %5849 = vst [vmem:[%s207 + $0x1e8] sm:$0xff] %v5785
        %5850 = vst [vmem:[%s207 + $0x1f0] sm:$0xff] %v5786
        %5851 = vst [vmem:[%s207 + $0x1f8] sm:$0xff] %v5787
        %s5852 = sand.u32 %s97, 1
        %s5853 = scalar_lea.sflag [#allocation5], %s5852
        %s5854 = sand.u32 %s97, 1
        %s5855 = smul.addr %s5854, 512
        %s5856 = scalar_lea.vmem [#allocation8], %s5855
        // Predicated region
        $region41: #{tpu_custom_call.1} parent=31 // pred_check
          %p5857 = pneg %p107
        $region42: #{tpu_custom_call.1} parent=31 // pred_check_branch
          %5859 = sbr.rel (%p5857) target = $region44
        $region43: #{tpu_custom_call.1} parent=31 // pred_region
          %5861 = vsyncadd %s5853, 0
          %s5862 = smul.addr %s21, 64
          %s5863 = smul.addr %s5862, 8
          %s5864 = scalar_lea.hbm %s3, %s5863
          %s5865 = sshll.u32 %s5856, 4
          %s5866 = int_to_ptr.vmem [resolvable:$true] %s5865
          %s5867 = sshll.u32 %s5864, 4
          %s5868 = int_to_ptr.hbm [resolvable:$true] %s5867
          %5873 = dma.vmem_to_hbm [thread:$0]  %s5866, 8192, %s5868, %s5853, 128, 128, 8
        $region44: #{tpu_custom_call.1} parent=31 // pred_fallthru
          _
      $region32: #{tpu_custom_call.1} parent=5 // pred_fallthru
        _
      %p5874 = scmp.le.s32.totalorder 2, %s16
      // Predicated region
      $region45: #{tpu_custom_call.1} parent=5 // pred_check
        %p5875 = pneg %p5874
      $region46: #{tpu_custom_call.1} parent=5 // pred_check_branch
        %5877 = sbr.rel (%p5875) target = $region48
      $region47: #{tpu_custom_call.1} parent=5 // pred_region
        %s5878 = ssub.s32 %s16, 2
        // Predicated region
        $region49: #{tpu_custom_call.1} parent=47 // pred_check
          %p5879 = pneg %p113
        $region50: #{tpu_custom_call.1} parent=47 // pred_check_branch
          %5881 = sbr.rel (%p5879) target = $region52
        $region51: #{tpu_custom_call.1} parent=47 // pred_region
          %s5882 = sand.u32 %s98, 1
          %s5883 = scalar_lea.sflag [#allocation5], %s5882
          %s5884 = sand.u32 %s98, 1
          %s5885 = smul.addr %s5884, 512
          %s5886 = scalar_lea.vmem [#allocation8], %s5885
          %5888 = dma.done %s5883, 8192
        $region52: #{tpu_custom_call.1} parent=47 // pred_fallthru
          _
      $region48: #{tpu_custom_call.1} parent=5 // pred_fallthru
        _
    $region6: #{tpu_custom_call.1} parent=1 // loop_footer
      %s20 = sadd.s32 1, %s16
    $region7: #{tpu_custom_call.1} parent=1 // loop_footer_branch
      %15 = sbr.rel target = $region3
    $region8: #{tpu_custom_call.1} parent=1 // loop_exit
      _
    %5889 = vsyncpa [#allocation4], 1
    %s5890 = scalar_lea.sflag [#allocation4], 1
    %5891 = vsyncpa %s5890, 1
    %5892 = vsyncpa [#allocation7], 1
    %5893 = vsyncpa [#allocation5], 1
    %s5894 = scalar_lea.sflag [#allocation5], 1
    %5895 = vsyncpa %s5894, 1

</llo_original>
